<compile_context>
chip_gen: v6e
topology: v6e:2x2x1
jax: 0.10.0
libtpu: 0.0.40
codegen_flags: <defaults>
</compile_context>

<pallas_src>
import jax
import jax.numpy as jnp
from jax.experimental import pallas as pl
from jax.experimental.pallas import tpu as pltpu


# ----------------------------------------------------------------------------
# In-kernel helpers (operate on traced values; all reshapes preserve the lane
# dim, all slices touch only leading / sublane dims).
# ----------------------------------------------------------------------------
def _pad_hw1(y):
    """Zero-pad by 1 on the two spatial axes of a (B, H, W, C) value."""
    B, H, W, C = y.shape
    zr = jnp.zeros((B, 1, W, C), y.dtype)
    y = jnp.concatenate([zr, y, zr], axis=1)            # pad H (leading dim)
    zc = jnp.zeros((B, H + 2, 1, C), y.dtype)
    return jnp.concatenate([zc, y, zc], axis=2)          # pad W (sublane dim)


def _im2col_3x3(xp):
    """(B, H+2, W+2, C) padded input -> (B*H*W, 9*C) patch matrix.

    Column order is (dy*3 + dx)*C + c, matching the flattened conv weights.
    """
    B, Hp, Wp, C = xp.shape
    H, W = Hp - 2, Wp - 2
    cols = [xp[:, dy:dy + H, dx:dx + W, :]
            for dy in range(3) for dx in range(3)]       # each (B, H, W, C)
    return jnp.concatenate(cols, axis=3).reshape(B * H * W, 9 * C)


def _maxpool_2x2(y, B, H, W, C):
    """2x2 / stride-2 max-pool of a (B*H*W, C) slab (rows ordered (b, h, w)).

    Returns a (B, H//2, W//2, C) value.  Only lane-preserving reshapes and
    elementwise maxima are used.
    """
    H2, W2 = H // 2, W // 2
    y = y.reshape(B * H * W2, 2, C)
    y = jnp.maximum(y[:, 0, :], y[:, 1, :])              # pool over W pairs
    y = y.reshape(B * H2, 2, W2, C)
    y = jnp.maximum(y[:, 0, :, :], y[:, 1, :, :])        # pool over H pairs
    return y.reshape(B, H2, W2, C)


# ----------------------------------------------------------------------------
# Single fused kernel for the whole forward pass.
# ----------------------------------------------------------------------------
def cnn_fused_kernel(x_ref, w1_ref, b1_ref, w2_ref, b2_ref,
                     wf1_ref, bf1_ref, wf2_ref, bf2_ref, o_ref):
    B, H, W, _ = x_ref.shape                  # input is (B, H, W, 1)
    C1 = w1_ref.shape[1]
    C2 = w2_ref.shape[1]
    H2, W2 = H // 2, W // 2
    H4, W4 = H2 // 2, W2 // 2
    NH = wf1_ref.shape[1]                     # fc1 hidden width (512)

    # ---- conv1: 3x3 / pad 1 as im2col + one MXU matmul, bias, ReLU ----------
    p1 = _im2col_3x3(_pad_hw1(x_ref[...]))                        # (B*H*W, 9)
    y1 = jnp.dot(p1, w1_ref[...], preferred_element_type=jnp.float32)
    y1 = jnp.maximum(y1 + b1_ref[...], 0.0)                       # (B*H*W, C1)
    y1 = _maxpool_2x2(y1, B, H, W, C1)                            # (B,H2,W2,C1)

    # ---- conv2 ---------------------------------------------------------------
    p2 = _im2col_3x3(_pad_hw1(y1))                                # (B*H2*W2, 9*C1)
    y2 = jnp.dot(p2, w2_ref[...], preferred_element_type=jnp.float32)
    y2 = jnp.maximum(y2 + b2_ref[...], 0.0)                       # (B*H2*W2, C2)
    y2 = _maxpool_2x2(y2, B, H2, W2, C2)                          # (B,H4,W4,C2)

    # ---- fc1: flatten + matmul fused as a sum of per-position MXU matmuls ----
    # w_fc1 rows were pre-permuted on the host to (h, w, c) order, so the
    # kernel needs no lane-changing reshape / transpose for the flatten.
    acc = jnp.zeros((B, NH), jnp.float32)
    for h in range(H4):
        for w in range(W4):
            r0 = (h * W4 + w) * C2
            acc = acc + jnp.dot(y2[:, h, w, :], wf1_ref[r0:r0 + C2, :],
                                preferred_element_type=jnp.float32)
    hidden = jnp.maximum(acc + bf1_ref[...], 0.0)                 # (B, 512)

    # ---- fc2 -----------------------------------------------------------------
    o_ref[...] = jnp.dot(hidden, wf2_ref[...],
                         preferred_element_type=jnp.float32) + bf2_ref[...]


# ----------------------------------------------------------------------------
# Wrapper
# ----------------------------------------------------------------------------
def _vmem():
    return pl.BlockSpec(memory_space=pltpu.MemorySpace.VMEM)


@jax.jit
def cnn_forward(x_nchw, kparams):
    B, Cin, H, W = x_nchw.shape
    assert Cin == 1, "conv1 expects a single input channel"
    x = x_nchw.reshape(B, H, W, 1)            # Cin == 1: pure metadata reshape
    num_classes = kparams["w_fc2"].shape[1]
    return pl.pallas_call(
        cnn_fused_kernel,
        out_shape=jax.ShapeDtypeStruct((B, num_classes), jnp.float32),
        in_specs=[_vmem()] * 9,
        out_specs=_vmem(),
    )(x,
      kparams["w_conv1"], kparams["b_conv1"],
      kparams["w_conv2"], kparams["b_conv2"],
      kparams["w_fc1"], kparams["b_fc1"],
      kparams["w_fc2"], kparams["b_fc2"])


def prepare_kernel_params(params, C2, H4, W4):
    """One-time host-side prep: permute fc1 rows from PyTorch's NCHW flatten
    order (c, h, w) to the kernel's natural (h, w, c) order."""
    kp = dict(params)
    kp["w_fc1"] = (params["w_fc1"]
                   .reshape(C2, H4, W4, -1)
                   .transpose(1, 2, 0, 3)
                   .reshape(H4 * W4 * C2, -1))
    return kp


# ----------------------------------------------------------------------------
# Pure-JAX reference (mirrors the PyTorch module semantics)
# ----------------------------------------------------------------------------
def cnn_reference(x_nchw, params):
    def conv(x, w_flat, b):
        cout = w_flat.shape[1]
        cin = w_flat.shape[0] // 9
        w_hwio = w_flat.reshape(3, 3, cin, cout)
        w_oihw = jnp.transpose(w_hwio, (3, 2, 0, 1))
        y = jax.lax.conv_general_dilated(
            x, w_oihw, window_strides=(1, 1), padding=((1, 1), (1, 1)),
            dimension_numbers=("NCHW", "OIHW", "NCHW"))
        return y + b.reshape(1, -1, 1, 1)

    def pool(x):
        Bn, C, H, W = x.shape
        return x.reshape(Bn, C, H // 2, 2, W // 2, 2).max(axis=(3, 5))

    y = pool(jax.nn.relu(conv(x_nchw, params["w_conv1"], params["b_conv1"])))
    y = pool(jax.nn.relu(conv(y, params["w_conv2"], params["b_conv2"])))
    flat = y.reshape(y.shape[0], -1)                      # NCHW-order flatten
    h = jax.nn.relu(flat @ params["w_fc1"] + params["b_fc1"])
    return h @ params["w_fc2"] + params["b_fc2"]


# ----------------------------------------------------------------------------
if __name__ == "__main__":
    # Module config: in_channels=[4, 8], num_classes=10, args.img_size=16
    in_channels = (4, 8)
    num_classes = 10
    img_size = 16
    B = 2
    C1, C2 = in_channels
    H4 = W4 = img_size // 4
    F = C2 * H4 * W4                                     # 8 * 4 * 4 = 128

    # Deterministic synthetic parameters (torch shapes, stored pre-transposed):
    #   conv weights flattened as (9*Cin, Cout), row k = (dy*3+dx)*Cin + ci
    #   fc weights stored as (in, out) == torch weight.T
    ks = jax.random.split(jax.random.PRNGKey(0), 8)
    params = {
        "w_conv1": 0.1 * jax.random.normal(ks[0], (9 * 1, C1), jnp.float32),
        "b_conv1": 0.1 * jax.random.normal(ks[1], (1, C1), jnp.float32),
        "w_conv2": 0.1 * jax.random.normal(ks[2], (9 * C1, C2), jnp.float32),
        "b_conv2": 0.1 * jax.random.normal(ks[3], (1, C2), jnp.float32),
        "w_fc1": 0.05 * jax.random.normal(ks[4], (F, 512), jnp.float32),
        "b_fc1": 0.05 * jax.random.normal(ks[5], (1, 512), jnp.float32),
        "w_fc2": 0.05 * jax.random.normal(ks[6], (512, num_classes), jnp.float32),
        "b_fc2": 0.05 * jax.random.normal(ks[7], (1, num_classes), jnp.float32),
    }
    kparams = prepare_kernel_params(params, C2, H4, W4)

    x = jax.random.normal(jax.random.PRNGKey(0),
                          (B, 1, img_size, img_size), jnp.float32)

    out = jax.block_until_ready(cnn_forward(x, kparams))
    assert out.shape == (B, num_classes), out.shape

    ref = cnn_reference(x, params)
    max_err = jnp.max(jnp.abs(out - ref))
    assert jnp.allclose(out, ref, atol=1e-3, rtol=1e-3), (
        "mismatch vs reference, max abs diff = %s" % max_err)

    print("KERNEL_OK")
</pallas_src>

<mosaic_0001>
module attributes {stable_mosaic.version = 11 : i64} {
  func.func @cnn_fused_kernel(%arg0: memref<2x16x16x1xf32, #tpu.memory_space<vmem>>, %arg1: memref<9x4xf32, #tpu.memory_space<vmem>>, %arg2: memref<1x4xf32, #tpu.memory_space<vmem>>, %arg3: memref<36x8xf32, #tpu.memory_space<vmem>>, %arg4: memref<1x8xf32, #tpu.memory_space<vmem>>, %arg5: memref<128x512xf32, #tpu.memory_space<vmem>>, %arg6: memref<1x512xf32, #tpu.memory_space<vmem>>, %arg7: memref<512x10xf32, #tpu.memory_space<vmem>>, %arg8: memref<1x10xf32, #tpu.memory_space<vmem>>, %arg9: memref<2x10xf32, #tpu.memory_space<vmem>>) attributes {dimension_semantics = [], scalar_prefetch = 0 : i64, scratch_operands = 0 : i64, tpu.core_type = #tpu.core_type<tc>} {
    %c0 = arith.constant 0 : index
    %c0_0 = arith.constant 0 : index
    %c0_1 = arith.constant 0 : index
    %c0_2 = arith.constant 0 : index
    %0 = vector.load %arg0[%c0, %c0_0, %c0_1, %c0_2] : memref<2x16x16x1xf32, #tpu.memory_space<vmem>>, vector<2x16x16x1xf32>
    %cst = arith.constant 0.000000e+00 : f32
    %1 = vector.broadcast %cst : f32 to vector<2x1x16x1xf32>
    %2 = tpu.concatenate %1, %0, %1 in 1 : vector<2x1x16x1xf32>, vector<2x16x16x1xf32>, vector<2x1x16x1xf32> -> vector<2x18x16x1xf32>
    %cst_3 = arith.constant 0.000000e+00 : f32
    %3 = vector.broadcast %cst_3 : f32 to vector<2x18x1x1xf32>
    %4 = tpu.concatenate %3, %2, %3 in 2 : vector<2x18x1x1xf32>, vector<2x18x16x1xf32>, vector<2x18x1x1xf32> -> vector<2x18x18x1xf32>
    %5 = vector.extract_strided_slice %4 {offsets = [0, 0, 0, 0], sizes = [2, 16, 16, 1], strides = [1, 1, 1, 1]} : vector<2x18x18x1xf32> to vector<2x16x16x1xf32>
    %6 = vector.extract_strided_slice %4 {offsets = [0, 0, 1, 0], sizes = [2, 16, 16, 1], strides = [1, 1, 1, 1]} : vector<2x18x18x1xf32> to vector<2x16x16x1xf32>
    %7 = vector.extract_strided_slice %4 {offsets = [0, 0, 2, 0], sizes = [2, 16, 16, 1], strides = [1, 1, 1, 1]} : vector<2x18x18x1xf32> to vector<2x16x16x1xf32>
    %8 = vector.extract_strided_slice %4 {offsets = [0, 1, 0, 0], sizes = [2, 16, 16, 1], strides = [1, 1, 1, 1]} : vector<2x18x18x1xf32> to vector<2x16x16x1xf32>
    %9 = vector.extract_strided_slice %4 {offsets = [0, 1, 1, 0], sizes = [2, 16, 16, 1], strides = [1, 1, 1, 1]} : vector<2x18x18x1xf32> to vector<2x16x16x1xf32>
    %10 = vector.extract_strided_slice %4 {offsets = [0, 1, 2, 0], sizes = [2, 16, 16, 1], strides = [1, 1, 1, 1]} : vector<2x18x18x1xf32> to vector<2x16x16x1xf32>
    %11 = vector.extract_strided_slice %4 {offsets = [0, 2, 0, 0], sizes = [2, 16, 16, 1], strides = [1, 1, 1, 1]} : vector<2x18x18x1xf32> to vector<2x16x16x1xf32>
    %12 = vector.extract_strided_slice %4 {offsets = [0, 2, 1, 0], sizes = [2, 16, 16, 1], strides = [1, 1, 1, 1]} : vector<2x18x18x1xf32> to vector<2x16x16x1xf32>
    %13 = vector.extract_strided_slice %4 {offsets = [0, 2, 2, 0], sizes = [2, 16, 16, 1], strides = [1, 1, 1, 1]} : vector<2x18x18x1xf32> to vector<2x16x16x1xf32>
    %14 = tpu.concatenate %5, %6, %7, %8, %9, %10, %11, %12, %13 in 3 : vector<2x16x16x1xf32>, vector<2x16x16x1xf32>, vector<2x16x16x1xf32>, vector<2x16x16x1xf32>, vector<2x16x16x1xf32>, vector<2x16x16x1xf32>, vector<2x16x16x1xf32>, vector<2x16x16x1xf32>, vector<2x16x16x1xf32> -> vector<2x16x16x9xf32>
    %15 = vector.shape_cast %14 : vector<2x16x16x9xf32> to vector<512x9xf32>
    %c0_4 = arith.constant 0 : index
    %c0_5 = arith.constant 0 : index
    %16 = vector.load %arg1[%c0_4, %c0_5] : memref<9x4xf32, #tpu.memory_space<vmem>>, vector<9x4xf32>
    %cst_6 = arith.constant dense<0.000000e+00> : vector<512x4xf32>
    %17 = tpu.matmul %15, %16, %cst_6 {dimension_numbers = #tpu.dot_dimension_numbers<[1], [0], [0], [1], [0, 0, 1, 1], [], []>} : vector<512x9xf32>, vector<9x4xf32>, vector<512x4xf32> -> vector<512x4xf32>
    %c0_7 = arith.constant 0 : index
    %c0_8 = arith.constant 0 : index
    %18 = vector.load %arg2[%c0_7, %c0_8] : memref<1x4xf32, #tpu.memory_space<vmem>>, vector<1x4xf32>
    %19 = vector.broadcast %18 : vector<1x4xf32> to vector<512x4xf32>
    %20 = arith.addf %17, %19 : vector<512x4xf32>
    %cst_9 = arith.constant 0.000000e+00 : f32
    %21 = vector.broadcast %cst_9 : f32 to vector<512x4xf32>
    %22 = arith.maximumf %20, %21 : vector<512x4xf32>
    %23 = vector.shape_cast %22 : vector<512x4xf32> to vector<256x2x4xf32>
    %24 = vector.extract_strided_slice %23 {offsets = [0, 0, 0], sizes = [256, 1, 4], strides = [1, 1, 1]} : vector<256x2x4xf32> to vector<256x1x4xf32>
    %25 = vector.shape_cast %24 : vector<256x1x4xf32> to vector<256x4xf32>
    %26 = vector.extract_strided_slice %23 {offsets = [0, 1, 0], sizes = [256, 1, 4], strides = [1, 1, 1]} : vector<256x2x4xf32> to vector<256x1x4xf32>
    %27 = vector.shape_cast %26 : vector<256x1x4xf32> to vector<256x4xf32>
    %28 = arith.maximumf %25, %27 : vector<256x4xf32>
    %29 = vector.shape_cast %28 : vector<256x4xf32> to vector<16x2x8x4xf32>
    %30 = vector.extract_strided_slice %29 {offsets = [0, 0, 0, 0], sizes = [16, 1, 8, 4], strides = [1, 1, 1, 1]} : vector<16x2x8x4xf32> to vector<16x1x8x4xf32>
    %31 = vector.shape_cast %30 : vector<16x1x8x4xf32> to vector<16x8x4xf32>
    %32 = vector.extract_strided_slice %29 {offsets = [0, 1, 0, 0], sizes = [16, 1, 8, 4], strides = [1, 1, 1, 1]} : vector<16x2x8x4xf32> to vector<16x1x8x4xf32>
    %33 = vector.shape_cast %32 : vector<16x1x8x4xf32> to vector<16x8x4xf32>
    %34 = arith.maximumf %31, %33 : vector<16x8x4xf32>
    %35 = vector.shape_cast %34 : vector<16x8x4xf32> to vector<2x8x8x4xf32>
    %cst_10 = arith.constant 0.000000e+00 : f32
    %36 = vector.broadcast %cst_10 : f32 to vector<2x1x8x4xf32>
    %37 = tpu.concatenate %36, %35, %36 in 1 : vector<2x1x8x4xf32>, vector<2x8x8x4xf32>, vector<2x1x8x4xf32> -> vector<2x10x8x4xf32>
    %cst_11 = arith.constant 0.000000e+00 : f32
    %38 = vector.broadcast %cst_11 : f32 to vector<2x10x1x4xf32>
    %39 = tpu.concatenate %38, %37, %38 in 2 : vector<2x10x1x4xf32>, vector<2x10x8x4xf32>, vector<2x10x1x4xf32> -> vector<2x10x10x4xf32>
    %40 = vector.extract_strided_slice %39 {offsets = [0, 0, 0, 0], sizes = [2, 8, 8, 4], strides = [1, 1, 1, 1]} : vector<2x10x10x4xf32> to vector<2x8x8x4xf32>
    %41 = vector.extract_strided_slice %39 {offsets = [0, 0, 1, 0], sizes = [2, 8, 8, 4], strides = [1, 1, 1, 1]} : vector<2x10x10x4xf32> to vector<2x8x8x4xf32>
    %42 = vector.extract_strided_slice %39 {offsets = [0, 0, 2, 0], sizes = [2, 8, 8, 4], strides = [1, 1, 1, 1]} : vector<2x10x10x4xf32> to vector<2x8x8x4xf32>
    %43 = vector.extract_strided_slice %39 {offsets = [0, 1, 0, 0], sizes = [2, 8, 8, 4], strides = [1, 1, 1, 1]} : vector<2x10x10x4xf32> to vector<2x8x8x4xf32>
    %44 = vector.extract_strided_slice %39 {offsets = [0, 1, 1, 0], sizes = [2, 8, 8, 4], strides = [1, 1, 1, 1]} : vector<2x10x10x4xf32> to vector<2x8x8x4xf32>
    %45 = vector.extract_strided_slice %39 {offsets = [0, 1, 2, 0], sizes = [2, 8, 8, 4], strides = [1, 1, 1, 1]} : vector<2x10x10x4xf32> to vector<2x8x8x4xf32>
    %46 = vector.extract_strided_slice %39 {offsets = [0, 2, 0, 0], sizes = [2, 8, 8, 4], strides = [1, 1, 1, 1]} : vector<2x10x10x4xf32> to vector<2x8x8x4xf32>
    %47 = vector.extract_strided_slice %39 {offsets = [0, 2, 1, 0], sizes = [2, 8, 8, 4], strides = [1, 1, 1, 1]} : vector<2x10x10x4xf32> to vector<2x8x8x4xf32>
    %48 = vector.extract_strided_slice %39 {offsets = [0, 2, 2, 0], sizes = [2, 8, 8, 4], strides = [1, 1, 1, 1]} : vector<2x10x10x4xf32> to vector<2x8x8x4xf32>
    %49 = tpu.concatenate %40, %41, %42, %43, %44, %45, %46, %47, %48 in 3 : vector<2x8x8x4xf32>, vector<2x8x8x4xf32>, vector<2x8x8x4xf32>, vector<2x8x8x4xf32>, vector<2x8x8x4xf32>, vector<2x8x8x4xf32>, vector<2x8x8x4xf32>, vector<2x8x8x4xf32>, vector<2x8x8x4xf32> -> vector<2x8x8x36xf32>
    %50 = vector.shape_cast %49 : vector<2x8x8x36xf32> to vector<128x36xf32>
    %c0_12 = arith.constant 0 : index
    %c0_13 = arith.constant 0 : index
    %51 = vector.load %arg3[%c0_12, %c0_13] : memref<36x8xf32, #tpu.memory_space<vmem>>, vector<36x8xf32>
    %cst_14 = arith.constant dense<0.000000e+00> : vector<128x8xf32>
    %52 = tpu.matmul %50, %51, %cst_14 {dimension_numbers = #tpu.dot_dimension_numbers<[1], [0], [0], [1], [0, 0, 1, 1], [], []>} : vector<128x36xf32>, vector<36x8xf32>, vector<128x8xf32> -> vector<128x8xf32>
    %c0_15 = arith.constant 0 : index
    %c0_16 = arith.constant 0 : index
    %53 = vector.load %arg4[%c0_15, %c0_16] : memref<1x8xf32, #tpu.memory_space<vmem>>, vector<1x8xf32>
    %54 = vector.broadcast %53 : vector<1x8xf32> to vector<128x8xf32>
    %55 = arith.addf %52, %54 : vector<128x8xf32>
    %cst_17 = arith.constant 0.000000e+00 : f32
    %56 = vector.broadcast %cst_17 : f32 to vector<128x8xf32>
    %57 = arith.maximumf %55, %56 : vector<128x8xf32>
    %58 = vector.shape_cast %57 : vector<128x8xf32> to vector<64x2x8xf32>
    %59 = vector.extract_strided_slice %58 {offsets = [0, 0, 0], sizes = [64, 1, 8], strides = [1, 1, 1]} : vector<64x2x8xf32> to vector<64x1x8xf32>
    %60 = vector.shape_cast %59 : vector<64x1x8xf32> to vector<64x8xf32>
    %61 = vector.extract_strided_slice %58 {offsets = [0, 1, 0], sizes = [64, 1, 8], strides = [1, 1, 1]} : vector<64x2x8xf32> to vector<64x1x8xf32>
    %62 = vector.shape_cast %61 : vector<64x1x8xf32> to vector<64x8xf32>
    %63 = arith.maximumf %60, %62 : vector<64x8xf32>
    %64 = vector.shape_cast %63 : vector<64x8xf32> to vector<8x2x4x8xf32>
    %65 = vector.extract_strided_slice %64 {offsets = [0, 0, 0, 0], sizes = [8, 1, 4, 8], strides = [1, 1, 1, 1]} : vector<8x2x4x8xf32> to vector<8x1x4x8xf32>
    %66 = vector.shape_cast %65 : vector<8x1x4x8xf32> to vector<8x4x8xf32>
    %67 = vector.extract_strided_slice %64 {offsets = [0, 1, 0, 0], sizes = [8, 1, 4, 8], strides = [1, 1, 1, 1]} : vector<8x2x4x8xf32> to vector<8x1x4x8xf32>
    %68 = vector.shape_cast %67 : vector<8x1x4x8xf32> to vector<8x4x8xf32>
    %69 = arith.maximumf %66, %68 : vector<8x4x8xf32>
    %70 = vector.shape_cast %69 : vector<8x4x8xf32> to vector<2x4x4x8xf32>
    %cst_18 = arith.constant 0.000000e+00 : f32
    %71 = vector.broadcast %cst_18 : f32 to vector<2x512xf32>
    %72 = vector.extract_strided_slice %70 {offsets = [0, 0, 0, 0], sizes = [2, 1, 1, 8], strides = [1, 1, 1, 1]} : vector<2x4x4x8xf32> to vector<2x1x1x8xf32>
    %73 = vector.shape_cast %72 : vector<2x1x1x8xf32> to vector<2x8xf32>
    %c0_19 = arith.constant 0 : index
    %c0_20 = arith.constant 0 : index
    %74 = vector.load %arg5[%c0_19, %c0_20] : memref<128x512xf32, #tpu.memory_space<vmem>>, vector<8x512xf32>
    %cst_21 = arith.constant dense<0.000000e+00> : vector<2x512xf32>
    %75 = tpu.matmul %73, %74, %cst_21 {dimension_numbers = #tpu.dot_dimension_numbers<[1], [0], [0], [1], [0, 0, 1, 1], [], []>} : vector<2x8xf32>, vector<8x512xf32>, vector<2x512xf32> -> vector<2x512xf32>
    %76 = arith.addf %71, %75 : vector<2x512xf32>
    %77 = vector.extract_strided_slice %70 {offsets = [0, 0, 1, 0], sizes = [2, 1, 1, 8], strides = [1, 1, 1, 1]} : vector<2x4x4x8xf32> to vector<2x1x1x8xf32>
    %78 = vector.shape_cast %77 : vector<2x1x1x8xf32> to vector<2x8xf32>
    %c8 = arith.constant 8 : index
    %c0_22 = arith.constant 0 : index
    %79 = vector.load %arg5[%c8, %c0_22] : memref<128x512xf32, #tpu.memory_space<vmem>>, vector<8x512xf32>
    %cst_23 = arith.constant dense<0.000000e+00> : vector<2x512xf32>
    %80 = tpu.matmul %78, %79, %cst_23 {dimension_numbers = #tpu.dot_dimension_numbers<[1], [0], [0], [1], [0, 0, 1, 1], [], []>} : vector<2x8xf32>, vector<8x512xf32>, vector<2x512xf32> -> vector<2x512xf32>
    %81 = arith.addf %76, %80 : vector<2x512xf32>
    %82 = vector.extract_strided_slice %70 {offsets = [0, 0, 2, 0], sizes = [2, 1, 1, 8], strides = [1, 1, 1, 1]} : vector<2x4x4x8xf32> to vector<2x1x1x8xf32>
    %83 = vector.shape_cast %82 : vector<2x1x1x8xf32> to vector<2x8xf32>
    %c16 = arith.constant 16 : index
    %c0_24 = arith.constant 0 : index
    %84 = vector.load %arg5[%c16, %c0_24] : memref<128x512xf32, #tpu.memory_space<vmem>>, vector<8x512xf32>
    %cst_25 = arith.constant dense<0.000000e+00> : vector<2x512xf32>
    %85 = tpu.matmul %83, %84, %cst_25 {dimension_numbers = #tpu.dot_dimension_numbers<[1], [0], [0], [1], [0, 0, 1, 1], [], []>} : vector<2x8xf32>, vector<8x512xf32>, vector<2x512xf32> -> vector<2x512xf32>
    %86 = arith.addf %81, %85 : vector<2x512xf32>
    %87 = vector.extract_strided_slice %70 {offsets = [0, 0, 3, 0], sizes = [2, 1, 1, 8], strides = [1, 1, 1, 1]} : vector<2x4x4x8xf32> to vector<2x1x1x8xf32>
    %88 = vector.shape_cast %87 : vector<2x1x1x8xf32> to vector<2x8xf32>
    %c24 = arith.constant 24 : index
    %c0_26 = arith.constant 0 : index
    %89 = vector.load %arg5[%c24, %c0_26] : memref<128x512xf32, #tpu.memory_space<vmem>>, vector<8x512xf32>
    %cst_27 = arith.constant dense<0.000000e+00> : vector<2x512xf32>
    %90 = tpu.matmul %88, %89, %cst_27 {dimension_numbers = #tpu.dot_dimension_numbers<[1], [0], [0], [1], [0, 0, 1, 1], [], []>} : vector<2x8xf32>, vector<8x512xf32>, vector<2x512xf32> -> vector<2x512xf32>
    %91 = arith.addf %86, %90 : vector<2x512xf32>
    %92 = vector.extract_strided_slice %70 {offsets = [0, 1, 0, 0], sizes = [2, 1, 1, 8], strides = [1, 1, 1, 1]} : vector<2x4x4x8xf32> to vector<2x1x1x8xf32>
    %93 = vector.shape_cast %92 : vector<2x1x1x8xf32> to vector<2x8xf32>
    %c32 = arith.constant 32 : index
    %c0_28 = arith.constant 0 : index
    %94 = vector.load %arg5[%c32, %c0_28] : memref<128x512xf32, #tpu.memory_space<vmem>>, vector<8x512xf32>
    %cst_29 = arith.constant dense<0.000000e+00> : vector<2x512xf32>
    %95 = tpu.matmul %93, %94, %cst_29 {dimension_numbers = #tpu.dot_dimension_numbers<[1], [0], [0], [1], [0, 0, 1, 1], [], []>} : vector<2x8xf32>, vector<8x512xf32>, vector<2x512xf32> -> vector<2x512xf32>
    %96 = arith.addf %91, %95 : vector<2x512xf32>
    %97 = vector.extract_strided_slice %70 {offsets = [0, 1, 1, 0], sizes = [2, 1, 1, 8], strides = [1, 1, 1, 1]} : vector<2x4x4x8xf32> to vector<2x1x1x8xf32>
    %98 = vector.shape_cast %97 : vector<2x1x1x8xf32> to vector<2x8xf32>
    %c40 = arith.constant 40 : index
    %c0_30 = arith.constant 0 : index
    %99 = vector.load %arg5[%c40, %c0_30] : memref<128x512xf32, #tpu.memory_space<vmem>>, vector<8x512xf32>
    %cst_31 = arith.constant dense<0.000000e+00> : vector<2x512xf32>
    %100 = tpu.matmul %98, %99, %cst_31 {dimension_numbers = #tpu.dot_dimension_numbers<[1], [0], [0], [1], [0, 0, 1, 1], [], []>} : vector<2x8xf32>, vector<8x512xf32>, vector<2x512xf32> -> vector<2x512xf32>
    %101 = arith.addf %96, %100 : vector<2x512xf32>
    %102 = vector.extract_strided_slice %70 {offsets = [0, 1, 2, 0], sizes = [2, 1, 1, 8], strides = [1, 1, 1, 1]} : vector<2x4x4x8xf32> to vector<2x1x1x8xf32>
    %103 = vector.shape_cast %102 : vector<2x1x1x8xf32> to vector<2x8xf32>
    %c48 = arith.constant 48 : index
    %c0_32 = arith.constant 0 : index
    %104 = vector.load %arg5[%c48, %c0_32] : memref<128x512xf32, #tpu.memory_space<vmem>>, vector<8x512xf32>
    %cst_33 = arith.constant dense<0.000000e+00> : vector<2x512xf32>
    %105 = tpu.matmul %103, %104, %cst_33 {dimension_numbers = #tpu.dot_dimension_numbers<[1], [0], [0], [1], [0, 0, 1, 1], [], []>} : vector<2x8xf32>, vector<8x512xf32>, vector<2x512xf32> -> vector<2x512xf32>
    %106 = arith.addf %101, %105 : vector<2x512xf32>
    %107 = vector.extract_strided_slice %70 {offsets = [0, 1, 3, 0], sizes = [2, 1, 1, 8], strides = [1, 1, 1, 1]} : vector<2x4x4x8xf32> to vector<2x1x1x8xf32>
    %108 = vector.shape_cast %107 : vector<2x1x1x8xf32> to vector<2x8xf32>
    %c56 = arith.constant 56 : index
    %c0_34 = arith.constant 0 : index
    %109 = vector.load %arg5[%c56, %c0_34] : memref<128x512xf32, #tpu.memory_space<vmem>>, vector<8x512xf32>
    %cst_35 = arith.constant dense<0.000000e+00> : vector<2x512xf32>
    %110 = tpu.matmul %108, %109, %cst_35 {dimension_numbers = #tpu.dot_dimension_numbers<[1], [0], [0], [1], [0, 0, 1, 1], [], []>} : vector<2x8xf32>, vector<8x512xf32>, vector<2x512xf32> -> vector<2x512xf32>
    %111 = arith.addf %106, %110 : vector<2x512xf32>
    %112 = vector.extract_strided_slice %70 {offsets = [0, 2, 0, 0], sizes = [2, 1, 1, 8], strides = [1, 1, 1, 1]} : vector<2x4x4x8xf32> to vector<2x1x1x8xf32>
    %113 = vector.shape_cast %112 : vector<2x1x1x8xf32> to vector<2x8xf32>
    %c64 = arith.constant 64 : index
    %c0_36 = arith.constant 0 : index
    %114 = vector.load %arg5[%c64, %c0_36] : memref<128x512xf32, #tpu.memory_space<vmem>>, vector<8x512xf32>
    %cst_37 = arith.constant dense<0.000000e+00> : vector<2x512xf32>
    %115 = tpu.matmul %113, %114, %cst_37 {dimension_numbers = #tpu.dot_dimension_numbers<[1], [0], [0], [1], [0, 0, 1, 1], [], []>} : vector<2x8xf32>, vector<8x512xf32>, vector<2x512xf32> -> vector<2x512xf32>
    %116 = arith.addf %111, %115 : vector<2x512xf32>
    %117 = vector.extract_strided_slice %70 {offsets = [0, 2, 1, 0], sizes = [2, 1, 1, 8], strides = [1, 1, 1, 1]} : vector<2x4x4x8xf32> to vector<2x1x1x8xf32>
    %118 = vector.shape_cast %117 : vector<2x1x1x8xf32> to vector<2x8xf32>
    %c72 = arith.constant 72 : index
    %c0_38 = arith.constant 0 : index
    %119 = vector.load %arg5[%c72, %c0_38] : memref<128x512xf32, #tpu.memory_space<vmem>>, vector<8x512xf32>
    %cst_39 = arith.constant dense<0.000000e+00> : vector<2x512xf32>
    %120 = tpu.matmul %118, %119, %cst_39 {dimension_numbers = #tpu.dot_dimension_numbers<[1], [0], [0], [1], [0, 0, 1, 1], [], []>} : vector<2x8xf32>, vector<8x512xf32>, vector<2x512xf32> -> vector<2x512xf32>
    %121 = arith.addf %116, %120 : vector<2x512xf32>
    %122 = vector.extract_strided_slice %70 {offsets = [0, 2, 2, 0], sizes = [2, 1, 1, 8], strides = [1, 1, 1, 1]} : vector<2x4x4x8xf32> to vector<2x1x1x8xf32>
    %123 = vector.shape_cast %122 : vector<2x1x1x8xf32> to vector<2x8xf32>
    %c80 = arith.constant 80 : index
    %c0_40 = arith.constant 0 : index
    %124 = vector.load %arg5[%c80, %c0_40] : memref<128x512xf32, #tpu.memory_space<vmem>>, vector<8x512xf32>
    %cst_41 = arith.constant dense<0.000000e+00> : vector<2x512xf32>
    %125 = tpu.matmul %123, %124, %cst_41 {dimension_numbers = #tpu.dot_dimension_numbers<[1], [0], [0], [1], [0, 0, 1, 1], [], []>} : vector<2x8xf32>, vector<8x512xf32>, vector<2x512xf32> -> vector<2x512xf32>
    %126 = arith.addf %121, %125 : vector<2x512xf32>
    %127 = vector.extract_strided_slice %70 {offsets = [0, 2, 3, 0], sizes = [2, 1, 1, 8], strides = [1, 1, 1, 1]} : vector<2x4x4x8xf32> to vector<2x1x1x8xf32>
    %128 = vector.shape_cast %127 : vector<2x1x1x8xf32> to vector<2x8xf32>
    %c88 = arith.constant 88 : index
    %c0_42 = arith.constant 0 : index
    %129 = vector.load %arg5[%c88, %c0_42] : memref<128x512xf32, #tpu.memory_space<vmem>>, vector<8x512xf32>
    %cst_43 = arith.constant dense<0.000000e+00> : vector<2x512xf32>
    %130 = tpu.matmul %128, %129, %cst_43 {dimension_numbers = #tpu.dot_dimension_numbers<[1], [0], [0], [1], [0, 0, 1, 1], [], []>} : vector<2x8xf32>, vector<8x512xf32>, vector<2x512xf32> -> vector<2x512xf32>
    %131 = arith.addf %126, %130 : vector<2x512xf32>
    %132 = vector.extract_strided_slice %70 {offsets = [0, 3, 0, 0], sizes = [2, 1, 1, 8], strides = [1, 1, 1, 1]} : vector<2x4x4x8xf32> to vector<2x1x1x8xf32>
    %133 = vector.shape_cast %132 : vector<2x1x1x8xf32> to vector<2x8xf32>
    %c96 = arith.constant 96 : index
    %c0_44 = arith.constant 0 : index
    %134 = vector.load %arg5[%c96, %c0_44] : memref<128x512xf32, #tpu.memory_space<vmem>>, vector<8x512xf32>
    %cst_45 = arith.constant dense<0.000000e+00> : vector<2x512xf32>
    %135 = tpu.matmul %133, %134, %cst_45 {dimension_numbers = #tpu.dot_dimension_numbers<[1], [0], [0], [1], [0, 0, 1, 1], [], []>} : vector<2x8xf32>, vector<8x512xf32>, vector<2x512xf32> -> vector<2x512xf32>
    %136 = arith.addf %131, %135 : vector<2x512xf32>
    %137 = vector.extract_strided_slice %70 {offsets = [0, 3, 1, 0], sizes = [2, 1, 1, 8], strides = [1, 1, 1, 1]} : vector<2x4x4x8xf32> to vector<2x1x1x8xf32>
    %138 = vector.shape_cast %137 : vector<2x1x1x8xf32> to vector<2x8xf32>
    %c104 = arith.constant 104 : index
    %c0_46 = arith.constant 0 : index
    %139 = vector.load %arg5[%c104, %c0_46] : memref<128x512xf32, #tpu.memory_space<vmem>>, vector<8x512xf32>
    %cst_47 = arith.constant dense<0.000000e+00> : vector<2x512xf32>
    %140 = tpu.matmul %138, %139, %cst_47 {dimension_numbers = #tpu.dot_dimension_numbers<[1], [0], [0], [1], [0, 0, 1, 1], [], []>} : vector<2x8xf32>, vector<8x512xf32>, vector<2x512xf32> -> vector<2x512xf32>
    %141 = arith.addf %136, %140 : vector<2x512xf32>
    %142 = vector.extract_strided_slice %70 {offsets = [0, 3, 2, 0], sizes = [2, 1, 1, 8], strides = [1, 1, 1, 1]} : vector<2x4x4x8xf32> to vector<2x1x1x8xf32>
    %143 = vector.shape_cast %142 : vector<2x1x1x8xf32> to vector<2x8xf32>
    %c112 = arith.constant 112 : index
    %c0_48 = arith.constant 0 : index
    %144 = vector.load %arg5[%c112, %c0_48] : memref<128x512xf32, #tpu.memory_space<vmem>>, vector<8x512xf32>
    %cst_49 = arith.constant dense<0.000000e+00> : vector<2x512xf32>
    %145 = tpu.matmul %143, %144, %cst_49 {dimension_numbers = #tpu.dot_dimension_numbers<[1], [0], [0], [1], [0, 0, 1, 1], [], []>} : vector<2x8xf32>, vector<8x512xf32>, vector<2x512xf32> -> vector<2x512xf32>
    %146 = arith.addf %141, %145 : vector<2x512xf32>
    %147 = vector.extract_strided_slice %70 {offsets = [0, 3, 3, 0], sizes = [2, 1, 1, 8], strides = [1, 1, 1, 1]} : vector<2x4x4x8xf32> to vector<2x1x1x8xf32>
    %148 = vector.shape_cast %147 : vector<2x1x1x8xf32> to vector<2x8xf32>
    %c120 = arith.constant 120 : index
    %c0_50 = arith.constant 0 : index
    %149 = vector.load %arg5[%c120, %c0_50] : memref<128x512xf32, #tpu.memory_space<vmem>>, vector<8x512xf32>
    %cst_51 = arith.constant dense<0.000000e+00> : vector<2x512xf32>
    %150 = tpu.matmul %148, %149, %cst_51 {dimension_numbers = #tpu.dot_dimension_numbers<[1], [0], [0], [1], [0, 0, 1, 1], [], []>} : vector<2x8xf32>, vector<8x512xf32>, vector<2x512xf32> -> vector<2x512xf32>
    %151 = arith.addf %146, %150 : vector<2x512xf32>
    %c0_52 = arith.constant 0 : index
    %c0_53 = arith.constant 0 : index
    %152 = vector.load %arg6[%c0_52, %c0_53] : memref<1x512xf32, #tpu.memory_space<vmem>>, vector<1x512xf32>
    %153 = vector.broadcast %152 : vector<1x512xf32> to vector<2x512xf32>
    %154 = arith.addf %151, %153 : vector<2x512xf32>
    %cst_54 = arith.constant 0.000000e+00 : f32
    %155 = vector.broadcast %cst_54 : f32 to vector<2x512xf32>
    %156 = arith.maximumf %154, %155 : vector<2x512xf32>
    %c0_55 = arith.constant 0 : index
    %c0_56 = arith.constant 0 : index
    %157 = vector.load %arg7[%c0_55, %c0_56] : memref<512x10xf32, #tpu.memory_space<vmem>>, vector<512x10xf32>
    %cst_57 = arith.constant dense<0.000000e+00> : vector<2x10xf32>
    %158 = tpu.matmul %156, %157, %cst_57 {dimension_numbers = #tpu.dot_dimension_numbers<[1], [0], [0], [1], [0, 0, 1, 1], [], []>} : vector<2x512xf32>, vector<512x10xf32>, vector<2x10xf32> -> vector<2x10xf32>
    %c0_58 = arith.constant 0 : index
    %c0_59 = arith.constant 0 : index
    %159 = vector.load %arg8[%c0_58, %c0_59] : memref<1x10xf32, #tpu.memory_space<vmem>>, vector<1x10xf32>
    %160 = vector.broadcast %159 : vector<1x10xf32> to vector<2x10xf32>
    %161 = arith.addf %158, %160 : vector<2x10xf32>
    %c0_60 = arith.constant 0 : index
    %c0_61 = arith.constant 0 : index
    %162 = vector.load %arg9[%c0_60, %c0_61] : memref<2x10xf32, #tpu.memory_space<vmem>>, vector<2x10xf32>
    tpu.vector_store %arg9[%c0_60, %c0_61], %161 {strides = array<i32>} : memref<2x10xf32, #tpu.memory_space<vmem>>, vector<2x10xf32>,
    return
  }
}

</mosaic_0001>

<llo_original>
// kernel: cnn_forward.1
$region0: #{cnn_forward.1}
  #allocation0 [shape = 'u32[]', space=smem, size = 0x4, offset = 0x4, fixed_abs, tag = 'smem constant byte address 0x4 - core index']
  #allocation1 [shape = 'u32[144,128]{1,0:T(1,128)}', space=vmem, size = 0x12000, scoped, tag = 'internal scratch']
  %s0 = inlined_call_operand.vmem [shape: f32[2,16,16,1], index: 0, kind: input, shape index: {}]
  %s1 = inlined_call_operand.vmem [shape: f32[9,4], index: 1, kind: input, shape index: {}]
  %s2 = inlined_call_operand.vmem [shape: f32[1,4], index: 2, kind: input, shape index: {}]
  %s3 = inlined_call_operand.vmem [shape: f32[36,8], index: 3, kind: input, shape index: {}]
  %s4 = inlined_call_operand.vmem [shape: f32[1,8], index: 4, kind: input, shape index: {}]
  %s5 = inlined_call_operand.vmem [shape: f32[128,512], index: 5, kind: input, shape index: {}]
  %s6 = inlined_call_operand.vmem [shape: f32[1,512], index: 6, kind: input, shape index: {}]
  %s7 = inlined_call_operand.vmem [shape: f32[512,10], index: 7, kind: input, shape index: {}]
  %s8 = inlined_call_operand.vmem [shape: f32[1,10], index: 8, kind: input, shape index: {}]
  %s9 = inlined_call_operand.hbm [shape: f32[2,10], index: 9, kind: output, shape index: {}]
  %s10 = sld [smem:[#allocation0]]
  $region46: #{cnn_forward.1} parent=0
    _
  %s12 = ssub.s32 1, %s10
  %s13 = scalar_select 0, %s12, %s10
  $region1: #{cnn_forward.1} parent=0
    #allocation2 [shape = 'u8[1024]{0}', space=vmem, size = 0x400, scoped, tag = 'output window, operand 0, single buffered']
    #allocation3 [shape = 's32[1]{0}', space=sflag, size = 0x4, scoped, tag = 'scoped memory for cnn_forward.1']
    %14 = vsyncpa [#allocation3], 0
    // Predicated region
    $region2: #{cnn_forward.1} parent=1 // pred_check
      _
    $region3: #{cnn_forward.1} parent=1 // pred_check_branch
      %16 = sbr.rel (0) target = $region5
    $region4: #{cnn_forward.1} parent=1 // pred_region
      _
    $region5: #{cnn_forward.1} parent=1 // pred_fallthru
      _
    // Predicated region
    $region6: #{cnn_forward.1} parent=1 // pred_check
      _
    $region7: #{cnn_forward.1} parent=1 // pred_check_branch
      %18 = sbr.rel (0) target = $region9
    $region8: #{cnn_forward.1} parent=1 // pred_region
      _
    $region9: #{cnn_forward.1} parent=1 // pred_fallthru
      _
    // Predicated region
    $region10: #{cnn_forward.1} parent=1 // pred_check
      _
    $region11: #{cnn_forward.1} parent=1 // pred_check_branch
      %20 = sbr.rel (0) target = $region13
    $region12: #{cnn_forward.1} parent=1 // pred_region
      _
    $region13: #{cnn_forward.1} parent=1 // pred_fallthru
      _
    // Predicated region
    $region14: #{cnn_forward.1} parent=1 // pred_check
      _
    $region15: #{cnn_forward.1} parent=1 // pred_check_branch
      %22 = sbr.rel (0) target = $region17
    $region16: #{cnn_forward.1} parent=1 // pred_region
      _
    $region17: #{cnn_forward.1} parent=1 // pred_fallthru
      _
    // Predicated region
    $region18: #{cnn_forward.1} parent=1 // pred_check
      _
    $region19: #{cnn_forward.1} parent=1 // pred_check_branch
      %24 = sbr.rel (0) target = $region21
    $region20: #{cnn_forward.1} parent=1 // pred_region
      _
    $region21: #{cnn_forward.1} parent=1 // pred_fallthru
      _
    // Predicated region
    $region22: #{cnn_forward.1} parent=1 // pred_check
      _
    $region23: #{cnn_forward.1} parent=1 // pred_check_branch
      %26 = sbr.rel (0) target = $region25
    $region24: #{cnn_forward.1} parent=1 // pred_region
      _
    $region25: #{cnn_forward.1} parent=1 // pred_fallthru
      _
    // Predicated region
    $region26: #{cnn_forward.1} parent=1 // pred_check
      _
    $region27: #{cnn_forward.1} parent=1 // pred_check_branch
      %28 = sbr.rel (0) target = $region29
    $region28: #{cnn_forward.1} parent=1 // pred_region
      _
    $region29: #{cnn_forward.1} parent=1 // pred_fallthru
      _
    // Predicated region
    $region30: #{cnn_forward.1} parent=1 // pred_check
      _
    $region31: #{cnn_forward.1} parent=1 // pred_check_branch
      %30 = sbr.rel (0) target = $region33
    $region32: #{cnn_forward.1} parent=1 // pred_region
      _
    $region33: #{cnn_forward.1} parent=1 // pred_fallthru
      _
    // Predicated region
    $region34: #{cnn_forward.1} parent=1 // pred_check
      _
    $region35: #{cnn_forward.1} parent=1 // pred_check_branch
      %32 = sbr.rel (0) target = $region37
    $region36: #{cnn_forward.1} parent=1 // pred_region
      _
    $region37: #{cnn_forward.1} parent=1 // pred_fallthru
      _
    %v33 = vld [vmem:[%s0] sm:$0xff]
    %v34 = vld [vmem:[%s0 + $0x8] sm:$0xff]
    %v35 = vld [vmem:[%s0 + $0x10] sm:$0xff]
    %v36 = vld [vmem:[%s0 + $0x18] sm:$0xff]
    %v37 = vld [vmem:[%s0 + $0x20] sm:$0xff]
    %v38 = vld [vmem:[%s0 + $0x28] sm:$0xff]
    %v39 = vld [vmem:[%s0 + $0x30] sm:$0xff]
    %v40 = vld [vmem:[%s0 + $0x38] sm:$0xff]
    %v41 = vld [vmem:[%s0 + $0x40] sm:$0xff]
    %v42 = vld [vmem:[%s0 + $0x48] sm:$0xff]
    %v43 = vld [vmem:[%s0 + $0x50] sm:$0xff]
    %v44 = vld [vmem:[%s0 + $0x58] sm:$0xff]
    %v45 = vld [vmem:[%s0 + $0x60] sm:$0xff]
    %v46 = vld [vmem:[%s0 + $0x68] sm:$0xff]
    %v47 = vld [vmem:[%s0 + $0x70] sm:$0xff]
    %v48 = vld [vmem:[%s0 + $0x78] sm:$0xff]
    %v49 = vld [vmem:[%s0 + $0x80] sm:$0xff]
    %v50 = vld [vmem:[%s0 + $0x88] sm:$0xff]
    %v51 = vld [vmem:[%s0 + $0x90] sm:$0xff]
    %v52 = vld [vmem:[%s0 + $0x98] sm:$0xff]
    %v53 = vld [vmem:[%s0 + $0xa0] sm:$0xff]
    %v54 = vld [vmem:[%s0 + $0xa8] sm:$0xff]
    %v55 = vld [vmem:[%s0 + $0xb0] sm:$0xff]
    %v56 = vld [vmem:[%s0 + $0xb8] sm:$0xff]
    %v57 = vld [vmem:[%s0 + $0xc0] sm:$0xff]
    %v58 = vld [vmem:[%s0 + $0xc8] sm:$0xff]
    %v59 = vld [vmem:[%s0 + $0xd0] sm:$0xff]
    %v60 = vld [vmem:[%s0 + $0xd8] sm:$0xff]
    %v61 = vld [vmem:[%s0 + $0xe0] sm:$0xff]
    %v62 = vld [vmem:[%s0 + $0xe8] sm:$0xff]
    %v63 = vld [vmem:[%s0 + $0xf0] sm:$0xff]
    %v64 = vld [vmem:[%s0 + $0xf8] sm:$0xff]
    %v65 = vld [vmem:[%s0 + $0x100] sm:$0xff]
    %v66 = vld [vmem:[%s0 + $0x108] sm:$0xff]
    %v67 = vld [vmem:[%s0 + $0x110] sm:$0xff]
    %v68 = vld [vmem:[%s0 + $0x118] sm:$0xff]
    %v69 = vld [vmem:[%s0 + $0x120] sm:$0xff]
    %v70 = vld [vmem:[%s0 + $0x128] sm:$0xff]
    %v71 = vld [vmem:[%s0 + $0x130] sm:$0xff]
    %v72 = vld [vmem:[%s0 + $0x138] sm:$0xff]
    %v73 = vld [vmem:[%s0 + $0x140] sm:$0xff]
    %v74 = vld [vmem:[%s0 + $0x148] sm:$0xff]
    %v75 = vld [vmem:[%s0 + $0x150] sm:$0xff]
    %v76 = vld [vmem:[%s0 + $0x158] sm:$0xff]
    %v77 = vld [vmem:[%s0 + $0x160] sm:$0xff]
    %v78 = vld [vmem:[%s0 + $0x168] sm:$0xff]
    %v79 = vld [vmem:[%s0 + $0x170] sm:$0xff]
    %v80 = vld [vmem:[%s0 + $0x178] sm:$0xff]
    %v81 = vld [vmem:[%s0 + $0x180] sm:$0xff]
    %v82 = vld [vmem:[%s0 + $0x188] sm:$0xff]
    %v83 = vld [vmem:[%s0 + $0x190] sm:$0xff]
    %v84 = vld [vmem:[%s0 + $0x198] sm:$0xff]
    %v85 = vld [vmem:[%s0 + $0x1a0] sm:$0xff]
    %v86 = vld [vmem:[%s0 + $0x1a8] sm:$0xff]
    %v87 = vld [vmem:[%s0 + $0x1b0] sm:$0xff]
    %v88 = vld [vmem:[%s0 + $0x1b8] sm:$0xff]
    %v89 = vld [vmem:[%s0 + $0x1c0] sm:$0xff]
    %v90 = vld [vmem:[%s0 + $0x1c8] sm:$0xff]
    %v91 = vld [vmem:[%s0 + $0x1d0] sm:$0xff]
    %v92 = vld [vmem:[%s0 + $0x1d8] sm:$0xff]
    %v93 = vld [vmem:[%s0 + $0x1e0] sm:$0xff]
    %v94 = vld [vmem:[%s0 + $0x1e8] sm:$0xff]
    %v95 = vld [vmem:[%s0 + $0x1f0] sm:$0xff]
    %v96 = vld [vmem:[%s0 + $0x1f8] sm:$0xff]
    %vm162 = vcmask 1040384
    %v163 = vrot.slane 0.0, 7
    %v164 = vsel %vm162, %v163, %v163
    %v165 = vrot.slane %v33, 7
    %v166 = vrot.slane %v34, 7
    %v167 = vsel %vm162, %v165, %v166
    %v168 = vrot.slane %v35, 7
    %v169 = vrot.slane %v36, 7
    %v170 = vsel %vm162, %v168, %v169
    %v171 = vrot.slane %v37, 7
    %v172 = vrot.slane %v38, 7
    %v173 = vsel %vm162, %v171, %v172
    %v174 = vrot.slane %v39, 7
    %v175 = vrot.slane %v40, 7
    %v176 = vsel %vm162, %v174, %v175
    %v177 = vrot.slane %v41, 7
    %v178 = vrot.slane %v42, 7
    %v179 = vsel %vm162, %v177, %v178
    %v180 = vrot.slane %v43, 7
    %v181 = vrot.slane %v44, 7
    %v182 = vsel %vm162, %v180, %v181
    %v183 = vrot.slane %v45, 7
    %v184 = vrot.slane %v46, 7
    %v185 = vsel %vm162, %v183, %v184
    %v186 = vrot.slane %v47, 7
    %v187 = vrot.slane %v48, 7
    %v188 = vsel %vm162, %v186, %v187
    %v189 = vrot.slane %v49, 7
    %v190 = vrot.slane %v50, 7
    %v191 = vsel %vm162, %v189, %v190
    %v192 = vrot.slane %v51, 7
    %v193 = vrot.slane %v52, 7
    %v194 = vsel %vm162, %v192, %v193
    %v195 = vrot.slane %v53, 7
    %v196 = vrot.slane %v54, 7
    %v197 = vsel %vm162, %v195, %v196
    %v198 = vrot.slane %v55, 7
    %v199 = vrot.slane %v56, 7
    %v200 = vsel %vm162, %v198, %v199
    %v201 = vrot.slane %v57, 7
    %v202 = vrot.slane %v58, 7
    %v203 = vsel %vm162, %v201, %v202
    %v204 = vrot.slane %v59, 7
    %v205 = vrot.slane %v60, 7
    %v206 = vsel %vm162, %v204, %v205
    %v207 = vrot.slane %v61, 7
    %v208 = vrot.slane %v62, 7
    %v209 = vsel %vm162, %v207, %v208
    %v210 = vrot.slane %v63, 7
    %v211 = vrot.slane %v64, 7
    %v212 = vsel %vm162, %v210, %v211
    %v213 = vrot.slane %v65, 7
    %v214 = vrot.slane %v66, 7
    %v215 = vsel %vm162, %v213, %v214
    %v216 = vrot.slane %v67, 7
    %v217 = vrot.slane %v68, 7
    %v218 = vsel %vm162, %v216, %v217
    %v219 = vrot.slane %v69, 7
    %v220 = vrot.slane %v70, 7
    %v221 = vsel %vm162, %v219, %v220
    %v222 = vrot.slane %v71, 7
    %v223 = vrot.slane %v72, 7
    %v224 = vsel %vm162, %v222, %v223
    %v225 = vrot.slane %v73, 7
    %v226 = vrot.slane %v74, 7
    %v227 = vsel %vm162, %v225, %v226
    %v228 = vrot.slane %v75, 7
    %v229 = vrot.slane %v76, 7
    %v230 = vsel %vm162, %v228, %v229
    %v231 = vrot.slane %v77, 7
    %v232 = vrot.slane %v78, 7
    %v233 = vsel %vm162, %v231, %v232
    %v234 = vrot.slane %v79, 7
    %v235 = vrot.slane %v80, 7
    %v236 = vsel %vm162, %v234, %v235
    %v237 = vrot.slane %v81, 7
    %v238 = vrot.slane %v82, 7
    %v239 = vsel %vm162, %v237, %v238
    %v240 = vrot.slane %v83, 7
    %v241 = vrot.slane %v84, 7
    %v242 = vsel %vm162, %v240, %v241
    %v243 = vrot.slane %v85, 7
    %v244 = vrot.slane %v86, 7
    %v245 = vsel %vm162, %v243, %v244
    %v246 = vrot.slane %v87, 7
    %v247 = vrot.slane %v88, 7
    %v248 = vsel %vm162, %v246, %v247
    %v249 = vrot.slane %v89, 7
    %v250 = vrot.slane %v90, 7
    %v251 = vsel %vm162, %v249, %v250
    %v252 = vrot.slane %v91, 7
    %v253 = vrot.slane %v92, 7
    %v254 = vsel %vm162, %v252, %v253
    %v255 = vrot.slane %v93, 7
    %v256 = vrot.slane %v94, 7
    %v257 = vsel %vm162, %v255, %v256
    %v258 = vrot.slane %v95, 7
    %v259 = vrot.slane %v96, 7
    %v260 = vsel %vm162, %v258, %v259
    %v357 = vsel %vm162, 0.0, %v163
    %v358 = vsel %vm162, 0.0, %v165
    %v359 = vsel %vm162, 0.0, %v168
    %v360 = vsel %vm162, 0.0, %v171
    %v361 = vsel %vm162, 0.0, %v174
    %v362 = vsel %vm162, 0.0, %v177
    %v363 = vsel %vm162, 0.0, %v180
    %v364 = vsel %vm162, 0.0, %v183
    %v365 = vsel %vm162, 0.0, %v186
    %v366 = vsel %vm162, 0.0, %v189
    %v367 = vsel %vm162, 0.0, %v192
    %v368 = vsel %vm162, 0.0, %v195
    %v369 = vsel %vm162, 0.0, %v198
    %v370 = vsel %vm162, 0.0, %v201
    %v371 = vsel %vm162, 0.0, %v204
    %v372 = vsel %vm162, 0.0, %v207
    %v373 = vsel %vm162, 0.0, %v210
    %v374 = vsel %vm162, 0.0, %v213
    %v375 = vsel %vm162, 0.0, %v216
    %v376 = vsel %vm162, 0.0, %v219
    %v377 = vsel %vm162, 0.0, %v222
    %v378 = vsel %vm162, 0.0, %v225
    %v379 = vsel %vm162, 0.0, %v228
    %v380 = vsel %vm162, 0.0, %v231
    %v381 = vsel %vm162, 0.0, %v234
    %v382 = vsel %vm162, 0.0, %v237
    %v383 = vsel %vm162, 0.0, %v240
    %v384 = vsel %vm162, 0.0, %v243
    %v385 = vsel %vm162, 0.0, %v246
    %v386 = vsel %vm162, 0.0, %v249
    %v387 = vsel %vm162, 0.0, %v252
    %v388 = vsel %vm162, 0.0, %v255
    %v389 = vsel %vm162, 0.0, %v258
    %v390 = vsel %vm162, %v163, 0.0
    %v391 = vsel %vm162, %v166, 0.0
    %v392 = vsel %vm162, %v169, 0.0
    %v393 = vsel %vm162, %v172, 0.0
    %v394 = vsel %vm162, %v175, 0.0
    %v395 = vsel %vm162, %v178, 0.0
    %v396 = vsel %vm162, %v181, 0.0
    %v397 = vsel %vm162, %v184, 0.0
    %v398 = vsel %vm162, %v187, 0.0
    %v399 = vsel %vm162, %v190, 0.0
    %v400 = vsel %vm162, %v193, 0.0
    %v401 = vsel %vm162, %v196, 0.0
    %v402 = vsel %vm162, %v199, 0.0
    %v403 = vsel %vm162, %v202, 0.0
    %v404 = vsel %vm162, %v205, 0.0
    %v405 = vsel %vm162, %v208, 0.0
    %v406 = vsel %vm162, %v211, 0.0
    %v407 = vsel %vm162, %v214, 0.0
    %v408 = vsel %vm162, %v217, 0.0
    %v409 = vsel %vm162, %v220, 0.0
    %v410 = vsel %vm162, %v223, 0.0
    %v411 = vsel %vm162, %v226, 0.0
    %v412 = vsel %vm162, %v229, 0.0
    %v413 = vsel %vm162, %v232, 0.0
    %v414 = vsel %vm162, %v235, 0.0
    %v415 = vsel %vm162, %v238, 0.0
    %v416 = vsel %vm162, %v241, 0.0
    %v417 = vsel %vm162, %v244, 0.0
    %v418 = vsel %vm162, %v247, 0.0
    %v419 = vsel %vm162, %v250, 0.0
    %v420 = vsel %vm162, %v253, 0.0
    %v421 = vsel %vm162, %v256, 0.0
    %v422 = vsel %vm162, %v259, 0.0
    %vm485 = vcmask 1046528
    %v486 = vrot.slane %v357, 1
    %v487 = vrot.slane %v164, 1
    %v488 = vsel %vm485, %v486, %v487
    %v489 = vrot.slane %v390, 1
    %v490 = vsel %vm485, %v487, %v489
    %v491 = vrot.slane %v358, 1
    %v492 = vrot.slane %v167, 1
    %v493 = vsel %vm485, %v491, %v492
    %v494 = vrot.slane %v391, 1
    %v495 = vsel %vm485, %v492, %v494
    %v496 = vrot.slane %v359, 1
    %v497 = vrot.slane %v170, 1
    %v498 = vsel %vm485, %v496, %v497
    %v499 = vrot.slane %v392, 1
    %v500 = vsel %vm485, %v497, %v499
    %v501 = vrot.slane %v360, 1
    %v502 = vrot.slane %v173, 1
    %v503 = vsel %vm485, %v501, %v502
    %v504 = vrot.slane %v393, 1
    %v505 = vsel %vm485, %v502, %v504
    %v506 = vrot.slane %v361, 1
    %v507 = vrot.slane %v176, 1
    %v508 = vsel %vm485, %v506, %v507
    %v509 = vrot.slane %v394, 1
    %v510 = vsel %vm485, %v507, %v509
    %v511 = vrot.slane %v362, 1
    %v512 = vrot.slane %v179, 1
    %v513 = vsel %vm485, %v511, %v512
    %v514 = vrot.slane %v395, 1
    %v515 = vsel %vm485, %v512, %v514
    %v516 = vrot.slane %v363, 1
    %v517 = vrot.slane %v182, 1
    %v518 = vsel %vm485, %v516, %v517
    %v519 = vrot.slane %v396, 1
    %v520 = vsel %vm485, %v517, %v519
    %v521 = vrot.slane %v364, 1
    %v522 = vrot.slane %v185, 1
    %v523 = vsel %vm485, %v521, %v522
    %v524 = vrot.slane %v397, 1
    %v525 = vsel %vm485, %v522, %v524
    %v526 = vrot.slane %v365, 1
    %v527 = vrot.slane %v188, 1
    %v528 = vsel %vm485, %v526, %v527
    %v529 = vrot.slane %v398, 1
    %v530 = vsel %vm485, %v527, %v529
    %v531 = vrot.slane %v366, 1
    %v532 = vrot.slane %v191, 1
    %v533 = vsel %vm485, %v531, %v532
    %v534 = vrot.slane %v399, 1
    %v535 = vsel %vm485, %v532, %v534
    %v536 = vrot.slane %v367, 1
    %v537 = vrot.slane %v194, 1
    %v538 = vsel %vm485, %v536, %v537
    %v539 = vrot.slane %v400, 1
    %v540 = vsel %vm485, %v537, %v539
    %v541 = vrot.slane %v368, 1
    %v542 = vrot.slane %v197, 1
    %v543 = vsel %vm485, %v541, %v542
    %v544 = vrot.slane %v401, 1
    %v545 = vsel %vm485, %v542, %v544
    %v546 = vrot.slane %v369, 1
    %v547 = vrot.slane %v200, 1
    %v548 = vsel %vm485, %v546, %v547
    %v549 = vrot.slane %v402, 1
    %v550 = vsel %vm485, %v547, %v549
    %v551 = vrot.slane %v370, 1
    %v552 = vrot.slane %v203, 1
    %v553 = vsel %vm485, %v551, %v552
    %v554 = vrot.slane %v403, 1
    %v555 = vsel %vm485, %v552, %v554
    %v556 = vrot.slane %v371, 1
    %v557 = vrot.slane %v206, 1
    %v558 = vsel %vm485, %v556, %v557
    %v559 = vrot.slane %v404, 1
    %v560 = vsel %vm485, %v557, %v559
    %v561 = vrot.slane %v372, 1
    %v562 = vrot.slane %v209, 1
    %v563 = vsel %vm485, %v561, %v562
    %v564 = vrot.slane %v405, 1
    %v565 = vsel %vm485, %v562, %v564
    %v566 = vrot.slane %v374, 1
    %v567 = vrot.slane %v215, 1
    %v568 = vsel %vm485, %v566, %v567
    %v569 = vrot.slane %v407, 1
    %v570 = vsel %vm485, %v567, %v569
    %v571 = vrot.slane %v375, 1
    %v572 = vrot.slane %v218, 1
    %v573 = vsel %vm485, %v571, %v572
    %v574 = vrot.slane %v408, 1
    %v575 = vsel %vm485, %v572, %v574
    %v576 = vrot.slane %v376, 1
    %v577 = vrot.slane %v221, 1
    %v578 = vsel %vm485, %v576, %v577
    %v579 = vrot.slane %v409, 1
    %v580 = vsel %vm485, %v577, %v579
    %v581 = vrot.slane %v377, 1
    %v582 = vrot.slane %v224, 1
    %v583 = vsel %vm485, %v581, %v582
    %v584 = vrot.slane %v410, 1
    %v585 = vsel %vm485, %v582, %v584
    %v586 = vrot.slane %v378, 1
    %v587 = vrot.slane %v227, 1
    %v588 = vsel %vm485, %v586, %v587
    %v589 = vrot.slane %v411, 1
    %v590 = vsel %vm485, %v587, %v589
    %v591 = vrot.slane %v379, 1
    %v592 = vrot.slane %v230, 1
    %v593 = vsel %vm485, %v591, %v592
    %v594 = vrot.slane %v412, 1
    %v595 = vsel %vm485, %v592, %v594
    %v596 = vrot.slane %v380, 1
    %v597 = vrot.slane %v233, 1
    %v598 = vsel %vm485, %v596, %v597
    %v599 = vrot.slane %v413, 1
    %v600 = vsel %vm485, %v597, %v599
    %v601 = vrot.slane %v381, 1
    %v602 = vrot.slane %v236, 1
    %v603 = vsel %vm485, %v601, %v602
    %v604 = vrot.slane %v414, 1
    %v605 = vsel %vm485, %v602, %v604
    %v606 = vrot.slane %v382, 1
    %v607 = vrot.slane %v239, 1
    %v608 = vsel %vm485, %v606, %v607
    %v609 = vrot.slane %v415, 1
    %v610 = vsel %vm485, %v607, %v609
    %v611 = vrot.slane %v383, 1
    %v612 = vrot.slane %v242, 1
    %v613 = vsel %vm485, %v611, %v612
    %v614 = vrot.slane %v416, 1
    %v615 = vsel %vm485, %v612, %v614
    %v616 = vrot.slane %v384, 1
    %v617 = vrot.slane %v245, 1
    %v618 = vsel %vm485, %v616, %v617
    %v619 = vrot.slane %v417, 1
    %v620 = vsel %vm485, %v617, %v619
    %v621 = vrot.slane %v385, 1
    %v622 = vrot.slane %v248, 1
    %v623 = vsel %vm485, %v621, %v622
    %v624 = vrot.slane %v418, 1
    %v625 = vsel %vm485, %v622, %v624
    %v626 = vrot.slane %v386, 1
    %v627 = vrot.slane %v251, 1
    %v628 = vsel %vm485, %v626, %v627
    %v629 = vrot.slane %v419, 1
    %v630 = vsel %vm485, %v627, %v629
    %v631 = vrot.slane %v387, 1
    %v632 = vrot.slane %v254, 1
    %v633 = vsel %vm485, %v631, %v632
    %v634 = vrot.slane %v420, 1
    %v635 = vsel %vm485, %v632, %v634
    %v636 = vrot.slane %v388, 1
    %v637 = vrot.slane %v257, 1
    %v638 = vsel %vm485, %v636, %v637
    %v639 = vrot.slane %v421, 1
    %v640 = vsel %vm485, %v637, %v639
    %641 = vrot.lane.b32.xlu0 %v488, 1
    %v642 = vpop.permute.xlu0 %641
    %643 = vrot.lane.b32.xlu0 %v490, 1
    %v644 = vpop.permute.xlu0 %643
    %645 = vrot.lane.b32.xlu0 %v493, 1
    %v646 = vpop.permute.xlu0 %645
    %647 = vrot.lane.b32.xlu0 %v495, 1
    %v648 = vpop.permute.xlu0 %647
    %649 = vrot.lane.b32.xlu0 %v498, 1
    %v650 = vpop.permute.xlu0 %649
    %651 = vrot.lane.b32.xlu0 %v500, 1
    %v652 = vpop.permute.xlu0 %651
    %653 = vrot.lane.b32.xlu0 %v503, 1
    %v654 = vpop.permute.xlu0 %653
    %655 = vrot.lane.b32.xlu0 %v505, 1
    %v656 = vpop.permute.xlu0 %655
    %657 = vrot.lane.b32.xlu0 %v508, 1
    %v658 = vpop.permute.xlu0 %657
    %659 = vrot.lane.b32.xlu0 %v510, 1
    %v660 = vpop.permute.xlu0 %659
    %661 = vrot.lane.b32.xlu0 %v513, 1
    %v662 = vpop.permute.xlu0 %661
    %663 = vrot.lane.b32.xlu0 %v515, 1
    %v664 = vpop.permute.xlu0 %663
    %665 = vrot.lane.b32.xlu0 %v518, 1
    %v666 = vpop.permute.xlu0 %665
    %667 = vrot.lane.b32.xlu0 %v520, 1
    %v668 = vpop.permute.xlu0 %667
    %669 = vrot.lane.b32.xlu0 %v523, 1
    %v670 = vpop.permute.xlu0 %669
    %671 = vrot.lane.b32.xlu0 %v525, 1
    %v672 = vpop.permute.xlu0 %671
    %673 = vrot.lane.b32.xlu0 %v528, 1
    %v674 = vpop.permute.xlu0 %673
    %675 = vrot.lane.b32.xlu0 %v530, 1
    %v676 = vpop.permute.xlu0 %675
    %677 = vrot.lane.b32.xlu0 %v533, 1
    %v678 = vpop.permute.xlu0 %677
    %679 = vrot.lane.b32.xlu0 %v535, 1
    %v680 = vpop.permute.xlu0 %679
    %681 = vrot.lane.b32.xlu0 %v538, 1
    %v682 = vpop.permute.xlu0 %681
    %683 = vrot.lane.b32.xlu0 %v540, 1
    %v684 = vpop.permute.xlu0 %683
    %685 = vrot.lane.b32.xlu0 %v543, 1
    %v686 = vpop.permute.xlu0 %685
    %687 = vrot.lane.b32.xlu0 %v545, 1
    %v688 = vpop.permute.xlu0 %687
    %689 = vrot.lane.b32.xlu0 %v548, 1
    %v690 = vpop.permute.xlu0 %689
    %691 = vrot.lane.b32.xlu0 %v550, 1
    %v692 = vpop.permute.xlu0 %691
    %693 = vrot.lane.b32.xlu0 %v553, 1
    %v694 = vpop.permute.xlu0 %693
    %695 = vrot.lane.b32.xlu0 %v555, 1
    %v696 = vpop.permute.xlu0 %695
    %697 = vrot.lane.b32.xlu0 %v558, 1
    %v698 = vpop.permute.xlu0 %697
    %699 = vrot.lane.b32.xlu0 %v560, 1
    %v700 = vpop.permute.xlu0 %699
    %701 = vrot.lane.b32.xlu0 %v563, 1
    %v702 = vpop.permute.xlu0 %701
    %703 = vrot.lane.b32.xlu0 %v565, 1
    %v704 = vpop.permute.xlu0 %703
    %705 = vrot.lane.b32.xlu0 %v568, 1
    %v706 = vpop.permute.xlu0 %705
    %707 = vrot.lane.b32.xlu0 %v570, 1
    %v708 = vpop.permute.xlu0 %707
    %709 = vrot.lane.b32.xlu0 %v573, 1
    %v710 = vpop.permute.xlu0 %709
    %711 = vrot.lane.b32.xlu0 %v575, 1
    %v712 = vpop.permute.xlu0 %711
    %713 = vrot.lane.b32.xlu0 %v578, 1
    %v714 = vpop.permute.xlu0 %713
    %715 = vrot.lane.b32.xlu0 %v580, 1
    %v716 = vpop.permute.xlu0 %715
    %717 = vrot.lane.b32.xlu0 %v583, 1
    %v718 = vpop.permute.xlu0 %717
    %719 = vrot.lane.b32.xlu0 %v585, 1
    %v720 = vpop.permute.xlu0 %719
    %721 = vrot.lane.b32.xlu0 %v588, 1
    %v722 = vpop.permute.xlu0 %721
    %723 = vrot.lane.b32.xlu0 %v590, 1
    %v724 = vpop.permute.xlu0 %723
    %725 = vrot.lane.b32.xlu0 %v593, 1
    %v726 = vpop.permute.xlu0 %725
    %727 = vrot.lane.b32.xlu0 %v595, 1
    %v728 = vpop.permute.xlu0 %727
    %729 = vrot.lane.b32.xlu0 %v598, 1
    %v730 = vpop.permute.xlu0 %729
    %731 = vrot.lane.b32.xlu0 %v600, 1
    %v732 = vpop.permute.xlu0 %731
    %733 = vrot.lane.b32.xlu0 %v603, 1
    %v734 = vpop.permute.xlu0 %733
    %735 = vrot.lane.b32.xlu0 %v605, 1
    %v736 = vpop.permute.xlu0 %735
    %737 = vrot.lane.b32.xlu0 %v608, 1
    %v738 = vpop.permute.xlu0 %737
    %739 = vrot.lane.b32.xlu0 %v610, 1
    %v740 = vpop.permute.xlu0 %739
    %741 = vrot.lane.b32.xlu0 %v613, 1
    %v742 = vpop.permute.xlu0 %741
    %743 = vrot.lane.b32.xlu0 %v615, 1
    %v744 = vpop.permute.xlu0 %743
    %745 = vrot.lane.b32.xlu0 %v618, 1
    %v746 = vpop.permute.xlu0 %745
    %747 = vrot.lane.b32.xlu0 %v620, 1
    %v748 = vpop.permute.xlu0 %747
    %749 = vrot.lane.b32.xlu0 %v623, 1
    %v750 = vpop.permute.xlu0 %749
    %751 = vrot.lane.b32.xlu0 %v625, 1
    %v752 = vpop.permute.xlu0 %751
    %753 = vrot.lane.b32.xlu0 %v628, 1
    %v754 = vpop.permute.xlu0 %753
    %755 = vrot.lane.b32.xlu0 %v630, 1
    %v756 = vpop.permute.xlu0 %755
    %757 = vrot.lane.b32.xlu0 %v633, 1
    %v758 = vpop.permute.xlu0 %757
    %759 = vrot.lane.b32.xlu0 %v635, 1
    %v760 = vpop.permute.xlu0 %759
    %761 = vrot.lane.b32.xlu0 %v638, 1
    %v762 = vpop.permute.xlu0 %761
    %763 = vrot.lane.b32.xlu0 %v640, 1
    %v764 = vpop.permute.xlu0 %763
    %vm827 = vcmask 1045504
    %v828 = vrot.slane %v357, 2
    %v829 = vrot.slane %v164, 2
    %v830 = vsel %vm827, %v828, %v829
    %v831 = vrot.slane %v390, 2
    %v832 = vsel %vm827, %v829, %v831
    %v833 = vrot.slane %v358, 2
    %v834 = vrot.slane %v167, 2
    %v835 = vsel %vm827, %v833, %v834
    %v836 = vrot.slane %v391, 2
    %v837 = vsel %vm827, %v834, %v836
    %v838 = vrot.slane %v359, 2
    %v839 = vrot.slane %v170, 2
    %v840 = vsel %vm827, %v838, %v839
    %v841 = vrot.slane %v392, 2
    %v842 = vsel %vm827, %v839, %v841
    %v843 = vrot.slane %v360, 2
    %v844 = vrot.slane %v173, 2
    %v845 = vsel %vm827, %v843, %v844
    %v846 = vrot.slane %v393, 2
    %v847 = vsel %vm827, %v844, %v846
    %v848 = vrot.slane %v361, 2
    %v849 = vrot.slane %v176, 2
    %v850 = vsel %vm827, %v848, %v849
    %v851 = vrot.slane %v394, 2
    %v852 = vsel %vm827, %v849, %v851
    %v853 = vrot.slane %v362, 2
    %v854 = vrot.slane %v179, 2
    %v855 = vsel %vm827, %v853, %v854
    %v856 = vrot.slane %v395, 2
    %v857 = vsel %vm827, %v854, %v856
    %v858 = vrot.slane %v363, 2
    %v859 = vrot.slane %v182, 2
    %v860 = vsel %vm827, %v858, %v859
    %v861 = vrot.slane %v396, 2
    %v862 = vsel %vm827, %v859, %v861
    %v863 = vrot.slane %v364, 2
    %v864 = vrot.slane %v185, 2
    %v865 = vsel %vm827, %v863, %v864
    %v866 = vrot.slane %v397, 2
    %v867 = vsel %vm827, %v864, %v866
    %v868 = vrot.slane %v365, 2
    %v869 = vrot.slane %v188, 2
    %v870 = vsel %vm827, %v868, %v869
    %v871 = vrot.slane %v398, 2
    %v872 = vsel %vm827, %v869, %v871
    %v873 = vrot.slane %v366, 2
    %v874 = vrot.slane %v191, 2
    %v875 = vsel %vm827, %v873, %v874
    %v876 = vrot.slane %v399, 2
    %v877 = vsel %vm827, %v874, %v876
    %v878 = vrot.slane %v367, 2
    %v879 = vrot.slane %v194, 2
    %v880 = vsel %vm827, %v878, %v879
    %v881 = vrot.slane %v400, 2
    %v882 = vsel %vm827, %v879, %v881
    %v883 = vrot.slane %v368, 2
    %v884 = vrot.slane %v197, 2
    %v885 = vsel %vm827, %v883, %v884
    %v886 = vrot.slane %v401, 2
    %v887 = vsel %vm827, %v884, %v886
    %v888 = vrot.slane %v369, 2
    %v889 = vrot.slane %v200, 2
    %v890 = vsel %vm827, %v888, %v889
    %v891 = vrot.slane %v402, 2
    %v892 = vsel %vm827, %v889, %v891
    %v893 = vrot.slane %v370, 2
    %v894 = vrot.slane %v203, 2
    %v895 = vsel %vm827, %v893, %v894
    %v896 = vrot.slane %v403, 2
    %v897 = vsel %vm827, %v894, %v896
    %v898 = vrot.slane %v371, 2
    %v899 = vrot.slane %v206, 2
    %v900 = vsel %vm827, %v898, %v899
    %v901 = vrot.slane %v404, 2
    %v902 = vsel %vm827, %v899, %v901
    %v903 = vrot.slane %v372, 2
    %v904 = vrot.slane %v209, 2
    %v905 = vsel %vm827, %v903, %v904
    %v906 = vrot.slane %v405, 2
    %v907 = vsel %vm827, %v904, %v906
    %v908 = vrot.slane %v374, 2
    %v909 = vrot.slane %v215, 2
    %v910 = vsel %vm827, %v908, %v909
    %v911 = vrot.slane %v407, 2
    %v912 = vsel %vm827, %v909, %v911
    %v913 = vrot.slane %v375, 2
    %v914 = vrot.slane %v218, 2
    %v915 = vsel %vm827, %v913, %v914
    %v916 = vrot.slane %v408, 2
    %v917 = vsel %vm827, %v914, %v916
    %v918 = vrot.slane %v376, 2
    %v919 = vrot.slane %v221, 2
    %v920 = vsel %vm827, %v918, %v919
    %v921 = vrot.slane %v409, 2
    %v922 = vsel %vm827, %v919, %v921
    %v923 = vrot.slane %v377, 2
    %v924 = vrot.slane %v224, 2
    %v925 = vsel %vm827, %v923, %v924
    %v926 = vrot.slane %v410, 2
    %v927 = vsel %vm827, %v924, %v926
    %v928 = vrot.slane %v378, 2
    %v929 = vrot.slane %v227, 2
    %v930 = vsel %vm827, %v928, %v929
    %v931 = vrot.slane %v411, 2
    %v932 = vsel %vm827, %v929, %v931
    %v933 = vrot.slane %v379, 2
    %v934 = vrot.slane %v230, 2
    %v935 = vsel %vm827, %v933, %v934
    %v936 = vrot.slane %v412, 2
    %v937 = vsel %vm827, %v934, %v936
    %v938 = vrot.slane %v380, 2
    %v939 = vrot.slane %v233, 2
    %v940 = vsel %vm827, %v938, %v939
    %v941 = vrot.slane %v413, 2
    %v942 = vsel %vm827, %v939, %v941
    %v943 = vrot.slane %v381, 2
    %v944 = vrot.slane %v236, 2
    %v945 = vsel %vm827, %v943, %v944
    %v946 = vrot.slane %v414, 2
    %v947 = vsel %vm827, %v944, %v946
    %v948 = vrot.slane %v382, 2
    %v949 = vrot.slane %v239, 2
    %v950 = vsel %vm827, %v948, %v949
    %v951 = vrot.slane %v415, 2
    %v952 = vsel %vm827, %v949, %v951
    %v953 = vrot.slane %v383, 2
    %v954 = vrot.slane %v242, 2
    %v955 = vsel %vm827, %v953, %v954
    %v956 = vrot.slane %v416, 2
    %v957 = vsel %vm827, %v954, %v956
    %v958 = vrot.slane %v384, 2
    %v959 = vrot.slane %v245, 2
    %v960 = vsel %vm827, %v958, %v959
    %v961 = vrot.slane %v417, 2
    %v962 = vsel %vm827, %v959, %v961
    %v963 = vrot.slane %v385, 2
    %v964 = vrot.slane %v248, 2
    %v965 = vsel %vm827, %v963, %v964
    %v966 = vrot.slane %v418, 2
    %v967 = vsel %vm827, %v964, %v966
    %v968 = vrot.slane %v386, 2
    %v969 = vrot.slane %v251, 2
    %v970 = vsel %vm827, %v968, %v969
    %v971 = vrot.slane %v419, 2
    %v972 = vsel %vm827, %v969, %v971
    %v973 = vrot.slane %v387, 2
    %v974 = vrot.slane %v254, 2
    %v975 = vsel %vm827, %v973, %v974
    %v976 = vrot.slane %v420, 2
    %v977 = vsel %vm827, %v974, %v976
    %v978 = vrot.slane %v388, 2
    %v979 = vrot.slane %v257, 2
    %v980 = vsel %vm827, %v978, %v979
    %v981 = vrot.slane %v421, 2
    %v982 = vsel %vm827, %v979, %v981
    %983 = vrot.lane.b32.xlu0 %v830, 2
    %v984 = vpop.permute.xlu0 %983
    %985 = vrot.lane.b32.xlu0 %v832, 2
    %v986 = vpop.permute.xlu0 %985
    %987 = vrot.lane.b32.xlu0 %v835, 2
    %v988 = vpop.permute.xlu0 %987
    %989 = vrot.lane.b32.xlu0 %v837, 2
    %v990 = vpop.permute.xlu0 %989
    %991 = vrot.lane.b32.xlu0 %v840, 2
    %v992 = vpop.permute.xlu0 %991
    %993 = vrot.lane.b32.xlu0 %v842, 2
    %v994 = vpop.permute.xlu0 %993
    %995 = vrot.lane.b32.xlu0 %v845, 2
    %v996 = vpop.permute.xlu0 %995
    %997 = vrot.lane.b32.xlu0 %v847, 2
    %v998 = vpop.permute.xlu0 %997
    %999 = vrot.lane.b32.xlu0 %v850, 2
    %v1000 = vpop.permute.xlu0 %999
    %1001 = vrot.lane.b32.xlu0 %v852, 2
    %v1002 = vpop.permute.xlu0 %1001
    %1003 = vrot.lane.b32.xlu0 %v855, 2
    %v1004 = vpop.permute.xlu0 %1003
    %1005 = vrot.lane.b32.xlu0 %v857, 2
    %v1006 = vpop.permute.xlu0 %1005
    %1007 = vrot.lane.b32.xlu0 %v860, 2
    %v1008 = vpop.permute.xlu0 %1007
    %1009 = vrot.lane.b32.xlu0 %v862, 2
    %v1010 = vpop.permute.xlu0 %1009
    %1011 = vrot.lane.b32.xlu0 %v865, 2
    %v1012 = vpop.permute.xlu0 %1011
    %1013 = vrot.lane.b32.xlu0 %v867, 2
    %v1014 = vpop.permute.xlu0 %1013
    %1015 = vrot.lane.b32.xlu0 %v870, 2
    %v1016 = vpop.permute.xlu0 %1015
    %1017 = vrot.lane.b32.xlu0 %v872, 2
    %v1018 = vpop.permute.xlu0 %1017
    %1019 = vrot.lane.b32.xlu0 %v875, 2
    %v1020 = vpop.permute.xlu0 %1019
    %1021 = vrot.lane.b32.xlu0 %v877, 2
    %v1022 = vpop.permute.xlu0 %1021
    %1023 = vrot.lane.b32.xlu0 %v880, 2
    %v1024 = vpop.permute.xlu0 %1023
    %1025 = vrot.lane.b32.xlu0 %v882, 2
    %v1026 = vpop.permute.xlu0 %1025
    %1027 = vrot.lane.b32.xlu0 %v885, 2
    %v1028 = vpop.permute.xlu0 %1027
    %1029 = vrot.lane.b32.xlu0 %v887, 2
    %v1030 = vpop.permute.xlu0 %1029
    %1031 = vrot.lane.b32.xlu0 %v890, 2
    %v1032 = vpop.permute.xlu0 %1031
    %1033 = vrot.lane.b32.xlu0 %v892, 2
    %v1034 = vpop.permute.xlu0 %1033
    %1035 = vrot.lane.b32.xlu0 %v895, 2
    %v1036 = vpop.permute.xlu0 %1035
    %1037 = vrot.lane.b32.xlu0 %v897, 2
    %v1038 = vpop.permute.xlu0 %1037
    %1039 = vrot.lane.b32.xlu0 %v900, 2
    %v1040 = vpop.permute.xlu0 %1039
    %1041 = vrot.lane.b32.xlu0 %v902, 2
    %v1042 = vpop.permute.xlu0 %1041
    %1043 = vrot.lane.b32.xlu0 %v905, 2
    %v1044 = vpop.permute.xlu0 %1043
    %1045 = vrot.lane.b32.xlu0 %v907, 2
    %v1046 = vpop.permute.xlu0 %1045
    %1047 = vrot.lane.b32.xlu0 %v910, 2
    %v1048 = vpop.permute.xlu0 %1047
    %1049 = vrot.lane.b32.xlu0 %v912, 2
    %v1050 = vpop.permute.xlu0 %1049
    %1051 = vrot.lane.b32.xlu0 %v915, 2
    %v1052 = vpop.permute.xlu0 %1051
    %1053 = vrot.lane.b32.xlu0 %v917, 2
    %v1054 = vpop.permute.xlu0 %1053
    %1055 = vrot.lane.b32.xlu0 %v920, 2
    %v1056 = vpop.permute.xlu0 %1055
    %1057 = vrot.lane.b32.xlu0 %v922, 2
    %v1058 = vpop.permute.xlu0 %1057
    %1059 = vrot.lane.b32.xlu0 %v925, 2
    %v1060 = vpop.permute.xlu0 %1059
    %1061 = vrot.lane.b32.xlu0 %v927, 2
    %v1062 = vpop.permute.xlu0 %1061
    %1063 = vrot.lane.b32.xlu0 %v930, 2
    %v1064 = vpop.permute.xlu0 %1063
    %1065 = vrot.lane.b32.xlu0 %v932, 2
    %v1066 = vpop.permute.xlu0 %1065
    %1067 = vrot.lane.b32.xlu0 %v935, 2
    %v1068 = vpop.permute.xlu0 %1067
    %1069 = vrot.lane.b32.xlu0 %v937, 2
    %v1070 = vpop.permute.xlu0 %1069
    %1071 = vrot.lane.b32.xlu0 %v940, 2
    %v1072 = vpop.permute.xlu0 %1071
    %1073 = vrot.lane.b32.xlu0 %v942, 2
    %v1074 = vpop.permute.xlu0 %1073
    %1075 = vrot.lane.b32.xlu0 %v945, 2
    %v1076 = vpop.permute.xlu0 %1075
    %1077 = vrot.lane.b32.xlu0 %v947, 2
    %v1078 = vpop.permute.xlu0 %1077
    %1079 = vrot.lane.b32.xlu0 %v950, 2
    %v1080 = vpop.permute.xlu0 %1079
    %1081 = vrot.lane.b32.xlu0 %v952, 2
    %v1082 = vpop.permute.xlu0 %1081
    %1083 = vrot.lane.b32.xlu0 %v955, 2
    %v1084 = vpop.permute.xlu0 %1083
    %1085 = vrot.lane.b32.xlu0 %v957, 2
    %v1086 = vpop.permute.xlu0 %1085
    %1087 = vrot.lane.b32.xlu0 %v960, 2
    %v1088 = vpop.permute.xlu0 %1087
    %1089 = vrot.lane.b32.xlu0 %v962, 2
    %v1090 = vpop.permute.xlu0 %1089
    %1091 = vrot.lane.b32.xlu0 %v965, 2
    %v1092 = vpop.permute.xlu0 %1091
    %1093 = vrot.lane.b32.xlu0 %v967, 2
    %v1094 = vpop.permute.xlu0 %1093
    %1095 = vrot.lane.b32.xlu0 %v970, 2
    %v1096 = vpop.permute.xlu0 %1095
    %1097 = vrot.lane.b32.xlu0 %v972, 2
    %v1098 = vpop.permute.xlu0 %1097
    %1099 = vrot.lane.b32.xlu0 %v975, 2
    %v1100 = vpop.permute.xlu0 %1099
    %1101 = vrot.lane.b32.xlu0 %v977, 2
    %v1102 = vpop.permute.xlu0 %1101
    %1103 = vrot.lane.b32.xlu0 %v980, 2
    %v1104 = vpop.permute.xlu0 %1103
    %1105 = vrot.lane.b32.xlu0 %v982, 2
    %v1106 = vpop.permute.xlu0 %1105
    %1171 = vrot.lane.b32.xlu0 %v358, 3
    %v1172 = vpop.permute.xlu0 %1171
    %1173 = vrot.lane.b32.xlu0 %v167, 3
    %v1174 = vpop.permute.xlu0 %1173
    %1175 = vrot.lane.b32.xlu0 %v359, 3
    %v1176 = vpop.permute.xlu0 %1175
    %1177 = vrot.lane.b32.xlu0 %v170, 3
    %v1178 = vpop.permute.xlu0 %1177
    %1179 = vrot.lane.b32.xlu0 %v360, 3
    %v1180 = vpop.permute.xlu0 %1179
    %1181 = vrot.lane.b32.xlu0 %v173, 3
    %v1182 = vpop.permute.xlu0 %1181
    %1183 = vrot.lane.b32.xlu0 %v361, 3
    %v1184 = vpop.permute.xlu0 %1183
    %1185 = vrot.lane.b32.xlu0 %v176, 3
    %v1186 = vpop.permute.xlu0 %1185
    %1187 = vrot.lane.b32.xlu0 %v362, 3
    %v1188 = vpop.permute.xlu0 %1187
    %1189 = vrot.lane.b32.xlu0 %v179, 3
    %v1190 = vpop.permute.xlu0 %1189
    %1191 = vrot.lane.b32.xlu0 %v363, 3
    %v1192 = vpop.permute.xlu0 %1191
    %1193 = vrot.lane.b32.xlu0 %v182, 3
    %v1194 = vpop.permute.xlu0 %1193
    %1195 = vrot.lane.b32.xlu0 %v364, 3
    %v1196 = vpop.permute.xlu0 %1195
    %1197 = vrot.lane.b32.xlu0 %v185, 3
    %v1198 = vpop.permute.xlu0 %1197
    %1199 = vrot.lane.b32.xlu0 %v365, 3
    %v1200 = vpop.permute.xlu0 %1199
    %1201 = vrot.lane.b32.xlu0 %v188, 3
    %v1202 = vpop.permute.xlu0 %1201
    %1203 = vrot.lane.b32.xlu0 %v366, 3
    %v1204 = vpop.permute.xlu0 %1203
    %1205 = vrot.lane.b32.xlu0 %v191, 3
    %v1206 = vpop.permute.xlu0 %1205
    %1207 = vrot.lane.b32.xlu0 %v367, 3
    %v1208 = vpop.permute.xlu0 %1207
    %1209 = vrot.lane.b32.xlu0 %v194, 3
    %v1210 = vpop.permute.xlu0 %1209
    %1211 = vrot.lane.b32.xlu0 %v368, 3
    %v1212 = vpop.permute.xlu0 %1211
    %1213 = vrot.lane.b32.xlu0 %v197, 3
    %v1214 = vpop.permute.xlu0 %1213
    %1215 = vrot.lane.b32.xlu0 %v369, 3
    %v1216 = vpop.permute.xlu0 %1215
    %1217 = vrot.lane.b32.xlu0 %v200, 3
    %v1218 = vpop.permute.xlu0 %1217
    %1219 = vrot.lane.b32.xlu0 %v370, 3
    %v1220 = vpop.permute.xlu0 %1219
    %1221 = vrot.lane.b32.xlu0 %v203, 3
    %v1222 = vpop.permute.xlu0 %1221
    %1223 = vrot.lane.b32.xlu0 %v371, 3
    %v1224 = vpop.permute.xlu0 %1223
    %1225 = vrot.lane.b32.xlu0 %v206, 3
    %v1226 = vpop.permute.xlu0 %1225
    %1227 = vrot.lane.b32.xlu0 %v372, 3
    %v1228 = vpop.permute.xlu0 %1227
    %1229 = vrot.lane.b32.xlu0 %v209, 3
    %v1230 = vpop.permute.xlu0 %1229
    %1231 = vrot.lane.b32.xlu0 %v373, 3
    %v1232 = vpop.permute.xlu0 %1231
    %1233 = vrot.lane.b32.xlu0 %v212, 3
    %v1234 = vpop.permute.xlu0 %1233
    %1235 = vrot.lane.b32.xlu0 %v374, 3
    %v1236 = vpop.permute.xlu0 %1235
    %1237 = vrot.lane.b32.xlu0 %v215, 3
    %v1238 = vpop.permute.xlu0 %1237
    %1239 = vrot.lane.b32.xlu0 %v375, 3
    %v1240 = vpop.permute.xlu0 %1239
    %1241 = vrot.lane.b32.xlu0 %v218, 3
    %v1242 = vpop.permute.xlu0 %1241
    %1243 = vrot.lane.b32.xlu0 %v376, 3
    %v1244 = vpop.permute.xlu0 %1243
    %1245 = vrot.lane.b32.xlu0 %v221, 3
    %v1246 = vpop.permute.xlu0 %1245
    %1247 = vrot.lane.b32.xlu0 %v377, 3
    %v1248 = vpop.permute.xlu0 %1247
    %1249 = vrot.lane.b32.xlu0 %v224, 3
    %v1250 = vpop.permute.xlu0 %1249
    %1251 = vrot.lane.b32.xlu0 %v378, 3
    %v1252 = vpop.permute.xlu0 %1251
    %1253 = vrot.lane.b32.xlu0 %v227, 3
    %v1254 = vpop.permute.xlu0 %1253
    %1255 = vrot.lane.b32.xlu0 %v379, 3
    %v1256 = vpop.permute.xlu0 %1255
    %1257 = vrot.lane.b32.xlu0 %v230, 3
    %v1258 = vpop.permute.xlu0 %1257
    %1259 = vrot.lane.b32.xlu0 %v380, 3
    %v1260 = vpop.permute.xlu0 %1259
    %1261 = vrot.lane.b32.xlu0 %v233, 3
    %v1262 = vpop.permute.xlu0 %1261
    %1263 = vrot.lane.b32.xlu0 %v381, 3
    %v1264 = vpop.permute.xlu0 %1263
    %1265 = vrot.lane.b32.xlu0 %v236, 3
    %v1266 = vpop.permute.xlu0 %1265
    %1267 = vrot.lane.b32.xlu0 %v382, 3
    %v1268 = vpop.permute.xlu0 %1267
    %1269 = vrot.lane.b32.xlu0 %v239, 3
    %v1270 = vpop.permute.xlu0 %1269
    %1271 = vrot.lane.b32.xlu0 %v383, 3
    %v1272 = vpop.permute.xlu0 %1271
    %1273 = vrot.lane.b32.xlu0 %v242, 3
    %v1274 = vpop.permute.xlu0 %1273
    %1275 = vrot.lane.b32.xlu0 %v384, 3
    %v1276 = vpop.permute.xlu0 %1275
    %1277 = vrot.lane.b32.xlu0 %v245, 3
    %v1278 = vpop.permute.xlu0 %1277
    %1279 = vrot.lane.b32.xlu0 %v385, 3
    %v1280 = vpop.permute.xlu0 %1279
    %1281 = vrot.lane.b32.xlu0 %v248, 3
    %v1282 = vpop.permute.xlu0 %1281
    %1283 = vrot.lane.b32.xlu0 %v386, 3
    %v1284 = vpop.permute.xlu0 %1283
    %1285 = vrot.lane.b32.xlu0 %v251, 3
    %v1286 = vpop.permute.xlu0 %1285
    %1287 = vrot.lane.b32.xlu0 %v387, 3
    %v1288 = vpop.permute.xlu0 %1287
    %1289 = vrot.lane.b32.xlu0 %v254, 3
    %v1290 = vpop.permute.xlu0 %1289
    %1291 = vrot.lane.b32.xlu0 %v388, 3
    %v1292 = vpop.permute.xlu0 %1291
    %1293 = vrot.lane.b32.xlu0 %v257, 3
    %v1294 = vpop.permute.xlu0 %1293
    %1295 = vrot.lane.b32.xlu0 %v389, 3
    %v1296 = vpop.permute.xlu0 %1295
    %1297 = vrot.lane.b32.xlu0 %v260, 3
    %v1298 = vpop.permute.xlu0 %1297
    %v1365 = vrot.slane %v373, 1
    %v1366 = vrot.slane %v212, 1
    %v1367 = vsel %vm485, %v1365, %v1366
    %v1368 = vrot.slane %v406, 1
    %v1369 = vsel %vm485, %v1366, %v1368
    %v1370 = vrot.slane %v389, 1
    %v1371 = vrot.slane %v260, 1
    %v1372 = vsel %vm485, %v1370, %v1371
    %v1373 = vrot.slane %v422, 1
    %v1374 = vsel %vm485, %v1371, %v1373
    %1375 = vrot.lane.b32.xlu0 %v493, 4
    %v1376 = vpop.permute.xlu0 %1375
    %1377 = vrot.lane.b32.xlu0 %v495, 4
    %v1378 = vpop.permute.xlu0 %1377
    %1379 = vrot.lane.b32.xlu0 %v498, 4
    %v1380 = vpop.permute.xlu0 %1379
    %1381 = vrot.lane.b32.xlu0 %v500, 4
    %v1382 = vpop.permute.xlu0 %1381
    %1383 = vrot.lane.b32.xlu0 %v503, 4
    %v1384 = vpop.permute.xlu0 %1383
    %1385 = vrot.lane.b32.xlu0 %v505, 4
    %v1386 = vpop.permute.xlu0 %1385
    %1387 = vrot.lane.b32.xlu0 %v508, 4
    %v1388 = vpop.permute.xlu0 %1387
    %1389 = vrot.lane.b32.xlu0 %v510, 4
    %v1390 = vpop.permute.xlu0 %1389
    %1391 = vrot.lane.b32.xlu0 %v513, 4
    %v1392 = vpop.permute.xlu0 %1391
    %1393 = vrot.lane.b32.xlu0 %v515, 4
    %v1394 = vpop.permute.xlu0 %1393
    %1395 = vrot.lane.b32.xlu0 %v518, 4
    %v1396 = vpop.permute.xlu0 %1395
    %1397 = vrot.lane.b32.xlu0 %v520, 4
    %v1398 = vpop.permute.xlu0 %1397
    %1399 = vrot.lane.b32.xlu0 %v523, 4
    %v1400 = vpop.permute.xlu0 %1399
    %1401 = vrot.lane.b32.xlu0 %v525, 4
    %v1402 = vpop.permute.xlu0 %1401
    %1403 = vrot.lane.b32.xlu0 %v528, 4
    %v1404 = vpop.permute.xlu0 %1403
    %1405 = vrot.lane.b32.xlu0 %v530, 4
    %v1406 = vpop.permute.xlu0 %1405
    %1407 = vrot.lane.b32.xlu0 %v533, 4
    %v1408 = vpop.permute.xlu0 %1407
    %1409 = vrot.lane.b32.xlu0 %v535, 4
    %v1410 = vpop.permute.xlu0 %1409
    %1411 = vrot.lane.b32.xlu0 %v538, 4
    %v1412 = vpop.permute.xlu0 %1411
    %1413 = vrot.lane.b32.xlu0 %v540, 4
    %v1414 = vpop.permute.xlu0 %1413
    %1415 = vrot.lane.b32.xlu0 %v543, 4
    %v1416 = vpop.permute.xlu0 %1415
    %1417 = vrot.lane.b32.xlu0 %v545, 4
    %v1418 = vpop.permute.xlu0 %1417
    %1419 = vrot.lane.b32.xlu0 %v548, 4
    %v1420 = vpop.permute.xlu0 %1419
    %1421 = vrot.lane.b32.xlu0 %v550, 4
    %v1422 = vpop.permute.xlu0 %1421
    %1423 = vrot.lane.b32.xlu0 %v553, 4
    %v1424 = vpop.permute.xlu0 %1423
    %1425 = vrot.lane.b32.xlu0 %v555, 4
    %v1426 = vpop.permute.xlu0 %1425
    %1427 = vrot.lane.b32.xlu0 %v558, 4
    %v1428 = vpop.permute.xlu0 %1427
    %1429 = vrot.lane.b32.xlu0 %v560, 4
    %v1430 = vpop.permute.xlu0 %1429
    %1431 = vrot.lane.b32.xlu0 %v563, 4
    %v1432 = vpop.permute.xlu0 %1431
    %1433 = vrot.lane.b32.xlu0 %v565, 4
    %v1434 = vpop.permute.xlu0 %1433
    %1435 = vrot.lane.b32.xlu0 %v1367, 4
    %v1436 = vpop.permute.xlu0 %1435
    %1437 = vrot.lane.b32.xlu0 %v1369, 4
    %v1438 = vpop.permute.xlu0 %1437
    %1439 = vrot.lane.b32.xlu0 %v568, 4
    %v1440 = vpop.permute.xlu0 %1439
    %1441 = vrot.lane.b32.xlu0 %v570, 4
    %v1442 = vpop.permute.xlu0 %1441
    %1443 = vrot.lane.b32.xlu0 %v573, 4
    %v1444 = vpop.permute.xlu0 %1443
    %1445 = vrot.lane.b32.xlu0 %v575, 4
    %v1446 = vpop.permute.xlu0 %1445
    %1447 = vrot.lane.b32.xlu0 %v578, 4
    %v1448 = vpop.permute.xlu0 %1447
    %1449 = vrot.lane.b32.xlu0 %v580, 4
    %v1450 = vpop.permute.xlu0 %1449
    %1451 = vrot.lane.b32.xlu0 %v583, 4
    %v1452 = vpop.permute.xlu0 %1451
    %1453 = vrot.lane.b32.xlu0 %v585, 4
    %v1454 = vpop.permute.xlu0 %1453
    %1455 = vrot.lane.b32.xlu0 %v588, 4
    %v1456 = vpop.permute.xlu0 %1455
    %1457 = vrot.lane.b32.xlu0 %v590, 4
    %v1458 = vpop.permute.xlu0 %1457
    %1459 = vrot.lane.b32.xlu0 %v593, 4
    %v1460 = vpop.permute.xlu0 %1459
    %1461 = vrot.lane.b32.xlu0 %v595, 4
    %v1462 = vpop.permute.xlu0 %1461
    %1463 = vrot.lane.b32.xlu0 %v598, 4
    %v1464 = vpop.permute.xlu0 %1463
    %1465 = vrot.lane.b32.xlu0 %v600, 4
    %v1466 = vpop.permute.xlu0 %1465
    %1467 = vrot.lane.b32.xlu0 %v603, 4
    %v1468 = vpop.permute.xlu0 %1467
    %1469 = vrot.lane.b32.xlu0 %v605, 4
    %v1470 = vpop.permute.xlu0 %1469
    %1471 = vrot.lane.b32.xlu0 %v608, 4
    %v1472 = vpop.permute.xlu0 %1471
    %1473 = vrot.lane.b32.xlu0 %v610, 4
    %v1474 = vpop.permute.xlu0 %1473
    %1475 = vrot.lane.b32.xlu0 %v613, 4
    %v1476 = vpop.permute.xlu0 %1475
    %1477 = vrot.lane.b32.xlu0 %v615, 4
    %v1478 = vpop.permute.xlu0 %1477
    %1479 = vrot.lane.b32.xlu0 %v618, 4
    %v1480 = vpop.permute.xlu0 %1479
    %1481 = vrot.lane.b32.xlu0 %v620, 4
    %v1482 = vpop.permute.xlu0 %1481
    %1483 = vrot.lane.b32.xlu0 %v623, 4
    %v1484 = vpop.permute.xlu0 %1483
    %1485 = vrot.lane.b32.xlu0 %v625, 4
    %v1486 = vpop.permute.xlu0 %1485
    %1487 = vrot.lane.b32.xlu0 %v628, 4
    %v1488 = vpop.permute.xlu0 %1487
    %1489 = vrot.lane.b32.xlu0 %v630, 4
    %v1490 = vpop.permute.xlu0 %1489
    %1491 = vrot.lane.b32.xlu0 %v633, 4
    %v1492 = vpop.permute.xlu0 %1491
    %1493 = vrot.lane.b32.xlu0 %v635, 4
    %v1494 = vpop.permute.xlu0 %1493
    %1495 = vrot.lane.b32.xlu0 %v638, 4
    %v1496 = vpop.permute.xlu0 %1495
    %1497 = vrot.lane.b32.xlu0 %v640, 4
    %v1498 = vpop.permute.xlu0 %1497
    %1499 = vrot.lane.b32.xlu0 %v1372, 4
    %v1500 = vpop.permute.xlu0 %1499
    %1501 = vrot.lane.b32.xlu0 %v1374, 4
    %v1502 = vpop.permute.xlu0 %1501
    %v1567 = vrot.slane %v373, 2
    %v1568 = vrot.slane %v212, 2
    %v1569 = vsel %vm827, %v1567, %v1568
    %v1570 = vrot.slane %v406, 2
    %v1571 = vsel %vm827, %v1568, %v1570
    %v1572 = vrot.slane %v389, 2
    %v1573 = vrot.slane %v260, 2
    %v1574 = vsel %vm827, %v1572, %v1573
    %v1575 = vrot.slane %v422, 2
    %v1576 = vsel %vm827, %v1573, %v1575
    %1577 = vrot.lane.b32.xlu0 %v835, 5
    %v1578 = vpop.permute.xlu0 %1577
    %1579 = vrot.lane.b32.xlu0 %v837, 5
    %v1580 = vpop.permute.xlu0 %1579
    %1581 = vrot.lane.b32.xlu0 %v840, 5
    %v1582 = vpop.permute.xlu0 %1581
    %1583 = vrot.lane.b32.xlu0 %v842, 5
    %v1584 = vpop.permute.xlu0 %1583
    %1585 = vrot.lane.b32.xlu0 %v845, 5
    %v1586 = vpop.permute.xlu0 %1585
    %1587 = vrot.lane.b32.xlu0 %v847, 5
    %v1588 = vpop.permute.xlu0 %1587
    %1589 = vrot.lane.b32.xlu0 %v850, 5
    %v1590 = vpop.permute.xlu0 %1589
    %1591 = vrot.lane.b32.xlu0 %v852, 5
    %v1592 = vpop.permute.xlu0 %1591
    %1593 = vrot.lane.b32.xlu0 %v855, 5
    %v1594 = vpop.permute.xlu0 %1593
    %1595 = vrot.lane.b32.xlu0 %v857, 5
    %v1596 = vpop.permute.xlu0 %1595
    %1597 = vrot.lane.b32.xlu0 %v860, 5
    %v1598 = vpop.permute.xlu0 %1597
    %1599 = vrot.lane.b32.xlu0 %v862, 5
    %v1600 = vpop.permute.xlu0 %1599
    %1601 = vrot.lane.b32.xlu0 %v865, 5
    %v1602 = vpop.permute.xlu0 %1601
    %1603 = vrot.lane.b32.xlu0 %v867, 5
    %v1604 = vpop.permute.xlu0 %1603
    %1605 = vrot.lane.b32.xlu0 %v870, 5
    %v1606 = vpop.permute.xlu0 %1605
    %1607 = vrot.lane.b32.xlu0 %v872, 5
    %v1608 = vpop.permute.xlu0 %1607
    %1609 = vrot.lane.b32.xlu0 %v875, 5
    %v1610 = vpop.permute.xlu0 %1609
    %1611 = vrot.lane.b32.xlu0 %v877, 5
    %v1612 = vpop.permute.xlu0 %1611
    %1613 = vrot.lane.b32.xlu0 %v880, 5
    %v1614 = vpop.permute.xlu0 %1613
    %1615 = vrot.lane.b32.xlu0 %v882, 5
    %v1616 = vpop.permute.xlu0 %1615
    %1617 = vrot.lane.b32.xlu0 %v885, 5
    %v1618 = vpop.permute.xlu0 %1617
    %1619 = vrot.lane.b32.xlu0 %v887, 5
    %v1620 = vpop.permute.xlu0 %1619
    %1621 = vrot.lane.b32.xlu0 %v890, 5
    %v1622 = vpop.permute.xlu0 %1621
    %1623 = vrot.lane.b32.xlu0 %v892, 5
    %v1624 = vpop.permute.xlu0 %1623
    %1625 = vrot.lane.b32.xlu0 %v895, 5
    %v1626 = vpop.permute.xlu0 %1625
    %1627 = vrot.lane.b32.xlu0 %v897, 5
    %v1628 = vpop.permute.xlu0 %1627
    %1629 = vrot.lane.b32.xlu0 %v900, 5
    %v1630 = vpop.permute.xlu0 %1629
    %1631 = vrot.lane.b32.xlu0 %v902, 5
    %v1632 = vpop.permute.xlu0 %1631
    %1633 = vrot.lane.b32.xlu0 %v905, 5
    %v1634 = vpop.permute.xlu0 %1633
    %1635 = vrot.lane.b32.xlu0 %v907, 5
    %v1636 = vpop.permute.xlu0 %1635
    %1637 = vrot.lane.b32.xlu0 %v1569, 5
    %v1638 = vpop.permute.xlu0 %1637
    %1639 = vrot.lane.b32.xlu0 %v1571, 5
    %v1640 = vpop.permute.xlu0 %1639
    %1641 = vrot.lane.b32.xlu0 %v910, 5
    %v1642 = vpop.permute.xlu0 %1641
    %1643 = vrot.lane.b32.xlu0 %v912, 5
    %v1644 = vpop.permute.xlu0 %1643
    %1645 = vrot.lane.b32.xlu0 %v915, 5
    %v1646 = vpop.permute.xlu0 %1645
    %1647 = vrot.lane.b32.xlu0 %v917, 5
    %v1648 = vpop.permute.xlu0 %1647
    %1649 = vrot.lane.b32.xlu0 %v920, 5
    %v1650 = vpop.permute.xlu0 %1649
    %1651 = vrot.lane.b32.xlu0 %v922, 5
    %v1652 = vpop.permute.xlu0 %1651
    %1653 = vrot.lane.b32.xlu0 %v925, 5
    %v1654 = vpop.permute.xlu0 %1653
    %1655 = vrot.lane.b32.xlu0 %v927, 5
    %v1656 = vpop.permute.xlu0 %1655
    %1657 = vrot.lane.b32.xlu0 %v930, 5
    %v1658 = vpop.permute.xlu0 %1657
    %1659 = vrot.lane.b32.xlu0 %v932, 5
    %v1660 = vpop.permute.xlu0 %1659
    %1661 = vrot.lane.b32.xlu0 %v935, 5
    %v1662 = vpop.permute.xlu0 %1661
    %1663 = vrot.lane.b32.xlu0 %v937, 5
    %v1664 = vpop.permute.xlu0 %1663
    %1665 = vrot.lane.b32.xlu0 %v940, 5
    %v1666 = vpop.permute.xlu0 %1665
    %1667 = vrot.lane.b32.xlu0 %v942, 5
    %v1668 = vpop.permute.xlu0 %1667
    %1669 = vrot.lane.b32.xlu0 %v945, 5
    %v1670 = vpop.permute.xlu0 %1669
    %1671 = vrot.lane.b32.xlu0 %v947, 5
    %v1672 = vpop.permute.xlu0 %1671
    %1673 = vrot.lane.b32.xlu0 %v950, 5
    %v1674 = vpop.permute.xlu0 %1673
    %1675 = vrot.lane.b32.xlu0 %v952, 5
    %v1676 = vpop.permute.xlu0 %1675
    %1677 = vrot.lane.b32.xlu0 %v955, 5
    %v1678 = vpop.permute.xlu0 %1677
    %1679 = vrot.lane.b32.xlu0 %v957, 5
    %v1680 = vpop.permute.xlu0 %1679
    %1681 = vrot.lane.b32.xlu0 %v960, 5
    %v1682 = vpop.permute.xlu0 %1681
    %1683 = vrot.lane.b32.xlu0 %v962, 5
    %v1684 = vpop.permute.xlu0 %1683
    %1685 = vrot.lane.b32.xlu0 %v965, 5
    %v1686 = vpop.permute.xlu0 %1685
    %1687 = vrot.lane.b32.xlu0 %v967, 5
    %v1688 = vpop.permute.xlu0 %1687
    %1689 = vrot.lane.b32.xlu0 %v970, 5
    %v1690 = vpop.permute.xlu0 %1689
    %1691 = vrot.lane.b32.xlu0 %v972, 5
    %v1692 = vpop.permute.xlu0 %1691
    %1693 = vrot.lane.b32.xlu0 %v975, 5
    %v1694 = vpop.permute.xlu0 %1693
    %1695 = vrot.lane.b32.xlu0 %v977, 5
    %v1696 = vpop.permute.xlu0 %1695
    %1697 = vrot.lane.b32.xlu0 %v980, 5
    %v1698 = vpop.permute.xlu0 %1697
    %1699 = vrot.lane.b32.xlu0 %v982, 5
    %v1700 = vpop.permute.xlu0 %1699
    %1701 = vrot.lane.b32.xlu0 %v1574, 5
    %v1702 = vpop.permute.xlu0 %1701
    %1703 = vrot.lane.b32.xlu0 %v1576, 5
    %v1704 = vpop.permute.xlu0 %1703
    %1769 = vrot.lane.b32.xlu0 %v359, 6
    %v1770 = vpop.permute.xlu0 %1769
    %1771 = vrot.lane.b32.xlu0 %v170, 6
    %v1772 = vpop.permute.xlu0 %1771
    %1773 = vrot.lane.b32.xlu0 %v360, 6
    %v1774 = vpop.permute.xlu0 %1773
    %1775 = vrot.lane.b32.xlu0 %v173, 6
    %v1776 = vpop.permute.xlu0 %1775
    %1777 = vrot.lane.b32.xlu0 %v361, 6
    %v1778 = vpop.permute.xlu0 %1777
    %1779 = vrot.lane.b32.xlu0 %v176, 6
    %v1780 = vpop.permute.xlu0 %1779
    %1781 = vrot.lane.b32.xlu0 %v362, 6
    %v1782 = vpop.permute.xlu0 %1781
    %1783 = vrot.lane.b32.xlu0 %v179, 6
    %v1784 = vpop.permute.xlu0 %1783
    %1785 = vrot.lane.b32.xlu0 %v363, 6
    %v1786 = vpop.permute.xlu0 %1785
    %1787 = vrot.lane.b32.xlu0 %v182, 6
    %v1788 = vpop.permute.xlu0 %1787
    %1789 = vrot.lane.b32.xlu0 %v364, 6
    %v1790 = vpop.permute.xlu0 %1789
    %1791 = vrot.lane.b32.xlu0 %v185, 6
    %v1792 = vpop.permute.xlu0 %1791
    %1793 = vrot.lane.b32.xlu0 %v365, 6
    %v1794 = vpop.permute.xlu0 %1793
    %1795 = vrot.lane.b32.xlu0 %v188, 6
    %v1796 = vpop.permute.xlu0 %1795
    %1797 = vrot.lane.b32.xlu0 %v366, 6
    %v1798 = vpop.permute.xlu0 %1797
    %1799 = vrot.lane.b32.xlu0 %v191, 6
    %v1800 = vpop.permute.xlu0 %1799
    %1801 = vrot.lane.b32.xlu0 %v367, 6
    %v1802 = vpop.permute.xlu0 %1801
    %1803 = vrot.lane.b32.xlu0 %v194, 6
    %v1804 = vpop.permute.xlu0 %1803
    %1805 = vrot.lane.b32.xlu0 %v368, 6
    %v1806 = vpop.permute.xlu0 %1805
    %1807 = vrot.lane.b32.xlu0 %v197, 6
    %v1808 = vpop.permute.xlu0 %1807
    %1809 = vrot.lane.b32.xlu0 %v369, 6
    %v1810 = vpop.permute.xlu0 %1809
    %1811 = vrot.lane.b32.xlu0 %v200, 6
    %v1812 = vpop.permute.xlu0 %1811
    %1813 = vrot.lane.b32.xlu0 %v370, 6
    %v1814 = vpop.permute.xlu0 %1813
    %1815 = vrot.lane.b32.xlu0 %v203, 6
    %v1816 = vpop.permute.xlu0 %1815
    %1817 = vrot.lane.b32.xlu0 %v371, 6
    %v1818 = vpop.permute.xlu0 %1817
    %1819 = vrot.lane.b32.xlu0 %v206, 6
    %v1820 = vpop.permute.xlu0 %1819
    %1821 = vrot.lane.b32.xlu0 %v372, 6
    %v1822 = vpop.permute.xlu0 %1821
    %1823 = vrot.lane.b32.xlu0 %v209, 6
    %v1824 = vpop.permute.xlu0 %1823
    %1825 = vrot.lane.b32.xlu0 %v373, 6
    %v1826 = vpop.permute.xlu0 %1825
    %1827 = vrot.lane.b32.xlu0 %v212, 6
    %v1828 = vpop.permute.xlu0 %1827
    %1829 = vrot.lane.b32.xlu0 %v357, 6
    %v1830 = vpop.permute.xlu0 %1829
    %1831 = vrot.lane.b32.xlu0 %v164, 6
    %v1832 = vpop.permute.xlu0 %1831
    %1833 = vrot.lane.b32.xlu0 %v375, 6
    %v1834 = vpop.permute.xlu0 %1833
    %1835 = vrot.lane.b32.xlu0 %v218, 6
    %v1836 = vpop.permute.xlu0 %1835
    %1837 = vrot.lane.b32.xlu0 %v376, 6
    %v1838 = vpop.permute.xlu0 %1837
    %1839 = vrot.lane.b32.xlu0 %v221, 6
    %v1840 = vpop.permute.xlu0 %1839
    %1841 = vrot.lane.b32.xlu0 %v377, 6
    %v1842 = vpop.permute.xlu0 %1841
    %1843 = vrot.lane.b32.xlu0 %v224, 6
    %v1844 = vpop.permute.xlu0 %1843
    %1845 = vrot.lane.b32.xlu0 %v378, 6
    %v1846 = vpop.permute.xlu0 %1845
    %1847 = vrot.lane.b32.xlu0 %v227, 6
    %v1848 = vpop.permute.xlu0 %1847
    %1849 = vrot.lane.b32.xlu0 %v379, 6
    %v1850 = vpop.permute.xlu0 %1849
    %1851 = vrot.lane.b32.xlu0 %v230, 6
    %v1852 = vpop.permute.xlu0 %1851
    %1853 = vrot.lane.b32.xlu0 %v380, 6
    %v1854 = vpop.permute.xlu0 %1853
    %1855 = vrot.lane.b32.xlu0 %v233, 6
    %v1856 = vpop.permute.xlu0 %1855
    %1857 = vrot.lane.b32.xlu0 %v381, 6
    %v1858 = vpop.permute.xlu0 %1857
    %1859 = vrot.lane.b32.xlu0 %v236, 6
    %v1860 = vpop.permute.xlu0 %1859
    %1861 = vrot.lane.b32.xlu0 %v382, 6
    %v1862 = vpop.permute.xlu0 %1861
    %1863 = vrot.lane.b32.xlu0 %v239, 6
    %v1864 = vpop.permute.xlu0 %1863
    %1865 = vrot.lane.b32.xlu0 %v383, 6
    %v1866 = vpop.permute.xlu0 %1865
    %1867 = vrot.lane.b32.xlu0 %v242, 6
    %v1868 = vpop.permute.xlu0 %1867
    %1869 = vrot.lane.b32.xlu0 %v384, 6
    %v1870 = vpop.permute.xlu0 %1869
    %1871 = vrot.lane.b32.xlu0 %v245, 6
    %v1872 = vpop.permute.xlu0 %1871
    %1873 = vrot.lane.b32.xlu0 %v385, 6
    %v1874 = vpop.permute.xlu0 %1873
    %1875 = vrot.lane.b32.xlu0 %v248, 6
    %v1876 = vpop.permute.xlu0 %1875
    %1877 = vrot.lane.b32.xlu0 %v386, 6
    %v1878 = vpop.permute.xlu0 %1877
    %1879 = vrot.lane.b32.xlu0 %v251, 6
    %v1880 = vpop.permute.xlu0 %1879
    %1881 = vrot.lane.b32.xlu0 %v387, 6
    %v1882 = vpop.permute.xlu0 %1881
    %1883 = vrot.lane.b32.xlu0 %v254, 6
    %v1884 = vpop.permute.xlu0 %1883
    %1885 = vrot.lane.b32.xlu0 %v388, 6
    %v1886 = vpop.permute.xlu0 %1885
    %1887 = vrot.lane.b32.xlu0 %v257, 6
    %v1888 = vpop.permute.xlu0 %1887
    %1889 = vrot.lane.b32.xlu0 %v389, 6
    %v1890 = vpop.permute.xlu0 %1889
    %1891 = vrot.lane.b32.xlu0 %v260, 6
    %v1892 = vpop.permute.xlu0 %1891
    %1955 = vrot.lane.b32.xlu0 %v498, 7
    %v1956 = vpop.permute.xlu0 %1955
    %1957 = vrot.lane.b32.xlu0 %v500, 7
    %v1958 = vpop.permute.xlu0 %1957
    %1959 = vrot.lane.b32.xlu0 %v503, 7
    %v1960 = vpop.permute.xlu0 %1959
    %1961 = vrot.lane.b32.xlu0 %v505, 7
    %v1962 = vpop.permute.xlu0 %1961
    %1963 = vrot.lane.b32.xlu0 %v508, 7
    %v1964 = vpop.permute.xlu0 %1963
    %1965 = vrot.lane.b32.xlu0 %v510, 7
    %v1966 = vpop.permute.xlu0 %1965
    %1967 = vrot.lane.b32.xlu0 %v513, 7
    %v1968 = vpop.permute.xlu0 %1967
    %1969 = vrot.lane.b32.xlu0 %v515, 7
    %v1970 = vpop.permute.xlu0 %1969
    %1971 = vrot.lane.b32.xlu0 %v518, 7
    %v1972 = vpop.permute.xlu0 %1971
    %1973 = vrot.lane.b32.xlu0 %v520, 7
    %v1974 = vpop.permute.xlu0 %1973
    %1975 = vrot.lane.b32.xlu0 %v523, 7
    %v1976 = vpop.permute.xlu0 %1975
    %1977 = vrot.lane.b32.xlu0 %v525, 7
    %v1978 = vpop.permute.xlu0 %1977
    %1979 = vrot.lane.b32.xlu0 %v528, 7
    %v1980 = vpop.permute.xlu0 %1979
    %1981 = vrot.lane.b32.xlu0 %v530, 7
    %v1982 = vpop.permute.xlu0 %1981
    %1983 = vrot.lane.b32.xlu0 %v533, 7
    %v1984 = vpop.permute.xlu0 %1983
    %1985 = vrot.lane.b32.xlu0 %v535, 7
    %v1986 = vpop.permute.xlu0 %1985
    %1987 = vrot.lane.b32.xlu0 %v538, 7
    %v1988 = vpop.permute.xlu0 %1987
    %1989 = vrot.lane.b32.xlu0 %v540, 7
    %v1990 = vpop.permute.xlu0 %1989
    %1991 = vrot.lane.b32.xlu0 %v543, 7
    %v1992 = vpop.permute.xlu0 %1991
    %1993 = vrot.lane.b32.xlu0 %v545, 7
    %v1994 = vpop.permute.xlu0 %1993
    %1995 = vrot.lane.b32.xlu0 %v548, 7
    %v1996 = vpop.permute.xlu0 %1995
    %1997 = vrot.lane.b32.xlu0 %v550, 7
    %v1998 = vpop.permute.xlu0 %1997
    %1999 = vrot.lane.b32.xlu0 %v553, 7
    %v2000 = vpop.permute.xlu0 %1999
    %2001 = vrot.lane.b32.xlu0 %v555, 7
    %v2002 = vpop.permute.xlu0 %2001
    %2003 = vrot.lane.b32.xlu0 %v558, 7
    %v2004 = vpop.permute.xlu0 %2003
    %2005 = vrot.lane.b32.xlu0 %v560, 7
    %v2006 = vpop.permute.xlu0 %2005
    %2007 = vrot.lane.b32.xlu0 %v563, 7
    %v2008 = vpop.permute.xlu0 %2007
    %2009 = vrot.lane.b32.xlu0 %v565, 7
    %v2010 = vpop.permute.xlu0 %2009
    %2011 = vrot.lane.b32.xlu0 %v1367, 7
    %v2012 = vpop.permute.xlu0 %2011
    %2013 = vrot.lane.b32.xlu0 %v1369, 7
    %v2014 = vpop.permute.xlu0 %2013
    %2015 = vrot.lane.b32.xlu0 %v488, 7
    %v2016 = vpop.permute.xlu0 %2015
    %2017 = vrot.lane.b32.xlu0 %v490, 7
    %v2018 = vpop.permute.xlu0 %2017
    %2019 = vrot.lane.b32.xlu0 %v573, 7
    %v2020 = vpop.permute.xlu0 %2019
    %2021 = vrot.lane.b32.xlu0 %v575, 7
    %v2022 = vpop.permute.xlu0 %2021
    %2023 = vrot.lane.b32.xlu0 %v578, 7
    %v2024 = vpop.permute.xlu0 %2023
    %2025 = vrot.lane.b32.xlu0 %v580, 7
    %v2026 = vpop.permute.xlu0 %2025
    %2027 = vrot.lane.b32.xlu0 %v583, 7
    %v2028 = vpop.permute.xlu0 %2027
    %2029 = vrot.lane.b32.xlu0 %v585, 7
    %v2030 = vpop.permute.xlu0 %2029
    %2031 = vrot.lane.b32.xlu0 %v588, 7
    %v2032 = vpop.permute.xlu0 %2031
    %2033 = vrot.lane.b32.xlu0 %v590, 7
    %v2034 = vpop.permute.xlu0 %2033
    %2035 = vrot.lane.b32.xlu0 %v593, 7
    %v2036 = vpop.permute.xlu0 %2035
    %2037 = vrot.lane.b32.xlu0 %v595, 7
    %v2038 = vpop.permute.xlu0 %2037
    %2039 = vrot.lane.b32.xlu0 %v598, 7
    %v2040 = vpop.permute.xlu0 %2039
    %2041 = vrot.lane.b32.xlu0 %v600, 7
    %v2042 = vpop.permute.xlu0 %2041
    %2043 = vrot.lane.b32.xlu0 %v603, 7
    %v2044 = vpop.permute.xlu0 %2043
    %2045 = vrot.lane.b32.xlu0 %v605, 7
    %v2046 = vpop.permute.xlu0 %2045
    %2047 = vrot.lane.b32.xlu0 %v608, 7
    %v2048 = vpop.permute.xlu0 %2047
    %2049 = vrot.lane.b32.xlu0 %v610, 7
    %v2050 = vpop.permute.xlu0 %2049
    %2051 = vrot.lane.b32.xlu0 %v613, 7
    %v2052 = vpop.permute.xlu0 %2051
    %2053 = vrot.lane.b32.xlu0 %v615, 7
    %v2054 = vpop.permute.xlu0 %2053
    %2055 = vrot.lane.b32.xlu0 %v618, 7
    %v2056 = vpop.permute.xlu0 %2055
    %2057 = vrot.lane.b32.xlu0 %v620, 7
    %v2058 = vpop.permute.xlu0 %2057
    %2059 = vrot.lane.b32.xlu0 %v623, 7
    %v2060 = vpop.permute.xlu0 %2059
    %2061 = vrot.lane.b32.xlu0 %v625, 7
    %v2062 = vpop.permute.xlu0 %2061
    %2063 = vrot.lane.b32.xlu0 %v628, 7
    %v2064 = vpop.permute.xlu0 %2063
    %2065 = vrot.lane.b32.xlu0 %v630, 7
    %v2066 = vpop.permute.xlu0 %2065
    %2067 = vrot.lane.b32.xlu0 %v633, 7
    %v2068 = vpop.permute.xlu0 %2067
    %2069 = vrot.lane.b32.xlu0 %v635, 7
    %v2070 = vpop.permute.xlu0 %2069
    %2071 = vrot.lane.b32.xlu0 %v638, 7
    %v2072 = vpop.permute.xlu0 %2071
    %2073 = vrot.lane.b32.xlu0 %v640, 7
    %v2074 = vpop.permute.xlu0 %2073
    %2075 = vrot.lane.b32.xlu0 %v1372, 7
    %v2076 = vpop.permute.xlu0 %2075
    %2077 = vrot.lane.b32.xlu0 %v1374, 7
    %v2078 = vpop.permute.xlu0 %2077
    %2141 = vrot.lane.b32.xlu0 %v840, 8
    %v2142 = vpop.permute.xlu0 %2141
    %2143 = vrot.lane.b32.xlu0 %v842, 8
    %v2144 = vpop.permute.xlu0 %2143
    %2145 = vrot.lane.b32.xlu0 %v845, 8
    %v2146 = vpop.permute.xlu0 %2145
    %2147 = vrot.lane.b32.xlu0 %v847, 8
    %v2148 = vpop.permute.xlu0 %2147
    %2149 = vrot.lane.b32.xlu0 %v850, 8
    %v2150 = vpop.permute.xlu0 %2149
    %2151 = vrot.lane.b32.xlu0 %v852, 8
    %v2152 = vpop.permute.xlu0 %2151
    %2153 = vrot.lane.b32.xlu0 %v855, 8
    %v2154 = vpop.permute.xlu0 %2153
    %2155 = vrot.lane.b32.xlu0 %v857, 8
    %v2156 = vpop.permute.xlu0 %2155
    %2157 = vrot.lane.b32.xlu0 %v860, 8
    %v2158 = vpop.permute.xlu0 %2157
    %2159 = vrot.lane.b32.xlu0 %v862, 8
    %v2160 = vpop.permute.xlu0 %2159
    %2161 = vrot.lane.b32.xlu0 %v865, 8
    %v2162 = vpop.permute.xlu0 %2161
    %2163 = vrot.lane.b32.xlu0 %v867, 8
    %v2164 = vpop.permute.xlu0 %2163
    %2165 = vrot.lane.b32.xlu0 %v870, 8
    %v2166 = vpop.permute.xlu0 %2165
    %2167 = vrot.lane.b32.xlu0 %v872, 8
    %v2168 = vpop.permute.xlu0 %2167
    %2169 = vrot.lane.b32.xlu0 %v875, 8
    %v2170 = vpop.permute.xlu0 %2169
    %2171 = vrot.lane.b32.xlu0 %v877, 8
    %v2172 = vpop.permute.xlu0 %2171
    %2173 = vrot.lane.b32.xlu0 %v880, 8
    %v2174 = vpop.permute.xlu0 %2173
    %2175 = vrot.lane.b32.xlu0 %v882, 8
    %v2176 = vpop.permute.xlu0 %2175
    %2177 = vrot.lane.b32.xlu0 %v885, 8
    %v2178 = vpop.permute.xlu0 %2177
    %2179 = vrot.lane.b32.xlu0 %v887, 8
    %v2180 = vpop.permute.xlu0 %2179
    %2181 = vrot.lane.b32.xlu0 %v890, 8
    %v2182 = vpop.permute.xlu0 %2181
    %2183 = vrot.lane.b32.xlu0 %v892, 8
    %v2184 = vpop.permute.xlu0 %2183
    %2185 = vrot.lane.b32.xlu0 %v895, 8
    %v2186 = vpop.permute.xlu0 %2185
    %2187 = vrot.lane.b32.xlu0 %v897, 8
    %v2188 = vpop.permute.xlu0 %2187
    %2189 = vrot.lane.b32.xlu0 %v900, 8
    %v2190 = vpop.permute.xlu0 %2189
    %2191 = vrot.lane.b32.xlu0 %v902, 8
    %v2192 = vpop.permute.xlu0 %2191
    %2193 = vrot.lane.b32.xlu0 %v905, 8
    %v2194 = vpop.permute.xlu0 %2193
    %2195 = vrot.lane.b32.xlu0 %v907, 8
    %v2196 = vpop.permute.xlu0 %2195
    %2197 = vrot.lane.b32.xlu0 %v1569, 8
    %v2198 = vpop.permute.xlu0 %2197
    %2199 = vrot.lane.b32.xlu0 %v1571, 8
    %v2200 = vpop.permute.xlu0 %2199
    %2201 = vrot.lane.b32.xlu0 %v830, 8
    %v2202 = vpop.permute.xlu0 %2201
    %2203 = vrot.lane.b32.xlu0 %v832, 8
    %v2204 = vpop.permute.xlu0 %2203
    %2205 = vrot.lane.b32.xlu0 %v915, 8
    %v2206 = vpop.permute.xlu0 %2205
    %2207 = vrot.lane.b32.xlu0 %v917, 8
    %v2208 = vpop.permute.xlu0 %2207
    %2209 = vrot.lane.b32.xlu0 %v920, 8
    %v2210 = vpop.permute.xlu0 %2209
    %2211 = vrot.lane.b32.xlu0 %v922, 8
    %v2212 = vpop.permute.xlu0 %2211
    %2213 = vrot.lane.b32.xlu0 %v925, 8
    %v2214 = vpop.permute.xlu0 %2213
    %2215 = vrot.lane.b32.xlu0 %v927, 8
    %v2216 = vpop.permute.xlu0 %2215
    %2217 = vrot.lane.b32.xlu0 %v930, 8
    %v2218 = vpop.permute.xlu0 %2217
    %2219 = vrot.lane.b32.xlu0 %v932, 8
    %v2220 = vpop.permute.xlu0 %2219
    %2221 = vrot.lane.b32.xlu0 %v935, 8
    %v2222 = vpop.permute.xlu0 %2221
    %2223 = vrot.lane.b32.xlu0 %v937, 8
    %v2224 = vpop.permute.xlu0 %2223
    %2225 = vrot.lane.b32.xlu0 %v940, 8
    %v2226 = vpop.permute.xlu0 %2225
    %2227 = vrot.lane.b32.xlu0 %v942, 8
    %v2228 = vpop.permute.xlu0 %2227
    %2229 = vrot.lane.b32.xlu0 %v945, 8
    %v2230 = vpop.permute.xlu0 %2229
    %2231 = vrot.lane.b32.xlu0 %v947, 8
    %v2232 = vpop.permute.xlu0 %2231
    %2233 = vrot.lane.b32.xlu0 %v950, 8
    %v2234 = vpop.permute.xlu0 %2233
    %2235 = vrot.lane.b32.xlu0 %v952, 8
    %v2236 = vpop.permute.xlu0 %2235
    %2237 = vrot.lane.b32.xlu0 %v955, 8
    %v2238 = vpop.permute.xlu0 %2237
    %2239 = vrot.lane.b32.xlu0 %v957, 8
    %v2240 = vpop.permute.xlu0 %2239
    %2241 = vrot.lane.b32.xlu0 %v960, 8
    %v2242 = vpop.permute.xlu0 %2241
    %2243 = vrot.lane.b32.xlu0 %v962, 8
    %v2244 = vpop.permute.xlu0 %2243
    %2245 = vrot.lane.b32.xlu0 %v965, 8
    %v2246 = vpop.permute.xlu0 %2245
    %2247 = vrot.lane.b32.xlu0 %v967, 8
    %v2248 = vpop.permute.xlu0 %2247
    %2249 = vrot.lane.b32.xlu0 %v970, 8
    %v2250 = vpop.permute.xlu0 %2249
    %2251 = vrot.lane.b32.xlu0 %v972, 8
    %v2252 = vpop.permute.xlu0 %2251
    %2253 = vrot.lane.b32.xlu0 %v975, 8
    %v2254 = vpop.permute.xlu0 %2253
    %2255 = vrot.lane.b32.xlu0 %v977, 8
    %v2256 = vpop.permute.xlu0 %2255
    %2257 = vrot.lane.b32.xlu0 %v980, 8
    %v2258 = vpop.permute.xlu0 %2257
    %2259 = vrot.lane.b32.xlu0 %v982, 8
    %v2260 = vpop.permute.xlu0 %2259
    %2261 = vrot.lane.b32.xlu0 %v1574, 8
    %v2262 = vpop.permute.xlu0 %2261
    %2263 = vrot.lane.b32.xlu0 %v1576, 8
    %v2264 = vpop.permute.xlu0 %2263
    %vm2327 = vcmask 7168
    %v2328 = vsel %vm2327, %v357, %v642
    %v2329 = vsel %vm2327, %v164, %v644
    %v2330 = vsel %vm2327, %v358, %v646
    %v2331 = vsel %vm2327, %v167, %v648
    %v2332 = vsel %vm2327, %v359, %v650
    %v2333 = vsel %vm2327, %v170, %v652
    %v2334 = vsel %vm2327, %v360, %v654
    %v2335 = vsel %vm2327, %v173, %v656
    %v2336 = vsel %vm2327, %v361, %v658
    %v2337 = vsel %vm2327, %v176, %v660
    %v2338 = vsel %vm2327, %v362, %v662
    %v2339 = vsel %vm2327, %v179, %v664
    %v2340 = vsel %vm2327, %v363, %v666
    %v2341 = vsel %vm2327, %v182, %v668
    %v2342 = vsel %vm2327, %v364, %v670
    %v2343 = vsel %vm2327, %v185, %v672
    %v2344 = vsel %vm2327, %v365, %v674
    %v2345 = vsel %vm2327, %v188, %v676
    %v2346 = vsel %vm2327, %v366, %v678
    %v2347 = vsel %vm2327, %v191, %v680
    %v2348 = vsel %vm2327, %v367, %v682
    %v2349 = vsel %vm2327, %v194, %v684
    %v2350 = vsel %vm2327, %v368, %v686
    %v2351 = vsel %vm2327, %v197, %v688
    %v2352 = vsel %vm2327, %v369, %v690
    %v2353 = vsel %vm2327, %v200, %v692
    %v2354 = vsel %vm2327, %v370, %v694
    %v2355 = vsel %vm2327, %v203, %v696
    %v2356 = vsel %vm2327, %v371, %v698
    %v2357 = vsel %vm2327, %v206, %v700
    %v2358 = vsel %vm2327, %v372, %v702
    %v2359 = vsel %vm2327, %v209, %v704
    %v2360 = vsel %vm2327, %v374, %v706
    %v2361 = vsel %vm2327, %v215, %v708
    %v2362 = vsel %vm2327, %v375, %v710
    %v2363 = vsel %vm2327, %v218, %v712
    %v2364 = vsel %vm2327, %v376, %v714
    %v2365 = vsel %vm2327, %v221, %v716
    %v2366 = vsel %vm2327, %v377, %v718
    %v2367 = vsel %vm2327, %v224, %v720
    %v2368 = vsel %vm2327, %v378, %v722
    %v2369 = vsel %vm2327, %v227, %v724
    %v2370 = vsel %vm2327, %v379, %v726
    %v2371 = vsel %vm2327, %v230, %v728
    %v2372 = vsel %vm2327, %v380, %v730
    %v2373 = vsel %vm2327, %v233, %v732
    %v2374 = vsel %vm2327, %v381, %v734
    %v2375 = vsel %vm2327, %v236, %v736
    %v2376 = vsel %vm2327, %v382, %v738
    %v2377 = vsel %vm2327, %v239, %v740
    %v2378 = vsel %vm2327, %v383, %v742
    %v2379 = vsel %vm2327, %v242, %v744
    %v2380 = vsel %vm2327, %v384, %v746
    %v2381 = vsel %vm2327, %v245, %v748
    %v2382 = vsel %vm2327, %v385, %v750
    %v2383 = vsel %vm2327, %v248, %v752
    %v2384 = vsel %vm2327, %v386, %v754
    %v2385 = vsel %vm2327, %v251, %v756
    %v2386 = vsel %vm2327, %v387, %v758
    %v2387 = vsel %vm2327, %v254, %v760
    %v2388 = vsel %vm2327, %v388, %v762
    %v2389 = vsel %vm2327, %v257, %v764
    %vm2390 = vcmask 15360
    %v2391 = vsel %vm2390, %v2328, %v984
    %v2392 = vsel %vm2390, %v2329, %v986
    %v2393 = vsel %vm2390, %v2330, %v988
    %v2394 = vsel %vm2390, %v2331, %v990
    %v2395 = vsel %vm2390, %v2332, %v992
    %v2396 = vsel %vm2390, %v2333, %v994
    %v2397 = vsel %vm2390, %v2334, %v996
    %v2398 = vsel %vm2390, %v2335, %v998
    %v2399 = vsel %vm2390, %v2336, %v1000
    %v2400 = vsel %vm2390, %v2337, %v1002
    %v2401 = vsel %vm2390, %v2338, %v1004
    %v2402 = vsel %vm2390, %v2339, %v1006
    %v2403 = vsel %vm2390, %v2340, %v1008
    %v2404 = vsel %vm2390, %v2341, %v1010
    %v2405 = vsel %vm2390, %v2342, %v1012
    %v2406 = vsel %vm2390, %v2343, %v1014
    %v2407 = vsel %vm2390, %v2344, %v1016
    %v2408 = vsel %vm2390, %v2345, %v1018
    %v2409 = vsel %vm2390, %v2346, %v1020
    %v2410 = vsel %vm2390, %v2347, %v1022
    %v2411 = vsel %vm2390, %v2348, %v1024
    %v2412 = vsel %vm2390, %v2349, %v1026
    %v2413 = vsel %vm2390, %v2350, %v1028
    %v2414 = vsel %vm2390, %v2351, %v1030
    %v2415 = vsel %vm2390, %v2352, %v1032
    %v2416 = vsel %vm2390, %v2353, %v1034
    %v2417 = vsel %vm2390, %v2354, %v1036
    %v2418 = vsel %vm2390, %v2355, %v1038
    %v2419 = vsel %vm2390, %v2356, %v1040
    %v2420 = vsel %vm2390, %v2357, %v1042
    %v2421 = vsel %vm2390, %v2358, %v1044
    %v2422 = vsel %vm2390, %v2359, %v1046
    %v2423 = vsel %vm2390, %v2360, %v1048
    %v2424 = vsel %vm2390, %v2361, %v1050
    %v2425 = vsel %vm2390, %v2362, %v1052
    %v2426 = vsel %vm2390, %v2363, %v1054
    %v2427 = vsel %vm2390, %v2364, %v1056
    %v2428 = vsel %vm2390, %v2365, %v1058
    %v2429 = vsel %vm2390, %v2366, %v1060
    %v2430 = vsel %vm2390, %v2367, %v1062
    %v2431 = vsel %vm2390, %v2368, %v1064
    %v2432 = vsel %vm2390, %v2369, %v1066
    %v2433 = vsel %vm2390, %v2370, %v1068
    %v2434 = vsel %vm2390, %v2371, %v1070
    %v2435 = vsel %vm2390, %v2372, %v1072
    %v2436 = vsel %vm2390, %v2373, %v1074
    %v2437 = vsel %vm2390, %v2374, %v1076
    %v2438 = vsel %vm2390, %v2375, %v1078
    %v2439 = vsel %vm2390, %v2376, %v1080
    %v2440 = vsel %vm2390, %v2377, %v1082
    %v2441 = vsel %vm2390, %v2378, %v1084
    %v2442 = vsel %vm2390, %v2379, %v1086
    %v2443 = vsel %vm2390, %v2380, %v1088
    %v2444 = vsel %vm2390, %v2381, %v1090
    %v2445 = vsel %vm2390, %v2382, %v1092
    %v2446 = vsel %vm2390, %v2383, %v1094
    %v2447 = vsel %vm2390, %v2384, %v1096
    %v2448 = vsel %vm2390, %v2385, %v1098
    %v2449 = vsel %vm2390, %v2386, %v1100
    %v2450 = vsel %vm2390, %v2387, %v1102
    %v2451 = vsel %vm2390, %v2388, %v1104
    %v2452 = vsel %vm2390, %v2389, %v1106
    %vm2453 = vcmask 23552
    %v2454 = vsel %vm2453, %v2391, %v1172
    %v2455 = vsel %vm2453, %v2392, %v1174
    %v2456 = vsel %vm2453, %v2393, %v1176
    %v2457 = vsel %vm2453, %v2394, %v1178
    %v2458 = vsel %vm2453, %v2395, %v1180
    %v2459 = vsel %vm2453, %v2396, %v1182
    %v2460 = vsel %vm2453, %v2397, %v1184
    %v2461 = vsel %vm2453, %v2398, %v1186
    %v2462 = vsel %vm2453, %v2399, %v1188
    %v2463 = vsel %vm2453, %v2400, %v1190
    %v2464 = vsel %vm2453, %v2401, %v1192
    %v2465 = vsel %vm2453, %v2402, %v1194
    %v2466 = vsel %vm2453, %v2403, %v1196
    %v2467 = vsel %vm2453, %v2404, %v1198
    %v2468 = vsel %vm2453, %v2405, %v1200
    %v2469 = vsel %vm2453, %v2406, %v1202
    %v2470 = vsel %vm2453, %v2407, %v1204
    %v2471 = vsel %vm2453, %v2408, %v1206
    %v2472 = vsel %vm2453, %v2409, %v1208
    %v2473 = vsel %vm2453, %v2410, %v1210
    %v2474 = vsel %vm2453, %v2411, %v1212
    %v2475 = vsel %vm2453, %v2412, %v1214
    %v2476 = vsel %vm2453, %v2413, %v1216
    %v2477 = vsel %vm2453, %v2414, %v1218
    %v2478 = vsel %vm2453, %v2415, %v1220
    %v2479 = vsel %vm2453, %v2416, %v1222
    %v2480 = vsel %vm2453, %v2417, %v1224
    %v2481 = vsel %vm2453, %v2418, %v1226
    %v2482 = vsel %vm2453, %v2419, %v1228
    %v2483 = vsel %vm2453, %v2420, %v1230
    %v2484 = vsel %vm2453, %v2421, %v1232
    %v2485 = vsel %vm2453, %v2422, %v1234
    %v2486 = vsel %vm2453, %v2391, %v1236
    %v2487 = vsel %vm2453, %v2392, %v1238
    %v2488 = vsel %vm2453, %v2423, %v1240
    %v2489 = vsel %vm2453, %v2424, %v1242
    %v2490 = vsel %vm2453, %v2425, %v1244
    %v2491 = vsel %vm2453, %v2426, %v1246
    %v2492 = vsel %vm2453, %v2427, %v1248
    %v2493 = vsel %vm2453, %v2428, %v1250
    %v2494 = vsel %vm2453, %v2429, %v1252
    %v2495 = vsel %vm2453, %v2430, %v1254
    %v2496 = vsel %vm2453, %v2431, %v1256
    %v2497 = vsel %vm2453, %v2432, %v1258
    %v2498 = vsel %vm2453, %v2433, %v1260
    %v2499 = vsel %vm2453, %v2434, %v1262
    %v2500 = vsel %vm2453, %v2435, %v1264
    %v2501 = vsel %vm2453, %v2436, %v1266
    %v2502 = vsel %vm2453, %v2437, %v1268
    %v2503 = vsel %vm2453, %v2438, %v1270
    %v2504 = vsel %vm2453, %v2439, %v1272
    %v2505 = vsel %vm2453, %v2440, %v1274
    %v2506 = vsel %vm2453, %v2441, %v1276
    %v2507 = vsel %vm2453, %v2442, %v1278
    %v2508 = vsel %vm2453, %v2443, %v1280
    %v2509 = vsel %vm2453, %v2444, %v1282
    %v2510 = vsel %vm2453, %v2445, %v1284
    %v2511 = vsel %vm2453, %v2446, %v1286
    %v2512 = vsel %vm2453, %v2447, %v1288
    %v2513 = vsel %vm2453, %v2448, %v1290
    %v2514 = vsel %vm2453, %v2449, %v1292
    %v2515 = vsel %vm2453, %v2450, %v1294
    %v2516 = vsel %vm2453, %v2451, %v1296
    %v2517 = vsel %vm2453, %v2452, %v1298
    %vm2518 = vcmask 31744
    %v2519 = vsel %vm2518, %v2454, %v1376
    %v2520 = vsel %vm2518, %v2455, %v1378
    %v2521 = vsel %vm2518, %v2456, %v1380
    %v2522 = vsel %vm2518, %v2457, %v1382
    %v2523 = vsel %vm2518, %v2458, %v1384
    %v2524 = vsel %vm2518, %v2459, %v1386
    %v2525 = vsel %vm2518, %v2460, %v1388
    %v2526 = vsel %vm2518, %v2461, %v1390
    %v2527 = vsel %vm2518, %v2462, %v1392
    %v2528 = vsel %vm2518, %v2463, %v1394
    %v2529 = vsel %vm2518, %v2464, %v1396
    %v2530 = vsel %vm2518, %v2465, %v1398
    %v2531 = vsel %vm2518, %v2466, %v1400
    %v2532 = vsel %vm2518, %v2467, %v1402
    %v2533 = vsel %vm2518, %v2468, %v1404
    %v2534 = vsel %vm2518, %v2469, %v1406
    %v2535 = vsel %vm2518, %v2470, %v1408
    %v2536 = vsel %vm2518, %v2471, %v1410
    %v2537 = vsel %vm2518, %v2472, %v1412
    %v2538 = vsel %vm2518, %v2473, %v1414
    %v2539 = vsel %vm2518, %v2474, %v1416
    %v2540 = vsel %vm2518, %v2475, %v1418
    %v2541 = vsel %vm2518, %v2476, %v1420
    %v2542 = vsel %vm2518, %v2477, %v1422
    %v2543 = vsel %vm2518, %v2478, %v1424
    %v2544 = vsel %vm2518, %v2479, %v1426
    %v2545 = vsel %vm2518, %v2480, %v1428
    %v2546 = vsel %vm2518, %v2481, %v1430
    %v2547 = vsel %vm2518, %v2482, %v1432
    %v2548 = vsel %vm2518, %v2483, %v1434
    %v2549 = vsel %vm2518, %v2484, %v1436
    %v2550 = vsel %vm2518, %v2485, %v1438
    %v2551 = vsel %vm2518, %v2486, %v1440
    %v2552 = vsel %vm2518, %v2487, %v1442
    %v2553 = vsel %vm2518, %v2488, %v1444
    %v2554 = vsel %vm2518, %v2489, %v1446
    %v2555 = vsel %vm2518, %v2490, %v1448
    %v2556 = vsel %vm2518, %v2491, %v1450
    %v2557 = vsel %vm2518, %v2492, %v1452
    %v2558 = vsel %vm2518, %v2493, %v1454
    %v2559 = vsel %vm2518, %v2494, %v1456
    %v2560 = vsel %vm2518, %v2495, %v1458
    %v2561 = vsel %vm2518, %v2496, %v1460
    %v2562 = vsel %vm2518, %v2497, %v1462
    %v2563 = vsel %vm2518, %v2498, %v1464
    %v2564 = vsel %vm2518, %v2499, %v1466
    %v2565 = vsel %vm2518, %v2500, %v1468
    %v2566 = vsel %vm2518, %v2501, %v1470
    %v2567 = vsel %vm2518, %v2502, %v1472
    %v2568 = vsel %vm2518, %v2503, %v1474
    %v2569 = vsel %vm2518, %v2504, %v1476
    %v2570 = vsel %vm2518, %v2505, %v1478
    %v2571 = vsel %vm2518, %v2506, %v1480
    %v2572 = vsel %vm2518, %v2507, %v1482
    %v2573 = vsel %vm2518, %v2508, %v1484
    %v2574 = vsel %vm2518, %v2509, %v1486
    %v2575 = vsel %vm2518, %v2510, %v1488
    %v2576 = vsel %vm2518, %v2511, %v1490
    %v2577 = vsel %vm2518, %v2512, %v1492
    %v2578 = vsel %vm2518, %v2513, %v1494
    %v2579 = vsel %vm2518, %v2514, %v1496
    %v2580 = vsel %vm2518, %v2515, %v1498
    %v2581 = vsel %vm2518, %v2516, %v1500
    %v2582 = vsel %vm2518, %v2517, %v1502
    %vm2583 = vcmask 39936
    %v2584 = vsel %vm2583, %v2519, %v1578
    %v2585 = vsel %vm2583, %v2520, %v1580
    %v2586 = vsel %vm2583, %v2521, %v1582
    %v2587 = vsel %vm2583, %v2522, %v1584
    %v2588 = vsel %vm2583, %v2523, %v1586
    %v2589 = vsel %vm2583, %v2524, %v1588
    %v2590 = vsel %vm2583, %v2525, %v1590
    %v2591 = vsel %vm2583, %v2526, %v1592
    %v2592 = vsel %vm2583, %v2527, %v1594
    %v2593 = vsel %vm2583, %v2528, %v1596
    %v2594 = vsel %vm2583, %v2529, %v1598
    %v2595 = vsel %vm2583, %v2530, %v1600
    %v2596 = vsel %vm2583, %v2531, %v1602
    %v2597 = vsel %vm2583, %v2532, %v1604
    %v2598 = vsel %vm2583, %v2533, %v1606
    %v2599 = vsel %vm2583, %v2534, %v1608
    %v2600 = vsel %vm2583, %v2535, %v1610
    %v2601 = vsel %vm2583, %v2536, %v1612
    %v2602 = vsel %vm2583, %v2537, %v1614
    %v2603 = vsel %vm2583, %v2538, %v1616
    %v2604 = vsel %vm2583, %v2539, %v1618
    %v2605 = vsel %vm2583, %v2540, %v1620
    %v2606 = vsel %vm2583, %v2541, %v1622
    %v2607 = vsel %vm2583, %v2542, %v1624
    %v2608 = vsel %vm2583, %v2543, %v1626
    %v2609 = vsel %vm2583, %v2544, %v1628
    %v2610 = vsel %vm2583, %v2545, %v1630
    %v2611 = vsel %vm2583, %v2546, %v1632
    %v2612 = vsel %vm2583, %v2547, %v1634
    %v2613 = vsel %vm2583, %v2548, %v1636
    %v2614 = vsel %vm2583, %v2549, %v1638
    %v2615 = vsel %vm2583, %v2550, %v1640
    %v2616 = vsel %vm2583, %v2551, %v1642
    %v2617 = vsel %vm2583, %v2552, %v1644
    %v2618 = vsel %vm2583, %v2553, %v1646
    %v2619 = vsel %vm2583, %v2554, %v1648
    %v2620 = vsel %vm2583, %v2555, %v1650
    %v2621 = vsel %vm2583, %v2556, %v1652
    %v2622 = vsel %vm2583, %v2557, %v1654
    %v2623 = vsel %vm2583, %v2558, %v1656
    %v2624 = vsel %vm2583, %v2559, %v1658
    %v2625 = vsel %vm2583, %v2560, %v1660
    %v2626 = vsel %vm2583, %v2561, %v1662
    %v2627 = vsel %vm2583, %v2562, %v1664
    %v2628 = vsel %vm2583, %v2563, %v1666
    %v2629 = vsel %vm2583, %v2564, %v1668
    %v2630 = vsel %vm2583, %v2565, %v1670
    %v2631 = vsel %vm2583, %v2566, %v1672
    %v2632 = vsel %vm2583, %v2567, %v1674
    %v2633 = vsel %vm2583, %v2568, %v1676
    %v2634 = vsel %vm2583, %v2569, %v1678
    %v2635 = vsel %vm2583, %v2570, %v1680
    %v2636 = vsel %vm2583, %v2571, %v1682
    %v2637 = vsel %vm2583, %v2572, %v1684
    %v2638 = vsel %vm2583, %v2573, %v1686
    %v2639 = vsel %vm2583, %v2574, %v1688
    %v2640 = vsel %vm2583, %v2575, %v1690
    %v2641 = vsel %vm2583, %v2576, %v1692
    %v2642 = vsel %vm2583, %v2577, %v1694
    %v2643 = vsel %vm2583, %v2578, %v1696
    %v2644 = vsel %vm2583, %v2579, %v1698
    %v2645 = vsel %vm2583, %v2580, %v1700
    %v2646 = vsel %vm2583, %v2581, %v1702
    %v2647 = vsel %vm2583, %v2582, %v1704
    %vm2648 = vcmask 48128
    %v2649 = vsel %vm2648, %v2584, %v1770
    %v2650 = vsel %vm2648, %v2585, %v1772
    %v2651 = vsel %vm2648, %v2586, %v1774
    %v2652 = vsel %vm2648, %v2587, %v1776
    %v2653 = vsel %vm2648, %v2588, %v1778
    %v2654 = vsel %vm2648, %v2589, %v1780
    %v2655 = vsel %vm2648, %v2590, %v1782
    %v2656 = vsel %vm2648, %v2591, %v1784
    %v2657 = vsel %vm2648, %v2592, %v1786
    %v2658 = vsel %vm2648, %v2593, %v1788
    %v2659 = vsel %vm2648, %v2594, %v1790
    %v2660 = vsel %vm2648, %v2595, %v1792
    %v2661 = vsel %vm2648, %v2596, %v1794
    %v2662 = vsel %vm2648, %v2597, %v1796
    %v2663 = vsel %vm2648, %v2598, %v1798
    %v2664 = vsel %vm2648, %v2599, %v1800
    %v2665 = vsel %vm2648, %v2600, %v1802
    %v2666 = vsel %vm2648, %v2601, %v1804
    %v2667 = vsel %vm2648, %v2602, %v1806
    %v2668 = vsel %vm2648, %v2603, %v1808
    %v2669 = vsel %vm2648, %v2604, %v1810
    %v2670 = vsel %vm2648, %v2605, %v1812
    %v2671 = vsel %vm2648, %v2606, %v1814
    %v2672 = vsel %vm2648, %v2607, %v1816
    %v2673 = vsel %vm2648, %v2608, %v1818
    %v2674 = vsel %vm2648, %v2609, %v1820
    %v2675 = vsel %vm2648, %v2610, %v1822
    %v2676 = vsel %vm2648, %v2611, %v1824
    %v2677 = vsel %vm2648, %v2612, %v1826
    %v2678 = vsel %vm2648, %v2613, %v1828
    %v2679 = vsel %vm2648, %v2614, %v1830
    %v2680 = vsel %vm2648, %v2615, %v1832
    %v2681 = vsel %vm2648, %v2616, %v1834
    %v2682 = vsel %vm2648, %v2617, %v1836
    %v2683 = vsel %vm2648, %v2618, %v1838
    %v2684 = vsel %vm2648, %v2619, %v1840
    %v2685 = vsel %vm2648, %v2620, %v1842
    %v2686 = vsel %vm2648, %v2621, %v1844
    %v2687 = vsel %vm2648, %v2622, %v1846
    %v2688 = vsel %vm2648, %v2623, %v1848
    %v2689 = vsel %vm2648, %v2624, %v1850
    %v2690 = vsel %vm2648, %v2625, %v1852
    %v2691 = vsel %vm2648, %v2626, %v1854
    %v2692 = vsel %vm2648, %v2627, %v1856
    %v2693 = vsel %vm2648, %v2628, %v1858
    %v2694 = vsel %vm2648, %v2629, %v1860
    %v2695 = vsel %vm2648, %v2630, %v1862
    %v2696 = vsel %vm2648, %v2631, %v1864
    %v2697 = vsel %vm2648, %v2632, %v1866
    %v2698 = vsel %vm2648, %v2633, %v1868
    %v2699 = vsel %vm2648, %v2634, %v1870
    %v2700 = vsel %vm2648, %v2635, %v1872
    %v2701 = vsel %vm2648, %v2636, %v1874
    %v2702 = vsel %vm2648, %v2637, %v1876
    %v2703 = vsel %vm2648, %v2638, %v1878
    %v2704 = vsel %vm2648, %v2639, %v1880
    %v2705 = vsel %vm2648, %v2640, %v1882
    %v2706 = vsel %vm2648, %v2641, %v1884
    %v2707 = vsel %vm2648, %v2642, %v1886
    %v2708 = vsel %vm2648, %v2643, %v1888
    %v2709 = vsel %vm2648, %v2644, %v1890
    %v2710 = vsel %vm2648, %v2645, %v1892
    %v2711 = vsel %vm2648, %v2646, %v1830
    %v2712 = vsel %vm2648, %v2647, %v1832
    %vm2713 = vcmask 56320
    %v2714 = vsel %vm2713, %v2649, %v1956
    %v2715 = vsel %vm2713, %v2650, %v1958
    %v2716 = vsel %vm2713, %v2651, %v1960
    %v2717 = vsel %vm2713, %v2652, %v1962
    %v2718 = vsel %vm2713, %v2653, %v1964
    %v2719 = vsel %vm2713, %v2654, %v1966
    %v2720 = vsel %vm2713, %v2655, %v1968
    %v2721 = vsel %vm2713, %v2656, %v1970
    %v2722 = vsel %vm2713, %v2657, %v1972
    %v2723 = vsel %vm2713, %v2658, %v1974
    %v2724 = vsel %vm2713, %v2659, %v1976
    %v2725 = vsel %vm2713, %v2660, %v1978
    %v2726 = vsel %vm2713, %v2661, %v1980
    %v2727 = vsel %vm2713, %v2662, %v1982
    %v2728 = vsel %vm2713, %v2663, %v1984
    %v2729 = vsel %vm2713, %v2664, %v1986
    %v2730 = vsel %vm2713, %v2665, %v1988
    %v2731 = vsel %vm2713, %v2666, %v1990
    %v2732 = vsel %vm2713, %v2667, %v1992
    %v2733 = vsel %vm2713, %v2668, %v1994
    %v2734 = vsel %vm2713, %v2669, %v1996
    %v2735 = vsel %vm2713, %v2670, %v1998
    %v2736 = vsel %vm2713, %v2671, %v2000
    %v2737 = vsel %vm2713, %v2672, %v2002
    %v2738 = vsel %vm2713, %v2673, %v2004
    %v2739 = vsel %vm2713, %v2674, %v2006
    %v2740 = vsel %vm2713, %v2675, %v2008
    %v2741 = vsel %vm2713, %v2676, %v2010
    %v2742 = vsel %vm2713, %v2677, %v2012
    %v2743 = vsel %vm2713, %v2678, %v2014
    %v2744 = vsel %vm2713, %v2679, %v2016
    %v2745 = vsel %vm2713, %v2680, %v2018
    %v2746 = vsel %vm2713, %v2681, %v2020
    %v2747 = vsel %vm2713, %v2682, %v2022
    %v2748 = vsel %vm2713, %v2683, %v2024
    %v2749 = vsel %vm2713, %v2684, %v2026
    %v2750 = vsel %vm2713, %v2685, %v2028
    %v2751 = vsel %vm2713, %v2686, %v2030
    %v2752 = vsel %vm2713, %v2687, %v2032
    %v2753 = vsel %vm2713, %v2688, %v2034
    %v2754 = vsel %vm2713, %v2689, %v2036
    %v2755 = vsel %vm2713, %v2690, %v2038
    %v2756 = vsel %vm2713, %v2691, %v2040
    %v2757 = vsel %vm2713, %v2692, %v2042
    %v2758 = vsel %vm2713, %v2693, %v2044
    %v2759 = vsel %vm2713, %v2694, %v2046
    %v2760 = vsel %vm2713, %v2695, %v2048
    %v2761 = vsel %vm2713, %v2696, %v2050
    %v2762 = vsel %vm2713, %v2697, %v2052
    %v2763 = vsel %vm2713, %v2698, %v2054
    %v2764 = vsel %vm2713, %v2699, %v2056
    %v2765 = vsel %vm2713, %v2700, %v2058
    %v2766 = vsel %vm2713, %v2701, %v2060
    %v2767 = vsel %vm2713, %v2702, %v2062
    %v2768 = vsel %vm2713, %v2703, %v2064
    %v2769 = vsel %vm2713, %v2704, %v2066
    %v2770 = vsel %vm2713, %v2705, %v2068
    %v2771 = vsel %vm2713, %v2706, %v2070
    %v2772 = vsel %vm2713, %v2707, %v2072
    %v2773 = vsel %vm2713, %v2708, %v2074
    %v2774 = vsel %vm2713, %v2709, %v2076
    %v2775 = vsel %vm2713, %v2710, %v2078
    %v2776 = vsel %vm2713, %v2711, %v2016
    %v2777 = vsel %vm2713, %v2712, %v2018
    %vm2778 = vcmask 64512
    %v2779 = vsel %vm2778, %v2714, %v2142
    %v2780 = vsel %vm2778, %v2715, %v2144
    %v2781 = vsel %vm2778, %v2716, %v2146
    %v2782 = vsel %vm2778, %v2717, %v2148
    %v2783 = vsel %vm2778, %v2718, %v2150
    %v2784 = vsel %vm2778, %v2719, %v2152
    %v2785 = vsel %vm2778, %v2720, %v2154
    %v2786 = vsel %vm2778, %v2721, %v2156
    %v2787 = vsel %vm2778, %v2722, %v2158
    %v2788 = vsel %vm2778, %v2723, %v2160
    %v2789 = vsel %vm2778, %v2724, %v2162
    %v2790 = vsel %vm2778, %v2725, %v2164
    %v2791 = vsel %vm2778, %v2726, %v2166
    %v2792 = vsel %vm2778, %v2727, %v2168
    %v2793 = vsel %vm2778, %v2728, %v2170
    %v2794 = vsel %vm2778, %v2729, %v2172
    %v2795 = vsel %vm2778, %v2730, %v2174
    %v2796 = vsel %vm2778, %v2731, %v2176
    %v2797 = vsel %vm2778, %v2732, %v2178
    %v2798 = vsel %vm2778, %v2733, %v2180
    %v2799 = vsel %vm2778, %v2734, %v2182
    %v2800 = vsel %vm2778, %v2735, %v2184
    %v2801 = vsel %vm2778, %v2736, %v2186
    %v2802 = vsel %vm2778, %v2737, %v2188
    %v2803 = vsel %vm2778, %v2738, %v2190
    %v2804 = vsel %vm2778, %v2739, %v2192
    %v2805 = vsel %vm2778, %v2740, %v2194
    %v2806 = vsel %vm2778, %v2741, %v2196
    %v2807 = vsel %vm2778, %v2742, %v2198
    %v2808 = vsel %vm2778, %v2743, %v2200
    %v2809 = vsel %vm2778, %v2744, %v2202
    %v2810 = vsel %vm2778, %v2745, %v2204
    %v2811 = vsel %vm2778, %v2746, %v2206
    %v2812 = vsel %vm2778, %v2747, %v2208
    %v2813 = vsel %vm2778, %v2748, %v2210
    %v2814 = vsel %vm2778, %v2749, %v2212
    %v2815 = vsel %vm2778, %v2750, %v2214
    %v2816 = vsel %vm2778, %v2751, %v2216
    %v2817 = vsel %vm2778, %v2752, %v2218
    %v2818 = vsel %vm2778, %v2753, %v2220
    %v2819 = vsel %vm2778, %v2754, %v2222
    %v2820 = vsel %vm2778, %v2755, %v2224
    %v2821 = vsel %vm2778, %v2756, %v2226
    %v2822 = vsel %vm2778, %v2757, %v2228
    %v2823 = vsel %vm2778, %v2758, %v2230
    %v2824 = vsel %vm2778, %v2759, %v2232
    %v2825 = vsel %vm2778, %v2760, %v2234
    %v2826 = vsel %vm2778, %v2761, %v2236
    %v2827 = vsel %vm2778, %v2762, %v2238
    %v2828 = vsel %vm2778, %v2763, %v2240
    %v2829 = vsel %vm2778, %v2764, %v2242
    %v2830 = vsel %vm2778, %v2765, %v2244
    %v2831 = vsel %vm2778, %v2766, %v2246
    %v2832 = vsel %vm2778, %v2767, %v2248
    %v2833 = vsel %vm2778, %v2768, %v2250
    %v2834 = vsel %vm2778, %v2769, %v2252
    %v2835 = vsel %vm2778, %v2770, %v2254
    %v2836 = vsel %vm2778, %v2771, %v2256
    %v2837 = vsel %vm2778, %v2772, %v2258
    %v2838 = vsel %vm2778, %v2773, %v2260
    %v2839 = vsel %vm2778, %v2774, %v2262
    %v2840 = vsel %vm2778, %v2775, %v2264
    %v2841 = vsel %vm2778, %v2776, %v2202
    %v2842 = vsel %vm2778, %v2777, %v2204
    %v2843 = vld [vmem:[%s1] sm:$0xff]
    %v2844 = vld [vmem:[%s1 + $0x8] sm:$0x1]
    %v2845 = vld [vmem:[%s2] sm:$0x1]
    %v2847 = vlaneseq
    %v2848 = vshrl.u32 %v2847, 7
    %v2849 = vsub.s32 0, %v2848
    %v2850 = vrot.slane %v2845, %v2849
    %vm2852 = vcmask 72704
    %v2854 = vsel %vm2852, %v2779, 0
    %v2857 = vsel %vm2852, %v2780, 0
    %v2860 = vsel %vm2852, %v2781, 0
    %v2863 = vsel %vm2852, %v2782, 0
    %v2866 = vsel %vm2852, %v2783, 0
    %v2869 = vsel %vm2852, %v2784, 0
    %v2872 = vsel %vm2852, %v2785, 0
    %v2875 = vsel %vm2852, %v2786, 0
    %v2878 = vsel %vm2852, %v2787, 0
    %v2881 = vsel %vm2852, %v2788, 0
    %v2884 = vsel %vm2852, %v2789, 0
    %v2887 = vsel %vm2852, %v2790, 0
    %v2890 = vsel %vm2852, %v2791, 0
    %v2893 = vsel %vm2852, %v2792, 0
    %v2896 = vsel %vm2852, %v2793, 0
    %v2899 = vsel %vm2852, %v2794, 0
    %v2902 = vsel %vm2852, %v2795, 0
    %v2905 = vsel %vm2852, %v2796, 0
    %v2908 = vsel %vm2852, %v2797, 0
    %v2911 = vsel %vm2852, %v2798, 0
    %v2914 = vsel %vm2852, %v2799, 0
    %v2917 = vsel %vm2852, %v2800, 0
    %v2920 = vsel %vm2852, %v2801, 0
    %v2923 = vsel %vm2852, %v2802, 0
    %v2926 = vsel %vm2852, %v2803, 0
    %v2929 = vsel %vm2852, %v2804, 0
    %v2932 = vsel %vm2852, %v2805, 0
    %v2935 = vsel %vm2852, %v2806, 0
    %v2938 = vsel %vm2852, %v2807, 0
    %v2941 = vsel %vm2852, %v2808, 0
    %v2944 = vsel %vm2852, %v2809, 0
    %v2947 = vsel %vm2852, %v2810, 0
    %v2950 = vsel %vm2852, %v2811, 0
    %v2953 = vsel %vm2852, %v2812, 0
    %v2956 = vsel %vm2852, %v2813, 0
    %v2959 = vsel %vm2852, %v2814, 0
    %v2962 = vsel %vm2852, %v2815, 0
    %v2965 = vsel %vm2852, %v2816, 0
    %v2968 = vsel %vm2852, %v2817, 0
    %v2971 = vsel %vm2852, %v2818, 0
    %v2974 = vsel %vm2852, %v2819, 0
    %v2977 = vsel %vm2852, %v2820, 0
    %v2980 = vsel %vm2852, %v2821, 0
    %v2983 = vsel %vm2852, %v2822, 0
    %v2986 = vsel %vm2852, %v2823, 0
    %v2989 = vsel %vm2852, %v2824, 0
    %v2992 = vsel %vm2852, %v2825, 0
    %v2995 = vsel %vm2852, %v2826, 0
    %v2998 = vsel %vm2852, %v2827, 0
    %v3001 = vsel %vm2852, %v2828, 0
    %v3004 = vsel %vm2852, %v2829, 0
    %v3007 = vsel %vm2852, %v2830, 0
    %v3010 = vsel %vm2852, %v2831, 0
    %v3013 = vsel %vm2852, %v2832, 0
    %v3016 = vsel %vm2852, %v2833, 0
    %v3019 = vsel %vm2852, %v2834, 0
    %v3022 = vsel %vm2852, %v2835, 0
    %v3025 = vsel %vm2852, %v2836, 0
    %v3028 = vsel %vm2852, %v2837, 0
    %v3031 = vsel %vm2852, %v2838, 0
    %v3034 = vsel %vm2852, %v2839, 0
    %v3037 = vsel %vm2852, %v2840, 0
    %v3040 = vsel %vm2852, %v2841, 0
    %v3043 = vsel %vm2852, %v2842, 0
    %v3046 = vsel %vm162, %v2844, 0
    %3048 = vmatprep.subr.mxu0 0.0
    %3049 = vmatpush1.msra.mxu0 0.0
    %3050 = vmatprep.subr.mxu0 0.0
    %3051 = vmatpush1.msra.mxu0 0.0
    %3052 = vmatprep.subr.mxu0 0.0
    %3053 = vmatpush1.msra.mxu0 0.0
    %3054 = vmatprep.subr.mxu0 0.0
    %3055 = vmatpush1.msra.mxu0 0.0
    %3056 = vmatprep.subr.mxu0 0.0
    %3057 = vmatpush1.msra.mxu0 0.0
    %3058 = vmatprep.subr.mxu0 0.0
    %3059 = vmatpush1.msra.mxu0 0.0
    %3060 = vmatprep.subr.mxu0 0.0
    %3061 = vmatpush1.msra.mxu0 0.0
    %3062 = vmatprep.subr.mxu0 0.0
    %3063 = vmatpush1.msra.mxu0 0.0
    %3064 = vmatprep.subr.mxu0 0.0
    %3065 = vmatpush1.msra.mxu0 0.0
    %3066 = vmatprep.subr.mxu0 0.0
    %3067 = vmatpush1.msra.mxu0 0.0
    %3068 = vmatprep.subr.mxu0 0.0
    %3069 = vmatpush1.msra.mxu0 0.0
    %3070 = vmatprep.subr.mxu0 0.0
    %3071 = vmatpush1.msra.mxu0 0.0
    %3072 = vmatprep.subr.mxu0 0.0
    %3073 = vmatpush1.msra.mxu0 0.0
    %3074 = vmatprep.subr.mxu0 0.0
    %3075 = vmatpush1.msra.mxu0 0.0
    %3076 = vmatprep.subr.mxu0 0.0
    %3077 = vmatpush1.msra.mxu0 %v3046
    %3078 = vmatprep.subr.mxu0 0.0
    %3079 = vmatpush1.msra.mxu0 %v2843
    %3080 = vmatprep.subr.mxu0 0.0
    %3081 = vmatpush2.msra.mxu0 0.0
    %3082 = vmatprep.subr.mxu0 0.0
    %3083 = vmatpush2.msra.mxu0 0.0
    %3084 = vmatprep.subr.mxu0 0.0
    %3085 = vmatpush2.msra.mxu0 0.0
    %3086 = vmatprep.subr.mxu0 0.0
    %3087 = vmatpush2.msra.mxu0 0.0
    %3088 = vmatprep.subr.mxu0 0.0
    %3089 = vmatpush2.msra.mxu0 0.0
    %3090 = vmatprep.subr.mxu0 0.0
    %3091 = vmatpush2.msra.mxu0 0.0
    %3092 = vmatprep.subr.mxu0 0.0
    %3093 = vmatpush2.msra.mxu0 0.0
    %3094 = vmatprep.subr.mxu0 0.0
    %3095 = vmatpush2.msra.mxu0 0.0
    %3096 = vmatprep.subr.mxu0 0.0
    %3097 = vmatpush2.msra.mxu0 0.0
    %3098 = vmatprep.subr.mxu0 0.0
    %3099 = vmatpush2.msra.mxu0 0.0
    %3100 = vmatprep.subr.mxu0 0.0
    %3101 = vmatpush2.msra.mxu0 0.0
    %3102 = vmatprep.subr.mxu0 0.0
    %3103 = vmatpush2.msra.mxu0 0.0
    %3104 = vmatprep.subr.mxu0 0.0
    %3105 = vmatpush2.msra.mxu0 0.0
    %3106 = vmatprep.subr.mxu0 0.0
    %3107 = vmatpush2.msra.mxu0 0.0
    %3108 = vmatprep.subr.mxu0 0.0
    %3109 = vmatpush2.msra.mxu0 0.0
    %3110 = vmatprep.subr.mxu0 0.0
    %3111 = vmatpush2.msra.mxu0 0.0
    %3112 = vmatprep.mubr.f32.mxu0 0.0
    %3113 = vmatmul.mubr.f32.gmra.mxu0 %v2854
    %v3114 = vpop.f32.mrf.mxu0
    %v3115 = vadd.f32 %v2850, %v3114
    %v3116 = vpop.f32.mrf.mxu0
    %3117 = vmatprep.mubr.f32.mxu0 0.0
    %3118 = vmatmul.mubr.f32.gmra.mxu0 %v2857
    %v3119 = vpop.f32.mrf.mxu0
    %v3120 = vadd.f32 %v2850, %v3119
    %v3121 = vpop.f32.mrf.mxu0
    %3122 = vmatprep.mubr.f32.mxu0 0.0
    %3123 = vmatmul.mubr.f32.gmra.mxu0 %v2860
    %v3124 = vpop.f32.mrf.mxu0
    %v3125 = vadd.f32 %v2850, %v3124
    %v3126 = vpop.f32.mrf.mxu0
    %3127 = vmatprep.mubr.f32.mxu0 0.0
    %3128 = vmatmul.mubr.f32.gmra.mxu0 %v2863
    %v3129 = vpop.f32.mrf.mxu0
    %v3130 = vadd.f32 %v2850, %v3129
    %v3131 = vpop.f32.mrf.mxu0
    %3132 = vmatprep.mubr.f32.mxu0 0.0
    %3133 = vmatmul.mubr.f32.gmra.mxu0 %v2866
    %v3134 = vpop.f32.mrf.mxu0
    %v3135 = vadd.f32 %v2850, %v3134
    %v3136 = vpop.f32.mrf.mxu0
    %3137 = vmatprep.mubr.f32.mxu0 0.0
    %3138 = vmatmul.mubr.f32.gmra.mxu0 %v2869
    %v3139 = vpop.f32.mrf.mxu0
    %v3140 = vadd.f32 %v2850, %v3139
    %v3141 = vpop.f32.mrf.mxu0
    %3142 = vmatprep.mubr.f32.mxu0 0.0
    %3143 = vmatmul.mubr.f32.gmra.mxu0 %v2872
    %v3144 = vpop.f32.mrf.mxu0
    %v3145 = vadd.f32 %v2850, %v3144
    %v3146 = vpop.f32.mrf.mxu0
    %3147 = vmatprep.mubr.f32.mxu0 0.0
    %3148 = vmatmul.mubr.f32.gmra.mxu0 %v2875
    %v3149 = vpop.f32.mrf.mxu0
    %v3150 = vadd.f32 %v2850, %v3149
    %v3151 = vpop.f32.mrf.mxu0
    %3152 = vmatprep.mubr.f32.mxu0 0.0
    %3153 = vmatmul.mubr.f32.gmra.mxu0 %v2878
    %v3154 = vpop.f32.mrf.mxu0
    %v3155 = vadd.f32 %v2850, %v3154
    %v3156 = vpop.f32.mrf.mxu0
    %3157 = vmatprep.mubr.f32.mxu0 0.0
    %3158 = vmatmul.mubr.f32.gmra.mxu0 %v2881
    %v3159 = vpop.f32.mrf.mxu0
    %v3160 = vadd.f32 %v2850, %v3159
    %v3161 = vpop.f32.mrf.mxu0
    %3162 = vmatprep.mubr.f32.mxu0 0.0
    %3163 = vmatmul.mubr.f32.gmra.mxu0 %v2884
    %v3164 = vpop.f32.mrf.mxu0
    %v3165 = vadd.f32 %v2850, %v3164
    %v3166 = vpop.f32.mrf.mxu0
    %3167 = vmatprep.mubr.f32.mxu0 0.0
    %3168 = vmatmul.mubr.f32.gmra.mxu0 %v2887
    %v3169 = vpop.f32.mrf.mxu0
    %v3170 = vadd.f32 %v2850, %v3169
    %v3171 = vpop.f32.mrf.mxu0
    %3172 = vmatprep.mubr.f32.mxu0 0.0
    %3173 = vmatmul.mubr.f32.gmra.mxu0 %v2890
    %v3174 = vpop.f32.mrf.mxu0
    %v3175 = vadd.f32 %v2850, %v3174
    %v3176 = vpop.f32.mrf.mxu0
    %3177 = vmatprep.mubr.f32.mxu0 0.0
    %3178 = vmatmul.mubr.f32.gmra.mxu0 %v2893
    %v3179 = vpop.f32.mrf.mxu0
    %v3180 = vadd.f32 %v2850, %v3179
    %v3181 = vpop.f32.mrf.mxu0
    %3182 = vmatprep.mubr.f32.mxu0 0.0
    %3183 = vmatmul.mubr.f32.gmra.mxu0 %v2896
    %v3184 = vpop.f32.mrf.mxu0
    %v3185 = vadd.f32 %v2850, %v3184
    %v3186 = vpop.f32.mrf.mxu0
    %3187 = vmatprep.mubr.f32.mxu0 0.0
    %3188 = vmatmul.mubr.f32.gmra.mxu0 %v2899
    %v3189 = vpop.f32.mrf.mxu0
    %v3190 = vadd.f32 %v2850, %v3189
    %v3191 = vpop.f32.mrf.mxu0
    %3192 = vmatprep.mubr.f32.mxu0 0.0
    %3193 = vmatmul.mubr.f32.gmra.mxu0 %v2902
    %v3194 = vpop.f32.mrf.mxu0
    %v3195 = vadd.f32 %v2850, %v3194
    %v3196 = vpop.f32.mrf.mxu0
    %3197 = vmatprep.mubr.f32.mxu0 0.0
    %3198 = vmatmul.mubr.f32.gmra.mxu0 %v2905
    %v3199 = vpop.f32.mrf.mxu0
    %v3200 = vadd.f32 %v2850, %v3199
    %v3201 = vpop.f32.mrf.mxu0
    %3202 = vmatprep.mubr.f32.mxu0 0.0
    %3203 = vmatmul.mubr.f32.gmra.mxu0 %v2908
    %v3204 = vpop.f32.mrf.mxu0
    %v3205 = vadd.f32 %v2850, %v3204
    %v3206 = vpop.f32.mrf.mxu0
    %3207 = vmatprep.mubr.f32.mxu0 0.0
    %3208 = vmatmul.mubr.f32.gmra.mxu0 %v2911
    %v3209 = vpop.f32.mrf.mxu0
    %v3210 = vadd.f32 %v2850, %v3209
    %v3211 = vpop.f32.mrf.mxu0
    %3212 = vmatprep.mubr.f32.mxu0 0.0
    %3213 = vmatmul.mubr.f32.gmra.mxu0 %v2914
    %v3214 = vpop.f32.mrf.mxu0
    %v3215 = vadd.f32 %v2850, %v3214
    %v3216 = vpop.f32.mrf.mxu0
    %3217 = vmatprep.mubr.f32.mxu0 0.0
    %3218 = vmatmul.mubr.f32.gmra.mxu0 %v2917
    %v3219 = vpop.f32.mrf.mxu0
    %v3220 = vadd.f32 %v2850, %v3219
    %v3221 = vpop.f32.mrf.mxu0
    %3222 = vmatprep.mubr.f32.mxu0 0.0
    %3223 = vmatmul.mubr.f32.gmra.mxu0 %v2920
    %v3224 = vpop.f32.mrf.mxu0
    %v3225 = vadd.f32 %v2850, %v3224
    %v3226 = vpop.f32.mrf.mxu0
    %3227 = vmatprep.mubr.f32.mxu0 0.0
    %3228 = vmatmul.mubr.f32.gmra.mxu0 %v2923
    %v3229 = vpop.f32.mrf.mxu0
    %v3230 = vadd.f32 %v2850, %v3229
    %v3231 = vpop.f32.mrf.mxu0
    %3232 = vmatprep.mubr.f32.mxu0 0.0
    %3233 = vmatmul.mubr.f32.gmra.mxu0 %v2926
    %v3234 = vpop.f32.mrf.mxu0
    %v3235 = vadd.f32 %v2850, %v3234
    %v3236 = vpop.f32.mrf.mxu0
    %3237 = vmatprep.mubr.f32.mxu0 0.0
    %3238 = vmatmul.mubr.f32.gmra.mxu0 %v2929
    %v3239 = vpop.f32.mrf.mxu0
    %v3240 = vadd.f32 %v2850, %v3239
    %v3241 = vpop.f32.mrf.mxu0
    %3242 = vmatprep.mubr.f32.mxu0 0.0
    %3243 = vmatmul.mubr.f32.gmra.mxu0 %v2932
    %v3244 = vpop.f32.mrf.mxu0
    %v3245 = vadd.f32 %v2850, %v3244
    %v3246 = vpop.f32.mrf.mxu0
    %3247 = vmatprep.mubr.f32.mxu0 0.0
    %3248 = vmatmul.mubr.f32.gmra.mxu0 %v2935
    %v3249 = vpop.f32.mrf.mxu0
    %v3250 = vadd.f32 %v2850, %v3249
    %v3251 = vpop.f32.mrf.mxu0
    %3252 = vmatprep.mubr.f32.mxu0 0.0
    %3253 = vmatmul.mubr.f32.gmra.mxu0 %v2938
    %v3254 = vpop.f32.mrf.mxu0
    %v3255 = vadd.f32 %v2850, %v3254
    %v3256 = vpop.f32.mrf.mxu0
    %3257 = vmatprep.mubr.f32.mxu0 0.0
    %3258 = vmatmul.mubr.f32.gmra.mxu0 %v2941
    %v3259 = vpop.f32.mrf.mxu0
    %v3260 = vadd.f32 %v2850, %v3259
    %v3261 = vpop.f32.mrf.mxu0
    %3262 = vmatprep.mubr.f32.mxu0 0.0
    %3263 = vmatmul.mubr.f32.gmra.mxu0 %v2944
    %v3264 = vpop.f32.mrf.mxu0
    %v3265 = vadd.f32 %v2850, %v3264
    %v3266 = vpop.f32.mrf.mxu0
    %3267 = vmatprep.mubr.f32.mxu0 0.0
    %3268 = vmatmul.mubr.f32.gmra.mxu0 %v2947
    %v3269 = vpop.f32.mrf.mxu0
    %v3270 = vadd.f32 %v2850, %v3269
    %v3271 = vpop.f32.mrf.mxu0
    %3272 = vmatprep.mubr.f32.mxu0 0.0
    %3273 = vmatmul.mubr.f32.gmra.mxu0 %v2950
    %v3274 = vpop.f32.mrf.mxu0
    %v3275 = vadd.f32 %v2850, %v3274
    %v3276 = vpop.f32.mrf.mxu0
    %3277 = vmatprep.mubr.f32.mxu0 0.0
    %3278 = vmatmul.mubr.f32.gmra.mxu0 %v2953
    %v3279 = vpop.f32.mrf.mxu0
    %v3280 = vadd.f32 %v2850, %v3279
    %v3281 = vpop.f32.mrf.mxu0
    %3282 = vmatprep.mubr.f32.mxu0 0.0
    %3283 = vmatmul.mubr.f32.gmra.mxu0 %v2956
    %v3284 = vpop.f32.mrf.mxu0
    %v3285 = vadd.f32 %v2850, %v3284
    %v3286 = vpop.f32.mrf.mxu0
    %3287 = vmatprep.mubr.f32.mxu0 0.0
    %3288 = vmatmul.mubr.f32.gmra.mxu0 %v2959
    %v3289 = vpop.f32.mrf.mxu0
    %v3290 = vadd.f32 %v2850, %v3289
    %v3291 = vpop.f32.mrf.mxu0
    %3292 = vmatprep.mubr.f32.mxu0 0.0
    %3293 = vmatmul.mubr.f32.gmra.mxu0 %v2962
    %v3294 = vpop.f32.mrf.mxu0
    %v3295 = vadd.f32 %v2850, %v3294
    %v3296 = vpop.f32.mrf.mxu0
    %3297 = vmatprep.mubr.f32.mxu0 0.0
    %3298 = vmatmul.mubr.f32.gmra.mxu0 %v2965
    %v3299 = vpop.f32.mrf.mxu0
    %v3300 = vadd.f32 %v2850, %v3299
    %v3301 = vpop.f32.mrf.mxu0
    %3302 = vmatprep.mubr.f32.mxu0 0.0
    %3303 = vmatmul.mubr.f32.gmra.mxu0 %v2968
    %v3304 = vpop.f32.mrf.mxu0
    %v3305 = vadd.f32 %v2850, %v3304
    %v3306 = vpop.f32.mrf.mxu0
    %3307 = vmatprep.mubr.f32.mxu0 0.0
    %3308 = vmatmul.mubr.f32.gmra.mxu0 %v2971
    %v3309 = vpop.f32.mrf.mxu0
    %v3310 = vadd.f32 %v2850, %v3309
    %v3311 = vpop.f32.mrf.mxu0
    %3312 = vmatprep.mubr.f32.mxu0 0.0
    %3313 = vmatmul.mubr.f32.gmra.mxu0 %v2974
    %v3314 = vpop.f32.mrf.mxu0
    %v3315 = vadd.f32 %v2850, %v3314
    %v3316 = vpop.f32.mrf.mxu0
    %3317 = vmatprep.mubr.f32.mxu0 0.0
    %3318 = vmatmul.mubr.f32.gmra.mxu0 %v2977
    %v3319 = vpop.f32.mrf.mxu0
    %v3320 = vadd.f32 %v2850, %v3319
    %v3321 = vpop.f32.mrf.mxu0
    %3322 = vmatprep.mubr.f32.mxu0 0.0
    %3323 = vmatmul.mubr.f32.gmra.mxu0 %v2980
    %v3324 = vpop.f32.mrf.mxu0
    %v3325 = vadd.f32 %v2850, %v3324
    %v3326 = vpop.f32.mrf.mxu0
    %3327 = vmatprep.mubr.f32.mxu0 0.0
    %3328 = vmatmul.mubr.f32.gmra.mxu0 %v2983
    %v3329 = vpop.f32.mrf.mxu0
    %v3330 = vadd.f32 %v2850, %v3329
    %v3331 = vpop.f32.mrf.mxu0
    %3332 = vmatprep.mubr.f32.mxu0 0.0
    %3333 = vmatmul.mubr.f32.gmra.mxu0 %v2986
    %v3334 = vpop.f32.mrf.mxu0
    %v3335 = vadd.f32 %v2850, %v3334
    %v3336 = vpop.f32.mrf.mxu0
    %3337 = vmatprep.mubr.f32.mxu0 0.0
    %3338 = vmatmul.mubr.f32.gmra.mxu0 %v2989
    %v3339 = vpop.f32.mrf.mxu0
    %v3340 = vadd.f32 %v2850, %v3339
    %v3341 = vpop.f32.mrf.mxu0
    %3342 = vmatprep.mubr.f32.mxu0 0.0
    %3343 = vmatmul.mubr.f32.gmra.mxu0 %v2992
    %v3344 = vpop.f32.mrf.mxu0
    %v3345 = vadd.f32 %v2850, %v3344
    %v3346 = vpop.f32.mrf.mxu0
    %3347 = vmatprep.mubr.f32.mxu0 0.0
    %3348 = vmatmul.mubr.f32.gmra.mxu0 %v2995
    %v3349 = vpop.f32.mrf.mxu0
    %v3350 = vadd.f32 %v2850, %v3349
    %v3351 = vpop.f32.mrf.mxu0
    %3352 = vmatprep.mubr.f32.mxu0 0.0
    %3353 = vmatmul.mubr.f32.gmra.mxu0 %v2998
    %v3354 = vpop.f32.mrf.mxu0
    %v3355 = vadd.f32 %v2850, %v3354
    %v3356 = vpop.f32.mrf.mxu0
    %3357 = vmatprep.mubr.f32.mxu0 0.0
    %3358 = vmatmul.mubr.f32.gmra.mxu0 %v3001
    %v3359 = vpop.f32.mrf.mxu0
    %v3360 = vadd.f32 %v2850, %v3359
    %v3361 = vpop.f32.mrf.mxu0
    %3362 = vmatprep.mubr.f32.mxu0 0.0
    %3363 = vmatmul.mubr.f32.gmra.mxu0 %v3004
    %v3364 = vpop.f32.mrf.mxu0
    %v3365 = vadd.f32 %v2850, %v3364
    %v3366 = vpop.f32.mrf.mxu0
    %3367 = vmatprep.mubr.f32.mxu0 0.0
    %3368 = vmatmul.mubr.f32.gmra.mxu0 %v3007
    %v3369 = vpop.f32.mrf.mxu0
    %v3370 = vadd.f32 %v2850, %v3369
    %v3371 = vpop.f32.mrf.mxu0
    %3372 = vmatprep.mubr.f32.mxu0 0.0
    %3373 = vmatmul.mubr.f32.gmra.mxu0 %v3010
    %v3374 = vpop.f32.mrf.mxu0
    %v3375 = vadd.f32 %v2850, %v3374
    %v3376 = vpop.f32.mrf.mxu0
    %3377 = vmatprep.mubr.f32.mxu0 0.0
    %3378 = vmatmul.mubr.f32.gmra.mxu0 %v3013
    %v3379 = vpop.f32.mrf.mxu0
    %v3380 = vadd.f32 %v2850, %v3379
    %v3381 = vpop.f32.mrf.mxu0
    %3382 = vmatprep.mubr.f32.mxu0 0.0
    %3383 = vmatmul.mubr.f32.gmra.mxu0 %v3016
    %v3384 = vpop.f32.mrf.mxu0
    %v3385 = vadd.f32 %v2850, %v3384
    %v3386 = vpop.f32.mrf.mxu0
    %3387 = vmatprep.mubr.f32.mxu0 0.0
    %3388 = vmatmul.mubr.f32.gmra.mxu0 %v3019
    %v3389 = vpop.f32.mrf.mxu0
    %v3390 = vadd.f32 %v2850, %v3389
    %v3391 = vpop.f32.mrf.mxu0
    %3392 = vmatprep.mubr.f32.mxu0 0.0
    %3393 = vmatmul.mubr.f32.gmra.mxu0 %v3022
    %v3394 = vpop.f32.mrf.mxu0
    %v3395 = vadd.f32 %v2850, %v3394
    %v3396 = vpop.f32.mrf.mxu0
    %3397 = vmatprep.mubr.f32.mxu0 0.0
    %3398 = vmatmul.mubr.f32.gmra.mxu0 %v3025
    %v3399 = vpop.f32.mrf.mxu0
    %v3400 = vadd.f32 %v2850, %v3399
    %v3401 = vpop.f32.mrf.mxu0
    %3402 = vmatprep.mubr.f32.mxu0 0.0
    %3403 = vmatmul.mubr.f32.gmra.mxu0 %v3028
    %v3404 = vpop.f32.mrf.mxu0
    %v3405 = vadd.f32 %v2850, %v3404
    %v3406 = vpop.f32.mrf.mxu0
    %3407 = vmatprep.mubr.f32.mxu0 0.0
    %3408 = vmatmul.mubr.f32.gmra.mxu0 %v3031
    %v3409 = vpop.f32.mrf.mxu0
    %v3410 = vadd.f32 %v2850, %v3409
    %v3411 = vpop.f32.mrf.mxu0
    %3412 = vmatprep.mubr.f32.mxu0 0.0
    %3413 = vmatmul.mubr.f32.gmra.mxu0 %v3034
    %v3414 = vpop.f32.mrf.mxu0
    %v3415 = vadd.f32 %v2850, %v3414
    %v3416 = vpop.f32.mrf.mxu0
    %3417 = vmatprep.mubr.f32.mxu0 0.0
    %3418 = vmatmul.mubr.f32.gmra.mxu0 %v3037
    %v3419 = vpop.f32.mrf.mxu0
    %v3420 = vadd.f32 %v2850, %v3419
    %v3421 = vpop.f32.mrf.mxu0
    %3422 = vmatprep.mubr.f32.mxu0 0.0
    %3423 = vmatmul.mubr.f32.gmra.mxu0 %v3040
    %v3424 = vpop.f32.mrf.mxu0
    %v3425 = vadd.f32 %v2850, %v3424
    %v3426 = vpop.f32.mrf.mxu0
    %3427 = vmatprep.mubr.f32.mxu0 0.0
    %3428 = vmatmul.mubr.f32.gmra.mxu0 %v3043
    %v3429 = vpop.f32.mrf.mxu0
    %v3430 = vadd.f32 %v2850, %v3429
    %v3431 = vpop.f32.mrf.mxu0
    %3432 = vdwg.mxu0
    %v3433 = vmax.f32 %v3115, 0.0
    %v3434 = vmax.f32 %v3120, 0.0
    %v3435 = vmax.f32 %v3125, 0.0
    %v3436 = vmax.f32 %v3130, 0.0
    %v3437 = vmax.f32 %v3135, 0.0
    %v3438 = vmax.f32 %v3140, 0.0
    %v3439 = vmax.f32 %v3145, 0.0
    %v3440 = vmax.f32 %v3150, 0.0
    %v3441 = vmax.f32 %v3155, 0.0
    %v3442 = vmax.f32 %v3160, 0.0
    %v3443 = vmax.f32 %v3165, 0.0
    %v3444 = vmax.f32 %v3170, 0.0
    %v3445 = vmax.f32 %v3175, 0.0
    %v3446 = vmax.f32 %v3180, 0.0
    %v3447 = vmax.f32 %v3185, 0.0
    %v3448 = vmax.f32 %v3190, 0.0
    %v3449 = vmax.f32 %v3195, 0.0
    %v3450 = vmax.f32 %v3200, 0.0
    %v3451 = vmax.f32 %v3205, 0.0
    %v3452 = vmax.f32 %v3210, 0.0
    %v3453 = vmax.f32 %v3215, 0.0
    %v3454 = vmax.f32 %v3220, 0.0
    %v3455 = vmax.f32 %v3225, 0.0
    %v3456 = vmax.f32 %v3230, 0.0
    %v3457 = vmax.f32 %v3235, 0.0
    %v3458 = vmax.f32 %v3240, 0.0
    %v3459 = vmax.f32 %v3245, 0.0
    %v3460 = vmax.f32 %v3250, 0.0
    %v3461 = vmax.f32 %v3255, 0.0
    %v3462 = vmax.f32 %v3260, 0.0
    %v3463 = vmax.f32 %v3265, 0.0
    %v3464 = vmax.f32 %v3270, 0.0
    %v3465 = vmax.f32 %v3275, 0.0
    %v3466 = vmax.f32 %v3280, 0.0
    %v3467 = vmax.f32 %v3285, 0.0
    %v3468 = vmax.f32 %v3290, 0.0
    %v3469 = vmax.f32 %v3295, 0.0
    %v3470 = vmax.f32 %v3300, 0.0
    %v3471 = vmax.f32 %v3305, 0.0
    %v3472 = vmax.f32 %v3310, 0.0
    %v3473 = vmax.f32 %v3315, 0.0
    %v3474 = vmax.f32 %v3320, 0.0
    %v3475 = vmax.f32 %v3325, 0.0
    %v3476 = vmax.f32 %v3330, 0.0
    %v3477 = vmax.f32 %v3335, 0.0
    %v3478 = vmax.f32 %v3340, 0.0
    %v3479 = vmax.f32 %v3345, 0.0
    %v3480 = vmax.f32 %v3350, 0.0
    %v3481 = vmax.f32 %v3355, 0.0
    %v3482 = vmax.f32 %v3360, 0.0
    %v3483 = vmax.f32 %v3365, 0.0
    %v3484 = vmax.f32 %v3370, 0.0
    %v3485 = vmax.f32 %v3375, 0.0
    %v3486 = vmax.f32 %v3380, 0.0
    %v3487 = vmax.f32 %v3385, 0.0
    %v3488 = vmax.f32 %v3390, 0.0
    %v3489 = vmax.f32 %v3395, 0.0
    %v3490 = vmax.f32 %v3400, 0.0
    %v3491 = vmax.f32 %v3405, 0.0
    %v3492 = vmax.f32 %v3410, 0.0
    %v3493 = vmax.f32 %v3415, 0.0
    %v3494 = vmax.f32 %v3420, 0.0
    %v3495 = vmax.f32 %v3425, 0.0
    %v3496 = vmax.f32 %v3430, 0.0
    %v3561 = vcombine.high %v3433, %v3433
    %v3563 = vunpack.c.l.s4 1983009808
    %v3564 = vunpack.c.0.s8 %v3563
    %v3565 = vlaneseq
    %v3566 = vshrl.u32 %v3565, 7
    %v3567 = vsub.s32 %v3564, %v3566
    %v3568 = vrot.slane %v3433, %v3567
    %v3570 = vunpack.c.l.s4 1983009808
    %v3571 = vunpack.c.0.s8 %v3570
    %v3572 = vlaneseq
    %v3573 = vshrl.u32 %v3572, 7
    %v3574 = vsub.s32 %v3571, %v3573
    %v3575 = vrot.slane %v3561, %v3574
    %v3576 = vcombine.high %v3568, %v3568
    %v3577 = vcombine.high %v3575, %v3575
    %v3578 = vcombine.high %v3434, %v3434
    %v3580 = vunpack.c.l.s4 1983009808
    %v3581 = vunpack.c.0.s8 %v3580
    %v3582 = vlaneseq
    %v3583 = vshrl.u32 %v3582, 7
    %v3584 = vsub.s32 %v3581, %v3583
    %v3585 = vrot.slane %v3434, %v3584
    %v3587 = vunpack.c.l.s4 1983009808
    %v3588 = vunpack.c.0.s8 %v3587
    %v3589 = vlaneseq
    %v3590 = vshrl.u32 %v3589, 7
    %v3591 = vsub.s32 %v3588, %v3590
    %v3592 = vrot.slane %v3578, %v3591
    %v3593 = vcombine.high %v3585, %v3585
    %v3594 = vcombine.high %v3592, %v3592
    %v3595 = vcombine.high %v3435, %v3435
    %v3597 = vunpack.c.l.s4 1983009808
    %v3598 = vunpack.c.0.s8 %v3597
    %v3599 = vlaneseq
    %v3600 = vshrl.u32 %v3599, 7
    %v3601 = vsub.s32 %v3598, %v3600
    %v3602 = vrot.slane %v3435, %v3601
    %v3604 = vunpack.c.l.s4 1983009808
    %v3605 = vunpack.c.0.s8 %v3604
    %v3606 = vlaneseq
    %v3607 = vshrl.u32 %v3606, 7
    %v3608 = vsub.s32 %v3605, %v3607
    %v3609 = vrot.slane %v3595, %v3608
    %v3610 = vcombine.high %v3602, %v3602
    %v3611 = vcombine.high %v3609, %v3609
    %v3612 = vcombine.high %v3436, %v3436
    %v3614 = vunpack.c.l.s4 1983009808
    %v3615 = vunpack.c.0.s8 %v3614
    %v3616 = vlaneseq
    %v3617 = vshrl.u32 %v3616, 7
    %v3618 = vsub.s32 %v3615, %v3617
    %v3619 = vrot.slane %v3436, %v3618
    %v3621 = vunpack.c.l.s4 1983009808
    %v3622 = vunpack.c.0.s8 %v3621
    %v3623 = vlaneseq
    %v3624 = vshrl.u32 %v3623, 7
    %v3625 = vsub.s32 %v3622, %v3624
    %v3626 = vrot.slane %v3612, %v3625
    %v3627 = vcombine.high %v3619, %v3619
    %v3628 = vcombine.high %v3626, %v3626
    %v3629 = vcombine.high %v3437, %v3437
    %v3631 = vunpack.c.l.s4 1983009808
    %v3632 = vunpack.c.0.s8 %v3631
    %v3633 = vlaneseq
    %v3634 = vshrl.u32 %v3633, 7
    %v3635 = vsub.s32 %v3632, %v3634
    %v3636 = vrot.slane %v3437, %v3635
    %v3638 = vunpack.c.l.s4 1983009808
    %v3639 = vunpack.c.0.s8 %v3638
    %v3640 = vlaneseq
    %v3641 = vshrl.u32 %v3640, 7
    %v3642 = vsub.s32 %v3639, %v3641
    %v3643 = vrot.slane %v3629, %v3642
    %v3644 = vcombine.high %v3636, %v3636
    %v3645 = vcombine.high %v3643, %v3643
    %v3646 = vcombine.high %v3438, %v3438
    %v3648 = vunpack.c.l.s4 1983009808
    %v3649 = vunpack.c.0.s8 %v3648
    %v3650 = vlaneseq
    %v3651 = vshrl.u32 %v3650, 7
    %v3652 = vsub.s32 %v3649, %v3651
    %v3653 = vrot.slane %v3438, %v3652
    %v3655 = vunpack.c.l.s4 1983009808
    %v3656 = vunpack.c.0.s8 %v3655
    %v3657 = vlaneseq
    %v3658 = vshrl.u32 %v3657, 7
    %v3659 = vsub.s32 %v3656, %v3658
    %v3660 = vrot.slane %v3646, %v3659
    %v3661 = vcombine.high %v3653, %v3653
    %v3662 = vcombine.high %v3660, %v3660
    %v3663 = vcombine.high %v3439, %v3439
    %v3665 = vunpack.c.l.s4 1983009808
    %v3666 = vunpack.c.0.s8 %v3665
    %v3667 = vlaneseq
    %v3668 = vshrl.u32 %v3667, 7
    %v3669 = vsub.s32 %v3666, %v3668
    %v3670 = vrot.slane %v3439, %v3669
    %v3672 = vunpack.c.l.s4 1983009808
    %v3673 = vunpack.c.0.s8 %v3672
    %v3674 = vlaneseq
    %v3675 = vshrl.u32 %v3674, 7
    %v3676 = vsub.s32 %v3673, %v3675
    %v3677 = vrot.slane %v3663, %v3676
    %v3678 = vcombine.high %v3670, %v3670
    %v3679 = vcombine.high %v3677, %v3677
    %v3680 = vcombine.high %v3440, %v3440
    %v3682 = vunpack.c.l.s4 1983009808
    %v3683 = vunpack.c.0.s8 %v3682
    %v3684 = vlaneseq
    %v3685 = vshrl.u32 %v3684, 7
    %v3686 = vsub.s32 %v3683, %v3685
    %v3687 = vrot.slane %v3440, %v3686
    %v3689 = vunpack.c.l.s4 1983009808
    %v3690 = vunpack.c.0.s8 %v3689
    %v3691 = vlaneseq
    %v3692 = vshrl.u32 %v3691, 7
    %v3693 = vsub.s32 %v3690, %v3692
    %v3694 = vrot.slane %v3680, %v3693
    %v3695 = vcombine.high %v3687, %v3687
    %v3696 = vcombine.high %v3694, %v3694
    %v3697 = vcombine.high %v3441, %v3441
    %v3699 = vunpack.c.l.s4 1983009808
    %v3700 = vunpack.c.0.s8 %v3699
    %v3701 = vlaneseq
    %v3702 = vshrl.u32 %v3701, 7
    %v3703 = vsub.s32 %v3700, %v3702
    %v3704 = vrot.slane %v3441, %v3703
    %v3706 = vunpack.c.l.s4 1983009808
    %v3707 = vunpack.c.0.s8 %v3706
    %v3708 = vlaneseq
    %v3709 = vshrl.u32 %v3708, 7
    %v3710 = vsub.s32 %v3707, %v3709
    %v3711 = vrot.slane %v3697, %v3710
    %v3712 = vcombine.high %v3704, %v3704
    %v3713 = vcombine.high %v3711, %v3711
    %v3714 = vcombine.high %v3442, %v3442
    %v3716 = vunpack.c.l.s4 1983009808
    %v3717 = vunpack.c.0.s8 %v3716
    %v3718 = vlaneseq
    %v3719 = vshrl.u32 %v3718, 7
    %v3720 = vsub.s32 %v3717, %v3719
    %v3721 = vrot.slane %v3442, %v3720
    %v3723 = vunpack.c.l.s4 1983009808
    %v3724 = vunpack.c.0.s8 %v3723
    %v3725 = vlaneseq
    %v3726 = vshrl.u32 %v3725, 7
    %v3727 = vsub.s32 %v3724, %v3726
    %v3728 = vrot.slane %v3714, %v3727
    %v3729 = vcombine.high %v3721, %v3721
    %v3730 = vcombine.high %v3728, %v3728
    %v3731 = vcombine.high %v3443, %v3443
    %v3733 = vunpack.c.l.s4 1983009808
    %v3734 = vunpack.c.0.s8 %v3733
    %v3735 = vlaneseq
    %v3736 = vshrl.u32 %v3735, 7
    %v3737 = vsub.s32 %v3734, %v3736
    %v3738 = vrot.slane %v3443, %v3737
    %v3740 = vunpack.c.l.s4 1983009808
    %v3741 = vunpack.c.0.s8 %v3740
    %v3742 = vlaneseq
    %v3743 = vshrl.u32 %v3742, 7
    %v3744 = vsub.s32 %v3741, %v3743
    %v3745 = vrot.slane %v3731, %v3744
    %v3746 = vcombine.high %v3738, %v3738
    %v3747 = vcombine.high %v3745, %v3745
    %v3748 = vcombine.high %v3444, %v3444
    %v3750 = vunpack.c.l.s4 1983009808
    %v3751 = vunpack.c.0.s8 %v3750
    %v3752 = vlaneseq
    %v3753 = vshrl.u32 %v3752, 7
    %v3754 = vsub.s32 %v3751, %v3753
    %v3755 = vrot.slane %v3444, %v3754
    %v3757 = vunpack.c.l.s4 1983009808
    %v3758 = vunpack.c.0.s8 %v3757
    %v3759 = vlaneseq
    %v3760 = vshrl.u32 %v3759, 7
    %v3761 = vsub.s32 %v3758, %v3760
    %v3762 = vrot.slane %v3748, %v3761
    %v3763 = vcombine.high %v3755, %v3755
    %v3764 = vcombine.high %v3762, %v3762
    %v3765 = vcombine.high %v3445, %v3445
    %v3767 = vunpack.c.l.s4 1983009808
    %v3768 = vunpack.c.0.s8 %v3767
    %v3769 = vlaneseq
    %v3770 = vshrl.u32 %v3769, 7
    %v3771 = vsub.s32 %v3768, %v3770
    %v3772 = vrot.slane %v3445, %v3771
    %v3774 = vunpack.c.l.s4 1983009808
    %v3775 = vunpack.c.0.s8 %v3774
    %v3776 = vlaneseq
    %v3777 = vshrl.u32 %v3776, 7
    %v3778 = vsub.s32 %v3775, %v3777
    %v3779 = vrot.slane %v3765, %v3778
    %v3780 = vcombine.high %v3772, %v3772
    %v3781 = vcombine.high %v3779, %v3779
    %v3782 = vcombine.high %v3446, %v3446
    %v3784 = vunpack.c.l.s4 1983009808
    %v3785 = vunpack.c.0.s8 %v3784
    %v3786 = vlaneseq
    %v3787 = vshrl.u32 %v3786, 7
    %v3788 = vsub.s32 %v3785, %v3787
    %v3789 = vrot.slane %v3446, %v3788
    %v3791 = vunpack.c.l.s4 1983009808
    %v3792 = vunpack.c.0.s8 %v3791
    %v3793 = vlaneseq
    %v3794 = vshrl.u32 %v3793, 7
    %v3795 = vsub.s32 %v3792, %v3794
    %v3796 = vrot.slane %v3782, %v3795
    %v3797 = vcombine.high %v3789, %v3789
    %v3798 = vcombine.high %v3796, %v3796
    %v3799 = vcombine.high %v3447, %v3447
    %v3801 = vunpack.c.l.s4 1983009808
    %v3802 = vunpack.c.0.s8 %v3801
    %v3803 = vlaneseq
    %v3804 = vshrl.u32 %v3803, 7
    %v3805 = vsub.s32 %v3802, %v3804
    %v3806 = vrot.slane %v3447, %v3805
    %v3808 = vunpack.c.l.s4 1983009808
    %v3809 = vunpack.c.0.s8 %v3808
    %v3810 = vlaneseq
    %v3811 = vshrl.u32 %v3810, 7
    %v3812 = vsub.s32 %v3809, %v3811
    %v3813 = vrot.slane %v3799, %v3812
    %v3814 = vcombine.high %v3806, %v3806
    %v3815 = vcombine.high %v3813, %v3813
    %v3816 = vcombine.high %v3448, %v3448
    %v3818 = vunpack.c.l.s4 1983009808
    %v3819 = vunpack.c.0.s8 %v3818
    %v3820 = vlaneseq
    %v3821 = vshrl.u32 %v3820, 7
    %v3822 = vsub.s32 %v3819, %v3821
    %v3823 = vrot.slane %v3448, %v3822
    %v3825 = vunpack.c.l.s4 1983009808
    %v3826 = vunpack.c.0.s8 %v3825
    %v3827 = vlaneseq
    %v3828 = vshrl.u32 %v3827, 7
    %v3829 = vsub.s32 %v3826, %v3828
    %v3830 = vrot.slane %v3816, %v3829
    %v3831 = vcombine.high %v3823, %v3823
    %v3832 = vcombine.high %v3830, %v3830
    %v3833 = vcombine.high %v3449, %v3449
    %v3835 = vunpack.c.l.s4 1983009808
    %v3836 = vunpack.c.0.s8 %v3835
    %v3837 = vlaneseq
    %v3838 = vshrl.u32 %v3837, 7
    %v3839 = vsub.s32 %v3836, %v3838
    %v3840 = vrot.slane %v3449, %v3839
    %v3842 = vunpack.c.l.s4 1983009808
    %v3843 = vunpack.c.0.s8 %v3842
    %v3844 = vlaneseq
    %v3845 = vshrl.u32 %v3844, 7
    %v3846 = vsub.s32 %v3843, %v3845
    %v3847 = vrot.slane %v3833, %v3846
    %v3848 = vcombine.high %v3840, %v3840
    %v3849 = vcombine.high %v3847, %v3847
    %v3850 = vcombine.high %v3450, %v3450
    %v3852 = vunpack.c.l.s4 1983009808
    %v3853 = vunpack.c.0.s8 %v3852
    %v3854 = vlaneseq
    %v3855 = vshrl.u32 %v3854, 7
    %v3856 = vsub.s32 %v3853, %v3855
    %v3857 = vrot.slane %v3450, %v3856
    %v3859 = vunpack.c.l.s4 1983009808
    %v3860 = vunpack.c.0.s8 %v3859
    %v3861 = vlaneseq
    %v3862 = vshrl.u32 %v3861, 7
    %v3863 = vsub.s32 %v3860, %v3862
    %v3864 = vrot.slane %v3850, %v3863
    %v3865 = vcombine.high %v3857, %v3857
    %v3866 = vcombine.high %v3864, %v3864
    %v3867 = vcombine.high %v3451, %v3451
    %v3869 = vunpack.c.l.s4 1983009808
    %v3870 = vunpack.c.0.s8 %v3869
    %v3871 = vlaneseq
    %v3872 = vshrl.u32 %v3871, 7
    %v3873 = vsub.s32 %v3870, %v3872
    %v3874 = vrot.slane %v3451, %v3873
    %v3876 = vunpack.c.l.s4 1983009808
    %v3877 = vunpack.c.0.s8 %v3876
    %v3878 = vlaneseq
    %v3879 = vshrl.u32 %v3878, 7
    %v3880 = vsub.s32 %v3877, %v3879
    %v3881 = vrot.slane %v3867, %v3880
    %v3882 = vcombine.high %v3874, %v3874
    %v3883 = vcombine.high %v3881, %v3881
    %v3884 = vcombine.high %v3452, %v3452
    %v3886 = vunpack.c.l.s4 1983009808
    %v3887 = vunpack.c.0.s8 %v3886
    %v3888 = vlaneseq
    %v3889 = vshrl.u32 %v3888, 7
    %v3890 = vsub.s32 %v3887, %v3889
    %v3891 = vrot.slane %v3452, %v3890
    %v3893 = vunpack.c.l.s4 1983009808
    %v3894 = vunpack.c.0.s8 %v3893
    %v3895 = vlaneseq
    %v3896 = vshrl.u32 %v3895, 7
    %v3897 = vsub.s32 %v3894, %v3896
    %v3898 = vrot.slane %v3884, %v3897
    %v3899 = vcombine.high %v3891, %v3891
    %v3900 = vcombine.high %v3898, %v3898
    %v3901 = vcombine.high %v3453, %v3453
    %v3903 = vunpack.c.l.s4 1983009808
    %v3904 = vunpack.c.0.s8 %v3903
    %v3905 = vlaneseq
    %v3906 = vshrl.u32 %v3905, 7
    %v3907 = vsub.s32 %v3904, %v3906
    %v3908 = vrot.slane %v3453, %v3907
    %v3910 = vunpack.c.l.s4 1983009808
    %v3911 = vunpack.c.0.s8 %v3910
    %v3912 = vlaneseq
    %v3913 = vshrl.u32 %v3912, 7
    %v3914 = vsub.s32 %v3911, %v3913
    %v3915 = vrot.slane %v3901, %v3914
    %v3916 = vcombine.high %v3908, %v3908
    %v3917 = vcombine.high %v3915, %v3915
    %v3918 = vcombine.high %v3454, %v3454
    %v3920 = vunpack.c.l.s4 1983009808
    %v3921 = vunpack.c.0.s8 %v3920
    %v3922 = vlaneseq
    %v3923 = vshrl.u32 %v3922, 7
    %v3924 = vsub.s32 %v3921, %v3923
    %v3925 = vrot.slane %v3454, %v3924
    %v3927 = vunpack.c.l.s4 1983009808
    %v3928 = vunpack.c.0.s8 %v3927
    %v3929 = vlaneseq
    %v3930 = vshrl.u32 %v3929, 7
    %v3931 = vsub.s32 %v3928, %v3930
    %v3932 = vrot.slane %v3918, %v3931
    %v3933 = vcombine.high %v3925, %v3925
    %v3934 = vcombine.high %v3932, %v3932
    %v3935 = vcombine.high %v3455, %v3455
    %v3937 = vunpack.c.l.s4 1983009808
    %v3938 = vunpack.c.0.s8 %v3937
    %v3939 = vlaneseq
    %v3940 = vshrl.u32 %v3939, 7
    %v3941 = vsub.s32 %v3938, %v3940
    %v3942 = vrot.slane %v3455, %v3941
    %v3944 = vunpack.c.l.s4 1983009808
    %v3945 = vunpack.c.0.s8 %v3944
    %v3946 = vlaneseq
    %v3947 = vshrl.u32 %v3946, 7
    %v3948 = vsub.s32 %v3945, %v3947
    %v3949 = vrot.slane %v3935, %v3948
    %v3950 = vcombine.high %v3942, %v3942
    %v3951 = vcombine.high %v3949, %v3949
    %v3952 = vcombine.high %v3456, %v3456
    %v3954 = vunpack.c.l.s4 1983009808
    %v3955 = vunpack.c.0.s8 %v3954
    %v3956 = vlaneseq
    %v3957 = vshrl.u32 %v3956, 7
    %v3958 = vsub.s32 %v3955, %v3957
    %v3959 = vrot.slane %v3456, %v3958
    %v3961 = vunpack.c.l.s4 1983009808
    %v3962 = vunpack.c.0.s8 %v3961
    %v3963 = vlaneseq
    %v3964 = vshrl.u32 %v3963, 7
    %v3965 = vsub.s32 %v3962, %v3964
    %v3966 = vrot.slane %v3952, %v3965
    %v3967 = vcombine.high %v3959, %v3959
    %v3968 = vcombine.high %v3966, %v3966
    %v3969 = vcombine.high %v3457, %v3457
    %v3971 = vunpack.c.l.s4 1983009808
    %v3972 = vunpack.c.0.s8 %v3971
    %v3973 = vlaneseq
    %v3974 = vshrl.u32 %v3973, 7
    %v3975 = vsub.s32 %v3972, %v3974
    %v3976 = vrot.slane %v3457, %v3975
    %v3978 = vunpack.c.l.s4 1983009808
    %v3979 = vunpack.c.0.s8 %v3978
    %v3980 = vlaneseq
    %v3981 = vshrl.u32 %v3980, 7
    %v3982 = vsub.s32 %v3979, %v3981
    %v3983 = vrot.slane %v3969, %v3982
    %v3984 = vcombine.high %v3976, %v3976
    %v3985 = vcombine.high %v3983, %v3983
    %v3986 = vcombine.high %v3458, %v3458
    %v3988 = vunpack.c.l.s4 1983009808
    %v3989 = vunpack.c.0.s8 %v3988
    %v3990 = vlaneseq
    %v3991 = vshrl.u32 %v3990, 7
    %v3992 = vsub.s32 %v3989, %v3991
    %v3993 = vrot.slane %v3458, %v3992
    %v3995 = vunpack.c.l.s4 1983009808
    %v3996 = vunpack.c.0.s8 %v3995
    %v3997 = vlaneseq
    %v3998 = vshrl.u32 %v3997, 7
    %v3999 = vsub.s32 %v3996, %v3998
    %v4000 = vrot.slane %v3986, %v3999
    %v4001 = vcombine.high %v3993, %v3993
    %v4002 = vcombine.high %v4000, %v4000
    %v4003 = vcombine.high %v3459, %v3459
    %v4005 = vunpack.c.l.s4 1983009808
    %v4006 = vunpack.c.0.s8 %v4005
    %v4007 = vlaneseq
    %v4008 = vshrl.u32 %v4007, 7
    %v4009 = vsub.s32 %v4006, %v4008
    %v4010 = vrot.slane %v3459, %v4009
    %v4012 = vunpack.c.l.s4 1983009808
    %v4013 = vunpack.c.0.s8 %v4012
    %v4014 = vlaneseq
    %v4015 = vshrl.u32 %v4014, 7
    %v4016 = vsub.s32 %v4013, %v4015
    %v4017 = vrot.slane %v4003, %v4016
    %v4018 = vcombine.high %v4010, %v4010
    %v4019 = vcombine.high %v4017, %v4017
    %v4020 = vcombine.high %v3460, %v3460
    %v4022 = vunpack.c.l.s4 1983009808
    %v4023 = vunpack.c.0.s8 %v4022
    %v4024 = vlaneseq
    %v4025 = vshrl.u32 %v4024, 7
    %v4026 = vsub.s32 %v4023, %v4025
    %v4027 = vrot.slane %v3460, %v4026
    %v4029 = vunpack.c.l.s4 1983009808
    %v4030 = vunpack.c.0.s8 %v4029
    %v4031 = vlaneseq
    %v4032 = vshrl.u32 %v4031, 7
    %v4033 = vsub.s32 %v4030, %v4032
    %v4034 = vrot.slane %v4020, %v4033
    %v4035 = vcombine.high %v4027, %v4027
    %v4036 = vcombine.high %v4034, %v4034
    %v4037 = vcombine.high %v3461, %v3461
    %v4039 = vunpack.c.l.s4 1983009808
    %v4040 = vunpack.c.0.s8 %v4039
    %v4041 = vlaneseq
    %v4042 = vshrl.u32 %v4041, 7
    %v4043 = vsub.s32 %v4040, %v4042
    %v4044 = vrot.slane %v3461, %v4043
    %v4046 = vunpack.c.l.s4 1983009808
    %v4047 = vunpack.c.0.s8 %v4046
    %v4048 = vlaneseq
    %v4049 = vshrl.u32 %v4048, 7
    %v4050 = vsub.s32 %v4047, %v4049
    %v4051 = vrot.slane %v4037, %v4050
    %v4052 = vcombine.high %v4044, %v4044
    %v4053 = vcombine.high %v4051, %v4051
    %v4054 = vcombine.high %v3462, %v3462
    %v4056 = vunpack.c.l.s4 1983009808
    %v4057 = vunpack.c.0.s8 %v4056
    %v4058 = vlaneseq
    %v4059 = vshrl.u32 %v4058, 7
    %v4060 = vsub.s32 %v4057, %v4059
    %v4061 = vrot.slane %v3462, %v4060
    %v4063 = vunpack.c.l.s4 1983009808
    %v4064 = vunpack.c.0.s8 %v4063
    %v4065 = vlaneseq
    %v4066 = vshrl.u32 %v4065, 7
    %v4067 = vsub.s32 %v4064, %v4066
    %v4068 = vrot.slane %v4054, %v4067
    %v4069 = vcombine.high %v4061, %v4061
    %v4070 = vcombine.high %v4068, %v4068
    %v4071 = vcombine.high %v3463, %v3463
    %v4073 = vunpack.c.l.s4 1983009808
    %v4074 = vunpack.c.0.s8 %v4073
    %v4075 = vlaneseq
    %v4076 = vshrl.u32 %v4075, 7
    %v4077 = vsub.s32 %v4074, %v4076
    %v4078 = vrot.slane %v3463, %v4077
    %v4080 = vunpack.c.l.s4 1983009808
    %v4081 = vunpack.c.0.s8 %v4080
    %v4082 = vlaneseq
    %v4083 = vshrl.u32 %v4082, 7
    %v4084 = vsub.s32 %v4081, %v4083
    %v4085 = vrot.slane %v4071, %v4084
    %v4086 = vcombine.high %v4078, %v4078
    %v4087 = vcombine.high %v4085, %v4085
    %v4088 = vcombine.high %v3464, %v3464
    %v4090 = vunpack.c.l.s4 1983009808
    %v4091 = vunpack.c.0.s8 %v4090
    %v4092 = vlaneseq
    %v4093 = vshrl.u32 %v4092, 7
    %v4094 = vsub.s32 %v4091, %v4093
    %v4095 = vrot.slane %v3464, %v4094
    %v4097 = vunpack.c.l.s4 1983009808
    %v4098 = vunpack.c.0.s8 %v4097
    %v4099 = vlaneseq
    %v4100 = vshrl.u32 %v4099, 7
    %v4101 = vsub.s32 %v4098, %v4100
    %v4102 = vrot.slane %v4088, %v4101
    %v4103 = vcombine.high %v4095, %v4095
    %v4104 = vcombine.high %v4102, %v4102
    %v4105 = vcombine.high %v3465, %v3465
    %v4107 = vunpack.c.l.s4 1983009808
    %v4108 = vunpack.c.0.s8 %v4107
    %v4109 = vlaneseq
    %v4110 = vshrl.u32 %v4109, 7
    %v4111 = vsub.s32 %v4108, %v4110
    %v4112 = vrot.slane %v3465, %v4111
    %v4114 = vunpack.c.l.s4 1983009808
    %v4115 = vunpack.c.0.s8 %v4114
    %v4116 = vlaneseq
    %v4117 = vshrl.u32 %v4116, 7
    %v4118 = vsub.s32 %v4115, %v4117
    %v4119 = vrot.slane %v4105, %v4118
    %v4120 = vcombine.high %v4112, %v4112
    %v4121 = vcombine.high %v4119, %v4119
    %v4122 = vcombine.high %v3466, %v3466
    %v4124 = vunpack.c.l.s4 1983009808
    %v4125 = vunpack.c.0.s8 %v4124
    %v4126 = vlaneseq
    %v4127 = vshrl.u32 %v4126, 7
    %v4128 = vsub.s32 %v4125, %v4127
    %v4129 = vrot.slane %v3466, %v4128
    %v4131 = vunpack.c.l.s4 1983009808
    %v4132 = vunpack.c.0.s8 %v4131
    %v4133 = vlaneseq
    %v4134 = vshrl.u32 %v4133, 7
    %v4135 = vsub.s32 %v4132, %v4134
    %v4136 = vrot.slane %v4122, %v4135
    %v4137 = vcombine.high %v4129, %v4129
    %v4138 = vcombine.high %v4136, %v4136
    %v4139 = vcombine.high %v3467, %v3467
    %v4141 = vunpack.c.l.s4 1983009808
    %v4142 = vunpack.c.0.s8 %v4141
    %v4143 = vlaneseq
    %v4144 = vshrl.u32 %v4143, 7
    %v4145 = vsub.s32 %v4142, %v4144
    %v4146 = vrot.slane %v3467, %v4145
    %v4148 = vunpack.c.l.s4 1983009808
    %v4149 = vunpack.c.0.s8 %v4148
    %v4150 = vlaneseq
    %v4151 = vshrl.u32 %v4150, 7
    %v4152 = vsub.s32 %v4149, %v4151
    %v4153 = vrot.slane %v4139, %v4152
    %v4154 = vcombine.high %v4146, %v4146
    %v4155 = vcombine.high %v4153, %v4153
    %v4156 = vcombine.high %v3468, %v3468
    %v4158 = vunpack.c.l.s4 1983009808
    %v4159 = vunpack.c.0.s8 %v4158
    %v4160 = vlaneseq
    %v4161 = vshrl.u32 %v4160, 7
    %v4162 = vsub.s32 %v4159, %v4161
    %v4163 = vrot.slane %v3468, %v4162
    %v4165 = vunpack.c.l.s4 1983009808
    %v4166 = vunpack.c.0.s8 %v4165
    %v4167 = vlaneseq
    %v4168 = vshrl.u32 %v4167, 7
    %v4169 = vsub.s32 %v4166, %v4168
    %v4170 = vrot.slane %v4156, %v4169
    %v4171 = vcombine.high %v4163, %v4163
    %v4172 = vcombine.high %v4170, %v4170
    %v4173 = vcombine.high %v3469, %v3469
    %v4175 = vunpack.c.l.s4 1983009808
    %v4176 = vunpack.c.0.s8 %v4175
    %v4177 = vlaneseq
    %v4178 = vshrl.u32 %v4177, 7
    %v4179 = vsub.s32 %v4176, %v4178
    %v4180 = vrot.slane %v3469, %v4179
    %v4182 = vunpack.c.l.s4 1983009808
    %v4183 = vunpack.c.0.s8 %v4182
    %v4184 = vlaneseq
    %v4185 = vshrl.u32 %v4184, 7
    %v4186 = vsub.s32 %v4183, %v4185
    %v4187 = vrot.slane %v4173, %v4186
    %v4188 = vcombine.high %v4180, %v4180
    %v4189 = vcombine.high %v4187, %v4187
    %v4190 = vcombine.high %v3470, %v3470
    %v4192 = vunpack.c.l.s4 1983009808
    %v4193 = vunpack.c.0.s8 %v4192
    %v4194 = vlaneseq
    %v4195 = vshrl.u32 %v4194, 7
    %v4196 = vsub.s32 %v4193, %v4195
    %v4197 = vrot.slane %v3470, %v4196
    %v4199 = vunpack.c.l.s4 1983009808
    %v4200 = vunpack.c.0.s8 %v4199
    %v4201 = vlaneseq
    %v4202 = vshrl.u32 %v4201, 7
    %v4203 = vsub.s32 %v4200, %v4202
    %v4204 = vrot.slane %v4190, %v4203
    %v4205 = vcombine.high %v4197, %v4197
    %v4206 = vcombine.high %v4204, %v4204
    %v4207 = vcombine.high %v3471, %v3471
    %v4209 = vunpack.c.l.s4 1983009808
    %v4210 = vunpack.c.0.s8 %v4209
    %v4211 = vlaneseq
    %v4212 = vshrl.u32 %v4211, 7
    %v4213 = vsub.s32 %v4210, %v4212
    %v4214 = vrot.slane %v3471, %v4213
    %v4216 = vunpack.c.l.s4 1983009808
    %v4217 = vunpack.c.0.s8 %v4216
    %v4218 = vlaneseq
    %v4219 = vshrl.u32 %v4218, 7
    %v4220 = vsub.s32 %v4217, %v4219
    %v4221 = vrot.slane %v4207, %v4220
    %v4222 = vcombine.high %v4214, %v4214
    %v4223 = vcombine.high %v4221, %v4221
    %v4224 = vcombine.high %v3472, %v3472
    %v4226 = vunpack.c.l.s4 1983009808
    %v4227 = vunpack.c.0.s8 %v4226
    %v4228 = vlaneseq
    %v4229 = vshrl.u32 %v4228, 7
    %v4230 = vsub.s32 %v4227, %v4229
    %v4231 = vrot.slane %v3472, %v4230
    %v4233 = vunpack.c.l.s4 1983009808
    %v4234 = vunpack.c.0.s8 %v4233
    %v4235 = vlaneseq
    %v4236 = vshrl.u32 %v4235, 7
    %v4237 = vsub.s32 %v4234, %v4236
    %v4238 = vrot.slane %v4224, %v4237
    %v4239 = vcombine.high %v4231, %v4231
    %v4240 = vcombine.high %v4238, %v4238
    %v4241 = vcombine.high %v3473, %v3473
    %v4243 = vunpack.c.l.s4 1983009808
    %v4244 = vunpack.c.0.s8 %v4243
    %v4245 = vlaneseq
    %v4246 = vshrl.u32 %v4245, 7
    %v4247 = vsub.s32 %v4244, %v4246
    %v4248 = vrot.slane %v3473, %v4247
    %v4250 = vunpack.c.l.s4 1983009808
    %v4251 = vunpack.c.0.s8 %v4250
    %v4252 = vlaneseq
    %v4253 = vshrl.u32 %v4252, 7
    %v4254 = vsub.s32 %v4251, %v4253
    %v4255 = vrot.slane %v4241, %v4254
    %v4256 = vcombine.high %v4248, %v4248
    %v4257 = vcombine.high %v4255, %v4255
    %v4258 = vcombine.high %v3474, %v3474
    %v4260 = vunpack.c.l.s4 1983009808
    %v4261 = vunpack.c.0.s8 %v4260
    %v4262 = vlaneseq
    %v4263 = vshrl.u32 %v4262, 7
    %v4264 = vsub.s32 %v4261, %v4263
    %v4265 = vrot.slane %v3474, %v4264
    %v4267 = vunpack.c.l.s4 1983009808
    %v4268 = vunpack.c.0.s8 %v4267
    %v4269 = vlaneseq
    %v4270 = vshrl.u32 %v4269, 7
    %v4271 = vsub.s32 %v4268, %v4270
    %v4272 = vrot.slane %v4258, %v4271
    %v4273 = vcombine.high %v4265, %v4265
    %v4274 = vcombine.high %v4272, %v4272
    %v4275 = vcombine.high %v3475, %v3475
    %v4277 = vunpack.c.l.s4 1983009808
    %v4278 = vunpack.c.0.s8 %v4277
    %v4279 = vlaneseq
    %v4280 = vshrl.u32 %v4279, 7
    %v4281 = vsub.s32 %v4278, %v4280
    %v4282 = vrot.slane %v3475, %v4281
    %v4284 = vunpack.c.l.s4 1983009808
    %v4285 = vunpack.c.0.s8 %v4284
    %v4286 = vlaneseq
    %v4287 = vshrl.u32 %v4286, 7
    %v4288 = vsub.s32 %v4285, %v4287
    %v4289 = vrot.slane %v4275, %v4288
    %v4290 = vcombine.high %v4282, %v4282
    %v4291 = vcombine.high %v4289, %v4289
    %v4292 = vcombine.high %v3476, %v3476
    %v4294 = vunpack.c.l.s4 1983009808
    %v4295 = vunpack.c.0.s8 %v4294
    %v4296 = vlaneseq
    %v4297 = vshrl.u32 %v4296, 7
    %v4298 = vsub.s32 %v4295, %v4297
    %v4299 = vrot.slane %v3476, %v4298
    %v4301 = vunpack.c.l.s4 1983009808
    %v4302 = vunpack.c.0.s8 %v4301
    %v4303 = vlaneseq
    %v4304 = vshrl.u32 %v4303, 7
    %v4305 = vsub.s32 %v4302, %v4304
    %v4306 = vrot.slane %v4292, %v4305
    %v4307 = vcombine.high %v4299, %v4299
    %v4308 = vcombine.high %v4306, %v4306
    %v4309 = vcombine.high %v3477, %v3477
    %v4311 = vunpack.c.l.s4 1983009808
    %v4312 = vunpack.c.0.s8 %v4311
    %v4313 = vlaneseq
    %v4314 = vshrl.u32 %v4313, 7
    %v4315 = vsub.s32 %v4312, %v4314
    %v4316 = vrot.slane %v3477, %v4315
    %v4318 = vunpack.c.l.s4 1983009808
    %v4319 = vunpack.c.0.s8 %v4318
    %v4320 = vlaneseq
    %v4321 = vshrl.u32 %v4320, 7
    %v4322 = vsub.s32 %v4319, %v4321
    %v4323 = vrot.slane %v4309, %v4322
    %v4324 = vcombine.high %v4316, %v4316
    %v4325 = vcombine.high %v4323, %v4323
    %v4326 = vcombine.high %v3478, %v3478
    %v4328 = vunpack.c.l.s4 1983009808
    %v4329 = vunpack.c.0.s8 %v4328
    %v4330 = vlaneseq
    %v4331 = vshrl.u32 %v4330, 7
    %v4332 = vsub.s32 %v4329, %v4331
    %v4333 = vrot.slane %v3478, %v4332
    %v4335 = vunpack.c.l.s4 1983009808
    %v4336 = vunpack.c.0.s8 %v4335
    %v4337 = vlaneseq
    %v4338 = vshrl.u32 %v4337, 7
    %v4339 = vsub.s32 %v4336, %v4338
    %v4340 = vrot.slane %v4326, %v4339
    %v4341 = vcombine.high %v4333, %v4333
    %v4342 = vcombine.high %v4340, %v4340
    %v4343 = vcombine.high %v3479, %v3479
    %v4345 = vunpack.c.l.s4 1983009808
    %v4346 = vunpack.c.0.s8 %v4345
    %v4347 = vlaneseq
    %v4348 = vshrl.u32 %v4347, 7
    %v4349 = vsub.s32 %v4346, %v4348
    %v4350 = vrot.slane %v3479, %v4349
    %v4352 = vunpack.c.l.s4 1983009808
    %v4353 = vunpack.c.0.s8 %v4352
    %v4354 = vlaneseq
    %v4355 = vshrl.u32 %v4354, 7
    %v4356 = vsub.s32 %v4353, %v4355
    %v4357 = vrot.slane %v4343, %v4356
    %v4358 = vcombine.high %v4350, %v4350
    %v4359 = vcombine.high %v4357, %v4357
    %v4360 = vcombine.high %v3480, %v3480
    %v4362 = vunpack.c.l.s4 1983009808
    %v4363 = vunpack.c.0.s8 %v4362
    %v4364 = vlaneseq
    %v4365 = vshrl.u32 %v4364, 7
    %v4366 = vsub.s32 %v4363, %v4365
    %v4367 = vrot.slane %v3480, %v4366
    %v4369 = vunpack.c.l.s4 1983009808
    %v4370 = vunpack.c.0.s8 %v4369
    %v4371 = vlaneseq
    %v4372 = vshrl.u32 %v4371, 7
    %v4373 = vsub.s32 %v4370, %v4372
    %v4374 = vrot.slane %v4360, %v4373
    %v4375 = vcombine.high %v4367, %v4367
    %v4376 = vcombine.high %v4374, %v4374
    %v4377 = vcombine.high %v3481, %v3481
    %v4379 = vunpack.c.l.s4 1983009808
    %v4380 = vunpack.c.0.s8 %v4379
    %v4381 = vlaneseq
    %v4382 = vshrl.u32 %v4381, 7
    %v4383 = vsub.s32 %v4380, %v4382
    %v4384 = vrot.slane %v3481, %v4383
    %v4386 = vunpack.c.l.s4 1983009808
    %v4387 = vunpack.c.0.s8 %v4386
    %v4388 = vlaneseq
    %v4389 = vshrl.u32 %v4388, 7
    %v4390 = vsub.s32 %v4387, %v4389
    %v4391 = vrot.slane %v4377, %v4390
    %v4392 = vcombine.high %v4384, %v4384
    %v4393 = vcombine.high %v4391, %v4391
    %v4394 = vcombine.high %v3482, %v3482
    %v4396 = vunpack.c.l.s4 1983009808
    %v4397 = vunpack.c.0.s8 %v4396
    %v4398 = vlaneseq
    %v4399 = vshrl.u32 %v4398, 7
    %v4400 = vsub.s32 %v4397, %v4399
    %v4401 = vrot.slane %v3482, %v4400
    %v4403 = vunpack.c.l.s4 1983009808
    %v4404 = vunpack.c.0.s8 %v4403
    %v4405 = vlaneseq
    %v4406 = vshrl.u32 %v4405, 7
    %v4407 = vsub.s32 %v4404, %v4406
    %v4408 = vrot.slane %v4394, %v4407
    %v4409 = vcombine.high %v4401, %v4401
    %v4410 = vcombine.high %v4408, %v4408
    %v4411 = vcombine.high %v3483, %v3483
    %v4413 = vunpack.c.l.s4 1983009808
    %v4414 = vunpack.c.0.s8 %v4413
    %v4415 = vlaneseq
    %v4416 = vshrl.u32 %v4415, 7
    %v4417 = vsub.s32 %v4414, %v4416
    %v4418 = vrot.slane %v3483, %v4417
    %v4420 = vunpack.c.l.s4 1983009808
    %v4421 = vunpack.c.0.s8 %v4420
    %v4422 = vlaneseq
    %v4423 = vshrl.u32 %v4422, 7
    %v4424 = vsub.s32 %v4421, %v4423
    %v4425 = vrot.slane %v4411, %v4424
    %v4426 = vcombine.high %v4418, %v4418
    %v4427 = vcombine.high %v4425, %v4425
    %v4428 = vcombine.high %v3484, %v3484
    %v4430 = vunpack.c.l.s4 1983009808
    %v4431 = vunpack.c.0.s8 %v4430
    %v4432 = vlaneseq
    %v4433 = vshrl.u32 %v4432, 7
    %v4434 = vsub.s32 %v4431, %v4433
    %v4435 = vrot.slane %v3484, %v4434
    %v4437 = vunpack.c.l.s4 1983009808
    %v4438 = vunpack.c.0.s8 %v4437
    %v4439 = vlaneseq
    %v4440 = vshrl.u32 %v4439, 7
    %v4441 = vsub.s32 %v4438, %v4440
    %v4442 = vrot.slane %v4428, %v4441
    %v4443 = vcombine.high %v4435, %v4435
    %v4444 = vcombine.high %v4442, %v4442
    %v4445 = vcombine.high %v3485, %v3485
    %v4447 = vunpack.c.l.s4 1983009808
    %v4448 = vunpack.c.0.s8 %v4447
    %v4449 = vlaneseq
    %v4450 = vshrl.u32 %v4449, 7
    %v4451 = vsub.s32 %v4448, %v4450
    %v4452 = vrot.slane %v3485, %v4451
    %v4454 = vunpack.c.l.s4 1983009808
    %v4455 = vunpack.c.0.s8 %v4454
    %v4456 = vlaneseq
    %v4457 = vshrl.u32 %v4456, 7
    %v4458 = vsub.s32 %v4455, %v4457
    %v4459 = vrot.slane %v4445, %v4458
    %v4460 = vcombine.high %v4452, %v4452
    %v4461 = vcombine.high %v4459, %v4459
    %v4462 = vcombine.high %v3486, %v3486
    %v4464 = vunpack.c.l.s4 1983009808
    %v4465 = vunpack.c.0.s8 %v4464
    %v4466 = vlaneseq
    %v4467 = vshrl.u32 %v4466, 7
    %v4468 = vsub.s32 %v4465, %v4467
    %v4469 = vrot.slane %v3486, %v4468
    %v4471 = vunpack.c.l.s4 1983009808
    %v4472 = vunpack.c.0.s8 %v4471
    %v4473 = vlaneseq
    %v4474 = vshrl.u32 %v4473, 7
    %v4475 = vsub.s32 %v4472, %v4474
    %v4476 = vrot.slane %v4462, %v4475
    %v4477 = vcombine.high %v4469, %v4469
    %v4478 = vcombine.high %v4476, %v4476
    %v4479 = vcombine.high %v3487, %v3487
    %v4481 = vunpack.c.l.s4 1983009808
    %v4482 = vunpack.c.0.s8 %v4481
    %v4483 = vlaneseq
    %v4484 = vshrl.u32 %v4483, 7
    %v4485 = vsub.s32 %v4482, %v4484
    %v4486 = vrot.slane %v3487, %v4485
    %v4488 = vunpack.c.l.s4 1983009808
    %v4489 = vunpack.c.0.s8 %v4488
    %v4490 = vlaneseq
    %v4491 = vshrl.u32 %v4490, 7
    %v4492 = vsub.s32 %v4489, %v4491
    %v4493 = vrot.slane %v4479, %v4492
    %v4494 = vcombine.high %v4486, %v4486
    %v4495 = vcombine.high %v4493, %v4493
    %v4496 = vcombine.high %v3488, %v3488
    %v4498 = vunpack.c.l.s4 1983009808
    %v4499 = vunpack.c.0.s8 %v4498
    %v4500 = vlaneseq
    %v4501 = vshrl.u32 %v4500, 7
    %v4502 = vsub.s32 %v4499, %v4501
    %v4503 = vrot.slane %v3488, %v4502
    %v4505 = vunpack.c.l.s4 1983009808
    %v4506 = vunpack.c.0.s8 %v4505
    %v4507 = vlaneseq
    %v4508 = vshrl.u32 %v4507, 7
    %v4509 = vsub.s32 %v4506, %v4508
    %v4510 = vrot.slane %v4496, %v4509
    %v4511 = vcombine.high %v4503, %v4503
    %v4512 = vcombine.high %v4510, %v4510
    %v4513 = vcombine.high %v3489, %v3489
    %v4515 = vunpack.c.l.s4 1983009808
    %v4516 = vunpack.c.0.s8 %v4515
    %v4517 = vlaneseq
    %v4518 = vshrl.u32 %v4517, 7
    %v4519 = vsub.s32 %v4516, %v4518
    %v4520 = vrot.slane %v3489, %v4519
    %v4522 = vunpack.c.l.s4 1983009808
    %v4523 = vunpack.c.0.s8 %v4522
    %v4524 = vlaneseq
    %v4525 = vshrl.u32 %v4524, 7
    %v4526 = vsub.s32 %v4523, %v4525
    %v4527 = vrot.slane %v4513, %v4526
    %v4528 = vcombine.high %v4520, %v4520
    %v4529 = vcombine.high %v4527, %v4527
    %v4530 = vcombine.high %v3490, %v3490
    %v4532 = vunpack.c.l.s4 1983009808
    %v4533 = vunpack.c.0.s8 %v4532
    %v4534 = vlaneseq
    %v4535 = vshrl.u32 %v4534, 7
    %v4536 = vsub.s32 %v4533, %v4535
    %v4537 = vrot.slane %v3490, %v4536
    %v4539 = vunpack.c.l.s4 1983009808
    %v4540 = vunpack.c.0.s8 %v4539
    %v4541 = vlaneseq
    %v4542 = vshrl.u32 %v4541, 7
    %v4543 = vsub.s32 %v4540, %v4542
    %v4544 = vrot.slane %v4530, %v4543
    %v4545 = vcombine.high %v4537, %v4537
    %v4546 = vcombine.high %v4544, %v4544
    %v4547 = vcombine.high %v3491, %v3491
    %v4549 = vunpack.c.l.s4 1983009808
    %v4550 = vunpack.c.0.s8 %v4549
    %v4551 = vlaneseq
    %v4552 = vshrl.u32 %v4551, 7
    %v4553 = vsub.s32 %v4550, %v4552
    %v4554 = vrot.slane %v3491, %v4553
    %v4556 = vunpack.c.l.s4 1983009808
    %v4557 = vunpack.c.0.s8 %v4556
    %v4558 = vlaneseq
    %v4559 = vshrl.u32 %v4558, 7
    %v4560 = vsub.s32 %v4557, %v4559
    %v4561 = vrot.slane %v4547, %v4560
    %v4562 = vcombine.high %v4554, %v4554
    %v4563 = vcombine.high %v4561, %v4561
    %v4564 = vcombine.high %v3492, %v3492
    %v4566 = vunpack.c.l.s4 1983009808
    %v4567 = vunpack.c.0.s8 %v4566
    %v4568 = vlaneseq
    %v4569 = vshrl.u32 %v4568, 7
    %v4570 = vsub.s32 %v4567, %v4569
    %v4571 = vrot.slane %v3492, %v4570
    %v4573 = vunpack.c.l.s4 1983009808
    %v4574 = vunpack.c.0.s8 %v4573
    %v4575 = vlaneseq
    %v4576 = vshrl.u32 %v4575, 7
    %v4577 = vsub.s32 %v4574, %v4576
    %v4578 = vrot.slane %v4564, %v4577
    %v4579 = vcombine.high %v4571, %v4571
    %v4580 = vcombine.high %v4578, %v4578
    %v4581 = vcombine.high %v3493, %v3493
    %v4583 = vunpack.c.l.s4 1983009808
    %v4584 = vunpack.c.0.s8 %v4583
    %v4585 = vlaneseq
    %v4586 = vshrl.u32 %v4585, 7
    %v4587 = vsub.s32 %v4584, %v4586
    %v4588 = vrot.slane %v3493, %v4587
    %v4590 = vunpack.c.l.s4 1983009808
    %v4591 = vunpack.c.0.s8 %v4590
    %v4592 = vlaneseq
    %v4593 = vshrl.u32 %v4592, 7
    %v4594 = vsub.s32 %v4591, %v4593
    %v4595 = vrot.slane %v4581, %v4594
    %v4596 = vcombine.high %v4588, %v4588
    %v4597 = vcombine.high %v4595, %v4595
    %v4598 = vcombine.high %v3494, %v3494
    %v4600 = vunpack.c.l.s4 1983009808
    %v4601 = vunpack.c.0.s8 %v4600
    %v4602 = vlaneseq
    %v4603 = vshrl.u32 %v4602, 7
    %v4604 = vsub.s32 %v4601, %v4603
    %v4605 = vrot.slane %v3494, %v4604
    %v4607 = vunpack.c.l.s4 1983009808
    %v4608 = vunpack.c.0.s8 %v4607
    %v4609 = vlaneseq
    %v4610 = vshrl.u32 %v4609, 7
    %v4611 = vsub.s32 %v4608, %v4610
    %v4612 = vrot.slane %v4598, %v4611
    %v4613 = vcombine.high %v4605, %v4605
    %v4614 = vcombine.high %v4612, %v4612
    %v4615 = vcombine.high %v3495, %v3495
    %v4617 = vunpack.c.l.s4 1983009808
    %v4618 = vunpack.c.0.s8 %v4617
    %v4619 = vlaneseq
    %v4620 = vshrl.u32 %v4619, 7
    %v4621 = vsub.s32 %v4618, %v4620
    %v4622 = vrot.slane %v3495, %v4621
    %v4624 = vunpack.c.l.s4 1983009808
    %v4625 = vunpack.c.0.s8 %v4624
    %v4626 = vlaneseq
    %v4627 = vshrl.u32 %v4626, 7
    %v4628 = vsub.s32 %v4625, %v4627
    %v4629 = vrot.slane %v4615, %v4628
    %v4630 = vcombine.high %v4622, %v4622
    %v4631 = vcombine.high %v4629, %v4629
    %v4632 = vcombine.high %v3496, %v3496
    %v4634 = vunpack.c.l.s4 1983009808
    %v4635 = vunpack.c.0.s8 %v4634
    %v4636 = vlaneseq
    %v4637 = vshrl.u32 %v4636, 7
    %v4638 = vsub.s32 %v4635, %v4637
    %v4639 = vrot.slane %v3496, %v4638
    %v4641 = vunpack.c.l.s4 1983009808
    %v4642 = vunpack.c.0.s8 %v4641
    %v4643 = vlaneseq
    %v4644 = vshrl.u32 %v4643, 7
    %v4645 = vsub.s32 %v4642, %v4644
    %v4646 = vrot.slane %v4632, %v4645
    %v4647 = vcombine.high %v4639, %v4639
    %v4648 = vcombine.high %v4646, %v4646
    %v4905 = vrot.slane %v3568, 7
    %v4906 = vrot.slane %v4905, 2
    %v4907 = vrot.slane %v3576, 7
    %v4908 = vrot.slane %v4907, 2
    %v4909 = vrot.slane %v3575, 7
    %v4910 = vrot.slane %v4909, 2
    %v4911 = vrot.slane %v3577, 7
    %v4912 = vrot.slane %v4911, 2
    %v4913 = vrot.slane %v3585, 7
    %v4914 = vrot.slane %v4913, 2
    %v4915 = vrot.slane %v3593, 7
    %v4916 = vrot.slane %v4915, 2
    %v4917 = vrot.slane %v3592, 7
    %v4918 = vrot.slane %v4917, 2
    %v4919 = vrot.slane %v3594, 7
    %v4920 = vrot.slane %v4919, 2
    %v4921 = vrot.slane %v3602, 7
    %v4922 = vrot.slane %v4921, 2
    %v4923 = vrot.slane %v3610, 7
    %v4924 = vrot.slane %v4923, 2
    %v4925 = vrot.slane %v3609, 7
    %v4926 = vrot.slane %v4925, 2
    %v4927 = vrot.slane %v3611, 7
    %v4928 = vrot.slane %v4927, 2
    %v4929 = vrot.slane %v3619, 7
    %v4930 = vrot.slane %v4929, 2
    %v4931 = vrot.slane %v3627, 7
    %v4932 = vrot.slane %v4931, 2
    %v4933 = vrot.slane %v3626, 7
    %v4934 = vrot.slane %v4933, 2
    %v4935 = vrot.slane %v3628, 7
    %v4936 = vrot.slane %v4935, 2
    %v4937 = vrot.slane %v3636, 7
    %v4938 = vrot.slane %v4937, 2
    %v4939 = vrot.slane %v3644, 7
    %v4940 = vrot.slane %v4939, 2
    %v4941 = vrot.slane %v3643, 7
    %v4942 = vrot.slane %v4941, 2
    %v4943 = vrot.slane %v3645, 7
    %v4944 = vrot.slane %v4943, 2
    %v4945 = vrot.slane %v3653, 7
    %v4946 = vrot.slane %v4945, 2
    %v4947 = vrot.slane %v3661, 7
    %v4948 = vrot.slane %v4947, 2
    %v4949 = vrot.slane %v3660, 7
    %v4950 = vrot.slane %v4949, 2
    %v4951 = vrot.slane %v3662, 7
    %v4952 = vrot.slane %v4951, 2
    %v4953 = vrot.slane %v3670, 7
    %v4954 = vrot.slane %v4953, 2
    %v4955 = vrot.slane %v3678, 7
    %v4956 = vrot.slane %v4955, 2
    %v4957 = vrot.slane %v3677, 7
    %v4958 = vrot.slane %v4957, 2
    %v4959 = vrot.slane %v3679, 7
    %v4960 = vrot.slane %v4959, 2
    %v4961 = vrot.slane %v3687, 7
    %v4962 = vrot.slane %v4961, 2
    %v4963 = vrot.slane %v3695, 7
    %v4964 = vrot.slane %v4963, 2
    %v4965 = vrot.slane %v3694, 7
    %v4966 = vrot.slane %v4965, 2
    %v4967 = vrot.slane %v3696, 7
    %v4968 = vrot.slane %v4967, 2
    %v4969 = vrot.slane %v3704, 7
    %v4970 = vrot.slane %v4969, 2
    %v4971 = vrot.slane %v3712, 7
    %v4972 = vrot.slane %v4971, 2
    %v4973 = vrot.slane %v3711, 7
    %v4974 = vrot.slane %v4973, 2
    %v4975 = vrot.slane %v3713, 7
    %v4976 = vrot.slane %v4975, 2
    %v4977 = vrot.slane %v3721, 7
    %v4978 = vrot.slane %v4977, 2
    %v4979 = vrot.slane %v3729, 7
    %v4980 = vrot.slane %v4979, 2
    %v4981 = vrot.slane %v3728, 7
    %v4982 = vrot.slane %v4981, 2
    %v4983 = vrot.slane %v3730, 7
    %v4984 = vrot.slane %v4983, 2
    %v4985 = vrot.slane %v3738, 7
    %v4986 = vrot.slane %v4985, 2
    %v4987 = vrot.slane %v3746, 7
    %v4988 = vrot.slane %v4987, 2
    %v4989 = vrot.slane %v3745, 7
    %v4990 = vrot.slane %v4989, 2
    %v4991 = vrot.slane %v3747, 7
    %v4992 = vrot.slane %v4991, 2
    %v4993 = vrot.slane %v3755, 7
    %v4994 = vrot.slane %v4993, 2
    %v4995 = vrot.slane %v3763, 7
    %v4996 = vrot.slane %v4995, 2
    %v4997 = vrot.slane %v3762, 7
    %v4998 = vrot.slane %v4997, 2
    %v4999 = vrot.slane %v3764, 7
    %v5000 = vrot.slane %v4999, 2
    %v5001 = vrot.slane %v3772, 7
    %v5002 = vrot.slane %v5001, 2
    %v5003 = vrot.slane %v3780, 7
    %v5004 = vrot.slane %v5003, 2
    %v5005 = vrot.slane %v3779, 7
    %v5006 = vrot.slane %v5005, 2
    %v5007 = vrot.slane %v3781, 7
    %v5008 = vrot.slane %v5007, 2
    %v5009 = vrot.slane %v3789, 7
    %v5010 = vrot.slane %v5009, 2
    %v5011 = vrot.slane %v3797, 7
    %v5012 = vrot.slane %v5011, 2
    %v5013 = vrot.slane %v3796, 7
    %v5014 = vrot.slane %v5013, 2
    %v5015 = vrot.slane %v3798, 7
    %v5016 = vrot.slane %v5015, 2
    %v5017 = vrot.slane %v3806, 7
    %v5018 = vrot.slane %v5017, 2
    %v5019 = vrot.slane %v3814, 7
    %v5020 = vrot.slane %v5019, 2
    %v5021 = vrot.slane %v3813, 7
    %v5022 = vrot.slane %v5021, 2
    %v5023 = vrot.slane %v3815, 7
    %v5024 = vrot.slane %v5023, 2
    %v5025 = vrot.slane %v3823, 7
    %v5026 = vrot.slane %v5025, 2
    %v5027 = vrot.slane %v3831, 7
    %v5028 = vrot.slane %v5027, 2
    %v5029 = vrot.slane %v3830, 7
    %v5030 = vrot.slane %v5029, 2
    %v5031 = vrot.slane %v3832, 7
    %v5032 = vrot.slane %v5031, 2
    %v5033 = vrot.slane %v3840, 7
    %v5034 = vrot.slane %v5033, 2
    %v5035 = vrot.slane %v3848, 7
    %v5036 = vrot.slane %v5035, 2
    %v5037 = vrot.slane %v3847, 7
    %v5038 = vrot.slane %v5037, 2
    %v5039 = vrot.slane %v3849, 7
    %v5040 = vrot.slane %v5039, 2
    %v5041 = vrot.slane %v3857, 7
    %v5042 = vrot.slane %v5041, 2
    %v5043 = vrot.slane %v3865, 7
    %v5044 = vrot.slane %v5043, 2
    %v5045 = vrot.slane %v3864, 7
    %v5046 = vrot.slane %v5045, 2
    %v5047 = vrot.slane %v3866, 7
    %v5048 = vrot.slane %v5047, 2
    %v5049 = vrot.slane %v3874, 7
    %v5050 = vrot.slane %v5049, 2
    %v5051 = vrot.slane %v3882, 7
    %v5052 = vrot.slane %v5051, 2
    %v5053 = vrot.slane %v3881, 7
    %v5054 = vrot.slane %v5053, 2
    %v5055 = vrot.slane %v3883, 7
    %v5056 = vrot.slane %v5055, 2
    %v5057 = vrot.slane %v3891, 7
    %v5058 = vrot.slane %v5057, 2
    %v5059 = vrot.slane %v3899, 7
    %v5060 = vrot.slane %v5059, 2
    %v5061 = vrot.slane %v3898, 7
    %v5062 = vrot.slane %v5061, 2
    %v5063 = vrot.slane %v3900, 7
    %v5064 = vrot.slane %v5063, 2
    %v5065 = vrot.slane %v3908, 7
    %v5066 = vrot.slane %v5065, 2
    %v5067 = vrot.slane %v3916, 7
    %v5068 = vrot.slane %v5067, 2
    %v5069 = vrot.slane %v3915, 7
    %v5070 = vrot.slane %v5069, 2
    %v5071 = vrot.slane %v3917, 7
    %v5072 = vrot.slane %v5071, 2
    %v5073 = vrot.slane %v3925, 7
    %v5074 = vrot.slane %v5073, 2
    %v5075 = vrot.slane %v3933, 7
    %v5076 = vrot.slane %v5075, 2
    %v5077 = vrot.slane %v3932, 7
    %v5078 = vrot.slane %v5077, 2
    %v5079 = vrot.slane %v3934, 7
    %v5080 = vrot.slane %v5079, 2
    %v5081 = vrot.slane %v3942, 7
    %v5082 = vrot.slane %v5081, 2
    %v5083 = vrot.slane %v3950, 7
    %v5084 = vrot.slane %v5083, 2
    %v5085 = vrot.slane %v3949, 7
    %v5086 = vrot.slane %v5085, 2
    %v5087 = vrot.slane %v3951, 7
    %v5088 = vrot.slane %v5087, 2
    %v5089 = vrot.slane %v3959, 7
    %v5090 = vrot.slane %v5089, 2
    %v5091 = vrot.slane %v3967, 7
    %v5092 = vrot.slane %v5091, 2
    %v5093 = vrot.slane %v3966, 7
    %v5094 = vrot.slane %v5093, 2
    %v5095 = vrot.slane %v3968, 7
    %v5096 = vrot.slane %v5095, 2
    %v5097 = vrot.slane %v3976, 7
    %v5098 = vrot.slane %v5097, 2
    %v5099 = vrot.slane %v3984, 7
    %v5100 = vrot.slane %v5099, 2
    %v5101 = vrot.slane %v3983, 7
    %v5102 = vrot.slane %v5101, 2
    %v5103 = vrot.slane %v3985, 7
    %v5104 = vrot.slane %v5103, 2
    %v5105 = vrot.slane %v3993, 7
    %v5106 = vrot.slane %v5105, 2
    %v5107 = vrot.slane %v4001, 7
    %v5108 = vrot.slane %v5107, 2
    %v5109 = vrot.slane %v4000, 7
    %v5110 = vrot.slane %v5109, 2
    %v5111 = vrot.slane %v4002, 7
    %v5112 = vrot.slane %v5111, 2
    %v5113 = vrot.slane %v4010, 7
    %v5114 = vrot.slane %v5113, 2
    %v5115 = vrot.slane %v4018, 7
    %v5116 = vrot.slane %v5115, 2
    %v5117 = vrot.slane %v4017, 7
    %v5118 = vrot.slane %v5117, 2
    %v5119 = vrot.slane %v4019, 7
    %v5120 = vrot.slane %v5119, 2
    %v5121 = vrot.slane %v4027, 7
    %v5122 = vrot.slane %v5121, 2
    %v5123 = vrot.slane %v4035, 7
    %v5124 = vrot.slane %v5123, 2
    %v5125 = vrot.slane %v4034, 7
    %v5126 = vrot.slane %v5125, 2
    %v5127 = vrot.slane %v4036, 7
    %v5128 = vrot.slane %v5127, 2
    %v5129 = vrot.slane %v4044, 7
    %v5130 = vrot.slane %v5129, 2
    %v5131 = vrot.slane %v4052, 7
    %v5132 = vrot.slane %v5131, 2
    %v5133 = vrot.slane %v4051, 7
    %v5134 = vrot.slane %v5133, 2
    %v5135 = vrot.slane %v4053, 7
    %v5136 = vrot.slane %v5135, 2
    %v5137 = vrot.slane %v4061, 7
    %v5138 = vrot.slane %v5137, 2
    %v5139 = vrot.slane %v4069, 7
    %v5140 = vrot.slane %v5139, 2
    %v5141 = vrot.slane %v4068, 7
    %v5142 = vrot.slane %v5141, 2
    %v5143 = vrot.slane %v4070, 7
    %v5144 = vrot.slane %v5143, 2
    %v5145 = vrot.slane %v4078, 7
    %v5146 = vrot.slane %v5145, 2
    %v5147 = vrot.slane %v4086, 7
    %v5148 = vrot.slane %v5147, 2
    %v5149 = vrot.slane %v4085, 7
    %v5150 = vrot.slane %v5149, 2
    %v5151 = vrot.slane %v4087, 7
    %v5152 = vrot.slane %v5151, 2
    %v5153 = vrot.slane %v4095, 7
    %v5154 = vrot.slane %v5153, 2
    %v5155 = vrot.slane %v4103, 7
    %v5156 = vrot.slane %v5155, 2
    %v5157 = vrot.slane %v4102, 7
    %v5158 = vrot.slane %v5157, 2
    %v5159 = vrot.slane %v4104, 7
    %v5160 = vrot.slane %v5159, 2
    %v5161 = vrot.slane %v4112, 7
    %v5162 = vrot.slane %v5161, 2
    %v5163 = vrot.slane %v4120, 7
    %v5164 = vrot.slane %v5163, 2
    %v5165 = vrot.slane %v4119, 7
    %v5166 = vrot.slane %v5165, 2
    %v5167 = vrot.slane %v4121, 7
    %v5168 = vrot.slane %v5167, 2
    %v5169 = vrot.slane %v4129, 7
    %v5170 = vrot.slane %v5169, 2
    %v5171 = vrot.slane %v4137, 7
    %v5172 = vrot.slane %v5171, 2
    %v5173 = vrot.slane %v4136, 7
    %v5174 = vrot.slane %v5173, 2
    %v5175 = vrot.slane %v4138, 7
    %v5176 = vrot.slane %v5175, 2
    %v5177 = vrot.slane %v4146, 7
    %v5178 = vrot.slane %v5177, 2
    %v5179 = vrot.slane %v4154, 7
    %v5180 = vrot.slane %v5179, 2
    %v5181 = vrot.slane %v4153, 7
    %v5182 = vrot.slane %v5181, 2
    %v5183 = vrot.slane %v4155, 7
    %v5184 = vrot.slane %v5183, 2
    %v5185 = vrot.slane %v4163, 7
    %v5186 = vrot.slane %v5185, 2
    %v5187 = vrot.slane %v4171, 7
    %v5188 = vrot.slane %v5187, 2
    %v5189 = vrot.slane %v4170, 7
    %v5190 = vrot.slane %v5189, 2
    %v5191 = vrot.slane %v4172, 7
    %v5192 = vrot.slane %v5191, 2
    %v5193 = vrot.slane %v4180, 7
    %v5194 = vrot.slane %v5193, 2
    %v5195 = vrot.slane %v4188, 7
    %v5196 = vrot.slane %v5195, 2
    %v5197 = vrot.slane %v4187, 7
    %v5198 = vrot.slane %v5197, 2
    %v5199 = vrot.slane %v4189, 7
    %v5200 = vrot.slane %v5199, 2
    %v5201 = vrot.slane %v4197, 7
    %v5202 = vrot.slane %v5201, 2
    %v5203 = vrot.slane %v4205, 7
    %v5204 = vrot.slane %v5203, 2
    %v5205 = vrot.slane %v4204, 7
    %v5206 = vrot.slane %v5205, 2
    %v5207 = vrot.slane %v4206, 7
    %v5208 = vrot.slane %v5207, 2
    %v5209 = vrot.slane %v4214, 7
    %v5210 = vrot.slane %v5209, 2
    %v5211 = vrot.slane %v4222, 7
    %v5212 = vrot.slane %v5211, 2
    %v5213 = vrot.slane %v4221, 7
    %v5214 = vrot.slane %v5213, 2
    %v5215 = vrot.slane %v4223, 7
    %v5216 = vrot.slane %v5215, 2
    %v5217 = vrot.slane %v4231, 7
    %v5218 = vrot.slane %v5217, 2
    %v5219 = vrot.slane %v4239, 7
    %v5220 = vrot.slane %v5219, 2
    %v5221 = vrot.slane %v4238, 7
    %v5222 = vrot.slane %v5221, 2
    %v5223 = vrot.slane %v4240, 7
    %v5224 = vrot.slane %v5223, 2
    %v5225 = vrot.slane %v4248, 7
    %v5226 = vrot.slane %v5225, 2
    %v5227 = vrot.slane %v4256, 7
    %v5228 = vrot.slane %v5227, 2
    %v5229 = vrot.slane %v4255, 7
    %v5230 = vrot.slane %v5229, 2
    %v5231 = vrot.slane %v4257, 7
    %v5232 = vrot.slane %v5231, 2
    %v5233 = vrot.slane %v4265, 7
    %v5234 = vrot.slane %v5233, 2
    %v5235 = vrot.slane %v4273, 7
    %v5236 = vrot.slane %v5235, 2
    %v5237 = vrot.slane %v4272, 7
    %v5238 = vrot.slane %v5237, 2
    %v5239 = vrot.slane %v4274, 7
    %v5240 = vrot.slane %v5239, 2
    %v5241 = vrot.slane %v4282, 7
    %v5242 = vrot.slane %v5241, 2
    %v5243 = vrot.slane %v4290, 7
    %v5244 = vrot.slane %v5243, 2
    %v5245 = vrot.slane %v4289, 7
    %v5246 = vrot.slane %v5245, 2
    %v5247 = vrot.slane %v4291, 7
    %v5248 = vrot.slane %v5247, 2
    %v5249 = vrot.slane %v4299, 7
    %v5250 = vrot.slane %v5249, 2
    %v5251 = vrot.slane %v4307, 7
    %v5252 = vrot.slane %v5251, 2
    %v5253 = vrot.slane %v4306, 7
    %v5254 = vrot.slane %v5253, 2
    %v5255 = vrot.slane %v4308, 7
    %v5256 = vrot.slane %v5255, 2
    %v5257 = vrot.slane %v4316, 7
    %v5258 = vrot.slane %v5257, 2
    %v5259 = vrot.slane %v4324, 7
    %v5260 = vrot.slane %v5259, 2
    %v5261 = vrot.slane %v4323, 7
    %v5262 = vrot.slane %v5261, 2
    %v5263 = vrot.slane %v4325, 7
    %v5264 = vrot.slane %v5263, 2
    %v5265 = vrot.slane %v4333, 7
    %v5266 = vrot.slane %v5265, 2
    %v5267 = vrot.slane %v4341, 7
    %v5268 = vrot.slane %v5267, 2
    %v5269 = vrot.slane %v4340, 7
    %v5270 = vrot.slane %v5269, 2
    %v5271 = vrot.slane %v4342, 7
    %v5272 = vrot.slane %v5271, 2
    %v5273 = vrot.slane %v4350, 7
    %v5274 = vrot.slane %v5273, 2
    %v5275 = vrot.slane %v4358, 7
    %v5276 = vrot.slane %v5275, 2
    %v5277 = vrot.slane %v4357, 7
    %v5278 = vrot.slane %v5277, 2
    %v5279 = vrot.slane %v4359, 7
    %v5280 = vrot.slane %v5279, 2
    %v5281 = vrot.slane %v4367, 7
    %v5282 = vrot.slane %v5281, 2
    %v5283 = vrot.slane %v4375, 7
    %v5284 = vrot.slane %v5283, 2
    %v5285 = vrot.slane %v4374, 7
    %v5286 = vrot.slane %v5285, 2
    %v5287 = vrot.slane %v4376, 7
    %v5288 = vrot.slane %v5287, 2
    %v5289 = vrot.slane %v4384, 7
    %v5290 = vrot.slane %v5289, 2
    %v5291 = vrot.slane %v4392, 7
    %v5292 = vrot.slane %v5291, 2
    %v5293 = vrot.slane %v4391, 7
    %v5294 = vrot.slane %v5293, 2
    %v5295 = vrot.slane %v4393, 7
    %v5296 = vrot.slane %v5295, 2
    %v5297 = vrot.slane %v4401, 7
    %v5298 = vrot.slane %v5297, 2
    %v5299 = vrot.slane %v4409, 7
    %v5300 = vrot.slane %v5299, 2
    %v5301 = vrot.slane %v4408, 7
    %v5302 = vrot.slane %v5301, 2
    %v5303 = vrot.slane %v4410, 7
    %v5304 = vrot.slane %v5303, 2
    %v5305 = vrot.slane %v4418, 7
    %v5306 = vrot.slane %v5305, 2
    %v5307 = vrot.slane %v4426, 7
    %v5308 = vrot.slane %v5307, 2
    %v5309 = vrot.slane %v4425, 7
    %v5310 = vrot.slane %v5309, 2
    %v5311 = vrot.slane %v4427, 7
    %v5312 = vrot.slane %v5311, 2
    %v5313 = vrot.slane %v4435, 7
    %v5314 = vrot.slane %v5313, 2
    %v5315 = vrot.slane %v4443, 7
    %v5316 = vrot.slane %v5315, 2
    %v5317 = vrot.slane %v4442, 7
    %v5318 = vrot.slane %v5317, 2
    %v5319 = vrot.slane %v4444, 7
    %v5320 = vrot.slane %v5319, 2
    %v5321 = vrot.slane %v4452, 7
    %v5322 = vrot.slane %v5321, 2
    %v5323 = vrot.slane %v4460, 7
    %v5324 = vrot.slane %v5323, 2
    %v5325 = vrot.slane %v4459, 7
    %v5326 = vrot.slane %v5325, 2
    %v5327 = vrot.slane %v4461, 7
    %v5328 = vrot.slane %v5327, 2
    %v5329 = vrot.slane %v4469, 7
    %v5330 = vrot.slane %v5329, 2
    %v5331 = vrot.slane %v4477, 7
    %v5332 = vrot.slane %v5331, 2
    %v5333 = vrot.slane %v4476, 7
    %v5334 = vrot.slane %v5333, 2
    %v5335 = vrot.slane %v4478, 7
    %v5336 = vrot.slane %v5335, 2
    %v5337 = vrot.slane %v4486, 7
    %v5338 = vrot.slane %v5337, 2
    %v5339 = vrot.slane %v4494, 7
    %v5340 = vrot.slane %v5339, 2
    %v5341 = vrot.slane %v4493, 7
    %v5342 = vrot.slane %v5341, 2
    %v5343 = vrot.slane %v4495, 7
    %v5344 = vrot.slane %v5343, 2
    %v5345 = vrot.slane %v4503, 7
    %v5346 = vrot.slane %v5345, 2
    %v5347 = vrot.slane %v4511, 7
    %v5348 = vrot.slane %v5347, 2
    %v5349 = vrot.slane %v4510, 7
    %v5350 = vrot.slane %v5349, 2
    %v5351 = vrot.slane %v4512, 7
    %v5352 = vrot.slane %v5351, 2
    %v5353 = vrot.slane %v4520, 7
    %v5354 = vrot.slane %v5353, 2
    %v5355 = vrot.slane %v4528, 7
    %v5356 = vrot.slane %v5355, 2
    %v5357 = vrot.slane %v4527, 7
    %v5358 = vrot.slane %v5357, 2
    %v5359 = vrot.slane %v4529, 7
    %v5360 = vrot.slane %v5359, 2
    %v5361 = vrot.slane %v4537, 7
    %v5362 = vrot.slane %v5361, 2
    %v5363 = vrot.slane %v4545, 7
    %v5364 = vrot.slane %v5363, 2
    %v5365 = vrot.slane %v4544, 7
    %v5366 = vrot.slane %v5365, 2
    %v5367 = vrot.slane %v4546, 7
    %v5368 = vrot.slane %v5367, 2
    %v5369 = vrot.slane %v4554, 7
    %v5370 = vrot.slane %v5369, 2
    %v5371 = vrot.slane %v4562, 7
    %v5372 = vrot.slane %v5371, 2
    %v5373 = vrot.slane %v4561, 7
    %v5374 = vrot.slane %v5373, 2
    %v5375 = vrot.slane %v4563, 7
    %v5376 = vrot.slane %v5375, 2
    %v5377 = vrot.slane %v4571, 7
    %v5378 = vrot.slane %v5377, 2
    %v5379 = vrot.slane %v4579, 7
    %v5380 = vrot.slane %v5379, 2
    %v5381 = vrot.slane %v4578, 7
    %v5382 = vrot.slane %v5381, 2
    %v5383 = vrot.slane %v4580, 7
    %v5384 = vrot.slane %v5383, 2
    %v5385 = vrot.slane %v4588, 7
    %v5386 = vrot.slane %v5385, 2
    %v5387 = vrot.slane %v4596, 7
    %v5388 = vrot.slane %v5387, 2
    %v5389 = vrot.slane %v4595, 7
    %v5390 = vrot.slane %v5389, 2
    %v5391 = vrot.slane %v4597, 7
    %v5392 = vrot.slane %v5391, 2
    %v5393 = vrot.slane %v4605, 7
    %v5394 = vrot.slane %v5393, 2
    %v5395 = vrot.slane %v4613, 7
    %v5396 = vrot.slane %v5395, 2
    %v5397 = vrot.slane %v4612, 7
    %v5398 = vrot.slane %v5397, 2
    %v5399 = vrot.slane %v4614, 7
    %v5400 = vrot.slane %v5399, 2
    %v5401 = vrot.slane %v4622, 7
    %v5402 = vrot.slane %v5401, 2
    %v5403 = vrot.slane %v4630, 7
    %v5404 = vrot.slane %v5403, 2
    %v5405 = vrot.slane %v4629, 7
    %v5406 = vrot.slane %v5405, 2
    %v5407 = vrot.slane %v4631, 7
    %v5408 = vrot.slane %v5407, 2
    %v5409 = vrot.slane %v4639, 7
    %v5410 = vrot.slane %v5409, 2
    %v5411 = vrot.slane %v4647, 7
    %v5412 = vrot.slane %v5411, 2
    %v5413 = vrot.slane %v4646, 7
    %v5414 = vrot.slane %v5413, 2
    %v5415 = vrot.slane %v4648, 7
    %v5416 = vrot.slane %v5415, 2
    %v5673 = vmax.f32 %v3568, %v4906
    %v5674 = vmax.f32 %v3576, %v4908
    %v5675 = vmax.f32 %v3575, %v4910
    %v5676 = vmax.f32 %v3577, %v4912
    %v5677 = vmax.f32 %v3585, %v4914
    %v5678 = vmax.f32 %v3593, %v4916
    %v5679 = vmax.f32 %v3592, %v4918
    %v5680 = vmax.f32 %v3594, %v4920
    %v5681 = vmax.f32 %v3602, %v4922
    %v5682 = vmax.f32 %v3610, %v4924
    %v5683 = vmax.f32 %v3609, %v4926
    %v5684 = vmax.f32 %v3611, %v4928
    %v5685 = vmax.f32 %v3619, %v4930
    %v5686 = vmax.f32 %v3627, %v4932
    %v5687 = vmax.f32 %v3626, %v4934
    %v5688 = vmax.f32 %v3628, %v4936
    %v5689 = vmax.f32 %v3636, %v4938
    %v5690 = vmax.f32 %v3644, %v4940
    %v5691 = vmax.f32 %v3643, %v4942
    %v5692 = vmax.f32 %v3645, %v4944
    %v5693 = vmax.f32 %v3653, %v4946
    %v5694 = vmax.f32 %v3661, %v4948
    %v5695 = vmax.f32 %v3660, %v4950
    %v5696 = vmax.f32 %v3662, %v4952
    %v5697 = vmax.f32 %v3670, %v4954
    %v5698 = vmax.f32 %v3678, %v4956
    %v5699 = vmax.f32 %v3677, %v4958
    %v5700 = vmax.f32 %v3679, %v4960
    %v5701 = vmax.f32 %v3687, %v4962
    %v5702 = vmax.f32 %v3695, %v4964
    %v5703 = vmax.f32 %v3694, %v4966
    %v5704 = vmax.f32 %v3696, %v4968
    %v5705 = vmax.f32 %v3704, %v4970
    %v5706 = vmax.f32 %v3712, %v4972
    %v5707 = vmax.f32 %v3711, %v4974
    %v5708 = vmax.f32 %v3713, %v4976
    %v5709 = vmax.f32 %v3721, %v4978
    %v5710 = vmax.f32 %v3729, %v4980
    %v5711 = vmax.f32 %v3728, %v4982
    %v5712 = vmax.f32 %v3730, %v4984
    %v5713 = vmax.f32 %v3738, %v4986
    %v5714 = vmax.f32 %v3746, %v4988
    %v5715 = vmax.f32 %v3745, %v4990
    %v5716 = vmax.f32 %v3747, %v4992
    %v5717 = vmax.f32 %v3755, %v4994
    %v5718 = vmax.f32 %v3763, %v4996
    %v5719 = vmax.f32 %v3762, %v4998
    %v5720 = vmax.f32 %v3764, %v5000
    %v5721 = vmax.f32 %v3772, %v5002
    %v5722 = vmax.f32 %v3780, %v5004
    %v5723 = vmax.f32 %v3779, %v5006
    %v5724 = vmax.f32 %v3781, %v5008
    %v5725 = vmax.f32 %v3789, %v5010
    %v5726 = vmax.f32 %v3797, %v5012
    %v5727 = vmax.f32 %v3796, %v5014
    %v5728 = vmax.f32 %v3798, %v5016
    %v5729 = vmax.f32 %v3806, %v5018
    %v5730 = vmax.f32 %v3814, %v5020
    %v5731 = vmax.f32 %v3813, %v5022
    %v5732 = vmax.f32 %v3815, %v5024
    %v5733 = vmax.f32 %v3823, %v5026
    %v5734 = vmax.f32 %v3831, %v5028
    %v5735 = vmax.f32 %v3830, %v5030
    %v5736 = vmax.f32 %v3832, %v5032
    %v5737 = vmax.f32 %v3840, %v5034
    %v5738 = vmax.f32 %v3848, %v5036
    %v5739 = vmax.f32 %v3847, %v5038
    %v5740 = vmax.f32 %v3849, %v5040
    %v5741 = vmax.f32 %v3857, %v5042
    %v5742 = vmax.f32 %v3865, %v5044
    %v5743 = vmax.f32 %v3864, %v5046
    %v5744 = vmax.f32 %v3866, %v5048
    %v5745 = vmax.f32 %v3874, %v5050
    %v5746 = vmax.f32 %v3882, %v5052
    %v5747 = vmax.f32 %v3881, %v5054
    %v5748 = vmax.f32 %v3883, %v5056
    %v5749 = vmax.f32 %v3891, %v5058
    %v5750 = vmax.f32 %v3899, %v5060
    %v5751 = vmax.f32 %v3898, %v5062
    %v5752 = vmax.f32 %v3900, %v5064
    %v5753 = vmax.f32 %v3908, %v5066
    %v5754 = vmax.f32 %v3916, %v5068
    %v5755 = vmax.f32 %v3915, %v5070
    %v5756 = vmax.f32 %v3917, %v5072
    %v5757 = vmax.f32 %v3925, %v5074
    %v5758 = vmax.f32 %v3933, %v5076
    %v5759 = vmax.f32 %v3932, %v5078
    %v5760 = vmax.f32 %v3934, %v5080
    %v5761 = vmax.f32 %v3942, %v5082
    %v5762 = vmax.f32 %v3950, %v5084
    %v5763 = vmax.f32 %v3949, %v5086
    %v5764 = vmax.f32 %v3951, %v5088
    %v5765 = vmax.f32 %v3959, %v5090
    %v5766 = vmax.f32 %v3967, %v5092
    %v5767 = vmax.f32 %v3966, %v5094
    %v5768 = vmax.f32 %v3968, %v5096
    %v5769 = vmax.f32 %v3976, %v5098
    %v5770 = vmax.f32 %v3984, %v5100
    %v5771 = vmax.f32 %v3983, %v5102
    %v5772 = vmax.f32 %v3985, %v5104
    %v5773 = vmax.f32 %v3993, %v5106
    %v5774 = vmax.f32 %v4001, %v5108
    %v5775 = vmax.f32 %v4000, %v5110
    %v5776 = vmax.f32 %v4002, %v5112
    %v5777 = vmax.f32 %v4010, %v5114
    %v5778 = vmax.f32 %v4018, %v5116
    %v5779 = vmax.f32 %v4017, %v5118
    %v5780 = vmax.f32 %v4019, %v5120
    %v5781 = vmax.f32 %v4027, %v5122
    %v5782 = vmax.f32 %v4035, %v5124
    %v5783 = vmax.f32 %v4034, %v5126
    %v5784 = vmax.f32 %v4036, %v5128
    %v5785 = vmax.f32 %v4044, %v5130
    %v5786 = vmax.f32 %v4052, %v5132
    %v5787 = vmax.f32 %v4051, %v5134
    %v5788 = vmax.f32 %v4053, %v5136
    %v5789 = vmax.f32 %v4061, %v5138
    %v5790 = vmax.f32 %v4069, %v5140
    %v5791 = vmax.f32 %v4068, %v5142
    %v5792 = vmax.f32 %v4070, %v5144
    %v5793 = vmax.f32 %v4078, %v5146
    %v5794 = vmax.f32 %v4086, %v5148
    %v5795 = vmax.f32 %v4085, %v5150
    %v5796 = vmax.f32 %v4087, %v5152
    %v5797 = vmax.f32 %v4095, %v5154
    %v5798 = vmax.f32 %v4103, %v5156
    %v5799 = vmax.f32 %v4102, %v5158
    %v5800 = vmax.f32 %v4104, %v5160
    %v5801 = vmax.f32 %v4112, %v5162
    %v5802 = vmax.f32 %v4120, %v5164
    %v5803 = vmax.f32 %v4119, %v5166
    %v5804 = vmax.f32 %v4121, %v5168
    %v5805 = vmax.f32 %v4129, %v5170
    %v5806 = vmax.f32 %v4137, %v5172
    %v5807 = vmax.f32 %v4136, %v5174
    %v5808 = vmax.f32 %v4138, %v5176
    %v5809 = vmax.f32 %v4146, %v5178
    %v5810 = vmax.f32 %v4154, %v5180
    %v5811 = vmax.f32 %v4153, %v5182
    %v5812 = vmax.f32 %v4155, %v5184
    %v5813 = vmax.f32 %v4163, %v5186
    %v5814 = vmax.f32 %v4171, %v5188
    %v5815 = vmax.f32 %v4170, %v5190
    %v5816 = vmax.f32 %v4172, %v5192
    %v5817 = vmax.f32 %v4180, %v5194
    %v5818 = vmax.f32 %v4188, %v5196
    %v5819 = vmax.f32 %v4187, %v5198
    %v5820 = vmax.f32 %v4189, %v5200
    %v5821 = vmax.f32 %v4197, %v5202
    %v5822 = vmax.f32 %v4205, %v5204
    %v5823 = vmax.f32 %v4204, %v5206
    %v5824 = vmax.f32 %v4206, %v5208
    %v5825 = vmax.f32 %v4214, %v5210
    %v5826 = vmax.f32 %v4222, %v5212
    %v5827 = vmax.f32 %v4221, %v5214
    %v5828 = vmax.f32 %v4223, %v5216
    %v5829 = vmax.f32 %v4231, %v5218
    %v5830 = vmax.f32 %v4239, %v5220
    %v5831 = vmax.f32 %v4238, %v5222
    %v5832 = vmax.f32 %v4240, %v5224
    %v5833 = vmax.f32 %v4248, %v5226
    %v5834 = vmax.f32 %v4256, %v5228
    %v5835 = vmax.f32 %v4255, %v5230
    %v5836 = vmax.f32 %v4257, %v5232
    %v5837 = vmax.f32 %v4265, %v5234
    %v5838 = vmax.f32 %v4273, %v5236
    %v5839 = vmax.f32 %v4272, %v5238
    %v5840 = vmax.f32 %v4274, %v5240
    %v5841 = vmax.f32 %v4282, %v5242
    %v5842 = vmax.f32 %v4290, %v5244
    %v5843 = vmax.f32 %v4289, %v5246
    %v5844 = vmax.f32 %v4291, %v5248
    %v5845 = vmax.f32 %v4299, %v5250
    %v5846 = vmax.f32 %v4307, %v5252
    %v5847 = vmax.f32 %v4306, %v5254
    %v5848 = vmax.f32 %v4308, %v5256
    %v5849 = vmax.f32 %v4316, %v5258
    %v5850 = vmax.f32 %v4324, %v5260
    %v5851 = vmax.f32 %v4323, %v5262
    %v5852 = vmax.f32 %v4325, %v5264
    %v5853 = vmax.f32 %v4333, %v5266
    %v5854 = vmax.f32 %v4341, %v5268
    %v5855 = vmax.f32 %v4340, %v5270
    %v5856 = vmax.f32 %v4342, %v5272
    %v5857 = vmax.f32 %v4350, %v5274
    %v5858 = vmax.f32 %v4358, %v5276
    %v5859 = vmax.f32 %v4357, %v5278
    %v5860 = vmax.f32 %v4359, %v5280
    %v5861 = vmax.f32 %v4367, %v5282
    %v5862 = vmax.f32 %v4375, %v5284
    %v5863 = vmax.f32 %v4374, %v5286
    %v5864 = vmax.f32 %v4376, %v5288
    %v5865 = vmax.f32 %v4384, %v5290
    %v5866 = vmax.f32 %v4392, %v5292
    %v5867 = vmax.f32 %v4391, %v5294
    %v5868 = vmax.f32 %v4393, %v5296
    %v5869 = vmax.f32 %v4401, %v5298
    %v5870 = vmax.f32 %v4409, %v5300
    %v5871 = vmax.f32 %v4408, %v5302
    %v5872 = vmax.f32 %v4410, %v5304
    %v5873 = vmax.f32 %v4418, %v5306
    %v5874 = vmax.f32 %v4426, %v5308
    %v5875 = vmax.f32 %v4425, %v5310
    %v5876 = vmax.f32 %v4427, %v5312
    %v5877 = vmax.f32 %v4435, %v5314
    %v5878 = vmax.f32 %v4443, %v5316
    %v5879 = vmax.f32 %v4442, %v5318
    %v5880 = vmax.f32 %v4444, %v5320
    %v5881 = vmax.f32 %v4452, %v5322
    %v5882 = vmax.f32 %v4460, %v5324
    %v5883 = vmax.f32 %v4459, %v5326
    %v5884 = vmax.f32 %v4461, %v5328
    %v5885 = vmax.f32 %v4469, %v5330
    %v5886 = vmax.f32 %v4477, %v5332
    %v5887 = vmax.f32 %v4476, %v5334
    %v5888 = vmax.f32 %v4478, %v5336
    %v5889 = vmax.f32 %v4486, %v5338
    %v5890 = vmax.f32 %v4494, %v5340
    %v5891 = vmax.f32 %v4493, %v5342
    %v5892 = vmax.f32 %v4495, %v5344
    %v5893 = vmax.f32 %v4503, %v5346
    %v5894 = vmax.f32 %v4511, %v5348
    %v5895 = vmax.f32 %v4510, %v5350
    %v5896 = vmax.f32 %v4512, %v5352
    %v5897 = vmax.f32 %v4520, %v5354
    %v5898 = vmax.f32 %v4528, %v5356
    %v5899 = vmax.f32 %v4527, %v5358
    %v5900 = vmax.f32 %v4529, %v5360
    %v5901 = vmax.f32 %v4537, %v5362
    %v5902 = vmax.f32 %v4545, %v5364
    %v5903 = vmax.f32 %v4544, %v5366
    %v5904 = vmax.f32 %v4546, %v5368
    %v5905 = vmax.f32 %v4554, %v5370
    %v5906 = vmax.f32 %v4562, %v5372
    %v5907 = vmax.f32 %v4561, %v5374
    %v5908 = vmax.f32 %v4563, %v5376
    %v5909 = vmax.f32 %v4571, %v5378
    %v5910 = vmax.f32 %v4579, %v5380
    %v5911 = vmax.f32 %v4578, %v5382
    %v5912 = vmax.f32 %v4580, %v5384
    %v5913 = vmax.f32 %v4588, %v5386
    %v5914 = vmax.f32 %v4596, %v5388
    %v5915 = vmax.f32 %v4595, %v5390
    %v5916 = vmax.f32 %v4597, %v5392
    %v5917 = vmax.f32 %v4605, %v5394
    %v5918 = vmax.f32 %v4613, %v5396
    %v5919 = vmax.f32 %v4612, %v5398
    %v5920 = vmax.f32 %v4614, %v5400
    %v5921 = vmax.f32 %v4622, %v5402
    %v5922 = vmax.f32 %v4630, %v5404
    %v5923 = vmax.f32 %v4629, %v5406
    %v5924 = vmax.f32 %v4631, %v5408
    %v5925 = vmax.f32 %v4639, %v5410
    %v5926 = vmax.f32 %v4647, %v5412
    %v5927 = vmax.f32 %v4646, %v5414
    %v5928 = vmax.f32 %v4648, %v5416
    %v5929 = vmax.f32 %v5673, %v5681
    %v5930 = vmax.f32 %v5674, %v5682
    %v5931 = vmax.f32 %v5675, %v5683
    %v5932 = vmax.f32 %v5676, %v5684
    %v5933 = vmax.f32 %v5677, %v5685
    %v5934 = vmax.f32 %v5678, %v5686
    %v5935 = vmax.f32 %v5679, %v5687
    %v5936 = vmax.f32 %v5680, %v5688
    %v5937 = vmax.f32 %v5689, %v5697
    %v5938 = vmax.f32 %v5690, %v5698
    %v5939 = vmax.f32 %v5691, %v5699
    %v5940 = vmax.f32 %v5692, %v5700
    %v5941 = vmax.f32 %v5693, %v5701
    %v5942 = vmax.f32 %v5694, %v5702
    %v5943 = vmax.f32 %v5695, %v5703
    %v5944 = vmax.f32 %v5696, %v5704
    %v5945 = vmax.f32 %v5705, %v5713
    %v5946 = vmax.f32 %v5706, %v5714
    %v5947 = vmax.f32 %v5707, %v5715
    %v5948 = vmax.f32 %v5708, %v5716
    %v5949 = vmax.f32 %v5709, %v5717
    %v5950 = vmax.f32 %v5710, %v5718
    %v5951 = vmax.f32 %v5711, %v5719
    %v5952 = vmax.f32 %v5712, %v5720
    %v5953 = vmax.f32 %v5721, %v5729
    %v5954 = vmax.f32 %v5722, %v5730
    %v5955 = vmax.f32 %v5723, %v5731
    %v5956 = vmax.f32 %v5724, %v5732
    %v5957 = vmax.f32 %v5725, %v5733
    %v5958 = vmax.f32 %v5726, %v5734
    %v5959 = vmax.f32 %v5727, %v5735
    %v5960 = vmax.f32 %v5728, %v5736
    %v5961 = vmax.f32 %v5737, %v5745
    %v5962 = vmax.f32 %v5738, %v5746
    %v5963 = vmax.f32 %v5739, %v5747
    %v5964 = vmax.f32 %v5740, %v5748
    %v5965 = vmax.f32 %v5741, %v5749
    %v5966 = vmax.f32 %v5742, %v5750
    %v5967 = vmax.f32 %v5743, %v5751
    %v5968 = vmax.f32 %v5744, %v5752
    %v5969 = vmax.f32 %v5753, %v5761
    %v5970 = vmax.f32 %v5754, %v5762
    %v5971 = vmax.f32 %v5755, %v5763
    %v5972 = vmax.f32 %v5756, %v5764
    %v5973 = vmax.f32 %v5757, %v5765
    %v5974 = vmax.f32 %v5758, %v5766
    %v5975 = vmax.f32 %v5759, %v5767
    %v5976 = vmax.f32 %v5760, %v5768
    %v5977 = vmax.f32 %v5769, %v5777
    %v5978 = vmax.f32 %v5770, %v5778
    %v5979 = vmax.f32 %v5771, %v5779
    %v5980 = vmax.f32 %v5772, %v5780
    %v5981 = vmax.f32 %v5773, %v5781
    %v5982 = vmax.f32 %v5774, %v5782
    %v5983 = vmax.f32 %v5775, %v5783
    %v5984 = vmax.f32 %v5776, %v5784
    %v5985 = vmax.f32 %v5785, %v5793
    %v5986 = vmax.f32 %v5786, %v5794
    %v5987 = vmax.f32 %v5787, %v5795
    %v5988 = vmax.f32 %v5788, %v5796
    %v5989 = vmax.f32 %v5789, %v5797
    %v5990 = vmax.f32 %v5790, %v5798
    %v5991 = vmax.f32 %v5791, %v5799
    %v5992 = vmax.f32 %v5792, %v5800
    %v5993 = vmax.f32 %v5801, %v5809
    %v5994 = vmax.f32 %v5802, %v5810
    %v5995 = vmax.f32 %v5803, %v5811
    %v5996 = vmax.f32 %v5804, %v5812
    %v5997 = vmax.f32 %v5805, %v5813
    %v5998 = vmax.f32 %v5806, %v5814
    %v5999 = vmax.f32 %v5807, %v5815
    %v6000 = vmax.f32 %v5808, %v5816
    %v6001 = vmax.f32 %v5817, %v5825
    %v6002 = vmax.f32 %v5818, %v5826
    %v6003 = vmax.f32 %v5819, %v5827
    %v6004 = vmax.f32 %v5820, %v5828
    %v6005 = vmax.f32 %v5821, %v5829
    %v6006 = vmax.f32 %v5822, %v5830
    %v6007 = vmax.f32 %v5823, %v5831
    %v6008 = vmax.f32 %v5824, %v5832
    %v6009 = vmax.f32 %v5833, %v5841
    %v6010 = vmax.f32 %v5834, %v5842
    %v6011 = vmax.f32 %v5835, %v5843
    %v6012 = vmax.f32 %v5836, %v5844
    %v6013 = vmax.f32 %v5837, %v5845
    %v6014 = vmax.f32 %v5838, %v5846
    %v6015 = vmax.f32 %v5839, %v5847
    %v6016 = vmax.f32 %v5840, %v5848
    %v6017 = vmax.f32 %v5849, %v5857
    %v6018 = vmax.f32 %v5850, %v5858
    %v6019 = vmax.f32 %v5851, %v5859
    %v6020 = vmax.f32 %v5852, %v5860
    %v6021 = vmax.f32 %v5853, %v5861
    %v6022 = vmax.f32 %v5854, %v5862
    %v6023 = vmax.f32 %v5855, %v5863
    %v6024 = vmax.f32 %v5856, %v5864
    %v6025 = vmax.f32 %v5865, %v5873
    %v6026 = vmax.f32 %v5866, %v5874
    %v6027 = vmax.f32 %v5867, %v5875
    %v6028 = vmax.f32 %v5868, %v5876
    %v6029 = vmax.f32 %v5869, %v5877
    %v6030 = vmax.f32 %v5870, %v5878
    %v6031 = vmax.f32 %v5871, %v5879
    %v6032 = vmax.f32 %v5872, %v5880
    %v6033 = vmax.f32 %v5881, %v5889
    %v6034 = vmax.f32 %v5882, %v5890
    %v6035 = vmax.f32 %v5883, %v5891
    %v6036 = vmax.f32 %v5884, %v5892
    %v6037 = vmax.f32 %v5885, %v5893
    %v6038 = vmax.f32 %v5886, %v5894
    %v6039 = vmax.f32 %v5887, %v5895
    %v6040 = vmax.f32 %v5888, %v5896
    %v6041 = vmax.f32 %v5897, %v5905
    %v6042 = vmax.f32 %v5898, %v5906
    %v6043 = vmax.f32 %v5899, %v5907
    %v6044 = vmax.f32 %v5900, %v5908
    %v6045 = vmax.f32 %v5901, %v5909
    %v6046 = vmax.f32 %v5902, %v5910
    %v6047 = vmax.f32 %v5903, %v5911
    %v6048 = vmax.f32 %v5904, %v5912
    %v6049 = vmax.f32 %v5913, %v5921
    %v6050 = vmax.f32 %v5914, %v5922
    %v6051 = vmax.f32 %v5915, %v5923
    %v6052 = vmax.f32 %v5916, %v5924
    %v6053 = vmax.f32 %v5917, %v5925
    %v6054 = vmax.f32 %v5918, %v5926
    %v6055 = vmax.f32 %v5919, %v5927
    %v6056 = vmax.f32 %v5920, %v5928
    %v6185 = vlaneseq
    %v6186 = vshrl.u32 %v6185, 7
    %v6187 = vsub.s32 0, %v6186
    %v6188 = vrot.slane %v5929, %v6187
    %v6189 = vlaneseq
    %v6190 = vshrl.u32 %v6189, 7
    %v6191 = vsub.s32 0, %v6190
    %v6192 = vrot.slane %v5930, %v6191
    %v6193 = vlaneseq
    %v6194 = vshrl.u32 %v6193, 7
    %v6195 = vsub.s32 0, %v6194
    %v6196 = vrot.slane %v5931, %v6195
    %v6197 = vlaneseq
    %v6198 = vshrl.u32 %v6197, 7
    %v6199 = vsub.s32 0, %v6198
    %v6200 = vrot.slane %v5932, %v6199
    %v6201 = vlaneseq
    %v6202 = vshrl.u32 %v6201, 7
    %v6203 = vsub.s32 0, %v6202
    %v6204 = vrot.slane %v5933, %v6203
    %v6205 = vlaneseq
    %v6206 = vshrl.u32 %v6205, 7
    %v6207 = vsub.s32 0, %v6206
    %v6208 = vrot.slane %v5934, %v6207
    %v6209 = vlaneseq
    %v6210 = vshrl.u32 %v6209, 7
    %v6211 = vsub.s32 0, %v6210
    %v6212 = vrot.slane %v5935, %v6211
    %v6213 = vlaneseq
    %v6214 = vshrl.u32 %v6213, 7
    %v6215 = vsub.s32 0, %v6214
    %v6216 = vrot.slane %v5936, %v6215
    %v6217 = vlaneseq
    %v6218 = vshrl.u32 %v6217, 7
    %v6219 = vsub.s32 0, %v6218
    %v6220 = vrot.slane %v5937, %v6219
    %v6221 = vlaneseq
    %v6222 = vshrl.u32 %v6221, 7
    %v6223 = vsub.s32 0, %v6222
    %v6224 = vrot.slane %v5938, %v6223
    %v6225 = vlaneseq
    %v6226 = vshrl.u32 %v6225, 7
    %v6227 = vsub.s32 0, %v6226
    %v6228 = vrot.slane %v5939, %v6227
    %v6229 = vlaneseq
    %v6230 = vshrl.u32 %v6229, 7
    %v6231 = vsub.s32 0, %v6230
    %v6232 = vrot.slane %v5940, %v6231
    %v6233 = vlaneseq
    %v6234 = vshrl.u32 %v6233, 7
    %v6235 = vsub.s32 0, %v6234
    %v6236 = vrot.slane %v5941, %v6235
    %v6237 = vlaneseq
    %v6238 = vshrl.u32 %v6237, 7
    %v6239 = vsub.s32 0, %v6238
    %v6240 = vrot.slane %v5942, %v6239
    %v6241 = vlaneseq
    %v6242 = vshrl.u32 %v6241, 7
    %v6243 = vsub.s32 0, %v6242
    %v6244 = vrot.slane %v5943, %v6243
    %v6245 = vlaneseq
    %v6246 = vshrl.u32 %v6245, 7
    %v6247 = vsub.s32 0, %v6246
    %v6248 = vrot.slane %v5944, %v6247
    %v6249 = vlaneseq
    %v6250 = vshrl.u32 %v6249, 7
    %v6251 = vsub.s32 0, %v6250
    %v6252 = vrot.slane %v5945, %v6251
    %v6253 = vlaneseq
    %v6254 = vshrl.u32 %v6253, 7
    %v6255 = vsub.s32 0, %v6254
    %v6256 = vrot.slane %v5946, %v6255
    %v6257 = vlaneseq
    %v6258 = vshrl.u32 %v6257, 7
    %v6259 = vsub.s32 0, %v6258
    %v6260 = vrot.slane %v5947, %v6259
    %v6261 = vlaneseq
    %v6262 = vshrl.u32 %v6261, 7
    %v6263 = vsub.s32 0, %v6262
    %v6264 = vrot.slane %v5948, %v6263
    %v6265 = vlaneseq
    %v6266 = vshrl.u32 %v6265, 7
    %v6267 = vsub.s32 0, %v6266
    %v6268 = vrot.slane %v5949, %v6267
    %v6269 = vlaneseq
    %v6270 = vshrl.u32 %v6269, 7
    %v6271 = vsub.s32 0, %v6270
    %v6272 = vrot.slane %v5950, %v6271
    %v6273 = vlaneseq
    %v6274 = vshrl.u32 %v6273, 7
    %v6275 = vsub.s32 0, %v6274
    %v6276 = vrot.slane %v5951, %v6275
    %v6277 = vlaneseq
    %v6278 = vshrl.u32 %v6277, 7
    %v6279 = vsub.s32 0, %v6278
    %v6280 = vrot.slane %v5952, %v6279
    %v6281 = vlaneseq
    %v6282 = vshrl.u32 %v6281, 7
    %v6283 = vsub.s32 0, %v6282
    %v6284 = vrot.slane %v5953, %v6283
    %v6285 = vlaneseq
    %v6286 = vshrl.u32 %v6285, 7
    %v6287 = vsub.s32 0, %v6286
    %v6288 = vrot.slane %v5954, %v6287
    %v6289 = vlaneseq
    %v6290 = vshrl.u32 %v6289, 7
    %v6291 = vsub.s32 0, %v6290
    %v6292 = vrot.slane %v5955, %v6291
    %v6293 = vlaneseq
    %v6294 = vshrl.u32 %v6293, 7
    %v6295 = vsub.s32 0, %v6294
    %v6296 = vrot.slane %v5956, %v6295
    %v6297 = vlaneseq
    %v6298 = vshrl.u32 %v6297, 7
    %v6299 = vsub.s32 0, %v6298
    %v6300 = vrot.slane %v5957, %v6299
    %v6301 = vlaneseq
    %v6302 = vshrl.u32 %v6301, 7
    %v6303 = vsub.s32 0, %v6302
    %v6304 = vrot.slane %v5958, %v6303
    %v6305 = vlaneseq
    %v6306 = vshrl.u32 %v6305, 7
    %v6307 = vsub.s32 0, %v6306
    %v6308 = vrot.slane %v5959, %v6307
    %v6309 = vlaneseq
    %v6310 = vshrl.u32 %v6309, 7
    %v6311 = vsub.s32 0, %v6310
    %v6312 = vrot.slane %v5960, %v6311
    %v6313 = vlaneseq
    %v6314 = vshrl.u32 %v6313, 7
    %v6315 = vsub.s32 0, %v6314
    %v6316 = vrot.slane %v5961, %v6315
    %v6317 = vlaneseq
    %v6318 = vshrl.u32 %v6317, 7
    %v6319 = vsub.s32 0, %v6318
    %v6320 = vrot.slane %v5962, %v6319
    %v6321 = vlaneseq
    %v6322 = vshrl.u32 %v6321, 7
    %v6323 = vsub.s32 0, %v6322
    %v6324 = vrot.slane %v5963, %v6323
    %v6325 = vlaneseq
    %v6326 = vshrl.u32 %v6325, 7
    %v6327 = vsub.s32 0, %v6326
    %v6328 = vrot.slane %v5964, %v6327
    %v6329 = vlaneseq
    %v6330 = vshrl.u32 %v6329, 7
    %v6331 = vsub.s32 0, %v6330
    %v6332 = vrot.slane %v5965, %v6331
    %v6333 = vlaneseq
    %v6334 = vshrl.u32 %v6333, 7
    %v6335 = vsub.s32 0, %v6334
    %v6336 = vrot.slane %v5966, %v6335
    %v6337 = vlaneseq
    %v6338 = vshrl.u32 %v6337, 7
    %v6339 = vsub.s32 0, %v6338
    %v6340 = vrot.slane %v5967, %v6339
    %v6341 = vlaneseq
    %v6342 = vshrl.u32 %v6341, 7
    %v6343 = vsub.s32 0, %v6342
    %v6344 = vrot.slane %v5968, %v6343
    %v6345 = vlaneseq
    %v6346 = vshrl.u32 %v6345, 7
    %v6347 = vsub.s32 0, %v6346
    %v6348 = vrot.slane %v5969, %v6347
    %v6349 = vlaneseq
    %v6350 = vshrl.u32 %v6349, 7
    %v6351 = vsub.s32 0, %v6350
    %v6352 = vrot.slane %v5970, %v6351
    %v6353 = vlaneseq
    %v6354 = vshrl.u32 %v6353, 7
    %v6355 = vsub.s32 0, %v6354
    %v6356 = vrot.slane %v5971, %v6355
    %v6357 = vlaneseq
    %v6358 = vshrl.u32 %v6357, 7
    %v6359 = vsub.s32 0, %v6358
    %v6360 = vrot.slane %v5972, %v6359
    %v6361 = vlaneseq
    %v6362 = vshrl.u32 %v6361, 7
    %v6363 = vsub.s32 0, %v6362
    %v6364 = vrot.slane %v5973, %v6363
    %v6365 = vlaneseq
    %v6366 = vshrl.u32 %v6365, 7
    %v6367 = vsub.s32 0, %v6366
    %v6368 = vrot.slane %v5974, %v6367
    %v6369 = vlaneseq
    %v6370 = vshrl.u32 %v6369, 7
    %v6371 = vsub.s32 0, %v6370
    %v6372 = vrot.slane %v5975, %v6371
    %v6373 = vlaneseq
    %v6374 = vshrl.u32 %v6373, 7
    %v6375 = vsub.s32 0, %v6374
    %v6376 = vrot.slane %v5976, %v6375
    %v6377 = vlaneseq
    %v6378 = vshrl.u32 %v6377, 7
    %v6379 = vsub.s32 0, %v6378
    %v6380 = vrot.slane %v5977, %v6379
    %v6381 = vlaneseq
    %v6382 = vshrl.u32 %v6381, 7
    %v6383 = vsub.s32 0, %v6382
    %v6384 = vrot.slane %v5978, %v6383
    %v6385 = vlaneseq
    %v6386 = vshrl.u32 %v6385, 7
    %v6387 = vsub.s32 0, %v6386
    %v6388 = vrot.slane %v5979, %v6387
    %v6389 = vlaneseq
    %v6390 = vshrl.u32 %v6389, 7
    %v6391 = vsub.s32 0, %v6390
    %v6392 = vrot.slane %v5980, %v6391
    %v6393 = vlaneseq
    %v6394 = vshrl.u32 %v6393, 7
    %v6395 = vsub.s32 0, %v6394
    %v6396 = vrot.slane %v5981, %v6395
    %v6397 = vlaneseq
    %v6398 = vshrl.u32 %v6397, 7
    %v6399 = vsub.s32 0, %v6398
    %v6400 = vrot.slane %v5982, %v6399
    %v6401 = vlaneseq
    %v6402 = vshrl.u32 %v6401, 7
    %v6403 = vsub.s32 0, %v6402
    %v6404 = vrot.slane %v5983, %v6403
    %v6405 = vlaneseq
    %v6406 = vshrl.u32 %v6405, 7
    %v6407 = vsub.s32 0, %v6406
    %v6408 = vrot.slane %v5984, %v6407
    %v6409 = vlaneseq
    %v6410 = vshrl.u32 %v6409, 7
    %v6411 = vsub.s32 0, %v6410
    %v6412 = vrot.slane %v5985, %v6411
    %v6413 = vlaneseq
    %v6414 = vshrl.u32 %v6413, 7
    %v6415 = vsub.s32 0, %v6414
    %v6416 = vrot.slane %v5986, %v6415
    %v6417 = vlaneseq
    %v6418 = vshrl.u32 %v6417, 7
    %v6419 = vsub.s32 0, %v6418
    %v6420 = vrot.slane %v5987, %v6419
    %v6421 = vlaneseq
    %v6422 = vshrl.u32 %v6421, 7
    %v6423 = vsub.s32 0, %v6422
    %v6424 = vrot.slane %v5988, %v6423
    %v6425 = vlaneseq
    %v6426 = vshrl.u32 %v6425, 7
    %v6427 = vsub.s32 0, %v6426
    %v6428 = vrot.slane %v5989, %v6427
    %v6429 = vlaneseq
    %v6430 = vshrl.u32 %v6429, 7
    %v6431 = vsub.s32 0, %v6430
    %v6432 = vrot.slane %v5990, %v6431
    %v6433 = vlaneseq
    %v6434 = vshrl.u32 %v6433, 7
    %v6435 = vsub.s32 0, %v6434
    %v6436 = vrot.slane %v5991, %v6435
    %v6437 = vlaneseq
    %v6438 = vshrl.u32 %v6437, 7
    %v6439 = vsub.s32 0, %v6438
    %v6440 = vrot.slane %v5992, %v6439
    %v6441 = vlaneseq
    %v6442 = vshrl.u32 %v6441, 7
    %v6443 = vsub.s32 0, %v6442
    %v6444 = vrot.slane %v5993, %v6443
    %v6445 = vlaneseq
    %v6446 = vshrl.u32 %v6445, 7
    %v6447 = vsub.s32 0, %v6446
    %v6448 = vrot.slane %v5994, %v6447
    %v6449 = vlaneseq
    %v6450 = vshrl.u32 %v6449, 7
    %v6451 = vsub.s32 0, %v6450
    %v6452 = vrot.slane %v5995, %v6451
    %v6453 = vlaneseq
    %v6454 = vshrl.u32 %v6453, 7
    %v6455 = vsub.s32 0, %v6454
    %v6456 = vrot.slane %v5996, %v6455
    %v6457 = vlaneseq
    %v6458 = vshrl.u32 %v6457, 7
    %v6459 = vsub.s32 0, %v6458
    %v6460 = vrot.slane %v5997, %v6459
    %v6461 = vlaneseq
    %v6462 = vshrl.u32 %v6461, 7
    %v6463 = vsub.s32 0, %v6462
    %v6464 = vrot.slane %v5998, %v6463
    %v6465 = vlaneseq
    %v6466 = vshrl.u32 %v6465, 7
    %v6467 = vsub.s32 0, %v6466
    %v6468 = vrot.slane %v5999, %v6467
    %v6469 = vlaneseq
    %v6470 = vshrl.u32 %v6469, 7
    %v6471 = vsub.s32 0, %v6470
    %v6472 = vrot.slane %v6000, %v6471
    %v6473 = vlaneseq
    %v6474 = vshrl.u32 %v6473, 7
    %v6475 = vsub.s32 0, %v6474
    %v6476 = vrot.slane %v6001, %v6475
    %v6477 = vlaneseq
    %v6478 = vshrl.u32 %v6477, 7
    %v6479 = vsub.s32 0, %v6478
    %v6480 = vrot.slane %v6002, %v6479
    %v6481 = vlaneseq
    %v6482 = vshrl.u32 %v6481, 7
    %v6483 = vsub.s32 0, %v6482
    %v6484 = vrot.slane %v6003, %v6483
    %v6485 = vlaneseq
    %v6486 = vshrl.u32 %v6485, 7
    %v6487 = vsub.s32 0, %v6486
    %v6488 = vrot.slane %v6004, %v6487
    %v6489 = vlaneseq
    %v6490 = vshrl.u32 %v6489, 7
    %v6491 = vsub.s32 0, %v6490
    %v6492 = vrot.slane %v6005, %v6491
    %v6493 = vlaneseq
    %v6494 = vshrl.u32 %v6493, 7
    %v6495 = vsub.s32 0, %v6494
    %v6496 = vrot.slane %v6006, %v6495
    %v6497 = vlaneseq
    %v6498 = vshrl.u32 %v6497, 7
    %v6499 = vsub.s32 0, %v6498
    %v6500 = vrot.slane %v6007, %v6499
    %v6501 = vlaneseq
    %v6502 = vshrl.u32 %v6501, 7
    %v6503 = vsub.s32 0, %v6502
    %v6504 = vrot.slane %v6008, %v6503
    %v6505 = vlaneseq
    %v6506 = vshrl.u32 %v6505, 7
    %v6507 = vsub.s32 0, %v6506
    %v6508 = vrot.slane %v6009, %v6507
    %v6509 = vlaneseq
    %v6510 = vshrl.u32 %v6509, 7
    %v6511 = vsub.s32 0, %v6510
    %v6512 = vrot.slane %v6010, %v6511
    %v6513 = vlaneseq
    %v6514 = vshrl.u32 %v6513, 7
    %v6515 = vsub.s32 0, %v6514
    %v6516 = vrot.slane %v6011, %v6515
    %v6517 = vlaneseq
    %v6518 = vshrl.u32 %v6517, 7
    %v6519 = vsub.s32 0, %v6518
    %v6520 = vrot.slane %v6012, %v6519
    %v6521 = vlaneseq
    %v6522 = vshrl.u32 %v6521, 7
    %v6523 = vsub.s32 0, %v6522
    %v6524 = vrot.slane %v6013, %v6523
    %v6525 = vlaneseq
    %v6526 = vshrl.u32 %v6525, 7
    %v6527 = vsub.s32 0, %v6526
    %v6528 = vrot.slane %v6014, %v6527
    %v6529 = vlaneseq
    %v6530 = vshrl.u32 %v6529, 7
    %v6531 = vsub.s32 0, %v6530
    %v6532 = vrot.slane %v6015, %v6531
    %v6533 = vlaneseq
    %v6534 = vshrl.u32 %v6533, 7
    %v6535 = vsub.s32 0, %v6534
    %v6536 = vrot.slane %v6016, %v6535
    %v6537 = vlaneseq
    %v6538 = vshrl.u32 %v6537, 7
    %v6539 = vsub.s32 0, %v6538
    %v6540 = vrot.slane %v6017, %v6539
    %v6541 = vlaneseq
    %v6542 = vshrl.u32 %v6541, 7
    %v6543 = vsub.s32 0, %v6542
    %v6544 = vrot.slane %v6018, %v6543
    %v6545 = vlaneseq
    %v6546 = vshrl.u32 %v6545, 7
    %v6547 = vsub.s32 0, %v6546
    %v6548 = vrot.slane %v6019, %v6547
    %v6549 = vlaneseq
    %v6550 = vshrl.u32 %v6549, 7
    %v6551 = vsub.s32 0, %v6550
    %v6552 = vrot.slane %v6020, %v6551
    %v6553 = vlaneseq
    %v6554 = vshrl.u32 %v6553, 7
    %v6555 = vsub.s32 0, %v6554
    %v6556 = vrot.slane %v6021, %v6555
    %v6557 = vlaneseq
    %v6558 = vshrl.u32 %v6557, 7
    %v6559 = vsub.s32 0, %v6558
    %v6560 = vrot.slane %v6022, %v6559
    %v6561 = vlaneseq
    %v6562 = vshrl.u32 %v6561, 7
    %v6563 = vsub.s32 0, %v6562
    %v6564 = vrot.slane %v6023, %v6563
    %v6565 = vlaneseq
    %v6566 = vshrl.u32 %v6565, 7
    %v6567 = vsub.s32 0, %v6566
    %v6568 = vrot.slane %v6024, %v6567
    %v6569 = vlaneseq
    %v6570 = vshrl.u32 %v6569, 7
    %v6571 = vsub.s32 0, %v6570
    %v6572 = vrot.slane %v6025, %v6571
    %v6573 = vlaneseq
    %v6574 = vshrl.u32 %v6573, 7
    %v6575 = vsub.s32 0, %v6574
    %v6576 = vrot.slane %v6026, %v6575
    %v6577 = vlaneseq
    %v6578 = vshrl.u32 %v6577, 7
    %v6579 = vsub.s32 0, %v6578
    %v6580 = vrot.slane %v6027, %v6579
    %v6581 = vlaneseq
    %v6582 = vshrl.u32 %v6581, 7
    %v6583 = vsub.s32 0, %v6582
    %v6584 = vrot.slane %v6028, %v6583
    %v6585 = vlaneseq
    %v6586 = vshrl.u32 %v6585, 7
    %v6587 = vsub.s32 0, %v6586
    %v6588 = vrot.slane %v6029, %v6587
    %v6589 = vlaneseq
    %v6590 = vshrl.u32 %v6589, 7
    %v6591 = vsub.s32 0, %v6590
    %v6592 = vrot.slane %v6030, %v6591
    %v6593 = vlaneseq
    %v6594 = vshrl.u32 %v6593, 7
    %v6595 = vsub.s32 0, %v6594
    %v6596 = vrot.slane %v6031, %v6595
    %v6597 = vlaneseq
    %v6598 = vshrl.u32 %v6597, 7
    %v6599 = vsub.s32 0, %v6598
    %v6600 = vrot.slane %v6032, %v6599
    %v6601 = vlaneseq
    %v6602 = vshrl.u32 %v6601, 7
    %v6603 = vsub.s32 0, %v6602
    %v6604 = vrot.slane %v6033, %v6603
    %v6605 = vlaneseq
    %v6606 = vshrl.u32 %v6605, 7
    %v6607 = vsub.s32 0, %v6606
    %v6608 = vrot.slane %v6034, %v6607
    %v6609 = vlaneseq
    %v6610 = vshrl.u32 %v6609, 7
    %v6611 = vsub.s32 0, %v6610
    %v6612 = vrot.slane %v6035, %v6611
    %v6613 = vlaneseq
    %v6614 = vshrl.u32 %v6613, 7
    %v6615 = vsub.s32 0, %v6614
    %v6616 = vrot.slane %v6036, %v6615
    %v6617 = vlaneseq
    %v6618 = vshrl.u32 %v6617, 7
    %v6619 = vsub.s32 0, %v6618
    %v6620 = vrot.slane %v6037, %v6619
    %v6621 = vlaneseq
    %v6622 = vshrl.u32 %v6621, 7
    %v6623 = vsub.s32 0, %v6622
    %v6624 = vrot.slane %v6038, %v6623
    %v6625 = vlaneseq
    %v6626 = vshrl.u32 %v6625, 7
    %v6627 = vsub.s32 0, %v6626
    %v6628 = vrot.slane %v6039, %v6627
    %v6629 = vlaneseq
    %v6630 = vshrl.u32 %v6629, 7
    %v6631 = vsub.s32 0, %v6630
    %v6632 = vrot.slane %v6040, %v6631
    %v6633 = vlaneseq
    %v6634 = vshrl.u32 %v6633, 7
    %v6635 = vsub.s32 0, %v6634
    %v6636 = vrot.slane %v6041, %v6635
    %v6637 = vlaneseq
    %v6638 = vshrl.u32 %v6637, 7
    %v6639 = vsub.s32 0, %v6638
    %v6640 = vrot.slane %v6042, %v6639
    %v6641 = vlaneseq
    %v6642 = vshrl.u32 %v6641, 7
    %v6643 = vsub.s32 0, %v6642
    %v6644 = vrot.slane %v6043, %v6643
    %v6645 = vlaneseq
    %v6646 = vshrl.u32 %v6645, 7
    %v6647 = vsub.s32 0, %v6646
    %v6648 = vrot.slane %v6044, %v6647
    %v6649 = vlaneseq
    %v6650 = vshrl.u32 %v6649, 7
    %v6651 = vsub.s32 0, %v6650
    %v6652 = vrot.slane %v6045, %v6651
    %v6653 = vlaneseq
    %v6654 = vshrl.u32 %v6653, 7
    %v6655 = vsub.s32 0, %v6654
    %v6656 = vrot.slane %v6046, %v6655
    %v6657 = vlaneseq
    %v6658 = vshrl.u32 %v6657, 7
    %v6659 = vsub.s32 0, %v6658
    %v6660 = vrot.slane %v6047, %v6659
    %v6661 = vlaneseq
    %v6662 = vshrl.u32 %v6661, 7
    %v6663 = vsub.s32 0, %v6662
    %v6664 = vrot.slane %v6048, %v6663
    %v6665 = vlaneseq
    %v6666 = vshrl.u32 %v6665, 7
    %v6667 = vsub.s32 0, %v6666
    %v6668 = vrot.slane %v6049, %v6667
    %v6669 = vlaneseq
    %v6670 = vshrl.u32 %v6669, 7
    %v6671 = vsub.s32 0, %v6670
    %v6672 = vrot.slane %v6050, %v6671
    %v6673 = vlaneseq
    %v6674 = vshrl.u32 %v6673, 7
    %v6675 = vsub.s32 0, %v6674
    %v6676 = vrot.slane %v6051, %v6675
    %v6677 = vlaneseq
    %v6678 = vshrl.u32 %v6677, 7
    %v6679 = vsub.s32 0, %v6678
    %v6680 = vrot.slane %v6052, %v6679
    %v6681 = vlaneseq
    %v6682 = vshrl.u32 %v6681, 7
    %v6683 = vsub.s32 0, %v6682
    %v6684 = vrot.slane %v6053, %v6683
    %v6685 = vlaneseq
    %v6686 = vshrl.u32 %v6685, 7
    %v6687 = vsub.s32 0, %v6686
    %v6688 = vrot.slane %v6054, %v6687
    %v6689 = vlaneseq
    %v6690 = vshrl.u32 %v6689, 7
    %v6691 = vsub.s32 0, %v6690
    %v6692 = vrot.slane %v6055, %v6691
    %v6693 = vlaneseq
    %v6694 = vshrl.u32 %v6693, 7
    %v6695 = vsub.s32 0, %v6694
    %v6696 = vrot.slane %v6056, %v6695
    %vm6697 = vcmask 1041409
    %v6698 = vsel %vm6697, %v6192, %v6188
    %vm6699 = vcmask 1042434
    %v6700 = vsel %vm6699, %v6196, %v6698
    %vm6701 = vcmask 1043459
    %v6702 = vsel %vm6701, %v6200, %v6700
    %vm6703 = vcmask 1044484
    %v6704 = vsel %vm6703, %v6204, %v6702
    %vm6705 = vcmask 1045509
    %v6706 = vsel %vm6705, %v6208, %v6704
    %vm6707 = vcmask 1046534
    %v6708 = vsel %vm6707, %v6212, %v6706
    %vm6709 = vcmask 1047559
    %v6710 = vsel %vm6709, %v6216, %v6708
    %v6711 = vsel %vm6697, %v6224, %v6220
    %v6712 = vsel %vm6699, %v6228, %v6711
    %v6713 = vsel %vm6701, %v6232, %v6712
    %v6714 = vsel %vm6703, %v6236, %v6713
    %v6715 = vsel %vm6705, %v6240, %v6714
    %v6716 = vsel %vm6707, %v6244, %v6715
    %v6717 = vsel %vm6709, %v6248, %v6716
    %v6718 = vsel %vm6697, %v6256, %v6252
    %v6719 = vsel %vm6699, %v6260, %v6718
    %v6720 = vsel %vm6701, %v6264, %v6719
    %v6721 = vsel %vm6703, %v6268, %v6720
    %v6722 = vsel %vm6705, %v6272, %v6721
    %v6723 = vsel %vm6707, %v6276, %v6722
    %v6724 = vsel %vm6709, %v6280, %v6723
    %v6725 = vsel %vm6697, %v6288, %v6284
    %v6726 = vsel %vm6699, %v6292, %v6725
    %v6727 = vsel %vm6701, %v6296, %v6726
    %v6728 = vsel %vm6703, %v6300, %v6727
    %v6729 = vsel %vm6705, %v6304, %v6728
    %v6730 = vsel %vm6707, %v6308, %v6729
    %v6731 = vsel %vm6709, %v6312, %v6730
    %v6732 = vsel %vm6697, %v6320, %v6316
    %v6733 = vsel %vm6699, %v6324, %v6732
    %v6734 = vsel %vm6701, %v6328, %v6733
    %v6735 = vsel %vm6703, %v6332, %v6734
    %v6736 = vsel %vm6705, %v6336, %v6735
    %v6737 = vsel %vm6707, %v6340, %v6736
    %v6738 = vsel %vm6709, %v6344, %v6737
    %v6739 = vsel %vm6697, %v6352, %v6348
    %v6740 = vsel %vm6699, %v6356, %v6739
    %v6741 = vsel %vm6701, %v6360, %v6740
    %v6742 = vsel %vm6703, %v6364, %v6741
    %v6743 = vsel %vm6705, %v6368, %v6742
    %v6744 = vsel %vm6707, %v6372, %v6743
    %v6745 = vsel %vm6709, %v6376, %v6744
    %v6746 = vsel %vm6697, %v6384, %v6380
    %v6747 = vsel %vm6699, %v6388, %v6746
    %v6748 = vsel %vm6701, %v6392, %v6747
    %v6749 = vsel %vm6703, %v6396, %v6748
    %v6750 = vsel %vm6705, %v6400, %v6749
    %v6751 = vsel %vm6707, %v6404, %v6750
    %v6752 = vsel %vm6709, %v6408, %v6751
    %v6753 = vsel %vm6697, %v6416, %v6412
    %v6754 = vsel %vm6699, %v6420, %v6753
    %v6755 = vsel %vm6701, %v6424, %v6754
    %v6756 = vsel %vm6703, %v6428, %v6755
    %v6757 = vsel %vm6705, %v6432, %v6756
    %v6758 = vsel %vm6707, %v6436, %v6757
    %v6759 = vsel %vm6709, %v6440, %v6758
    %v6760 = vsel %vm6697, %v6448, %v6444
    %v6761 = vsel %vm6699, %v6452, %v6760
    %v6762 = vsel %vm6701, %v6456, %v6761
    %v6763 = vsel %vm6703, %v6460, %v6762
    %v6764 = vsel %vm6705, %v6464, %v6763
    %v6765 = vsel %vm6707, %v6468, %v6764
    %v6766 = vsel %vm6709, %v6472, %v6765
    %v6767 = vsel %vm6697, %v6480, %v6476
    %v6768 = vsel %vm6699, %v6484, %v6767
    %v6769 = vsel %vm6701, %v6488, %v6768
    %v6770 = vsel %vm6703, %v6492, %v6769
    %v6771 = vsel %vm6705, %v6496, %v6770
    %v6772 = vsel %vm6707, %v6500, %v6771
    %v6773 = vsel %vm6709, %v6504, %v6772
    %v6774 = vsel %vm6697, %v6512, %v6508
    %v6775 = vsel %vm6699, %v6516, %v6774
    %v6776 = vsel %vm6701, %v6520, %v6775
    %v6777 = vsel %vm6703, %v6524, %v6776
    %v6778 = vsel %vm6705, %v6528, %v6777
    %v6779 = vsel %vm6707, %v6532, %v6778
    %v6780 = vsel %vm6709, %v6536, %v6779
    %v6781 = vsel %vm6697, %v6544, %v6540
    %v6782 = vsel %vm6699, %v6548, %v6781
    %v6783 = vsel %vm6701, %v6552, %v6782
    %v6784 = vsel %vm6703, %v6556, %v6783
    %v6785 = vsel %vm6705, %v6560, %v6784
    %v6786 = vsel %vm6707, %v6564, %v6785
    %v6787 = vsel %vm6709, %v6568, %v6786
    %v6788 = vsel %vm6697, %v6576, %v6572
    %v6789 = vsel %vm6699, %v6580, %v6788
    %v6790 = vsel %vm6701, %v6584, %v6789
    %v6791 = vsel %vm6703, %v6588, %v6790
    %v6792 = vsel %vm6705, %v6592, %v6791
    %v6793 = vsel %vm6707, %v6596, %v6792
    %v6794 = vsel %vm6709, %v6600, %v6793
    %v6795 = vsel %vm6697, %v6608, %v6604
    %v6796 = vsel %vm6699, %v6612, %v6795
    %v6797 = vsel %vm6701, %v6616, %v6796
    %v6798 = vsel %vm6703, %v6620, %v6797
    %v6799 = vsel %vm6705, %v6624, %v6798
    %v6800 = vsel %vm6707, %v6628, %v6799
    %v6801 = vsel %vm6709, %v6632, %v6800
    %v6802 = vsel %vm6697, %v6640, %v6636
    %v6803 = vsel %vm6699, %v6644, %v6802
    %v6804 = vsel %vm6701, %v6648, %v6803
    %v6805 = vsel %vm6703, %v6652, %v6804
    %v6806 = vsel %vm6705, %v6656, %v6805
    %v6807 = vsel %vm6707, %v6660, %v6806
    %v6808 = vsel %vm6709, %v6664, %v6807
    %v6809 = vsel %vm6697, %v6672, %v6668
    %v6810 = vsel %vm6699, %v6676, %v6809
    %v6811 = vsel %vm6701, %v6680, %v6810
    %v6812 = vsel %vm6703, %v6684, %v6811
    %v6813 = vsel %vm6705, %v6688, %v6812
    %v6814 = vsel %vm6707, %v6692, %v6813
    %v6815 = vsel %vm6709, %v6696, %v6814
    %v6816 = vrot.slane %v6710, 7
    %v6817 = vrot.slane %v6717, 7
    %v6818 = vrot.slane %v6724, 7
    %v6819 = vrot.slane %v6731, 7
    %v6820 = vrot.slane %v6738, 7
    %v6821 = vrot.slane %v6745, 7
    %v6822 = vrot.slane %v6752, 7
    %v6823 = vrot.slane %v6759, 7
    %v6824 = vrot.slane %v6766, 7
    %v6825 = vrot.slane %v6773, 7
    %v6826 = vrot.slane %v6780, 7
    %v6827 = vrot.slane %v6787, 7
    %v6828 = vrot.slane %v6794, 7
    %v6829 = vrot.slane %v6801, 7
    %v6830 = vrot.slane %v6808, 7
    %v6831 = vrot.slane %v6815, 7
    %v6848 = vsel %vm162, 0.0, %v6816
    %v6849 = vsel %vm162, 0.0, %v6817
    %v6850 = vsel %vm162, 0.0, %v6818
    %v6851 = vsel %vm162, 0.0, %v6819
    %v6852 = vsel %vm162, 0.0, %v6820
    %v6853 = vsel %vm162, 0.0, %v6821
    %v6854 = vsel %vm162, 0.0, %v6822
    %v6855 = vsel %vm162, 0.0, %v6823
    %v6856 = vsel %vm162, 0.0, %v6824
    %v6857 = vsel %vm162, 0.0, %v6825
    %v6858 = vsel %vm162, 0.0, %v6826
    %v6859 = vsel %vm162, 0.0, %v6827
    %v6860 = vsel %vm162, 0.0, %v6828
    %v6861 = vsel %vm162, 0.0, %v6829
    %v6862 = vsel %vm162, 0.0, %v6830
    %v6863 = vsel %vm162, 0.0, %v6831
    %v6864 = vsel %vm162, %v6816, 0.0
    %v6865 = vsel %vm162, %v6817, 0.0
    %v6866 = vsel %vm162, %v6818, 0.0
    %v6867 = vsel %vm162, %v6819, 0.0
    %v6868 = vsel %vm162, %v6820, 0.0
    %v6869 = vsel %vm162, %v6821, 0.0
    %v6870 = vsel %vm162, %v6822, 0.0
    %v6871 = vsel %vm162, %v6823, 0.0
    %v6872 = vsel %vm162, %v6824, 0.0
    %v6873 = vsel %vm162, %v6825, 0.0
    %v6874 = vsel %vm162, %v6826, 0.0
    %v6875 = vsel %vm162, %v6827, 0.0
    %v6876 = vsel %vm162, %v6828, 0.0
    %v6877 = vsel %vm162, %v6829, 0.0
    %v6878 = vsel %vm162, %v6830, 0.0
    %v6879 = vsel %vm162, %v6831, 0.0
    %v6908 = vsel %vm485, %v486, %v489
    %v6909 = vrot.slane %v6848, 1
    %v6910 = vrot.slane %v6864, 1
    %v6911 = vsel %vm485, %v6909, %v6910
    %v6912 = vrot.slane %v6849, 1
    %v6913 = vrot.slane %v6865, 1
    %v6914 = vsel %vm485, %v6912, %v6913
    %v6915 = vrot.slane %v6850, 1
    %v6916 = vrot.slane %v6866, 1
    %v6917 = vsel %vm485, %v6915, %v6916
    %v6918 = vrot.slane %v6851, 1
    %v6919 = vrot.slane %v6867, 1
    %v6920 = vsel %vm485, %v6918, %v6919
    %v6921 = vrot.slane %v6852, 1
    %v6922 = vrot.slane %v6868, 1
    %v6923 = vsel %vm485, %v6921, %v6922
    %v6924 = vrot.slane %v6853, 1
    %v6925 = vrot.slane %v6869, 1
    %v6926 = vsel %vm485, %v6924, %v6925
    %v6927 = vrot.slane %v6854, 1
    %v6928 = vrot.slane %v6870, 1
    %v6929 = vsel %vm485, %v6927, %v6928
    %v6930 = vrot.slane %v6856, 1
    %v6931 = vrot.slane %v6872, 1
    %v6932 = vsel %vm485, %v6930, %v6931
    %v6933 = vrot.slane %v6857, 1
    %v6934 = vrot.slane %v6873, 1
    %v6935 = vsel %vm485, %v6933, %v6934
    %v6936 = vrot.slane %v6858, 1
    %v6937 = vrot.slane %v6874, 1
    %v6938 = vsel %vm485, %v6936, %v6937
    %v6939 = vrot.slane %v6859, 1
    %v6940 = vrot.slane %v6875, 1
    %v6941 = vsel %vm485, %v6939, %v6940
    %v6942 = vrot.slane %v6860, 1
    %v6943 = vrot.slane %v6876, 1
    %v6944 = vsel %vm485, %v6942, %v6943
    %v6945 = vrot.slane %v6861, 1
    %v6946 = vrot.slane %v6877, 1
    %v6947 = vsel %vm485, %v6945, %v6946
    %v6948 = vrot.slane %v6862, 1
    %v6949 = vrot.slane %v6878, 1
    %v6950 = vsel %vm485, %v6948, %v6949
    %6951 = vrot.lane.b32.xlu0 %v6908, 4
    %v6952 = vpop.permute.xlu0 %6951
    %6953 = vrot.lane.b32.xlu0 %v6911, 4
    %v6954 = vpop.permute.xlu0 %6953
    %6955 = vrot.lane.b32.xlu0 %v6914, 4
    %v6956 = vpop.permute.xlu0 %6955
    %6957 = vrot.lane.b32.xlu0 %v6917, 4
    %v6958 = vpop.permute.xlu0 %6957
    %6959 = vrot.lane.b32.xlu0 %v6920, 4
    %v6960 = vpop.permute.xlu0 %6959
    %6961 = vrot.lane.b32.xlu0 %v6923, 4
    %v6962 = vpop.permute.xlu0 %6961
    %6963 = vrot.lane.b32.xlu0 %v6926, 4
    %v6964 = vpop.permute.xlu0 %6963
    %6965 = vrot.lane.b32.xlu0 %v6929, 4
    %v6966 = vpop.permute.xlu0 %6965
    %6967 = vrot.lane.b32.xlu0 %v6932, 4
    %v6968 = vpop.permute.xlu0 %6967
    %6969 = vrot.lane.b32.xlu0 %v6935, 4
    %v6970 = vpop.permute.xlu0 %6969
    %6971 = vrot.lane.b32.xlu0 %v6938, 4
    %v6972 = vpop.permute.xlu0 %6971
    %6973 = vrot.lane.b32.xlu0 %v6941, 4
    %v6974 = vpop.permute.xlu0 %6973
    %6975 = vrot.lane.b32.xlu0 %v6944, 4
    %v6976 = vpop.permute.xlu0 %6975
    %6977 = vrot.lane.b32.xlu0 %v6947, 4
    %v6978 = vpop.permute.xlu0 %6977
    %6979 = vrot.lane.b32.xlu0 %v6950, 4
    %v6980 = vpop.permute.xlu0 %6979
    %v6996 = vsel %vm827, %v828, %v831
    %v6997 = vrot.slane %v6848, 2
    %v6998 = vrot.slane %v6864, 2
    %v6999 = vsel %vm827, %v6997, %v6998
    %v7000 = vrot.slane %v6849, 2
    %v7001 = vrot.slane %v6865, 2
    %v7002 = vsel %vm827, %v7000, %v7001
    %v7003 = vrot.slane %v6850, 2
    %v7004 = vrot.slane %v6866, 2
    %v7005 = vsel %vm827, %v7003, %v7004
    %v7006 = vrot.slane %v6851, 2
    %v7007 = vrot.slane %v6867, 2
    %v7008 = vsel %vm827, %v7006, %v7007
    %v7009 = vrot.slane %v6852, 2
    %v7010 = vrot.slane %v6868, 2
    %v7011 = vsel %vm827, %v7009, %v7010
    %v7012 = vrot.slane %v6853, 2
    %v7013 = vrot.slane %v6869, 2
    %v7014 = vsel %vm827, %v7012, %v7013
    %v7015 = vrot.slane %v6854, 2
    %v7016 = vrot.slane %v6870, 2
    %v7017 = vsel %vm827, %v7015, %v7016
    %v7018 = vrot.slane %v6856, 2
    %v7019 = vrot.slane %v6872, 2
    %v7020 = vsel %vm827, %v7018, %v7019
    %v7021 = vrot.slane %v6857, 2
    %v7022 = vrot.slane %v6873, 2
    %v7023 = vsel %vm827, %v7021, %v7022
    %v7024 = vrot.slane %v6858, 2
    %v7025 = vrot.slane %v6874, 2
    %v7026 = vsel %vm827, %v7024, %v7025
    %v7027 = vrot.slane %v6859, 2
    %v7028 = vrot.slane %v6875, 2
    %v7029 = vsel %vm827, %v7027, %v7028
    %v7030 = vrot.slane %v6860, 2
    %v7031 = vrot.slane %v6876, 2
    %v7032 = vsel %vm827, %v7030, %v7031
    %v7033 = vrot.slane %v6861, 2
    %v7034 = vrot.slane %v6877, 2
    %v7035 = vsel %vm827, %v7033, %v7034
    %v7036 = vrot.slane %v6862, 2
    %v7037 = vrot.slane %v6878, 2
    %v7038 = vsel %vm827, %v7036, %v7037
    %7039 = vrot.lane.b32.xlu0 %v6996, 8
    %v7040 = vpop.permute.xlu0 %7039
    %7041 = vrot.lane.b32.xlu0 %v6999, 8
    %v7042 = vpop.permute.xlu0 %7041
    %7043 = vrot.lane.b32.xlu0 %v7002, 8
    %v7044 = vpop.permute.xlu0 %7043
    %7045 = vrot.lane.b32.xlu0 %v7005, 8
    %v7046 = vpop.permute.xlu0 %7045
    %7047 = vrot.lane.b32.xlu0 %v7008, 8
    %v7048 = vpop.permute.xlu0 %7047
    %7049 = vrot.lane.b32.xlu0 %v7011, 8
    %v7050 = vpop.permute.xlu0 %7049
    %7051 = vrot.lane.b32.xlu0 %v7014, 8
    %v7052 = vpop.permute.xlu0 %7051
    %7053 = vrot.lane.b32.xlu0 %v7017, 8
    %v7054 = vpop.permute.xlu0 %7053
    %7055 = vrot.lane.b32.xlu0 %v7020, 8
    %v7056 = vpop.permute.xlu0 %7055
    %7057 = vrot.lane.b32.xlu0 %v7023, 8
    %v7058 = vpop.permute.xlu0 %7057
    %7059 = vrot.lane.b32.xlu0 %v7026, 8
    %v7060 = vpop.permute.xlu0 %7059
    %7061 = vrot.lane.b32.xlu0 %v7029, 8
    %v7062 = vpop.permute.xlu0 %7061
    %7063 = vrot.lane.b32.xlu0 %v7032, 8
    %v7064 = vpop.permute.xlu0 %7063
    %7065 = vrot.lane.b32.xlu0 %v7035, 8
    %v7066 = vpop.permute.xlu0 %7065
    %7067 = vrot.lane.b32.xlu0 %v7038, 8
    %v7068 = vpop.permute.xlu0 %7067
    %7086 = vrot.lane.b32.xlu0 %v6848, 12
    %v7087 = vpop.permute.xlu0 %7086
    %7088 = vrot.lane.b32.xlu0 %v6849, 12
    %v7089 = vpop.permute.xlu0 %7088
    %7090 = vrot.lane.b32.xlu0 %v6850, 12
    %v7091 = vpop.permute.xlu0 %7090
    %7092 = vrot.lane.b32.xlu0 %v6851, 12
    %v7093 = vpop.permute.xlu0 %7092
    %7094 = vrot.lane.b32.xlu0 %v6852, 12
    %v7095 = vpop.permute.xlu0 %7094
    %7096 = vrot.lane.b32.xlu0 %v6853, 12
    %v7097 = vpop.permute.xlu0 %7096
    %7098 = vrot.lane.b32.xlu0 %v6854, 12
    %v7099 = vpop.permute.xlu0 %7098
    %7100 = vrot.lane.b32.xlu0 %v6855, 12
    %v7101 = vpop.permute.xlu0 %7100
    %7102 = vrot.lane.b32.xlu0 %v6856, 12
    %v7103 = vpop.permute.xlu0 %7102
    %7104 = vrot.lane.b32.xlu0 %v6857, 12
    %v7105 = vpop.permute.xlu0 %7104
    %7106 = vrot.lane.b32.xlu0 %v6858, 12
    %v7107 = vpop.permute.xlu0 %7106
    %7108 = vrot.lane.b32.xlu0 %v6859, 12
    %v7109 = vpop.permute.xlu0 %7108
    %7110 = vrot.lane.b32.xlu0 %v6860, 12
    %v7111 = vpop.permute.xlu0 %7110
    %7112 = vrot.lane.b32.xlu0 %v6861, 12
    %v7113 = vpop.permute.xlu0 %7112
    %7114 = vrot.lane.b32.xlu0 %v6862, 12
    %v7115 = vpop.permute.xlu0 %7114
    %7116 = vrot.lane.b32.xlu0 %v6863, 12
    %v7117 = vpop.permute.xlu0 %7116
    %v7136 = vrot.slane %v6855, 1
    %v7137 = vrot.slane %v6871, 1
    %v7138 = vsel %vm485, %v7136, %v7137
    %v7139 = vrot.slane %v6863, 1
    %v7140 = vrot.slane %v6879, 1
    %v7141 = vsel %vm485, %v7139, %v7140
    %7142 = vrot.lane.b32.xlu0 %v6911, 16
    %v7143 = vpop.permute.xlu0 %7142
    %7144 = vrot.lane.b32.xlu0 %v6914, 16
    %v7145 = vpop.permute.xlu0 %7144
    %7146 = vrot.lane.b32.xlu0 %v6917, 16
    %v7147 = vpop.permute.xlu0 %7146
    %7148 = vrot.lane.b32.xlu0 %v6920, 16
    %v7149 = vpop.permute.xlu0 %7148
    %7150 = vrot.lane.b32.xlu0 %v6923, 16
    %v7151 = vpop.permute.xlu0 %7150
    %7152 = vrot.lane.b32.xlu0 %v6926, 16
    %v7153 = vpop.permute.xlu0 %7152
    %7154 = vrot.lane.b32.xlu0 %v6929, 16
    %v7155 = vpop.permute.xlu0 %7154
    %7156 = vrot.lane.b32.xlu0 %v7138, 16
    %v7157 = vpop.permute.xlu0 %7156
    %7158 = vrot.lane.b32.xlu0 %v6932, 16
    %v7159 = vpop.permute.xlu0 %7158
    %7160 = vrot.lane.b32.xlu0 %v6935, 16
    %v7161 = vpop.permute.xlu0 %7160
    %7162 = vrot.lane.b32.xlu0 %v6938, 16
    %v7163 = vpop.permute.xlu0 %7162
    %7164 = vrot.lane.b32.xlu0 %v6941, 16
    %v7165 = vpop.permute.xlu0 %7164
    %7166 = vrot.lane.b32.xlu0 %v6944, 16
    %v7167 = vpop.permute.xlu0 %7166
    %7168 = vrot.lane.b32.xlu0 %v6947, 16
    %v7169 = vpop.permute.xlu0 %7168
    %7170 = vrot.lane.b32.xlu0 %v6950, 16
    %v7171 = vpop.permute.xlu0 %7170
    %7172 = vrot.lane.b32.xlu0 %v7141, 16
    %v7173 = vpop.permute.xlu0 %7172
    %v7190 = vrot.slane %v6855, 2
    %v7191 = vrot.slane %v6871, 2
    %v7192 = vsel %vm827, %v7190, %v7191
    %v7193 = vrot.slane %v6863, 2
    %v7194 = vrot.slane %v6879, 2
    %v7195 = vsel %vm827, %v7193, %v7194
    %7196 = vrot.lane.b32.xlu0 %v6999, 20
    %v7197 = vpop.permute.xlu0 %7196
    %7198 = vrot.lane.b32.xlu0 %v7002, 20
    %v7199 = vpop.permute.xlu0 %7198
    %7200 = vrot.lane.b32.xlu0 %v7005, 20
    %v7201 = vpop.permute.xlu0 %7200
    %7202 = vrot.lane.b32.xlu0 %v7008, 20
    %v7203 = vpop.permute.xlu0 %7202
    %7204 = vrot.lane.b32.xlu0 %v7011, 20
    %v7205 = vpop.permute.xlu0 %7204
    %7206 = vrot.lane.b32.xlu0 %v7014, 20
    %v7207 = vpop.permute.xlu0 %7206
    %7208 = vrot.lane.b32.xlu0 %v7017, 20
    %v7209 = vpop.permute.xlu0 %7208
    %7210 = vrot.lane.b32.xlu0 %v7192, 20
    %v7211 = vpop.permute.xlu0 %7210
    %7212 = vrot.lane.b32.xlu0 %v7020, 20
    %v7213 = vpop.permute.xlu0 %7212
    %7214 = vrot.lane.b32.xlu0 %v7023, 20
    %v7215 = vpop.permute.xlu0 %7214
    %7216 = vrot.lane.b32.xlu0 %v7026, 20
    %v7217 = vpop.permute.xlu0 %7216
    %7218 = vrot.lane.b32.xlu0 %v7029, 20
    %v7219 = vpop.permute.xlu0 %7218
    %7220 = vrot.lane.b32.xlu0 %v7032, 20
    %v7221 = vpop.permute.xlu0 %7220
    %7222 = vrot.lane.b32.xlu0 %v7035, 20
    %v7223 = vpop.permute.xlu0 %7222
    %7224 = vrot.lane.b32.xlu0 %v7038, 20
    %v7225 = vpop.permute.xlu0 %7224
    %7226 = vrot.lane.b32.xlu0 %v7195, 20
    %v7227 = vpop.permute.xlu0 %7226
    %7244 = vrot.lane.b32.xlu0 %v6849, 24
    %v7245 = vpop.permute.xlu0 %7244
    %7246 = vrot.lane.b32.xlu0 %v6850, 24
    %v7247 = vpop.permute.xlu0 %7246
    %7248 = vrot.lane.b32.xlu0 %v6851, 24
    %v7249 = vpop.permute.xlu0 %7248
    %7250 = vrot.lane.b32.xlu0 %v6852, 24
    %v7251 = vpop.permute.xlu0 %7250
    %7252 = vrot.lane.b32.xlu0 %v6853, 24
    %v7253 = vpop.permute.xlu0 %7252
    %7254 = vrot.lane.b32.xlu0 %v6854, 24
    %v7255 = vpop.permute.xlu0 %7254
    %7256 = vrot.lane.b32.xlu0 %v6855, 24
    %v7257 = vpop.permute.xlu0 %7256
    %7258 = vrot.lane.b32.xlu0 %v357, 24
    %v7259 = vpop.permute.xlu0 %7258
    %7260 = vrot.lane.b32.xlu0 %v6857, 24
    %v7261 = vpop.permute.xlu0 %7260
    %7262 = vrot.lane.b32.xlu0 %v6858, 24
    %v7263 = vpop.permute.xlu0 %7262
    %7264 = vrot.lane.b32.xlu0 %v6859, 24
    %v7265 = vpop.permute.xlu0 %7264
    %7266 = vrot.lane.b32.xlu0 %v6860, 24
    %v7267 = vpop.permute.xlu0 %7266
    %7268 = vrot.lane.b32.xlu0 %v6861, 24
    %v7269 = vpop.permute.xlu0 %7268
    %7270 = vrot.lane.b32.xlu0 %v6862, 24
    %v7271 = vpop.permute.xlu0 %7270
    %7272 = vrot.lane.b32.xlu0 %v6863, 24
    %v7273 = vpop.permute.xlu0 %7272
    %7289 = vrot.lane.b32.xlu0 %v6914, 28
    %v7290 = vpop.permute.xlu0 %7289
    %7291 = vrot.lane.b32.xlu0 %v6917, 28
    %v7292 = vpop.permute.xlu0 %7291
    %7293 = vrot.lane.b32.xlu0 %v6920, 28
    %v7294 = vpop.permute.xlu0 %7293
    %7295 = vrot.lane.b32.xlu0 %v6923, 28
    %v7296 = vpop.permute.xlu0 %7295
    %7297 = vrot.lane.b32.xlu0 %v6926, 28
    %v7298 = vpop.permute.xlu0 %7297
    %7299 = vrot.lane.b32.xlu0 %v6929, 28
    %v7300 = vpop.permute.xlu0 %7299
    %7301 = vrot.lane.b32.xlu0 %v7138, 28
    %v7302 = vpop.permute.xlu0 %7301
    %7303 = vrot.lane.b32.xlu0 %v6908, 28
    %v7304 = vpop.permute.xlu0 %7303
    %7305 = vrot.lane.b32.xlu0 %v6935, 28
    %v7306 = vpop.permute.xlu0 %7305
    %7307 = vrot.lane.b32.xlu0 %v6938, 28
    %v7308 = vpop.permute.xlu0 %7307
    %7309 = vrot.lane.b32.xlu0 %v6941, 28
    %v7310 = vpop.permute.xlu0 %7309
    %7311 = vrot.lane.b32.xlu0 %v6944, 28
    %v7312 = vpop.permute.xlu0 %7311
    %7313 = vrot.lane.b32.xlu0 %v6947, 28
    %v7314 = vpop.permute.xlu0 %7313
    %7315 = vrot.lane.b32.xlu0 %v6950, 28
    %v7316 = vpop.permute.xlu0 %7315
    %7317 = vrot.lane.b32.xlu0 %v7141, 28
    %v7318 = vpop.permute.xlu0 %7317
    %7334 = vrot.lane.b32.xlu0 %v7002, 32
    %v7335 = vpop.permute.xlu0 %7334
    %7336 = vrot.lane.b32.xlu0 %v7005, 32
    %v7337 = vpop.permute.xlu0 %7336
    %7338 = vrot.lane.b32.xlu0 %v7008, 32
    %v7339 = vpop.permute.xlu0 %7338
    %7340 = vrot.lane.b32.xlu0 %v7011, 32
    %v7341 = vpop.permute.xlu0 %7340
    %7342 = vrot.lane.b32.xlu0 %v7014, 32
    %v7343 = vpop.permute.xlu0 %7342
    %7344 = vrot.lane.b32.xlu0 %v7017, 32
    %v7345 = vpop.permute.xlu0 %7344
    %7346 = vrot.lane.b32.xlu0 %v7192, 32
    %v7347 = vpop.permute.xlu0 %7346
    %7348 = vrot.lane.b32.xlu0 %v6996, 32
    %v7349 = vpop.permute.xlu0 %7348
    %7350 = vrot.lane.b32.xlu0 %v7023, 32
    %v7351 = vpop.permute.xlu0 %7350
    %7352 = vrot.lane.b32.xlu0 %v7026, 32
    %v7353 = vpop.permute.xlu0 %7352
    %7354 = vrot.lane.b32.xlu0 %v7029, 32
    %v7355 = vpop.permute.xlu0 %7354
    %7356 = vrot.lane.b32.xlu0 %v7032, 32
    %v7357 = vpop.permute.xlu0 %7356
    %7358 = vrot.lane.b32.xlu0 %v7035, 32
    %v7359 = vpop.permute.xlu0 %7358
    %7360 = vrot.lane.b32.xlu0 %v7038, 32
    %v7361 = vpop.permute.xlu0 %7360
    %7362 = vrot.lane.b32.xlu0 %v7195, 32
    %v7363 = vpop.permute.xlu0 %7362
    %v7379 = vsel %vm2518, %v357, %v6952
    %v7380 = vsel %vm2518, %v6848, %v6954
    %v7381 = vsel %vm2518, %v6849, %v6956
    %v7382 = vsel %vm2518, %v6850, %v6958
    %v7383 = vsel %vm2518, %v6851, %v6960
    %v7384 = vsel %vm2518, %v6852, %v6962
    %v7385 = vsel %vm2518, %v6853, %v6964
    %v7386 = vsel %vm2518, %v6854, %v6966
    %v7387 = vsel %vm2518, %v6856, %v6968
    %v7388 = vsel %vm2518, %v6857, %v6970
    %v7389 = vsel %vm2518, %v6858, %v6972
    %v7390 = vsel %vm2518, %v6859, %v6974
    %v7391 = vsel %vm2518, %v6860, %v6976
    %v7392 = vsel %vm2518, %v6861, %v6978
    %v7393 = vsel %vm2518, %v6862, %v6980
    %v7394 = vsel %vm2778, %v7379, %v7040
    %v7395 = vsel %vm2778, %v7380, %v7042
    %v7396 = vsel %vm2778, %v7381, %v7044
    %v7397 = vsel %vm2778, %v7382, %v7046
    %v7398 = vsel %vm2778, %v7383, %v7048
    %v7399 = vsel %vm2778, %v7384, %v7050
    %v7400 = vsel %vm2778, %v7385, %v7052
    %v7401 = vsel %vm2778, %v7386, %v7054
    %v7402 = vsel %vm2778, %v7387, %v7056
    %v7403 = vsel %vm2778, %v7388, %v7058
    %v7404 = vsel %vm2778, %v7389, %v7060
    %v7405 = vsel %vm2778, %v7390, %v7062
    %v7406 = vsel %vm2778, %v7391, %v7064
    %v7407 = vsel %vm2778, %v7392, %v7066
    %v7408 = vsel %vm2778, %v7393, %v7068
    %vm7409 = vcmask 97280
    %v7410 = vsel %vm7409, %v7394, %v7087
    %v7411 = vsel %vm7409, %v7395, %v7089
    %v7412 = vsel %vm7409, %v7396, %v7091
    %v7413 = vsel %vm7409, %v7397, %v7093
    %v7414 = vsel %vm7409, %v7398, %v7095
    %v7415 = vsel %vm7409, %v7399, %v7097
    %v7416 = vsel %vm7409, %v7400, %v7099
    %v7417 = vsel %vm7409, %v7401, %v7101
    %v7418 = vsel %vm7409, %v7394, %v7103
    %v7419 = vsel %vm7409, %v7402, %v7105
    %v7420 = vsel %vm7409, %v7403, %v7107
    %v7421 = vsel %vm7409, %v7404, %v7109
    %v7422 = vsel %vm7409, %v7405, %v7111
    %v7423 = vsel %vm7409, %v7406, %v7113
    %v7424 = vsel %vm7409, %v7407, %v7115
    %v7425 = vsel %vm7409, %v7408, %v7117
    %vm7426 = vcmask 130048
    %v7427 = vsel %vm7426, %v7410, %v7143
    %v7428 = vsel %vm7426, %v7411, %v7145
    %v7429 = vsel %vm7426, %v7412, %v7147
    %v7430 = vsel %vm7426, %v7413, %v7149
    %v7431 = vsel %vm7426, %v7414, %v7151
    %v7432 = vsel %vm7426, %v7415, %v7153
    %v7433 = vsel %vm7426, %v7416, %v7155
    %v7434 = vsel %vm7426, %v7417, %v7157
    %v7435 = vsel %vm7426, %v7418, %v7159
    %v7436 = vsel %vm7426, %v7419, %v7161
    %v7437 = vsel %vm7426, %v7420, %v7163
    %v7438 = vsel %vm7426, %v7421, %v7165
    %v7439 = vsel %vm7426, %v7422, %v7167
    %v7440 = vsel %vm7426, %v7423, %v7169
    %v7441 = vsel %vm7426, %v7424, %v7171
    %v7442 = vsel %vm7426, %v7425, %v7173
    %vm7443 = vcmask 162816
    %v7444 = vsel %vm7443, %v7427, %v7197
    %v7445 = vsel %vm7443, %v7428, %v7199
    %v7446 = vsel %vm7443, %v7429, %v7201
    %v7447 = vsel %vm7443, %v7430, %v7203
    %v7448 = vsel %vm7443, %v7431, %v7205
    %v7449 = vsel %vm7443, %v7432, %v7207
    %v7450 = vsel %vm7443, %v7433, %v7209
    %v7451 = vsel %vm7443, %v7434, %v7211
    %v7452 = vsel %vm7443, %v7435, %v7213
    %v7453 = vsel %vm7443, %v7436, %v7215
    %v7454 = vsel %vm7443, %v7437, %v7217
    %v7455 = vsel %vm7443, %v7438, %v7219
    %v7456 = vsel %vm7443, %v7439, %v7221
    %v7457 = vsel %vm7443, %v7440, %v7223
    %v7458 = vsel %vm7443, %v7441, %v7225
    %v7459 = vsel %vm7443, %v7442, %v7227
    %vm7460 = vcmask 195584
    %v7461 = vsel %vm7460, %v7444, %v7245
    %v7462 = vsel %vm7460, %v7445, %v7247
    %v7463 = vsel %vm7460, %v7446, %v7249
    %v7464 = vsel %vm7460, %v7447, %v7251
    %v7465 = vsel %vm7460, %v7448, %v7253
    %v7466 = vsel %vm7460, %v7449, %v7255
    %v7467 = vsel %vm7460, %v7450, %v7257
    %v7468 = vsel %vm7460, %v7451, %v7259
    %v7469 = vsel %vm7460, %v7452, %v7261
    %v7470 = vsel %vm7460, %v7453, %v7263
    %v7471 = vsel %vm7460, %v7454, %v7265
    %v7472 = vsel %vm7460, %v7455, %v7267
    %v7473 = vsel %vm7460, %v7456, %v7269
    %v7474 = vsel %vm7460, %v7457, %v7271
    %v7475 = vsel %vm7460, %v7458, %v7273
    %v7476 = vsel %vm7460, %v7459, %v7259
    %vm7477 = vcmask 228352
    %v7478 = vsel %vm7477, %v7461, %v7290
    %v7479 = vsel %vm7477, %v7462, %v7292
    %v7480 = vsel %vm7477, %v7463, %v7294
    %v7481 = vsel %vm7477, %v7464, %v7296
    %v7482 = vsel %vm7477, %v7465, %v7298
    %v7483 = vsel %vm7477, %v7466, %v7300
    %v7484 = vsel %vm7477, %v7467, %v7302
    %v7485 = vsel %vm7477, %v7468, %v7304
    %v7486 = vsel %vm7477, %v7469, %v7306
    %v7487 = vsel %vm7477, %v7470, %v7308
    %v7488 = vsel %vm7477, %v7471, %v7310
    %v7489 = vsel %vm7477, %v7472, %v7312
    %v7490 = vsel %vm7477, %v7473, %v7314
    %v7491 = vsel %vm7477, %v7474, %v7316
    %v7492 = vsel %vm7477, %v7475, %v7318
    %v7493 = vsel %vm7477, %v7476, %v7304
    %vm7494 = vcmask 261120
    %v7495 = vsel %vm7494, %v7478, %v7335
    %v7496 = vsel %vm7494, %v7479, %v7337
    %v7497 = vsel %vm7494, %v7480, %v7339
    %v7498 = vsel %vm7494, %v7481, %v7341
    %v7499 = vsel %vm7494, %v7482, %v7343
    %v7500 = vsel %vm7494, %v7483, %v7345
    %v7501 = vsel %vm7494, %v7484, %v7347
    %v7502 = vsel %vm7494, %v7485, %v7349
    %v7503 = vsel %vm7494, %v7486, %v7351
    %v7504 = vsel %vm7494, %v7487, %v7353
    %v7505 = vsel %vm7494, %v7488, %v7355
    %v7506 = vsel %vm7494, %v7489, %v7357
    %v7507 = vsel %vm7494, %v7490, %v7359
    %v7508 = vsel %vm7494, %v7491, %v7361
    %v7509 = vsel %vm7494, %v7492, %v7363
    %v7510 = vsel %vm7494, %v7493, %v7349
    %v7511 = vld [vmem:[%s3] sm:$0xff]
    %v7512 = vld [vmem:[%s3 + $0x8] sm:$0xff]
    %v7513 = vld [vmem:[%s3 + $0x10] sm:$0xff]
    %v7514 = vld [vmem:[%s3 + $0x18] sm:$0xff]
    %v7515 = vld [vmem:[%s3 + $0x20] sm:$0xf]
    %v7516 = vld [vmem:[%s4] sm:$0x1]
    %v7518 = vlaneseq
    %v7519 = vshrl.u32 %v7518, 7
    %v7520 = vsub.s32 0, %v7519
    %v7521 = vrot.slane %v7516, %v7520
    %vm7523 = vcmask 293888
    %v7525 = vsel %vm7523, %v7495, 0
    %v7528 = vsel %vm7523, %v7496, 0
    %v7531 = vsel %vm7523, %v7497, 0
    %v7534 = vsel %vm7523, %v7498, 0
    %v7537 = vsel %vm7523, %v7499, 0
    %v7540 = vsel %vm7523, %v7500, 0
    %v7543 = vsel %vm7523, %v7501, 0
    %v7546 = vsel %vm7523, %v7502, 0
    %v7549 = vsel %vm7523, %v7503, 0
    %v7552 = vsel %vm7523, %v7504, 0
    %v7555 = vsel %vm7523, %v7505, 0
    %v7558 = vsel %vm7523, %v7506, 0
    %v7561 = vsel %vm7523, %v7507, 0
    %v7564 = vsel %vm7523, %v7508, 0
    %v7567 = vsel %vm7523, %v7509, 0
    %v7570 = vsel %vm7523, %v7510, 0
    %vm7572 = vcmask 1043456
    %v7574 = vsel %vm7572, %v7515, 0
    %7576 = vmatprep.subr.mxu0 0.0
    %7577 = vmatpush1.msra.mxu0 0.0
    %7578 = vmatprep.subr.mxu0 0.0
    %7579 = vmatpush1.msra.mxu0 0.0
    %7580 = vmatprep.subr.mxu0 0.0
    %7581 = vmatpush1.msra.mxu0 0.0
    %7582 = vmatprep.subr.mxu0 0.0
    %7583 = vmatpush1.msra.mxu0 0.0
    %7584 = vmatprep.subr.mxu0 0.0
    %7585 = vmatpush1.msra.mxu0 0.0
    %7586 = vmatprep.subr.mxu0 0.0
    %7587 = vmatpush1.msra.mxu0 0.0
    %7588 = vmatprep.subr.mxu0 0.0
    %7589 = vmatpush1.msra.mxu0 0.0
    %7590 = vmatprep.subr.mxu0 0.0
    %7591 = vmatpush1.msra.mxu0 0.0
    %7592 = vmatprep.subr.mxu0 0.0
    %7593 = vmatpush1.msra.mxu0 0.0
    %7594 = vmatprep.subr.mxu0 0.0
    %7595 = vmatpush1.msra.mxu0 0.0
    %7596 = vmatprep.subr.mxu0 0.0
    %7597 = vmatpush1.msra.mxu0 0.0
    %7598 = vmatprep.subr.mxu0 0.0
    %7599 = vmatpush1.msra.mxu0 %v7574
    %7600 = vmatprep.subr.mxu0 0.0
    %7601 = vmatpush1.msra.mxu0 %v7514
    %7602 = vmatprep.subr.mxu0 0.0
    %7603 = vmatpush1.msra.mxu0 %v7513
    %7604 = vmatprep.subr.mxu0 0.0
    %7605 = vmatpush1.msra.mxu0 %v7512
    %7606 = vmatprep.subr.mxu0 0.0
    %7607 = vmatpush1.msra.mxu0 %v7511
    %7608 = vmatprep.subr.mxu0 0.0
    %7609 = vmatpush2.msra.mxu0 0.0
    %7610 = vmatprep.subr.mxu0 0.0
    %7611 = vmatpush2.msra.mxu0 0.0
    %7612 = vmatprep.subr.mxu0 0.0
    %7613 = vmatpush2.msra.mxu0 0.0
    %7614 = vmatprep.subr.mxu0 0.0
    %7615 = vmatpush2.msra.mxu0 0.0
    %7616 = vmatprep.subr.mxu0 0.0
    %7617 = vmatpush2.msra.mxu0 0.0
    %7618 = vmatprep.subr.mxu0 0.0
    %7619 = vmatpush2.msra.mxu0 0.0
    %7620 = vmatprep.subr.mxu0 0.0
    %7621 = vmatpush2.msra.mxu0 0.0
    %7622 = vmatprep.subr.mxu0 0.0
    %7623 = vmatpush2.msra.mxu0 0.0
    %7624 = vmatprep.subr.mxu0 0.0
    %7625 = vmatpush2.msra.mxu0 0.0
    %7626 = vmatprep.subr.mxu0 0.0
    %7627 = vmatpush2.msra.mxu0 0.0
    %7628 = vmatprep.subr.mxu0 0.0
    %7629 = vmatpush2.msra.mxu0 0.0
    %7630 = vmatprep.subr.mxu0 0.0
    %7631 = vmatpush2.msra.mxu0 0.0
    %7632 = vmatprep.subr.mxu0 0.0
    %7633 = vmatpush2.msra.mxu0 0.0
    %7634 = vmatprep.subr.mxu0 0.0
    %7635 = vmatpush2.msra.mxu0 0.0
    %7636 = vmatprep.subr.mxu0 0.0
    %7637 = vmatpush2.msra.mxu0 0.0
    %7638 = vmatprep.subr.mxu0 0.0
    %7639 = vmatpush2.msra.mxu0 0.0
    %7640 = vmatprep.mubr.f32.mxu0 0.0
    %7641 = vmatmul.mubr.f32.gmra.mxu0 %v7525
    %v7642 = vpop.f32.mrf.mxu0
    %v7643 = vadd.f32 %v7521, %v7642
    %v7644 = vpop.f32.mrf.mxu0
    %7645 = vmatprep.mubr.f32.mxu0 0.0
    %7646 = vmatmul.mubr.f32.gmra.mxu0 %v7528
    %v7647 = vpop.f32.mrf.mxu0
    %v7648 = vadd.f32 %v7521, %v7647
    %v7649 = vpop.f32.mrf.mxu0
    %7650 = vmatprep.mubr.f32.mxu0 0.0
    %7651 = vmatmul.mubr.f32.gmra.mxu0 %v7531
    %v7652 = vpop.f32.mrf.mxu0
    %v7653 = vadd.f32 %v7521, %v7652
    %v7654 = vpop.f32.mrf.mxu0
    %7655 = vmatprep.mubr.f32.mxu0 0.0
    %7656 = vmatmul.mubr.f32.gmra.mxu0 %v7534
    %v7657 = vpop.f32.mrf.mxu0
    %v7658 = vadd.f32 %v7521, %v7657
    %v7659 = vpop.f32.mrf.mxu0
    %7660 = vmatprep.mubr.f32.mxu0 0.0
    %7661 = vmatmul.mubr.f32.gmra.mxu0 %v7537
    %v7662 = vpop.f32.mrf.mxu0
    %v7663 = vadd.f32 %v7521, %v7662
    %v7664 = vpop.f32.mrf.mxu0
    %7665 = vmatprep.mubr.f32.mxu0 0.0
    %7666 = vmatmul.mubr.f32.gmra.mxu0 %v7540
    %v7667 = vpop.f32.mrf.mxu0
    %v7668 = vadd.f32 %v7521, %v7667
    %v7669 = vpop.f32.mrf.mxu0
    %7670 = vmatprep.mubr.f32.mxu0 0.0
    %7671 = vmatmul.mubr.f32.gmra.mxu0 %v7543
    %v7672 = vpop.f32.mrf.mxu0
    %v7673 = vadd.f32 %v7521, %v7672
    %v7674 = vpop.f32.mrf.mxu0
    %7675 = vmatprep.mubr.f32.mxu0 0.0
    %7676 = vmatmul.mubr.f32.gmra.mxu0 %v7546
    %v7677 = vpop.f32.mrf.mxu0
    %v7678 = vadd.f32 %v7521, %v7677
    %v7679 = vpop.f32.mrf.mxu0
    %7680 = vmatprep.mubr.f32.mxu0 0.0
    %7681 = vmatmul.mubr.f32.gmra.mxu0 %v7549
    %v7682 = vpop.f32.mrf.mxu0
    %v7683 = vadd.f32 %v7521, %v7682
    %v7684 = vpop.f32.mrf.mxu0
    %7685 = vmatprep.mubr.f32.mxu0 0.0
    %7686 = vmatmul.mubr.f32.gmra.mxu0 %v7552
    %v7687 = vpop.f32.mrf.mxu0
    %v7688 = vadd.f32 %v7521, %v7687
    %v7689 = vpop.f32.mrf.mxu0
    %7690 = vmatprep.mubr.f32.mxu0 0.0
    %7691 = vmatmul.mubr.f32.gmra.mxu0 %v7555
    %v7692 = vpop.f32.mrf.mxu0
    %v7693 = vadd.f32 %v7521, %v7692
    %v7694 = vpop.f32.mrf.mxu0
    %7695 = vmatprep.mubr.f32.mxu0 0.0
    %7696 = vmatmul.mubr.f32.gmra.mxu0 %v7558
    %v7697 = vpop.f32.mrf.mxu0
    %v7698 = vadd.f32 %v7521, %v7697
    %v7699 = vpop.f32.mrf.mxu0
    %7700 = vmatprep.mubr.f32.mxu0 0.0
    %7701 = vmatmul.mubr.f32.gmra.mxu0 %v7561
    %v7702 = vpop.f32.mrf.mxu0
    %v7703 = vadd.f32 %v7521, %v7702
    %v7704 = vpop.f32.mrf.mxu0
    %7705 = vmatprep.mubr.f32.mxu0 0.0
    %7706 = vmatmul.mubr.f32.gmra.mxu0 %v7564
    %v7707 = vpop.f32.mrf.mxu0
    %v7708 = vadd.f32 %v7521, %v7707
    %v7709 = vpop.f32.mrf.mxu0
    %7710 = vmatprep.mubr.f32.mxu0 0.0
    %7711 = vmatmul.mubr.f32.gmra.mxu0 %v7567
    %v7712 = vpop.f32.mrf.mxu0
    %v7713 = vadd.f32 %v7521, %v7712
    %v7714 = vpop.f32.mrf.mxu0
    %7715 = vmatprep.mubr.f32.mxu0 0.0
    %7716 = vmatmul.mubr.f32.gmra.mxu0 %v7570
    %v7717 = vpop.f32.mrf.mxu0
    %v7718 = vadd.f32 %v7521, %v7717
    %v7719 = vpop.f32.mrf.mxu0
    %7720 = vdwg.mxu0
    %v7721 = vmax.f32 %v7643, 0.0
    %v7722 = vmax.f32 %v7648, 0.0
    %v7723 = vmax.f32 %v7653, 0.0
    %v7724 = vmax.f32 %v7658, 0.0
    %v7725 = vmax.f32 %v7663, 0.0
    %v7726 = vmax.f32 %v7668, 0.0
    %v7727 = vmax.f32 %v7673, 0.0
    %v7728 = vmax.f32 %v7678, 0.0
    %v7729 = vmax.f32 %v7683, 0.0
    %v7730 = vmax.f32 %v7688, 0.0
    %v7731 = vmax.f32 %v7693, 0.0
    %v7732 = vmax.f32 %v7698, 0.0
    %v7733 = vmax.f32 %v7703, 0.0
    %v7734 = vmax.f32 %v7708, 0.0
    %v7735 = vmax.f32 %v7713, 0.0
    %v7736 = vmax.f32 %v7718, 0.0
    %v7753 = vcombine.high %v7721, %v7721
    %v7755 = vunpack.c.l.s4 1983009808
    %v7756 = vunpack.c.0.s8 %v7755
    %v7757 = vlaneseq
    %v7758 = vshrl.u32 %v7757, 7
    %v7759 = vsub.s32 %v7756, %v7758
    %v7760 = vrot.slane %v7721, %v7759
    %v7762 = vunpack.c.l.s4 1983009808
    %v7763 = vunpack.c.0.s8 %v7762
    %v7764 = vlaneseq
    %v7765 = vshrl.u32 %v7764, 7
    %v7766 = vsub.s32 %v7763, %v7765
    %v7767 = vrot.slane %v7753, %v7766
    %v7768 = vcombine.high %v7760, %v7760
    %v7769 = vcombine.high %v7767, %v7767
    %v7770 = vcombine.high %v7722, %v7722
    %v7772 = vunpack.c.l.s4 1983009808
    %v7773 = vunpack.c.0.s8 %v7772
    %v7774 = vlaneseq
    %v7775 = vshrl.u32 %v7774, 7
    %v7776 = vsub.s32 %v7773, %v7775
    %v7777 = vrot.slane %v7722, %v7776
    %v7779 = vunpack.c.l.s4 1983009808
    %v7780 = vunpack.c.0.s8 %v7779
    %v7781 = vlaneseq
    %v7782 = vshrl.u32 %v7781, 7
    %v7783 = vsub.s32 %v7780, %v7782
    %v7784 = vrot.slane %v7770, %v7783
    %v7785 = vcombine.high %v7777, %v7777
    %v7786 = vcombine.high %v7784, %v7784
    %v7787 = vcombine.high %v7723, %v7723
    %v7789 = vunpack.c.l.s4 1983009808
    %v7790 = vunpack.c.0.s8 %v7789
    %v7791 = vlaneseq
    %v7792 = vshrl.u32 %v7791, 7
    %v7793 = vsub.s32 %v7790, %v7792
    %v7794 = vrot.slane %v7723, %v7793
    %v7796 = vunpack.c.l.s4 1983009808
    %v7797 = vunpack.c.0.s8 %v7796
    %v7798 = vlaneseq
    %v7799 = vshrl.u32 %v7798, 7
    %v7800 = vsub.s32 %v7797, %v7799
    %v7801 = vrot.slane %v7787, %v7800
    %v7802 = vcombine.high %v7794, %v7794
    %v7803 = vcombine.high %v7801, %v7801
    %v7804 = vcombine.high %v7724, %v7724
    %v7806 = vunpack.c.l.s4 1983009808
    %v7807 = vunpack.c.0.s8 %v7806
    %v7808 = vlaneseq
    %v7809 = vshrl.u32 %v7808, 7
    %v7810 = vsub.s32 %v7807, %v7809
    %v7811 = vrot.slane %v7724, %v7810
    %v7813 = vunpack.c.l.s4 1983009808
    %v7814 = vunpack.c.0.s8 %v7813
    %v7815 = vlaneseq
    %v7816 = vshrl.u32 %v7815, 7
    %v7817 = vsub.s32 %v7814, %v7816
    %v7818 = vrot.slane %v7804, %v7817
    %v7819 = vcombine.high %v7811, %v7811
    %v7820 = vcombine.high %v7818, %v7818
    %v7821 = vcombine.high %v7725, %v7725
    %v7823 = vunpack.c.l.s4 1983009808
    %v7824 = vunpack.c.0.s8 %v7823
    %v7825 = vlaneseq
    %v7826 = vshrl.u32 %v7825, 7
    %v7827 = vsub.s32 %v7824, %v7826
    %v7828 = vrot.slane %v7725, %v7827
    %v7830 = vunpack.c.l.s4 1983009808
    %v7831 = vunpack.c.0.s8 %v7830
    %v7832 = vlaneseq
    %v7833 = vshrl.u32 %v7832, 7
    %v7834 = vsub.s32 %v7831, %v7833
    %v7835 = vrot.slane %v7821, %v7834
    %v7836 = vcombine.high %v7828, %v7828
    %v7837 = vcombine.high %v7835, %v7835
    %v7838 = vcombine.high %v7726, %v7726
    %v7840 = vunpack.c.l.s4 1983009808
    %v7841 = vunpack.c.0.s8 %v7840
    %v7842 = vlaneseq
    %v7843 = vshrl.u32 %v7842, 7
    %v7844 = vsub.s32 %v7841, %v7843
    %v7845 = vrot.slane %v7726, %v7844
    %v7847 = vunpack.c.l.s4 1983009808
    %v7848 = vunpack.c.0.s8 %v7847
    %v7849 = vlaneseq
    %v7850 = vshrl.u32 %v7849, 7
    %v7851 = vsub.s32 %v7848, %v7850
    %v7852 = vrot.slane %v7838, %v7851
    %v7853 = vcombine.high %v7845, %v7845
    %v7854 = vcombine.high %v7852, %v7852
    %v7855 = vcombine.high %v7727, %v7727
    %v7857 = vunpack.c.l.s4 1983009808
    %v7858 = vunpack.c.0.s8 %v7857
    %v7859 = vlaneseq
    %v7860 = vshrl.u32 %v7859, 7
    %v7861 = vsub.s32 %v7858, %v7860
    %v7862 = vrot.slane %v7727, %v7861
    %v7864 = vunpack.c.l.s4 1983009808
    %v7865 = vunpack.c.0.s8 %v7864
    %v7866 = vlaneseq
    %v7867 = vshrl.u32 %v7866, 7
    %v7868 = vsub.s32 %v7865, %v7867
    %v7869 = vrot.slane %v7855, %v7868
    %v7870 = vcombine.high %v7862, %v7862
    %v7871 = vcombine.high %v7869, %v7869
    %v7872 = vcombine.high %v7728, %v7728
    %v7874 = vunpack.c.l.s4 1983009808
    %v7875 = vunpack.c.0.s8 %v7874
    %v7876 = vlaneseq
    %v7877 = vshrl.u32 %v7876, 7
    %v7878 = vsub.s32 %v7875, %v7877
    %v7879 = vrot.slane %v7728, %v7878
    %v7881 = vunpack.c.l.s4 1983009808
    %v7882 = vunpack.c.0.s8 %v7881
    %v7883 = vlaneseq
    %v7884 = vshrl.u32 %v7883, 7
    %v7885 = vsub.s32 %v7882, %v7884
    %v7886 = vrot.slane %v7872, %v7885
    %v7887 = vcombine.high %v7879, %v7879
    %v7888 = vcombine.high %v7886, %v7886
    %v7889 = vcombine.high %v7729, %v7729
    %v7891 = vunpack.c.l.s4 1983009808
    %v7892 = vunpack.c.0.s8 %v7891
    %v7893 = vlaneseq
    %v7894 = vshrl.u32 %v7893, 7
    %v7895 = vsub.s32 %v7892, %v7894
    %v7896 = vrot.slane %v7729, %v7895
    %v7898 = vunpack.c.l.s4 1983009808
    %v7899 = vunpack.c.0.s8 %v7898
    %v7900 = vlaneseq
    %v7901 = vshrl.u32 %v7900, 7
    %v7902 = vsub.s32 %v7899, %v7901
    %v7903 = vrot.slane %v7889, %v7902
    %v7904 = vcombine.high %v7896, %v7896
    %v7905 = vcombine.high %v7903, %v7903
    %v7906 = vcombine.high %v7730, %v7730
    %v7908 = vunpack.c.l.s4 1983009808
    %v7909 = vunpack.c.0.s8 %v7908
    %v7910 = vlaneseq
    %v7911 = vshrl.u32 %v7910, 7
    %v7912 = vsub.s32 %v7909, %v7911
    %v7913 = vrot.slane %v7730, %v7912
    %v7915 = vunpack.c.l.s4 1983009808
    %v7916 = vunpack.c.0.s8 %v7915
    %v7917 = vlaneseq
    %v7918 = vshrl.u32 %v7917, 7
    %v7919 = vsub.s32 %v7916, %v7918
    %v7920 = vrot.slane %v7906, %v7919
    %v7921 = vcombine.high %v7913, %v7913
    %v7922 = vcombine.high %v7920, %v7920
    %v7923 = vcombine.high %v7731, %v7731
    %v7925 = vunpack.c.l.s4 1983009808
    %v7926 = vunpack.c.0.s8 %v7925
    %v7927 = vlaneseq
    %v7928 = vshrl.u32 %v7927, 7
    %v7929 = vsub.s32 %v7926, %v7928
    %v7930 = vrot.slane %v7731, %v7929
    %v7932 = vunpack.c.l.s4 1983009808
    %v7933 = vunpack.c.0.s8 %v7932
    %v7934 = vlaneseq
    %v7935 = vshrl.u32 %v7934, 7
    %v7936 = vsub.s32 %v7933, %v7935
    %v7937 = vrot.slane %v7923, %v7936
    %v7938 = vcombine.high %v7930, %v7930
    %v7939 = vcombine.high %v7937, %v7937
    %v7940 = vcombine.high %v7732, %v7732
    %v7942 = vunpack.c.l.s4 1983009808
    %v7943 = vunpack.c.0.s8 %v7942
    %v7944 = vlaneseq
    %v7945 = vshrl.u32 %v7944, 7
    %v7946 = vsub.s32 %v7943, %v7945
    %v7947 = vrot.slane %v7732, %v7946
    %v7949 = vunpack.c.l.s4 1983009808
    %v7950 = vunpack.c.0.s8 %v7949
    %v7951 = vlaneseq
    %v7952 = vshrl.u32 %v7951, 7
    %v7953 = vsub.s32 %v7950, %v7952
    %v7954 = vrot.slane %v7940, %v7953
    %v7955 = vcombine.high %v7947, %v7947
    %v7956 = vcombine.high %v7954, %v7954
    %v7957 = vcombine.high %v7733, %v7733
    %v7959 = vunpack.c.l.s4 1983009808
    %v7960 = vunpack.c.0.s8 %v7959
    %v7961 = vlaneseq
    %v7962 = vshrl.u32 %v7961, 7
    %v7963 = vsub.s32 %v7960, %v7962
    %v7964 = vrot.slane %v7733, %v7963
    %v7966 = vunpack.c.l.s4 1983009808
    %v7967 = vunpack.c.0.s8 %v7966
    %v7968 = vlaneseq
    %v7969 = vshrl.u32 %v7968, 7
    %v7970 = vsub.s32 %v7967, %v7969
    %v7971 = vrot.slane %v7957, %v7970
    %v7972 = vcombine.high %v7964, %v7964
    %v7973 = vcombine.high %v7971, %v7971
    %v7974 = vcombine.high %v7734, %v7734
    %v7976 = vunpack.c.l.s4 1983009808
    %v7977 = vunpack.c.0.s8 %v7976
    %v7978 = vlaneseq
    %v7979 = vshrl.u32 %v7978, 7
    %v7980 = vsub.s32 %v7977, %v7979
    %v7981 = vrot.slane %v7734, %v7980
    %v7983 = vunpack.c.l.s4 1983009808
    %v7984 = vunpack.c.0.s8 %v7983
    %v7985 = vlaneseq
    %v7986 = vshrl.u32 %v7985, 7
    %v7987 = vsub.s32 %v7984, %v7986
    %v7988 = vrot.slane %v7974, %v7987
    %v7989 = vcombine.high %v7981, %v7981
    %v7990 = vcombine.high %v7988, %v7988
    %v7991 = vcombine.high %v7735, %v7735
    %v7993 = vunpack.c.l.s4 1983009808
    %v7994 = vunpack.c.0.s8 %v7993
    %v7995 = vlaneseq
    %v7996 = vshrl.u32 %v7995, 7
    %v7997 = vsub.s32 %v7994, %v7996
    %v7998 = vrot.slane %v7735, %v7997
    %v8000 = vunpack.c.l.s4 1983009808
    %v8001 = vunpack.c.0.s8 %v8000
    %v8002 = vlaneseq
    %v8003 = vshrl.u32 %v8002, 7
    %v8004 = vsub.s32 %v8001, %v8003
    %v8005 = vrot.slane %v7991, %v8004
    %v8006 = vcombine.high %v7998, %v7998
    %v8007 = vcombine.high %v8005, %v8005
    %v8008 = vcombine.high %v7736, %v7736
    %v8010 = vunpack.c.l.s4 1983009808
    %v8011 = vunpack.c.0.s8 %v8010
    %v8012 = vlaneseq
    %v8013 = vshrl.u32 %v8012, 7
    %v8014 = vsub.s32 %v8011, %v8013
    %v8015 = vrot.slane %v7736, %v8014
    %v8017 = vunpack.c.l.s4 1983009808
    %v8018 = vunpack.c.0.s8 %v8017
    %v8019 = vlaneseq
    %v8020 = vshrl.u32 %v8019, 7
    %v8021 = vsub.s32 %v8018, %v8020
    %v8022 = vrot.slane %v8008, %v8021
    %v8023 = vcombine.high %v8015, %v8015
    %v8024 = vcombine.high %v8022, %v8022
    %v8089 = vrot.slane %v7760, 7
    %v8090 = vrot.slane %v8089, 2
    %v8091 = vrot.slane %v7768, 7
    %v8092 = vrot.slane %v8091, 2
    %v8093 = vrot.slane %v7767, 7
    %v8094 = vrot.slane %v8093, 2
    %v8095 = vrot.slane %v7769, 7
    %v8096 = vrot.slane %v8095, 2
    %v8097 = vrot.slane %v7777, 7
    %v8098 = vrot.slane %v8097, 2
    %v8099 = vrot.slane %v7785, 7
    %v8100 = vrot.slane %v8099, 2
    %v8101 = vrot.slane %v7784, 7
    %v8102 = vrot.slane %v8101, 2
    %v8103 = vrot.slane %v7786, 7
    %v8104 = vrot.slane %v8103, 2
    %v8105 = vrot.slane %v7794, 7
    %v8106 = vrot.slane %v8105, 2
    %v8107 = vrot.slane %v7802, 7
    %v8108 = vrot.slane %v8107, 2
    %v8109 = vrot.slane %v7801, 7
    %v8110 = vrot.slane %v8109, 2
    %v8111 = vrot.slane %v7803, 7
    %v8112 = vrot.slane %v8111, 2
    %v8113 = vrot.slane %v7811, 7
    %v8114 = vrot.slane %v8113, 2
    %v8115 = vrot.slane %v7819, 7
    %v8116 = vrot.slane %v8115, 2
    %v8117 = vrot.slane %v7818, 7
    %v8118 = vrot.slane %v8117, 2
    %v8119 = vrot.slane %v7820, 7
    %v8120 = vrot.slane %v8119, 2
    %v8121 = vrot.slane %v7828, 7
    %v8122 = vrot.slane %v8121, 2
    %v8123 = vrot.slane %v7836, 7
    %v8124 = vrot.slane %v8123, 2
    %v8125 = vrot.slane %v7835, 7
    %v8126 = vrot.slane %v8125, 2
    %v8127 = vrot.slane %v7837, 7
    %v8128 = vrot.slane %v8127, 2
    %v8129 = vrot.slane %v7845, 7
    %v8130 = vrot.slane %v8129, 2
    %v8131 = vrot.slane %v7853, 7
    %v8132 = vrot.slane %v8131, 2
    %v8133 = vrot.slane %v7852, 7
    %v8134 = vrot.slane %v8133, 2
    %v8135 = vrot.slane %v7854, 7
    %v8136 = vrot.slane %v8135, 2
    %v8137 = vrot.slane %v7862, 7
    %v8138 = vrot.slane %v8137, 2
    %v8139 = vrot.slane %v7870, 7
    %v8140 = vrot.slane %v8139, 2
    %v8141 = vrot.slane %v7869, 7
    %v8142 = vrot.slane %v8141, 2
    %v8143 = vrot.slane %v7871, 7
    %v8144 = vrot.slane %v8143, 2
    %v8145 = vrot.slane %v7879, 7
    %v8146 = vrot.slane %v8145, 2
    %v8147 = vrot.slane %v7887, 7
    %v8148 = vrot.slane %v8147, 2
    %v8149 = vrot.slane %v7886, 7
    %v8150 = vrot.slane %v8149, 2
    %v8151 = vrot.slane %v7888, 7
    %v8152 = vrot.slane %v8151, 2
    %v8153 = vrot.slane %v7896, 7
    %v8154 = vrot.slane %v8153, 2
    %v8155 = vrot.slane %v7904, 7
    %v8156 = vrot.slane %v8155, 2
    %v8157 = vrot.slane %v7903, 7
    %v8158 = vrot.slane %v8157, 2
    %v8159 = vrot.slane %v7905, 7
    %v8160 = vrot.slane %v8159, 2
    %v8161 = vrot.slane %v7913, 7
    %v8162 = vrot.slane %v8161, 2
    %v8163 = vrot.slane %v7921, 7
    %v8164 = vrot.slane %v8163, 2
    %v8165 = vrot.slane %v7920, 7
    %v8166 = vrot.slane %v8165, 2
    %v8167 = vrot.slane %v7922, 7
    %v8168 = vrot.slane %v8167, 2
    %v8169 = vrot.slane %v7930, 7
    %v8170 = vrot.slane %v8169, 2
    %v8171 = vrot.slane %v7938, 7
    %v8172 = vrot.slane %v8171, 2
    %v8173 = vrot.slane %v7937, 7
    %v8174 = vrot.slane %v8173, 2
    %v8175 = vrot.slane %v7939, 7
    %v8176 = vrot.slane %v8175, 2
    %v8177 = vrot.slane %v7947, 7
    %v8178 = vrot.slane %v8177, 2
    %v8179 = vrot.slane %v7955, 7
    %v8180 = vrot.slane %v8179, 2
    %v8181 = vrot.slane %v7954, 7
    %v8182 = vrot.slane %v8181, 2
    %v8183 = vrot.slane %v7956, 7
    %v8184 = vrot.slane %v8183, 2
    %v8185 = vrot.slane %v7964, 7
    %v8186 = vrot.slane %v8185, 2
    %v8187 = vrot.slane %v7972, 7
    %v8188 = vrot.slane %v8187, 2
    %v8189 = vrot.slane %v7971, 7
    %v8190 = vrot.slane %v8189, 2
    %v8191 = vrot.slane %v7973, 7
    %v8192 = vrot.slane %v8191, 2
    %v8193 = vrot.slane %v7981, 7
    %v8194 = vrot.slane %v8193, 2
    %v8195 = vrot.slane %v7989, 7
    %v8196 = vrot.slane %v8195, 2
    %v8197 = vrot.slane %v7988, 7
    %v8198 = vrot.slane %v8197, 2
    %v8199 = vrot.slane %v7990, 7
    %v8200 = vrot.slane %v8199, 2
    %v8201 = vrot.slane %v7998, 7
    %v8202 = vrot.slane %v8201, 2
    %v8203 = vrot.slane %v8006, 7
    %v8204 = vrot.slane %v8203, 2
    %v8205 = vrot.slane %v8005, 7
    %v8206 = vrot.slane %v8205, 2
    %v8207 = vrot.slane %v8007, 7
    %v8208 = vrot.slane %v8207, 2
    %v8209 = vrot.slane %v8015, 7
    %v8210 = vrot.slane %v8209, 2
    %v8211 = vrot.slane %v8023, 7
    %v8212 = vrot.slane %v8211, 2
    %v8213 = vrot.slane %v8022, 7
    %v8214 = vrot.slane %v8213, 2
    %v8215 = vrot.slane %v8024, 7
    %v8216 = vrot.slane %v8215, 2
    %v8281 = vmax.f32 %v7760, %v8090
    %v8282 = vmax.f32 %v7768, %v8092
    %v8283 = vmax.f32 %v7767, %v8094
    %v8284 = vmax.f32 %v7769, %v8096
    %v8285 = vmax.f32 %v7777, %v8098
    %v8286 = vmax.f32 %v7785, %v8100
    %v8287 = vmax.f32 %v7784, %v8102
    %v8288 = vmax.f32 %v7786, %v8104
    %v8289 = vmax.f32 %v7794, %v8106
    %v8290 = vmax.f32 %v7802, %v8108
    %v8291 = vmax.f32 %v7801, %v8110
    %v8292 = vmax.f32 %v7803, %v8112
    %v8293 = vmax.f32 %v7811, %v8114
    %v8294 = vmax.f32 %v7819, %v8116
    %v8295 = vmax.f32 %v7818, %v8118
    %v8296 = vmax.f32 %v7820, %v8120
    %v8297 = vmax.f32 %v7828, %v8122
    %v8298 = vmax.f32 %v7836, %v8124
    %v8299 = vmax.f32 %v7835, %v8126
    %v8300 = vmax.f32 %v7837, %v8128
    %v8301 = vmax.f32 %v7845, %v8130
    %v8302 = vmax.f32 %v7853, %v8132
    %v8303 = vmax.f32 %v7852, %v8134
    %v8304 = vmax.f32 %v7854, %v8136
    %v8305 = vmax.f32 %v7862, %v8138
    %v8306 = vmax.f32 %v7870, %v8140
    %v8307 = vmax.f32 %v7869, %v8142
    %v8308 = vmax.f32 %v7871, %v8144
    %v8309 = vmax.f32 %v7879, %v8146
    %v8310 = vmax.f32 %v7887, %v8148
    %v8311 = vmax.f32 %v7886, %v8150
    %v8312 = vmax.f32 %v7888, %v8152
    %v8313 = vmax.f32 %v7896, %v8154
    %v8314 = vmax.f32 %v7904, %v8156
    %v8315 = vmax.f32 %v7903, %v8158
    %v8316 = vmax.f32 %v7905, %v8160
    %v8317 = vmax.f32 %v7913, %v8162
    %v8318 = vmax.f32 %v7921, %v8164
    %v8319 = vmax.f32 %v7920, %v8166
    %v8320 = vmax.f32 %v7922, %v8168
    %v8321 = vmax.f32 %v7930, %v8170
    %v8322 = vmax.f32 %v7938, %v8172
    %v8323 = vmax.f32 %v7937, %v8174
    %v8324 = vmax.f32 %v7939, %v8176
    %v8325 = vmax.f32 %v7947, %v8178
    %v8326 = vmax.f32 %v7955, %v8180
    %v8327 = vmax.f32 %v7954, %v8182
    %v8328 = vmax.f32 %v7956, %v8184
    %v8329 = vmax.f32 %v7964, %v8186
    %v8330 = vmax.f32 %v7972, %v8188
    %v8331 = vmax.f32 %v7971, %v8190
    %v8332 = vmax.f32 %v7973, %v8192
    %v8333 = vmax.f32 %v7981, %v8194
    %v8334 = vmax.f32 %v7989, %v8196
    %v8335 = vmax.f32 %v7988, %v8198
    %v8336 = vmax.f32 %v7990, %v8200
    %v8337 = vmax.f32 %v7998, %v8202
    %v8338 = vmax.f32 %v8006, %v8204
    %v8339 = vmax.f32 %v8005, %v8206
    %v8340 = vmax.f32 %v8007, %v8208
    %v8341 = vmax.f32 %v8015, %v8210
    %v8342 = vmax.f32 %v8023, %v8212
    %v8343 = vmax.f32 %v8022, %v8214
    %v8344 = vmax.f32 %v8024, %v8216
    %v8345 = vmax.f32 %v8281, %v8285
    %v8346 = vmax.f32 %v8282, %v8286
    %v8347 = vmax.f32 %v8283, %v8287
    %v8348 = vmax.f32 %v8284, %v8288
    %v8349 = vmax.f32 %v8289, %v8293
    %v8350 = vmax.f32 %v8290, %v8294
    %v8351 = vmax.f32 %v8291, %v8295
    %v8352 = vmax.f32 %v8292, %v8296
    %v8353 = vmax.f32 %v8297, %v8301
    %v8354 = vmax.f32 %v8298, %v8302
    %v8355 = vmax.f32 %v8299, %v8303
    %v8356 = vmax.f32 %v8300, %v8304
    %v8357 = vmax.f32 %v8305, %v8309
    %v8358 = vmax.f32 %v8306, %v8310
    %v8359 = vmax.f32 %v8307, %v8311
    %v8360 = vmax.f32 %v8308, %v8312
    %v8361 = vmax.f32 %v8313, %v8317
    %v8362 = vmax.f32 %v8314, %v8318
    %v8363 = vmax.f32 %v8315, %v8319
    %v8364 = vmax.f32 %v8316, %v8320
    %v8365 = vmax.f32 %v8321, %v8325
    %v8366 = vmax.f32 %v8322, %v8326
    %v8367 = vmax.f32 %v8323, %v8327
    %v8368 = vmax.f32 %v8324, %v8328
    %v8369 = vmax.f32 %v8329, %v8333
    %v8370 = vmax.f32 %v8330, %v8334
    %v8371 = vmax.f32 %v8331, %v8335
    %v8372 = vmax.f32 %v8332, %v8336
    %v8373 = vmax.f32 %v8337, %v8341
    %v8374 = vmax.f32 %v8338, %v8342
    %v8375 = vmax.f32 %v8339, %v8343
    %v8376 = vmax.f32 %v8340, %v8344
    %v8377 = vld [vmem:[%s5] sm:$0xff]
    %v8378 = vld [vmem:[%s5 + $0x8] sm:$0xff]
    %v8379 = vld [vmem:[%s5 + $0x10] sm:$0xff]
    %v8380 = vld [vmem:[%s5 + $0x18] sm:$0xff]
    %v8381 = vld [vmem:[%s5 + $0x20] sm:$0xff]
    %v8382 = vld [vmem:[%s5 + $0x28] sm:$0xff]
    %v8383 = vld [vmem:[%s5 + $0x30] sm:$0xff]
    %v8384 = vld [vmem:[%s5 + $0x38] sm:$0xff]
    %v8387 = vlaneseq
    %v8388 = vshrl.u32 %v8387, 7
    %v8389 = vsub.s32 0, %v8388
    %v8390 = vrot.slane %v8346, %v8389
    %v8391 = vlaneseq
    %v8392 = vshrl.u32 %v8391, 7
    %v8393 = vsub.s32 0, %v8392
    %v8394 = vrot.slane %v8362, %v8393
    %v8395 = vsel %vm6697, %v8394, %v8390
    %v8396 = vsel %vm2778, %v8395, 0
    %8398 = vmatprep.subr.mxu0 0.0
    %8399 = vmatpush1.msra.mxu0 0.0
    %8400 = vmatprep.subr.mxu0 0.0
    %8401 = vmatpush1.msra.mxu0 0.0
    %8402 = vmatprep.subr.mxu0 0.0
    %8403 = vmatpush1.msra.mxu0 0.0
    %8404 = vmatprep.subr.mxu0 0.0
    %8405 = vmatpush1.msra.mxu0 0.0
    %8406 = vmatprep.subr.mxu0 0.0
    %8407 = vmatpush1.msra.mxu0 0.0
    %8408 = vmatprep.subr.mxu0 0.0
    %8409 = vmatpush1.msra.mxu0 0.0
    %8410 = vmatprep.subr.mxu0 0.0
    %8411 = vmatpush1.msra.mxu0 0.0
    %8412 = vmatprep.subr.mxu0 0.0
    %8413 = vmatpush1.msra.mxu0 0.0
    %8414 = vmatprep.subr.mxu0 0.0
    %8415 = vmatpush1.msra.mxu0 0.0
    %8416 = vmatprep.subr.mxu0 0.0
    %8417 = vmatpush1.msra.mxu0 0.0
    %8418 = vmatprep.subr.mxu0 0.0
    %8419 = vmatpush1.msra.mxu0 0.0
    %8420 = vmatprep.subr.mxu0 0.0
    %8421 = vmatpush1.msra.mxu0 0.0
    %8422 = vmatprep.subr.mxu0 0.0
    %8423 = vmatpush1.msra.mxu0 0.0
    %8424 = vmatprep.subr.mxu0 0.0
    %8425 = vmatpush1.msra.mxu0 0.0
    %8426 = vmatprep.subr.mxu0 0.0
    %8427 = vmatpush1.msra.mxu0 0.0
    %8428 = vmatprep.subr.mxu0 %v8382
    %8429 = vmatpush1.msra.mxu0 %v8381
    %8430 = vmatprep.subr.mxu0 0.0
    %8431 = vmatpush2.msra.mxu0 0.0
    %8432 = vmatprep.subr.mxu0 0.0
    %8433 = vmatpush2.msra.mxu0 0.0
    %8434 = vmatprep.subr.mxu0 0.0
    %8435 = vmatpush2.msra.mxu0 0.0
    %8436 = vmatprep.subr.mxu0 0.0
    %8437 = vmatpush2.msra.mxu0 0.0
    %8438 = vmatprep.subr.mxu0 0.0
    %8439 = vmatpush2.msra.mxu0 0.0
    %8440 = vmatprep.subr.mxu0 0.0
    %8441 = vmatpush2.msra.mxu0 0.0
    %8442 = vmatprep.subr.mxu0 0.0
    %8443 = vmatpush2.msra.mxu0 0.0
    %8444 = vmatprep.subr.mxu0 0.0
    %8445 = vmatpush2.msra.mxu0 0.0
    %8446 = vmatprep.subr.mxu0 0.0
    %8447 = vmatpush2.msra.mxu0 0.0
    %8448 = vmatprep.subr.mxu0 0.0
    %8449 = vmatpush2.msra.mxu0 0.0
    %8450 = vmatprep.subr.mxu0 0.0
    %8451 = vmatpush2.msra.mxu0 0.0
    %8452 = vmatprep.subr.mxu0 0.0
    %8453 = vmatpush2.msra.mxu0 0.0
    %8454 = vmatprep.subr.mxu0 0.0
    %8455 = vmatpush2.msra.mxu0 0.0
    %8456 = vmatprep.subr.mxu0 0.0
    %8457 = vmatpush2.msra.mxu0 0.0
    %8458 = vmatprep.subr.mxu0 0.0
    %8459 = vmatpush2.msra.mxu0 0.0
    %8460 = vmatprep.subr.mxu0 0.0
    %8461 = vmatpush2.msra.mxu0 0.0
    %8462 = vmatprep.mubr.f32.mxu0 0.0
    %8463 = vmatmul.mubr.f32.gmra.mxu0 %v8396
    %v8464 = vpop.f32.mrf.mxu0
    %v8465 = vadd.f32 0.0, %v8464
    %v8466 = vpop.f32.mrf.mxu0
    %v8467 = vadd.f32 0.0, %v8466
    %8468 = vdwg.mxu0
    %8469 = vmatprep.subr.mxu0 0.0
    %8470 = vmatpush1.msra.mxu0 0.0
    %8471 = vmatprep.subr.mxu0 0.0
    %8472 = vmatpush1.msra.mxu0 0.0
    %8473 = vmatprep.subr.mxu0 0.0
    %8474 = vmatpush1.msra.mxu0 0.0
    %8475 = vmatprep.subr.mxu0 0.0
    %8476 = vmatpush1.msra.mxu0 0.0
    %8477 = vmatprep.subr.mxu0 0.0
    %8478 = vmatpush1.msra.mxu0 0.0
    %8479 = vmatprep.subr.mxu0 0.0
    %8480 = vmatpush1.msra.mxu0 0.0
    %8481 = vmatprep.subr.mxu0 0.0
    %8482 = vmatpush1.msra.mxu0 0.0
    %8483 = vmatprep.subr.mxu0 0.0
    %8484 = vmatpush1.msra.mxu0 0.0
    %8485 = vmatprep.subr.mxu0 0.0
    %8486 = vmatpush1.msra.mxu0 0.0
    %8487 = vmatprep.subr.mxu0 0.0
    %8488 = vmatpush1.msra.mxu0 0.0
    %8489 = vmatprep.subr.mxu0 0.0
    %8490 = vmatpush1.msra.mxu0 0.0
    %8491 = vmatprep.subr.mxu0 0.0
    %8492 = vmatpush1.msra.mxu0 0.0
    %8493 = vmatprep.subr.mxu0 0.0
    %8494 = vmatpush1.msra.mxu0 0.0
    %8495 = vmatprep.subr.mxu0 0.0
    %8496 = vmatpush1.msra.mxu0 0.0
    %8497 = vmatprep.subr.mxu0 0.0
    %8498 = vmatpush1.msra.mxu0 0.0
    %8499 = vmatprep.subr.mxu0 %v8384
    %8500 = vmatpush1.msra.mxu0 %v8383
    %8501 = vmatprep.subr.mxu0 0.0
    %8502 = vmatpush2.msra.mxu0 0.0
    %8503 = vmatprep.subr.mxu0 0.0
    %8504 = vmatpush2.msra.mxu0 0.0
    %8505 = vmatprep.subr.mxu0 0.0
    %8506 = vmatpush2.msra.mxu0 0.0
    %8507 = vmatprep.subr.mxu0 0.0
    %8508 = vmatpush2.msra.mxu0 0.0
    %8509 = vmatprep.subr.mxu0 0.0
    %8510 = vmatpush2.msra.mxu0 0.0
    %8511 = vmatprep.subr.mxu0 0.0
    %8512 = vmatpush2.msra.mxu0 0.0
    %8513 = vmatprep.subr.mxu0 0.0
    %8514 = vmatpush2.msra.mxu0 0.0
    %8515 = vmatprep.subr.mxu0 0.0
    %8516 = vmatpush2.msra.mxu0 0.0
    %8517 = vmatprep.subr.mxu0 0.0
    %8518 = vmatpush2.msra.mxu0 0.0
    %8519 = vmatprep.subr.mxu0 0.0
    %8520 = vmatpush2.msra.mxu0 0.0
    %8521 = vmatprep.subr.mxu0 0.0
    %8522 = vmatpush2.msra.mxu0 0.0
    %8523 = vmatprep.subr.mxu0 0.0
    %8524 = vmatpush2.msra.mxu0 0.0
    %8525 = vmatprep.subr.mxu0 0.0
    %8526 = vmatpush2.msra.mxu0 0.0
    %8527 = vmatprep.subr.mxu0 0.0
    %8528 = vmatpush2.msra.mxu0 0.0
    %8529 = vmatprep.subr.mxu0 0.0
    %8530 = vmatpush2.msra.mxu0 0.0
    %8531 = vmatprep.subr.mxu0 0.0
    %8532 = vmatpush2.msra.mxu0 0.0
    %8533 = vmatprep.mubr.f32.mxu0 0.0
    %8534 = vmatmul.mubr.f32.gmra.mxu0 %v8396
    %v8535 = vpop.f32.mrf.mxu0
    %v8536 = vadd.f32 0.0, %v8535
    %v8537 = vpop.f32.mrf.mxu0
    %v8538 = vadd.f32 0.0, %v8537
    %8539 = vdwg.mxu0
    %v8542 = vlaneseq
    %v8543 = vshrl.u32 %v8542, 7
    %v8544 = vsub.s32 0, %v8543
    %v8545 = vrot.slane %v8345, %v8544
    %v8546 = vlaneseq
    %v8547 = vshrl.u32 %v8546, 7
    %v8548 = vsub.s32 0, %v8547
    %v8549 = vrot.slane %v8361, %v8548
    %v8550 = vsel %vm6697, %v8549, %v8545
    %v8551 = vsel %vm2778, %v8550, 0
    %8553 = vmatprep.subr.mxu0 0.0
    %8554 = vmatpush1.msra.mxu0 0.0
    %8555 = vmatprep.subr.mxu0 0.0
    %8556 = vmatpush1.msra.mxu0 0.0
    %8557 = vmatprep.subr.mxu0 0.0
    %8558 = vmatpush1.msra.mxu0 0.0
    %8559 = vmatprep.subr.mxu0 0.0
    %8560 = vmatpush1.msra.mxu0 0.0
    %8561 = vmatprep.subr.mxu0 0.0
    %8562 = vmatpush1.msra.mxu0 0.0
    %8563 = vmatprep.subr.mxu0 0.0
    %8564 = vmatpush1.msra.mxu0 0.0
    %8565 = vmatprep.subr.mxu0 0.0
    %8566 = vmatpush1.msra.mxu0 0.0
    %8567 = vmatprep.subr.mxu0 0.0
    %8568 = vmatpush1.msra.mxu0 0.0
    %8569 = vmatprep.subr.mxu0 0.0
    %8570 = vmatpush1.msra.mxu0 0.0
    %8571 = vmatprep.subr.mxu0 0.0
    %8572 = vmatpush1.msra.mxu0 0.0
    %8573 = vmatprep.subr.mxu0 0.0
    %8574 = vmatpush1.msra.mxu0 0.0
    %8575 = vmatprep.subr.mxu0 0.0
    %8576 = vmatpush1.msra.mxu0 0.0
    %8577 = vmatprep.subr.mxu0 0.0
    %8578 = vmatpush1.msra.mxu0 0.0
    %8579 = vmatprep.subr.mxu0 0.0
    %8580 = vmatpush1.msra.mxu0 0.0
    %8581 = vmatprep.subr.mxu0 0.0
    %8582 = vmatpush1.msra.mxu0 0.0
    %8583 = vmatprep.subr.mxu0 %v8378
    %8584 = vmatpush1.msra.mxu0 %v8377
    %8585 = vmatprep.subr.mxu0 0.0
    %8586 = vmatpush2.msra.mxu0 0.0
    %8587 = vmatprep.subr.mxu0 0.0
    %8588 = vmatpush2.msra.mxu0 0.0
    %8589 = vmatprep.subr.mxu0 0.0
    %8590 = vmatpush2.msra.mxu0 0.0
    %8591 = vmatprep.subr.mxu0 0.0
    %8592 = vmatpush2.msra.mxu0 0.0
    %8593 = vmatprep.subr.mxu0 0.0
    %8594 = vmatpush2.msra.mxu0 0.0
    %8595 = vmatprep.subr.mxu0 0.0
    %8596 = vmatpush2.msra.mxu0 0.0
    %8597 = vmatprep.subr.mxu0 0.0
    %8598 = vmatpush2.msra.mxu0 0.0
    %8599 = vmatprep.subr.mxu0 0.0
    %8600 = vmatpush2.msra.mxu0 0.0
    %8601 = vmatprep.subr.mxu0 0.0
    %8602 = vmatpush2.msra.mxu0 0.0
    %8603 = vmatprep.subr.mxu0 0.0
    %8604 = vmatpush2.msra.mxu0 0.0
    %8605 = vmatprep.subr.mxu0 0.0
    %8606 = vmatpush2.msra.mxu0 0.0
    %8607 = vmatprep.subr.mxu0 0.0
    %8608 = vmatpush2.msra.mxu0 0.0
    %8609 = vmatprep.subr.mxu0 0.0
    %8610 = vmatpush2.msra.mxu0 0.0
    %8611 = vmatprep.subr.mxu0 0.0
    %8612 = vmatpush2.msra.mxu0 0.0
    %8613 = vmatprep.subr.mxu0 0.0
    %8614 = vmatpush2.msra.mxu0 0.0
    %8615 = vmatprep.subr.mxu0 0.0
    %8616 = vmatpush2.msra.mxu0 0.0
    %8617 = vmatprep.mubr.f32.mxu0 0.0
    %8618 = vmatmul.mubr.f32.gmra.mxu0 %v8551
    %v8619 = vpop.f32.mrf.mxu0
    %v8620 = vadd.f32 %v8465, %v8619
    %v8621 = vpop.f32.mrf.mxu0
    %v8622 = vadd.f32 %v8467, %v8621
    %8623 = vdwg.mxu0
    %8624 = vmatprep.subr.mxu0 0.0
    %8625 = vmatpush1.msra.mxu0 0.0
    %8626 = vmatprep.subr.mxu0 0.0
    %8627 = vmatpush1.msra.mxu0 0.0
    %8628 = vmatprep.subr.mxu0 0.0
    %8629 = vmatpush1.msra.mxu0 0.0
    %8630 = vmatprep.subr.mxu0 0.0
    %8631 = vmatpush1.msra.mxu0 0.0
    %8632 = vmatprep.subr.mxu0 0.0
    %8633 = vmatpush1.msra.mxu0 0.0
    %8634 = vmatprep.subr.mxu0 0.0
    %8635 = vmatpush1.msra.mxu0 0.0
    %8636 = vmatprep.subr.mxu0 0.0
    %8637 = vmatpush1.msra.mxu0 0.0
    %8638 = vmatprep.subr.mxu0 0.0
    %8639 = vmatpush1.msra.mxu0 0.0
    %8640 = vmatprep.subr.mxu0 0.0
    %8641 = vmatpush1.msra.mxu0 0.0
    %8642 = vmatprep.subr.mxu0 0.0
    %8643 = vmatpush1.msra.mxu0 0.0
    %8644 = vmatprep.subr.mxu0 0.0
    %8645 = vmatpush1.msra.mxu0 0.0
    %8646 = vmatprep.subr.mxu0 0.0
    %8647 = vmatpush1.msra.mxu0 0.0
    %8648 = vmatprep.subr.mxu0 0.0
    %8649 = vmatpush1.msra.mxu0 0.0
    %8650 = vmatprep.subr.mxu0 0.0
    %8651 = vmatpush1.msra.mxu0 0.0
    %8652 = vmatprep.subr.mxu0 0.0
    %8653 = vmatpush1.msra.mxu0 0.0
    %8654 = vmatprep.subr.mxu0 %v8380
    %8655 = vmatpush1.msra.mxu0 %v8379
    %8656 = vmatprep.subr.mxu0 0.0
    %8657 = vmatpush2.msra.mxu0 0.0
    %8658 = vmatprep.subr.mxu0 0.0
    %8659 = vmatpush2.msra.mxu0 0.0
    %8660 = vmatprep.subr.mxu0 0.0
    %8661 = vmatpush2.msra.mxu0 0.0
    %8662 = vmatprep.subr.mxu0 0.0
    %8663 = vmatpush2.msra.mxu0 0.0
    %8664 = vmatprep.subr.mxu0 0.0
    %8665 = vmatpush2.msra.mxu0 0.0
    %8666 = vmatprep.subr.mxu0 0.0
    %8667 = vmatpush2.msra.mxu0 0.0
    %8668 = vmatprep.subr.mxu0 0.0
    %8669 = vmatpush2.msra.mxu0 0.0
    %8670 = vmatprep.subr.mxu0 0.0
    %8671 = vmatpush2.msra.mxu0 0.0
    %8672 = vmatprep.subr.mxu0 0.0
    %8673 = vmatpush2.msra.mxu0 0.0
    %8674 = vmatprep.subr.mxu0 0.0
    %8675 = vmatpush2.msra.mxu0 0.0
    %8676 = vmatprep.subr.mxu0 0.0
    %8677 = vmatpush2.msra.mxu0 0.0
    %8678 = vmatprep.subr.mxu0 0.0
    %8679 = vmatpush2.msra.mxu0 0.0
    %8680 = vmatprep.subr.mxu0 0.0
    %8681 = vmatpush2.msra.mxu0 0.0
    %8682 = vmatprep.subr.mxu0 0.0
    %8683 = vmatpush2.msra.mxu0 0.0
    %8684 = vmatprep.subr.mxu0 0.0
    %8685 = vmatpush2.msra.mxu0 0.0
    %8686 = vmatprep.subr.mxu0 0.0
    %8687 = vmatpush2.msra.mxu0 0.0
    %8688 = vmatprep.mubr.f32.mxu0 0.0
    %8689 = vmatmul.mubr.f32.gmra.mxu0 %v8551
    %v8690 = vpop.f32.mrf.mxu0
    %v8691 = vadd.f32 %v8536, %v8690
    %v8692 = vpop.f32.mrf.mxu0
    %v8693 = vadd.f32 %v8538, %v8692
    %8694 = vdwg.mxu0
    %v8695 = vld [vmem:[%s5 + $0x40] sm:$0xff]
    %v8696 = vld [vmem:[%s5 + $0x48] sm:$0xff]
    %v8697 = vld [vmem:[%s5 + $0x50] sm:$0xff]
    %v8698 = vld [vmem:[%s5 + $0x58] sm:$0xff]
    %v8701 = vlaneseq
    %v8702 = vshrl.u32 %v8701, 7
    %v8703 = vsub.s32 0, %v8702
    %v8704 = vrot.slane %v8347, %v8703
    %v8705 = vlaneseq
    %v8706 = vshrl.u32 %v8705, 7
    %v8707 = vsub.s32 0, %v8706
    %v8708 = vrot.slane %v8363, %v8707
    %v8709 = vsel %vm6697, %v8708, %v8704
    %v8710 = vsel %vm2778, %v8709, 0
    %8712 = vmatprep.subr.mxu0 0.0
    %8713 = vmatpush1.msra.mxu0 0.0
    %8714 = vmatprep.subr.mxu0 0.0
    %8715 = vmatpush1.msra.mxu0 0.0
    %8716 = vmatprep.subr.mxu0 0.0
    %8717 = vmatpush1.msra.mxu0 0.0
    %8718 = vmatprep.subr.mxu0 0.0
    %8719 = vmatpush1.msra.mxu0 0.0
    %8720 = vmatprep.subr.mxu0 0.0
    %8721 = vmatpush1.msra.mxu0 0.0
    %8722 = vmatprep.subr.mxu0 0.0
    %8723 = vmatpush1.msra.mxu0 0.0
    %8724 = vmatprep.subr.mxu0 0.0
    %8725 = vmatpush1.msra.mxu0 0.0
    %8726 = vmatprep.subr.mxu0 0.0
    %8727 = vmatpush1.msra.mxu0 0.0
    %8728 = vmatprep.subr.mxu0 0.0
    %8729 = vmatpush1.msra.mxu0 0.0
    %8730 = vmatprep.subr.mxu0 0.0
    %8731 = vmatpush1.msra.mxu0 0.0
    %8732 = vmatprep.subr.mxu0 0.0
    %8733 = vmatpush1.msra.mxu0 0.0
    %8734 = vmatprep.subr.mxu0 0.0
    %8735 = vmatpush1.msra.mxu0 0.0
    %8736 = vmatprep.subr.mxu0 0.0
    %8737 = vmatpush1.msra.mxu0 0.0
    %8738 = vmatprep.subr.mxu0 0.0
    %8739 = vmatpush1.msra.mxu0 0.0
    %8740 = vmatprep.subr.mxu0 0.0
    %8741 = vmatpush1.msra.mxu0 0.0
    %8742 = vmatprep.subr.mxu0 %v8696
    %8743 = vmatpush1.msra.mxu0 %v8695
    %8744 = vmatprep.subr.mxu0 0.0
    %8745 = vmatpush2.msra.mxu0 0.0
    %8746 = vmatprep.subr.mxu0 0.0
    %8747 = vmatpush2.msra.mxu0 0.0
    %8748 = vmatprep.subr.mxu0 0.0
    %8749 = vmatpush2.msra.mxu0 0.0
    %8750 = vmatprep.subr.mxu0 0.0
    %8751 = vmatpush2.msra.mxu0 0.0
    %8752 = vmatprep.subr.mxu0 0.0
    %8753 = vmatpush2.msra.mxu0 0.0
    %8754 = vmatprep.subr.mxu0 0.0
    %8755 = vmatpush2.msra.mxu0 0.0
    %8756 = vmatprep.subr.mxu0 0.0
    %8757 = vmatpush2.msra.mxu0 0.0
    %8758 = vmatprep.subr.mxu0 0.0
    %8759 = vmatpush2.msra.mxu0 0.0
    %8760 = vmatprep.subr.mxu0 0.0
    %8761 = vmatpush2.msra.mxu0 0.0
    %8762 = vmatprep.subr.mxu0 0.0
    %8763 = vmatpush2.msra.mxu0 0.0
    %8764 = vmatprep.subr.mxu0 0.0
    %8765 = vmatpush2.msra.mxu0 0.0
    %8766 = vmatprep.subr.mxu0 0.0
    %8767 = vmatpush2.msra.mxu0 0.0
    %8768 = vmatprep.subr.mxu0 0.0
    %8769 = vmatpush2.msra.mxu0 0.0
    %8770 = vmatprep.subr.mxu0 0.0
    %8771 = vmatpush2.msra.mxu0 0.0
    %8772 = vmatprep.subr.mxu0 0.0
    %8773 = vmatpush2.msra.mxu0 0.0
    %8774 = vmatprep.subr.mxu0 0.0
    %8775 = vmatpush2.msra.mxu0 0.0
    %8776 = vmatprep.mubr.f32.mxu0 0.0
    %8777 = vmatmul.mubr.f32.gmra.mxu0 %v8710
    %v8778 = vpop.f32.mrf.mxu0
    %v8779 = vadd.f32 0.0, %v8778
    %v8780 = vpop.f32.mrf.mxu0
    %v8781 = vadd.f32 0.0, %v8780
    %8782 = vdwg.mxu0
    %8783 = vmatprep.subr.mxu0 0.0
    %8784 = vmatpush1.msra.mxu0 0.0
    %8785 = vmatprep.subr.mxu0 0.0
    %8786 = vmatpush1.msra.mxu0 0.0
    %8787 = vmatprep.subr.mxu0 0.0
    %8788 = vmatpush1.msra.mxu0 0.0
    %8789 = vmatprep.subr.mxu0 0.0
    %8790 = vmatpush1.msra.mxu0 0.0
    %8791 = vmatprep.subr.mxu0 0.0
    %8792 = vmatpush1.msra.mxu0 0.0
    %8793 = vmatprep.subr.mxu0 0.0
    %8794 = vmatpush1.msra.mxu0 0.0
    %8795 = vmatprep.subr.mxu0 0.0
    %8796 = vmatpush1.msra.mxu0 0.0
    %8797 = vmatprep.subr.mxu0 0.0
    %8798 = vmatpush1.msra.mxu0 0.0
    %8799 = vmatprep.subr.mxu0 0.0
    %8800 = vmatpush1.msra.mxu0 0.0
    %8801 = vmatprep.subr.mxu0 0.0
    %8802 = vmatpush1.msra.mxu0 0.0
    %8803 = vmatprep.subr.mxu0 0.0
    %8804 = vmatpush1.msra.mxu0 0.0
    %8805 = vmatprep.subr.mxu0 0.0
    %8806 = vmatpush1.msra.mxu0 0.0
    %8807 = vmatprep.subr.mxu0 0.0
    %8808 = vmatpush1.msra.mxu0 0.0
    %8809 = vmatprep.subr.mxu0 0.0
    %8810 = vmatpush1.msra.mxu0 0.0
    %8811 = vmatprep.subr.mxu0 0.0
    %8812 = vmatpush1.msra.mxu0 0.0
    %8813 = vmatprep.subr.mxu0 %v8698
    %8814 = vmatpush1.msra.mxu0 %v8697
    %8815 = vmatprep.subr.mxu0 0.0
    %8816 = vmatpush2.msra.mxu0 0.0
    %8817 = vmatprep.subr.mxu0 0.0
    %8818 = vmatpush2.msra.mxu0 0.0
    %8819 = vmatprep.subr.mxu0 0.0
    %8820 = vmatpush2.msra.mxu0 0.0
    %8821 = vmatprep.subr.mxu0 0.0
    %8822 = vmatpush2.msra.mxu0 0.0
    %8823 = vmatprep.subr.mxu0 0.0
    %8824 = vmatpush2.msra.mxu0 0.0
    %8825 = vmatprep.subr.mxu0 0.0
    %8826 = vmatpush2.msra.mxu0 0.0
    %8827 = vmatprep.subr.mxu0 0.0
    %8828 = vmatpush2.msra.mxu0 0.0
    %8829 = vmatprep.subr.mxu0 0.0
    %8830 = vmatpush2.msra.mxu0 0.0
    %8831 = vmatprep.subr.mxu0 0.0
    %8832 = vmatpush2.msra.mxu0 0.0
    %8833 = vmatprep.subr.mxu0 0.0
    %8834 = vmatpush2.msra.mxu0 0.0
    %8835 = vmatprep.subr.mxu0 0.0
    %8836 = vmatpush2.msra.mxu0 0.0
    %8837 = vmatprep.subr.mxu0 0.0
    %8838 = vmatpush2.msra.mxu0 0.0
    %8839 = vmatprep.subr.mxu0 0.0
    %8840 = vmatpush2.msra.mxu0 0.0
    %8841 = vmatprep.subr.mxu0 0.0
    %8842 = vmatpush2.msra.mxu0 0.0
    %8843 = vmatprep.subr.mxu0 0.0
    %8844 = vmatpush2.msra.mxu0 0.0
    %8845 = vmatprep.subr.mxu0 0.0
    %8846 = vmatpush2.msra.mxu0 0.0
    %8847 = vmatprep.mubr.f32.mxu0 0.0
    %8848 = vmatmul.mubr.f32.gmra.mxu0 %v8710
    %v8849 = vpop.f32.mrf.mxu0
    %v8850 = vadd.f32 0.0, %v8849
    %v8851 = vpop.f32.mrf.mxu0
    %v8852 = vadd.f32 0.0, %v8851
    %8853 = vdwg.mxu0
    %v8854 = vadd.f32 %v8620, %v8779
    %v8855 = vadd.f32 %v8622, %v8781
    %v8856 = vadd.f32 %v8691, %v8850
    %v8857 = vadd.f32 %v8693, %v8852
    %v8858 = vld [vmem:[%s5 + $0x60] sm:$0xff]
    %v8859 = vld [vmem:[%s5 + $0x68] sm:$0xff]
    %v8860 = vld [vmem:[%s5 + $0x70] sm:$0xff]
    %v8861 = vld [vmem:[%s5 + $0x78] sm:$0xff]
    %v8864 = vlaneseq
    %v8865 = vshrl.u32 %v8864, 7
    %v8866 = vsub.s32 0, %v8865
    %v8867 = vrot.slane %v8348, %v8866
    %v8868 = vlaneseq
    %v8869 = vshrl.u32 %v8868, 7
    %v8870 = vsub.s32 0, %v8869
    %v8871 = vrot.slane %v8364, %v8870
    %v8872 = vsel %vm6697, %v8871, %v8867
    %v8873 = vsel %vm2778, %v8872, 0
    %8875 = vmatprep.subr.mxu0 0.0
    %8876 = vmatpush1.msra.mxu0 0.0
    %8877 = vmatprep.subr.mxu0 0.0
    %8878 = vmatpush1.msra.mxu0 0.0
    %8879 = vmatprep.subr.mxu0 0.0
    %8880 = vmatpush1.msra.mxu0 0.0
    %8881 = vmatprep.subr.mxu0 0.0
    %8882 = vmatpush1.msra.mxu0 0.0
    %8883 = vmatprep.subr.mxu0 0.0
    %8884 = vmatpush1.msra.mxu0 0.0
    %8885 = vmatprep.subr.mxu0 0.0
    %8886 = vmatpush1.msra.mxu0 0.0
    %8887 = vmatprep.subr.mxu0 0.0
    %8888 = vmatpush1.msra.mxu0 0.0
    %8889 = vmatprep.subr.mxu0 0.0
    %8890 = vmatpush1.msra.mxu0 0.0
    %8891 = vmatprep.subr.mxu0 0.0
    %8892 = vmatpush1.msra.mxu0 0.0
    %8893 = vmatprep.subr.mxu0 0.0
    %8894 = vmatpush1.msra.mxu0 0.0
    %8895 = vmatprep.subr.mxu0 0.0
    %8896 = vmatpush1.msra.mxu0 0.0
    %8897 = vmatprep.subr.mxu0 0.0
    %8898 = vmatpush1.msra.mxu0 0.0
    %8899 = vmatprep.subr.mxu0 0.0
    %8900 = vmatpush1.msra.mxu0 0.0
    %8901 = vmatprep.subr.mxu0 0.0
    %8902 = vmatpush1.msra.mxu0 0.0
    %8903 = vmatprep.subr.mxu0 0.0
    %8904 = vmatpush1.msra.mxu0 0.0
    %8905 = vmatprep.subr.mxu0 %v8859
    %8906 = vmatpush1.msra.mxu0 %v8858
    %8907 = vmatprep.subr.mxu0 0.0
    %8908 = vmatpush2.msra.mxu0 0.0
    %8909 = vmatprep.subr.mxu0 0.0
    %8910 = vmatpush2.msra.mxu0 0.0
    %8911 = vmatprep.subr.mxu0 0.0
    %8912 = vmatpush2.msra.mxu0 0.0
    %8913 = vmatprep.subr.mxu0 0.0
    %8914 = vmatpush2.msra.mxu0 0.0
    %8915 = vmatprep.subr.mxu0 0.0
    %8916 = vmatpush2.msra.mxu0 0.0
    %8917 = vmatprep.subr.mxu0 0.0
    %8918 = vmatpush2.msra.mxu0 0.0
    %8919 = vmatprep.subr.mxu0 0.0
    %8920 = vmatpush2.msra.mxu0 0.0
    %8921 = vmatprep.subr.mxu0 0.0
    %8922 = vmatpush2.msra.mxu0 0.0
    %8923 = vmatprep.subr.mxu0 0.0
    %8924 = vmatpush2.msra.mxu0 0.0
    %8925 = vmatprep.subr.mxu0 0.0
    %8926 = vmatpush2.msra.mxu0 0.0
    %8927 = vmatprep.subr.mxu0 0.0
    %8928 = vmatpush2.msra.mxu0 0.0
    %8929 = vmatprep.subr.mxu0 0.0
    %8930 = vmatpush2.msra.mxu0 0.0
    %8931 = vmatprep.subr.mxu0 0.0
    %8932 = vmatpush2.msra.mxu0 0.0
    %8933 = vmatprep.subr.mxu0 0.0
    %8934 = vmatpush2.msra.mxu0 0.0
    %8935 = vmatprep.subr.mxu0 0.0
    %8936 = vmatpush2.msra.mxu0 0.0
    %8937 = vmatprep.subr.mxu0 0.0
    %8938 = vmatpush2.msra.mxu0 0.0
    %8939 = vmatprep.mubr.f32.mxu0 0.0
    %8940 = vmatmul.mubr.f32.gmra.mxu0 %v8873
    %v8941 = vpop.f32.mrf.mxu0
    %v8942 = vadd.f32 0.0, %v8941
    %v8943 = vpop.f32.mrf.mxu0
    %v8944 = vadd.f32 0.0, %v8943
    %8945 = vdwg.mxu0
    %8946 = vmatprep.subr.mxu0 0.0
    %8947 = vmatpush1.msra.mxu0 0.0
    %8948 = vmatprep.subr.mxu0 0.0
    %8949 = vmatpush1.msra.mxu0 0.0
    %8950 = vmatprep.subr.mxu0 0.0
    %8951 = vmatpush1.msra.mxu0 0.0
    %8952 = vmatprep.subr.mxu0 0.0
    %8953 = vmatpush1.msra.mxu0 0.0
    %8954 = vmatprep.subr.mxu0 0.0
    %8955 = vmatpush1.msra.mxu0 0.0
    %8956 = vmatprep.subr.mxu0 0.0
    %8957 = vmatpush1.msra.mxu0 0.0
    %8958 = vmatprep.subr.mxu0 0.0
    %8959 = vmatpush1.msra.mxu0 0.0
    %8960 = vmatprep.subr.mxu0 0.0
    %8961 = vmatpush1.msra.mxu0 0.0
    %8962 = vmatprep.subr.mxu0 0.0
    %8963 = vmatpush1.msra.mxu0 0.0
    %8964 = vmatprep.subr.mxu0 0.0
    %8965 = vmatpush1.msra.mxu0 0.0
    %8966 = vmatprep.subr.mxu0 0.0
    %8967 = vmatpush1.msra.mxu0 0.0
    %8968 = vmatprep.subr.mxu0 0.0
    %8969 = vmatpush1.msra.mxu0 0.0
    %8970 = vmatprep.subr.mxu0 0.0
    %8971 = vmatpush1.msra.mxu0 0.0
    %8972 = vmatprep.subr.mxu0 0.0
    %8973 = vmatpush1.msra.mxu0 0.0
    %8974 = vmatprep.subr.mxu0 0.0
    %8975 = vmatpush1.msra.mxu0 0.0
    %8976 = vmatprep.subr.mxu0 %v8861
    %8977 = vmatpush1.msra.mxu0 %v8860
    %8978 = vmatprep.subr.mxu0 0.0
    %8979 = vmatpush2.msra.mxu0 0.0
    %8980 = vmatprep.subr.mxu0 0.0
    %8981 = vmatpush2.msra.mxu0 0.0
    %8982 = vmatprep.subr.mxu0 0.0
    %8983 = vmatpush2.msra.mxu0 0.0
    %8984 = vmatprep.subr.mxu0 0.0
    %8985 = vmatpush2.msra.mxu0 0.0
    %8986 = vmatprep.subr.mxu0 0.0
    %8987 = vmatpush2.msra.mxu0 0.0
    %8988 = vmatprep.subr.mxu0 0.0
    %8989 = vmatpush2.msra.mxu0 0.0
    %8990 = vmatprep.subr.mxu0 0.0
    %8991 = vmatpush2.msra.mxu0 0.0
    %8992 = vmatprep.subr.mxu0 0.0
    %8993 = vmatpush2.msra.mxu0 0.0
    %8994 = vmatprep.subr.mxu0 0.0
    %8995 = vmatpush2.msra.mxu0 0.0
    %8996 = vmatprep.subr.mxu0 0.0
    %8997 = vmatpush2.msra.mxu0 0.0
    %8998 = vmatprep.subr.mxu0 0.0
    %8999 = vmatpush2.msra.mxu0 0.0
    %9000 = vmatprep.subr.mxu0 0.0
    %9001 = vmatpush2.msra.mxu0 0.0
    %9002 = vmatprep.subr.mxu0 0.0
    %9003 = vmatpush2.msra.mxu0 0.0
    %9004 = vmatprep.subr.mxu0 0.0
    %9005 = vmatpush2.msra.mxu0 0.0
    %9006 = vmatprep.subr.mxu0 0.0
    %9007 = vmatpush2.msra.mxu0 0.0
    %9008 = vmatprep.subr.mxu0 0.0
    %9009 = vmatpush2.msra.mxu0 0.0
    %9010 = vmatprep.mubr.f32.mxu0 0.0
    %9011 = vmatmul.mubr.f32.gmra.mxu0 %v8873
    %v9012 = vpop.f32.mrf.mxu0
    %v9013 = vadd.f32 0.0, %v9012
    %v9014 = vpop.f32.mrf.mxu0
    %v9015 = vadd.f32 0.0, %v9014
    %9016 = vdwg.mxu0
    %v9017 = vadd.f32 %v8854, %v8942
    %v9018 = vadd.f32 %v8855, %v8944
    %v9019 = vadd.f32 %v8856, %v9013
    %v9020 = vadd.f32 %v8857, %v9015
    %v9021 = vld [vmem:[%s5 + $0x80] sm:$0xff]
    %v9022 = vld [vmem:[%s5 + $0x88] sm:$0xff]
    %v9023 = vld [vmem:[%s5 + $0x90] sm:$0xff]
    %v9024 = vld [vmem:[%s5 + $0x98] sm:$0xff]
    %v9027 = vlaneseq
    %v9028 = vshrl.u32 %v9027, 7
    %v9029 = vsub.s32 0, %v9028
    %v9030 = vrot.slane %v8349, %v9029
    %v9031 = vlaneseq
    %v9032 = vshrl.u32 %v9031, 7
    %v9033 = vsub.s32 0, %v9032
    %v9034 = vrot.slane %v8365, %v9033
    %v9035 = vsel %vm6697, %v9034, %v9030
    %v9036 = vsel %vm2778, %v9035, 0
    %9038 = vmatprep.subr.mxu0 0.0
    %9039 = vmatpush1.msra.mxu0 0.0
    %9040 = vmatprep.subr.mxu0 0.0
    %9041 = vmatpush1.msra.mxu0 0.0
    %9042 = vmatprep.subr.mxu0 0.0
    %9043 = vmatpush1.msra.mxu0 0.0
    %9044 = vmatprep.subr.mxu0 0.0
    %9045 = vmatpush1.msra.mxu0 0.0
    %9046 = vmatprep.subr.mxu0 0.0
    %9047 = vmatpush1.msra.mxu0 0.0
    %9048 = vmatprep.subr.mxu0 0.0
    %9049 = vmatpush1.msra.mxu0 0.0
    %9050 = vmatprep.subr.mxu0 0.0
    %9051 = vmatpush1.msra.mxu0 0.0
    %9052 = vmatprep.subr.mxu0 0.0
    %9053 = vmatpush1.msra.mxu0 0.0
    %9054 = vmatprep.subr.mxu0 0.0
    %9055 = vmatpush1.msra.mxu0 0.0
    %9056 = vmatprep.subr.mxu0 0.0
    %9057 = vmatpush1.msra.mxu0 0.0
    %9058 = vmatprep.subr.mxu0 0.0
    %9059 = vmatpush1.msra.mxu0 0.0
    %9060 = vmatprep.subr.mxu0 0.0
    %9061 = vmatpush1.msra.mxu0 0.0
    %9062 = vmatprep.subr.mxu0 0.0
    %9063 = vmatpush1.msra.mxu0 0.0
    %9064 = vmatprep.subr.mxu0 0.0
    %9065 = vmatpush1.msra.mxu0 0.0
    %9066 = vmatprep.subr.mxu0 0.0
    %9067 = vmatpush1.msra.mxu0 0.0
    %9068 = vmatprep.subr.mxu0 %v9022
    %9069 = vmatpush1.msra.mxu0 %v9021
    %9070 = vmatprep.subr.mxu0 0.0
    %9071 = vmatpush2.msra.mxu0 0.0
    %9072 = vmatprep.subr.mxu0 0.0
    %9073 = vmatpush2.msra.mxu0 0.0
    %9074 = vmatprep.subr.mxu0 0.0
    %9075 = vmatpush2.msra.mxu0 0.0
    %9076 = vmatprep.subr.mxu0 0.0
    %9077 = vmatpush2.msra.mxu0 0.0
    %9078 = vmatprep.subr.mxu0 0.0
    %9079 = vmatpush2.msra.mxu0 0.0
    %9080 = vmatprep.subr.mxu0 0.0
    %9081 = vmatpush2.msra.mxu0 0.0
    %9082 = vmatprep.subr.mxu0 0.0
    %9083 = vmatpush2.msra.mxu0 0.0
    %9084 = vmatprep.subr.mxu0 0.0
    %9085 = vmatpush2.msra.mxu0 0.0
    %9086 = vmatprep.subr.mxu0 0.0
    %9087 = vmatpush2.msra.mxu0 0.0
    %9088 = vmatprep.subr.mxu0 0.0
    %9089 = vmatpush2.msra.mxu0 0.0
    %9090 = vmatprep.subr.mxu0 0.0
    %9091 = vmatpush2.msra.mxu0 0.0
    %9092 = vmatprep.subr.mxu0 0.0
    %9093 = vmatpush2.msra.mxu0 0.0
    %9094 = vmatprep.subr.mxu0 0.0
    %9095 = vmatpush2.msra.mxu0 0.0
    %9096 = vmatprep.subr.mxu0 0.0
    %9097 = vmatpush2.msra.mxu0 0.0
    %9098 = vmatprep.subr.mxu0 0.0
    %9099 = vmatpush2.msra.mxu0 0.0
    %9100 = vmatprep.subr.mxu0 0.0
    %9101 = vmatpush2.msra.mxu0 0.0
    %9102 = vmatprep.mubr.f32.mxu0 0.0
    %9103 = vmatmul.mubr.f32.gmra.mxu0 %v9036
    %v9104 = vpop.f32.mrf.mxu0
    %v9105 = vadd.f32 0.0, %v9104
    %v9106 = vpop.f32.mrf.mxu0
    %v9107 = vadd.f32 0.0, %v9106
    %9108 = vdwg.mxu0
    %9109 = vmatprep.subr.mxu0 0.0
    %9110 = vmatpush1.msra.mxu0 0.0
    %9111 = vmatprep.subr.mxu0 0.0
    %9112 = vmatpush1.msra.mxu0 0.0
    %9113 = vmatprep.subr.mxu0 0.0
    %9114 = vmatpush1.msra.mxu0 0.0
    %9115 = vmatprep.subr.mxu0 0.0
    %9116 = vmatpush1.msra.mxu0 0.0
    %9117 = vmatprep.subr.mxu0 0.0
    %9118 = vmatpush1.msra.mxu0 0.0
    %9119 = vmatprep.subr.mxu0 0.0
    %9120 = vmatpush1.msra.mxu0 0.0
    %9121 = vmatprep.subr.mxu0 0.0
    %9122 = vmatpush1.msra.mxu0 0.0
    %9123 = vmatprep.subr.mxu0 0.0
    %9124 = vmatpush1.msra.mxu0 0.0
    %9125 = vmatprep.subr.mxu0 0.0
    %9126 = vmatpush1.msra.mxu0 0.0
    %9127 = vmatprep.subr.mxu0 0.0
    %9128 = vmatpush1.msra.mxu0 0.0
    %9129 = vmatprep.subr.mxu0 0.0
    %9130 = vmatpush1.msra.mxu0 0.0
    %9131 = vmatprep.subr.mxu0 0.0
    %9132 = vmatpush1.msra.mxu0 0.0
    %9133 = vmatprep.subr.mxu0 0.0
    %9134 = vmatpush1.msra.mxu0 0.0
    %9135 = vmatprep.subr.mxu0 0.0
    %9136 = vmatpush1.msra.mxu0 0.0
    %9137 = vmatprep.subr.mxu0 0.0
    %9138 = vmatpush1.msra.mxu0 0.0
    %9139 = vmatprep.subr.mxu0 %v9024
    %9140 = vmatpush1.msra.mxu0 %v9023
    %9141 = vmatprep.subr.mxu0 0.0
    %9142 = vmatpush2.msra.mxu0 0.0
    %9143 = vmatprep.subr.mxu0 0.0
    %9144 = vmatpush2.msra.mxu0 0.0
    %9145 = vmatprep.subr.mxu0 0.0
    %9146 = vmatpush2.msra.mxu0 0.0
    %9147 = vmatprep.subr.mxu0 0.0
    %9148 = vmatpush2.msra.mxu0 0.0
    %9149 = vmatprep.subr.mxu0 0.0
    %9150 = vmatpush2.msra.mxu0 0.0
    %9151 = vmatprep.subr.mxu0 0.0
    %9152 = vmatpush2.msra.mxu0 0.0
    %9153 = vmatprep.subr.mxu0 0.0
    %9154 = vmatpush2.msra.mxu0 0.0
    %9155 = vmatprep.subr.mxu0 0.0
    %9156 = vmatpush2.msra.mxu0 0.0
    %9157 = vmatprep.subr.mxu0 0.0
    %9158 = vmatpush2.msra.mxu0 0.0
    %9159 = vmatprep.subr.mxu0 0.0
    %9160 = vmatpush2.msra.mxu0 0.0
    %9161 = vmatprep.subr.mxu0 0.0
    %9162 = vmatpush2.msra.mxu0 0.0
    %9163 = vmatprep.subr.mxu0 0.0
    %9164 = vmatpush2.msra.mxu0 0.0
    %9165 = vmatprep.subr.mxu0 0.0
    %9166 = vmatpush2.msra.mxu0 0.0
    %9167 = vmatprep.subr.mxu0 0.0
    %9168 = vmatpush2.msra.mxu0 0.0
    %9169 = vmatprep.subr.mxu0 0.0
    %9170 = vmatpush2.msra.mxu0 0.0
    %9171 = vmatprep.subr.mxu0 0.0
    %9172 = vmatpush2.msra.mxu0 0.0
    %9173 = vmatprep.mubr.f32.mxu0 0.0
    %9174 = vmatmul.mubr.f32.gmra.mxu0 %v9036
    %v9175 = vpop.f32.mrf.mxu0
    %v9176 = vadd.f32 0.0, %v9175
    %v9177 = vpop.f32.mrf.mxu0
    %v9178 = vadd.f32 0.0, %v9177
    %9179 = vdwg.mxu0
    %v9180 = vadd.f32 %v9017, %v9105
    %v9181 = vadd.f32 %v9018, %v9107
    %v9182 = vadd.f32 %v9019, %v9176
    %v9183 = vadd.f32 %v9020, %v9178
    %v9184 = vld [vmem:[%s5 + $0xa0] sm:$0xff]
    %v9185 = vld [vmem:[%s5 + $0xa8] sm:$0xff]
    %v9186 = vld [vmem:[%s5 + $0xb0] sm:$0xff]
    %v9187 = vld [vmem:[%s5 + $0xb8] sm:$0xff]
    %v9190 = vlaneseq
    %v9191 = vshrl.u32 %v9190, 7
    %v9192 = vsub.s32 0, %v9191
    %v9193 = vrot.slane %v8350, %v9192
    %v9194 = vlaneseq
    %v9195 = vshrl.u32 %v9194, 7
    %v9196 = vsub.s32 0, %v9195
    %v9197 = vrot.slane %v8366, %v9196
    %v9198 = vsel %vm6697, %v9197, %v9193
    %v9199 = vsel %vm2778, %v9198, 0
    %9201 = vmatprep.subr.mxu0 0.0
    %9202 = vmatpush1.msra.mxu0 0.0
    %9203 = vmatprep.subr.mxu0 0.0
    %9204 = vmatpush1.msra.mxu0 0.0
    %9205 = vmatprep.subr.mxu0 0.0
    %9206 = vmatpush1.msra.mxu0 0.0
    %9207 = vmatprep.subr.mxu0 0.0
    %9208 = vmatpush1.msra.mxu0 0.0
    %9209 = vmatprep.subr.mxu0 0.0
    %9210 = vmatpush1.msra.mxu0 0.0
    %9211 = vmatprep.subr.mxu0 0.0
    %9212 = vmatpush1.msra.mxu0 0.0
    %9213 = vmatprep.subr.mxu0 0.0
    %9214 = vmatpush1.msra.mxu0 0.0
    %9215 = vmatprep.subr.mxu0 0.0
    %9216 = vmatpush1.msra.mxu0 0.0
    %9217 = vmatprep.subr.mxu0 0.0
    %9218 = vmatpush1.msra.mxu0 0.0
    %9219 = vmatprep.subr.mxu0 0.0
    %9220 = vmatpush1.msra.mxu0 0.0
    %9221 = vmatprep.subr.mxu0 0.0
    %9222 = vmatpush1.msra.mxu0 0.0
    %9223 = vmatprep.subr.mxu0 0.0
    %9224 = vmatpush1.msra.mxu0 0.0
    %9225 = vmatprep.subr.mxu0 0.0
    %9226 = vmatpush1.msra.mxu0 0.0
    %9227 = vmatprep.subr.mxu0 0.0
    %9228 = vmatpush1.msra.mxu0 0.0
    %9229 = vmatprep.subr.mxu0 0.0
    %9230 = vmatpush1.msra.mxu0 0.0
    %9231 = vmatprep.subr.mxu0 %v9185
    %9232 = vmatpush1.msra.mxu0 %v9184
    %9233 = vmatprep.subr.mxu0 0.0
    %9234 = vmatpush2.msra.mxu0 0.0
    %9235 = vmatprep.subr.mxu0 0.0
    %9236 = vmatpush2.msra.mxu0 0.0
    %9237 = vmatprep.subr.mxu0 0.0
    %9238 = vmatpush2.msra.mxu0 0.0
    %9239 = vmatprep.subr.mxu0 0.0
    %9240 = vmatpush2.msra.mxu0 0.0
    %9241 = vmatprep.subr.mxu0 0.0
    %9242 = vmatpush2.msra.mxu0 0.0
    %9243 = vmatprep.subr.mxu0 0.0
    %9244 = vmatpush2.msra.mxu0 0.0
    %9245 = vmatprep.subr.mxu0 0.0
    %9246 = vmatpush2.msra.mxu0 0.0
    %9247 = vmatprep.subr.mxu0 0.0
    %9248 = vmatpush2.msra.mxu0 0.0
    %9249 = vmatprep.subr.mxu0 0.0
    %9250 = vmatpush2.msra.mxu0 0.0
    %9251 = vmatprep.subr.mxu0 0.0
    %9252 = vmatpush2.msra.mxu0 0.0
    %9253 = vmatprep.subr.mxu0 0.0
    %9254 = vmatpush2.msra.mxu0 0.0
    %9255 = vmatprep.subr.mxu0 0.0
    %9256 = vmatpush2.msra.mxu0 0.0
    %9257 = vmatprep.subr.mxu0 0.0
    %9258 = vmatpush2.msra.mxu0 0.0
    %9259 = vmatprep.subr.mxu0 0.0
    %9260 = vmatpush2.msra.mxu0 0.0
    %9261 = vmatprep.subr.mxu0 0.0
    %9262 = vmatpush2.msra.mxu0 0.0
    %9263 = vmatprep.subr.mxu0 0.0
    %9264 = vmatpush2.msra.mxu0 0.0
    %9265 = vmatprep.mubr.f32.mxu0 0.0
    %9266 = vmatmul.mubr.f32.gmra.mxu0 %v9199
    %v9267 = vpop.f32.mrf.mxu0
    %v9268 = vadd.f32 0.0, %v9267
    %v9269 = vpop.f32.mrf.mxu0
    %v9270 = vadd.f32 0.0, %v9269
    %9271 = vdwg.mxu0
    %9272 = vmatprep.subr.mxu0 0.0
    %9273 = vmatpush1.msra.mxu0 0.0
    %9274 = vmatprep.subr.mxu0 0.0
    %9275 = vmatpush1.msra.mxu0 0.0
    %9276 = vmatprep.subr.mxu0 0.0
    %9277 = vmatpush1.msra.mxu0 0.0
    %9278 = vmatprep.subr.mxu0 0.0
    %9279 = vmatpush1.msra.mxu0 0.0
    %9280 = vmatprep.subr.mxu0 0.0
    %9281 = vmatpush1.msra.mxu0 0.0
    %9282 = vmatprep.subr.mxu0 0.0
    %9283 = vmatpush1.msra.mxu0 0.0
    %9284 = vmatprep.subr.mxu0 0.0
    %9285 = vmatpush1.msra.mxu0 0.0
    %9286 = vmatprep.subr.mxu0 0.0
    %9287 = vmatpush1.msra.mxu0 0.0
    %9288 = vmatprep.subr.mxu0 0.0
    %9289 = vmatpush1.msra.mxu0 0.0
    %9290 = vmatprep.subr.mxu0 0.0
    %9291 = vmatpush1.msra.mxu0 0.0
    %9292 = vmatprep.subr.mxu0 0.0
    %9293 = vmatpush1.msra.mxu0 0.0
    %9294 = vmatprep.subr.mxu0 0.0
    %9295 = vmatpush1.msra.mxu0 0.0
    %9296 = vmatprep.subr.mxu0 0.0
    %9297 = vmatpush1.msra.mxu0 0.0
    %9298 = vmatprep.subr.mxu0 0.0
    %9299 = vmatpush1.msra.mxu0 0.0
    %9300 = vmatprep.subr.mxu0 0.0
    %9301 = vmatpush1.msra.mxu0 0.0
    %9302 = vmatprep.subr.mxu0 %v9187
    %9303 = vmatpush1.msra.mxu0 %v9186
    %9304 = vmatprep.subr.mxu0 0.0
    %9305 = vmatpush2.msra.mxu0 0.0
    %9306 = vmatprep.subr.mxu0 0.0
    %9307 = vmatpush2.msra.mxu0 0.0
    %9308 = vmatprep.subr.mxu0 0.0
    %9309 = vmatpush2.msra.mxu0 0.0
    %9310 = vmatprep.subr.mxu0 0.0
    %9311 = vmatpush2.msra.mxu0 0.0
    %9312 = vmatprep.subr.mxu0 0.0
    %9313 = vmatpush2.msra.mxu0 0.0
    %9314 = vmatprep.subr.mxu0 0.0
    %9315 = vmatpush2.msra.mxu0 0.0
    %9316 = vmatprep.subr.mxu0 0.0
    %9317 = vmatpush2.msra.mxu0 0.0
    %9318 = vmatprep.subr.mxu0 0.0
    %9319 = vmatpush2.msra.mxu0 0.0
    %9320 = vmatprep.subr.mxu0 0.0
    %9321 = vmatpush2.msra.mxu0 0.0
    %9322 = vmatprep.subr.mxu0 0.0
    %9323 = vmatpush2.msra.mxu0 0.0
    %9324 = vmatprep.subr.mxu0 0.0
    %9325 = vmatpush2.msra.mxu0 0.0
    %9326 = vmatprep.subr.mxu0 0.0
    %9327 = vmatpush2.msra.mxu0 0.0
    %9328 = vmatprep.subr.mxu0 0.0
    %9329 = vmatpush2.msra.mxu0 0.0
    %9330 = vmatprep.subr.mxu0 0.0
    %9331 = vmatpush2.msra.mxu0 0.0
    %9332 = vmatprep.subr.mxu0 0.0
    %9333 = vmatpush2.msra.mxu0 0.0
    %9334 = vmatprep.subr.mxu0 0.0
    %9335 = vmatpush2.msra.mxu0 0.0
    %9336 = vmatprep.mubr.f32.mxu0 0.0
    %9337 = vmatmul.mubr.f32.gmra.mxu0 %v9199
    %v9338 = vpop.f32.mrf.mxu0
    %v9339 = vadd.f32 0.0, %v9338
    %v9340 = vpop.f32.mrf.mxu0
    %v9341 = vadd.f32 0.0, %v9340
    %9342 = vdwg.mxu0
    %v9343 = vadd.f32 %v9180, %v9268
    %v9344 = vadd.f32 %v9181, %v9270
    %v9345 = vadd.f32 %v9182, %v9339
    %v9346 = vadd.f32 %v9183, %v9341
    %v9347 = vld [vmem:[%s5 + $0xc0] sm:$0xff]
    %v9348 = vld [vmem:[%s5 + $0xc8] sm:$0xff]
    %v9349 = vld [vmem:[%s5 + $0xd0] sm:$0xff]
    %v9350 = vld [vmem:[%s5 + $0xd8] sm:$0xff]
    %v9353 = vlaneseq
    %v9354 = vshrl.u32 %v9353, 7
    %v9355 = vsub.s32 0, %v9354
    %v9356 = vrot.slane %v8351, %v9355
    %v9357 = vlaneseq
    %v9358 = vshrl.u32 %v9357, 7
    %v9359 = vsub.s32 0, %v9358
    %v9360 = vrot.slane %v8367, %v9359
    %v9361 = vsel %vm6697, %v9360, %v9356
    %v9362 = vsel %vm2778, %v9361, 0
    %9364 = vmatprep.subr.mxu0 0.0
    %9365 = vmatpush1.msra.mxu0 0.0
    %9366 = vmatprep.subr.mxu0 0.0
    %9367 = vmatpush1.msra.mxu0 0.0
    %9368 = vmatprep.subr.mxu0 0.0
    %9369 = vmatpush1.msra.mxu0 0.0
    %9370 = vmatprep.subr.mxu0 0.0
    %9371 = vmatpush1.msra.mxu0 0.0
    %9372 = vmatprep.subr.mxu0 0.0
    %9373 = vmatpush1.msra.mxu0 0.0
    %9374 = vmatprep.subr.mxu0 0.0
    %9375 = vmatpush1.msra.mxu0 0.0
    %9376 = vmatprep.subr.mxu0 0.0
    %9377 = vmatpush1.msra.mxu0 0.0
    %9378 = vmatprep.subr.mxu0 0.0
    %9379 = vmatpush1.msra.mxu0 0.0
    %9380 = vmatprep.subr.mxu0 0.0
    %9381 = vmatpush1.msra.mxu0 0.0
    %9382 = vmatprep.subr.mxu0 0.0
    %9383 = vmatpush1.msra.mxu0 0.0
    %9384 = vmatprep.subr.mxu0 0.0
    %9385 = vmatpush1.msra.mxu0 0.0
    %9386 = vmatprep.subr.mxu0 0.0
    %9387 = vmatpush1.msra.mxu0 0.0
    %9388 = vmatprep.subr.mxu0 0.0
    %9389 = vmatpush1.msra.mxu0 0.0
    %9390 = vmatprep.subr.mxu0 0.0
    %9391 = vmatpush1.msra.mxu0 0.0
    %9392 = vmatprep.subr.mxu0 0.0
    %9393 = vmatpush1.msra.mxu0 0.0
    %9394 = vmatprep.subr.mxu0 %v9348
    %9395 = vmatpush1.msra.mxu0 %v9347
    %9396 = vmatprep.subr.mxu0 0.0
    %9397 = vmatpush2.msra.mxu0 0.0
    %9398 = vmatprep.subr.mxu0 0.0
    %9399 = vmatpush2.msra.mxu0 0.0
    %9400 = vmatprep.subr.mxu0 0.0
    %9401 = vmatpush2.msra.mxu0 0.0
    %9402 = vmatprep.subr.mxu0 0.0
    %9403 = vmatpush2.msra.mxu0 0.0
    %9404 = vmatprep.subr.mxu0 0.0
    %9405 = vmatpush2.msra.mxu0 0.0
    %9406 = vmatprep.subr.mxu0 0.0
    %9407 = vmatpush2.msra.mxu0 0.0
    %9408 = vmatprep.subr.mxu0 0.0
    %9409 = vmatpush2.msra.mxu0 0.0
    %9410 = vmatprep.subr.mxu0 0.0
    %9411 = vmatpush2.msra.mxu0 0.0
    %9412 = vmatprep.subr.mxu0 0.0
    %9413 = vmatpush2.msra.mxu0 0.0
    %9414 = vmatprep.subr.mxu0 0.0
    %9415 = vmatpush2.msra.mxu0 0.0
    %9416 = vmatprep.subr.mxu0 0.0
    %9417 = vmatpush2.msra.mxu0 0.0
    %9418 = vmatprep.subr.mxu0 0.0
    %9419 = vmatpush2.msra.mxu0 0.0
    %9420 = vmatprep.subr.mxu0 0.0
    %9421 = vmatpush2.msra.mxu0 0.0
    %9422 = vmatprep.subr.mxu0 0.0
    %9423 = vmatpush2.msra.mxu0 0.0
    %9424 = vmatprep.subr.mxu0 0.0
    %9425 = vmatpush2.msra.mxu0 0.0
    %9426 = vmatprep.subr.mxu0 0.0
    %9427 = vmatpush2.msra.mxu0 0.0
    %9428 = vmatprep.mubr.f32.mxu0 0.0
    %9429 = vmatmul.mubr.f32.gmra.mxu0 %v9362
    %v9430 = vpop.f32.mrf.mxu0
    %v9431 = vadd.f32 0.0, %v9430
    %v9432 = vpop.f32.mrf.mxu0
    %v9433 = vadd.f32 0.0, %v9432
    %9434 = vdwg.mxu0
    %9435 = vmatprep.subr.mxu0 0.0
    %9436 = vmatpush1.msra.mxu0 0.0
    %9437 = vmatprep.subr.mxu0 0.0
    %9438 = vmatpush1.msra.mxu0 0.0
    %9439 = vmatprep.subr.mxu0 0.0
    %9440 = vmatpush1.msra.mxu0 0.0
    %9441 = vmatprep.subr.mxu0 0.0
    %9442 = vmatpush1.msra.mxu0 0.0
    %9443 = vmatprep.subr.mxu0 0.0
    %9444 = vmatpush1.msra.mxu0 0.0
    %9445 = vmatprep.subr.mxu0 0.0
    %9446 = vmatpush1.msra.mxu0 0.0
    %9447 = vmatprep.subr.mxu0 0.0
    %9448 = vmatpush1.msra.mxu0 0.0
    %9449 = vmatprep.subr.mxu0 0.0
    %9450 = vmatpush1.msra.mxu0 0.0
    %9451 = vmatprep.subr.mxu0 0.0
    %9452 = vmatpush1.msra.mxu0 0.0
    %9453 = vmatprep.subr.mxu0 0.0
    %9454 = vmatpush1.msra.mxu0 0.0
    %9455 = vmatprep.subr.mxu0 0.0
    %9456 = vmatpush1.msra.mxu0 0.0
    %9457 = vmatprep.subr.mxu0 0.0
    %9458 = vmatpush1.msra.mxu0 0.0
    %9459 = vmatprep.subr.mxu0 0.0
    %9460 = vmatpush1.msra.mxu0 0.0
    %9461 = vmatprep.subr.mxu0 0.0
    %9462 = vmatpush1.msra.mxu0 0.0
    %9463 = vmatprep.subr.mxu0 0.0
    %9464 = vmatpush1.msra.mxu0 0.0
    %9465 = vmatprep.subr.mxu0 %v9350
    %9466 = vmatpush1.msra.mxu0 %v9349
    %9467 = vmatprep.subr.mxu0 0.0
    %9468 = vmatpush2.msra.mxu0 0.0
    %9469 = vmatprep.subr.mxu0 0.0
    %9470 = vmatpush2.msra.mxu0 0.0
    %9471 = vmatprep.subr.mxu0 0.0
    %9472 = vmatpush2.msra.mxu0 0.0
    %9473 = vmatprep.subr.mxu0 0.0
    %9474 = vmatpush2.msra.mxu0 0.0
    %9475 = vmatprep.subr.mxu0 0.0
    %9476 = vmatpush2.msra.mxu0 0.0
    %9477 = vmatprep.subr.mxu0 0.0
    %9478 = vmatpush2.msra.mxu0 0.0
    %9479 = vmatprep.subr.mxu0 0.0
    %9480 = vmatpush2.msra.mxu0 0.0
    %9481 = vmatprep.subr.mxu0 0.0
    %9482 = vmatpush2.msra.mxu0 0.0
    %9483 = vmatprep.subr.mxu0 0.0
    %9484 = vmatpush2.msra.mxu0 0.0
    %9485 = vmatprep.subr.mxu0 0.0
    %9486 = vmatpush2.msra.mxu0 0.0
    %9487 = vmatprep.subr.mxu0 0.0
    %9488 = vmatpush2.msra.mxu0 0.0
    %9489 = vmatprep.subr.mxu0 0.0
    %9490 = vmatpush2.msra.mxu0 0.0
    %9491 = vmatprep.subr.mxu0 0.0
    %9492 = vmatpush2.msra.mxu0 0.0
    %9493 = vmatprep.subr.mxu0 0.0
    %9494 = vmatpush2.msra.mxu0 0.0
    %9495 = vmatprep.subr.mxu0 0.0
    %9496 = vmatpush2.msra.mxu0 0.0
    %9497 = vmatprep.subr.mxu0 0.0
    %9498 = vmatpush2.msra.mxu0 0.0
    %9499 = vmatprep.mubr.f32.mxu0 0.0
    %9500 = vmatmul.mubr.f32.gmra.mxu0 %v9362
    %v9501 = vpop.f32.mrf.mxu0
    %v9502 = vadd.f32 0.0, %v9501
    %v9503 = vpop.f32.mrf.mxu0
    %v9504 = vadd.f32 0.0, %v9503
    %9505 = vdwg.mxu0
    %v9506 = vadd.f32 %v9343, %v9431
    %v9507 = vadd.f32 %v9344, %v9433
    %v9508 = vadd.f32 %v9345, %v9502
    %v9509 = vadd.f32 %v9346, %v9504
    %v9510 = vld [vmem:[%s5 + $0xe0] sm:$0xff]
    %v9511 = vld [vmem:[%s5 + $0xe8] sm:$0xff]
    %v9512 = vld [vmem:[%s5 + $0xf0] sm:$0xff]
    %v9513 = vld [vmem:[%s5 + $0xf8] sm:$0xff]
    %v9516 = vlaneseq
    %v9517 = vshrl.u32 %v9516, 7
    %v9518 = vsub.s32 0, %v9517
    %v9519 = vrot.slane %v8352, %v9518
    %v9520 = vlaneseq
    %v9521 = vshrl.u32 %v9520, 7
    %v9522 = vsub.s32 0, %v9521
    %v9523 = vrot.slane %v8368, %v9522
    %v9524 = vsel %vm6697, %v9523, %v9519
    %v9525 = vsel %vm2778, %v9524, 0
    %9527 = vmatprep.subr.mxu0 0.0
    %9528 = vmatpush1.msra.mxu0 0.0
    %9529 = vmatprep.subr.mxu0 0.0
    %9530 = vmatpush1.msra.mxu0 0.0
    %9531 = vmatprep.subr.mxu0 0.0
    %9532 = vmatpush1.msra.mxu0 0.0
    %9533 = vmatprep.subr.mxu0 0.0
    %9534 = vmatpush1.msra.mxu0 0.0
    %9535 = vmatprep.subr.mxu0 0.0
    %9536 = vmatpush1.msra.mxu0 0.0
    %9537 = vmatprep.subr.mxu0 0.0
    %9538 = vmatpush1.msra.mxu0 0.0
    %9539 = vmatprep.subr.mxu0 0.0
    %9540 = vmatpush1.msra.mxu0 0.0
    %9541 = vmatprep.subr.mxu0 0.0
    %9542 = vmatpush1.msra.mxu0 0.0
    %9543 = vmatprep.subr.mxu0 0.0
    %9544 = vmatpush1.msra.mxu0 0.0
    %9545 = vmatprep.subr.mxu0 0.0
    %9546 = vmatpush1.msra.mxu0 0.0
    %9547 = vmatprep.subr.mxu0 0.0
    %9548 = vmatpush1.msra.mxu0 0.0
    %9549 = vmatprep.subr.mxu0 0.0
    %9550 = vmatpush1.msra.mxu0 0.0
    %9551 = vmatprep.subr.mxu0 0.0
    %9552 = vmatpush1.msra.mxu0 0.0
    %9553 = vmatprep.subr.mxu0 0.0
    %9554 = vmatpush1.msra.mxu0 0.0
    %9555 = vmatprep.subr.mxu0 0.0
    %9556 = vmatpush1.msra.mxu0 0.0
    %9557 = vmatprep.subr.mxu0 %v9511
    %9558 = vmatpush1.msra.mxu0 %v9510
    %9559 = vmatprep.subr.mxu0 0.0
    %9560 = vmatpush2.msra.mxu0 0.0
    %9561 = vmatprep.subr.mxu0 0.0
    %9562 = vmatpush2.msra.mxu0 0.0
    %9563 = vmatprep.subr.mxu0 0.0
    %9564 = vmatpush2.msra.mxu0 0.0
    %9565 = vmatprep.subr.mxu0 0.0
    %9566 = vmatpush2.msra.mxu0 0.0
    %9567 = vmatprep.subr.mxu0 0.0
    %9568 = vmatpush2.msra.mxu0 0.0
    %9569 = vmatprep.subr.mxu0 0.0
    %9570 = vmatpush2.msra.mxu0 0.0
    %9571 = vmatprep.subr.mxu0 0.0
    %9572 = vmatpush2.msra.mxu0 0.0
    %9573 = vmatprep.subr.mxu0 0.0
    %9574 = vmatpush2.msra.mxu0 0.0
    %9575 = vmatprep.subr.mxu0 0.0
    %9576 = vmatpush2.msra.mxu0 0.0
    %9577 = vmatprep.subr.mxu0 0.0
    %9578 = vmatpush2.msra.mxu0 0.0
    %9579 = vmatprep.subr.mxu0 0.0
    %9580 = vmatpush2.msra.mxu0 0.0
    %9581 = vmatprep.subr.mxu0 0.0
    %9582 = vmatpush2.msra.mxu0 0.0
    %9583 = vmatprep.subr.mxu0 0.0
    %9584 = vmatpush2.msra.mxu0 0.0
    %9585 = vmatprep.subr.mxu0 0.0
    %9586 = vmatpush2.msra.mxu0 0.0
    %9587 = vmatprep.subr.mxu0 0.0
    %9588 = vmatpush2.msra.mxu0 0.0
    %9589 = vmatprep.subr.mxu0 0.0
    %9590 = vmatpush2.msra.mxu0 0.0
    %9591 = vmatprep.mubr.f32.mxu0 0.0
    %9592 = vmatmul.mubr.f32.gmra.mxu0 %v9525
    %v9593 = vpop.f32.mrf.mxu0
    %v9594 = vadd.f32 0.0, %v9593
    %v9595 = vpop.f32.mrf.mxu0
    %v9596 = vadd.f32 0.0, %v9595
    %9597 = vdwg.mxu0
    %9598 = vmatprep.subr.mxu0 0.0
    %9599 = vmatpush1.msra.mxu0 0.0
    %9600 = vmatprep.subr.mxu0 0.0
    %9601 = vmatpush1.msra.mxu0 0.0
    %9602 = vmatprep.subr.mxu0 0.0
    %9603 = vmatpush1.msra.mxu0 0.0
    %9604 = vmatprep.subr.mxu0 0.0
    %9605 = vmatpush1.msra.mxu0 0.0
    %9606 = vmatprep.subr.mxu0 0.0
    %9607 = vmatpush1.msra.mxu0 0.0
    %9608 = vmatprep.subr.mxu0 0.0
    %9609 = vmatpush1.msra.mxu0 0.0
    %9610 = vmatprep.subr.mxu0 0.0
    %9611 = vmatpush1.msra.mxu0 0.0
    %9612 = vmatprep.subr.mxu0 0.0
    %9613 = vmatpush1.msra.mxu0 0.0
    %9614 = vmatprep.subr.mxu0 0.0
    %9615 = vmatpush1.msra.mxu0 0.0
    %9616 = vmatprep.subr.mxu0 0.0
    %9617 = vmatpush1.msra.mxu0 0.0
    %9618 = vmatprep.subr.mxu0 0.0
    %9619 = vmatpush1.msra.mxu0 0.0
    %9620 = vmatprep.subr.mxu0 0.0
    %9621 = vmatpush1.msra.mxu0 0.0
    %9622 = vmatprep.subr.mxu0 0.0
    %9623 = vmatpush1.msra.mxu0 0.0
    %9624 = vmatprep.subr.mxu0 0.0
    %9625 = vmatpush1.msra.mxu0 0.0
    %9626 = vmatprep.subr.mxu0 0.0
    %9627 = vmatpush1.msra.mxu0 0.0
    %9628 = vmatprep.subr.mxu0 %v9513
    %9629 = vmatpush1.msra.mxu0 %v9512
    %9630 = vmatprep.subr.mxu0 0.0
    %9631 = vmatpush2.msra.mxu0 0.0
    %9632 = vmatprep.subr.mxu0 0.0
    %9633 = vmatpush2.msra.mxu0 0.0
    %9634 = vmatprep.subr.mxu0 0.0
    %9635 = vmatpush2.msra.mxu0 0.0
    %9636 = vmatprep.subr.mxu0 0.0
    %9637 = vmatpush2.msra.mxu0 0.0
    %9638 = vmatprep.subr.mxu0 0.0
    %9639 = vmatpush2.msra.mxu0 0.0
    %9640 = vmatprep.subr.mxu0 0.0
    %9641 = vmatpush2.msra.mxu0 0.0
    %9642 = vmatprep.subr.mxu0 0.0
    %9643 = vmatpush2.msra.mxu0 0.0
    %9644 = vmatprep.subr.mxu0 0.0
    %9645 = vmatpush2.msra.mxu0 0.0
    %9646 = vmatprep.subr.mxu0 0.0
    %9647 = vmatpush2.msra.mxu0 0.0
    %9648 = vmatprep.subr.mxu0 0.0
    %9649 = vmatpush2.msra.mxu0 0.0
    %9650 = vmatprep.subr.mxu0 0.0
    %9651 = vmatpush2.msra.mxu0 0.0
    %9652 = vmatprep.subr.mxu0 0.0
    %9653 = vmatpush2.msra.mxu0 0.0
    %9654 = vmatprep.subr.mxu0 0.0
    %9655 = vmatpush2.msra.mxu0 0.0
    %9656 = vmatprep.subr.mxu0 0.0
    %9657 = vmatpush2.msra.mxu0 0.0
    %9658 = vmatprep.subr.mxu0 0.0
    %9659 = vmatpush2.msra.mxu0 0.0
    %9660 = vmatprep.subr.mxu0 0.0
    %9661 = vmatpush2.msra.mxu0 0.0
    %9662 = vmatprep.mubr.f32.mxu0 0.0
    %9663 = vmatmul.mubr.f32.gmra.mxu0 %v9525
    %v9664 = vpop.f32.mrf.mxu0
    %v9665 = vadd.f32 0.0, %v9664
    %v9666 = vpop.f32.mrf.mxu0
    %v9667 = vadd.f32 0.0, %v9666
    %9668 = vdwg.mxu0
    %v9669 = vadd.f32 %v9506, %v9594
    %v9670 = vadd.f32 %v9507, %v9596
    %v9671 = vadd.f32 %v9508, %v9665
    %v9672 = vadd.f32 %v9509, %v9667
    %v9673 = vld [vmem:[%s5 + $0x100] sm:$0xff]
    %v9674 = vld [vmem:[%s5 + $0x108] sm:$0xff]
    %v9675 = vld [vmem:[%s5 + $0x110] sm:$0xff]
    %v9676 = vld [vmem:[%s5 + $0x118] sm:$0xff]
    %v9679 = vlaneseq
    %v9680 = vshrl.u32 %v9679, 7
    %v9681 = vsub.s32 0, %v9680
    %v9682 = vrot.slane %v8353, %v9681
    %v9683 = vlaneseq
    %v9684 = vshrl.u32 %v9683, 7
    %v9685 = vsub.s32 0, %v9684
    %v9686 = vrot.slane %v8369, %v9685
    %v9687 = vsel %vm6697, %v9686, %v9682
    %v9688 = vsel %vm2778, %v9687, 0
    %9690 = vmatprep.subr.mxu0 0.0
    %9691 = vmatpush1.msra.mxu0 0.0
    %9692 = vmatprep.subr.mxu0 0.0
    %9693 = vmatpush1.msra.mxu0 0.0
    %9694 = vmatprep.subr.mxu0 0.0
    %9695 = vmatpush1.msra.mxu0 0.0
    %9696 = vmatprep.subr.mxu0 0.0
    %9697 = vmatpush1.msra.mxu0 0.0
    %9698 = vmatprep.subr.mxu0 0.0
    %9699 = vmatpush1.msra.mxu0 0.0
    %9700 = vmatprep.subr.mxu0 0.0
    %9701 = vmatpush1.msra.mxu0 0.0
    %9702 = vmatprep.subr.mxu0 0.0
    %9703 = vmatpush1.msra.mxu0 0.0
    %9704 = vmatprep.subr.mxu0 0.0
    %9705 = vmatpush1.msra.mxu0 0.0
    %9706 = vmatprep.subr.mxu0 0.0
    %9707 = vmatpush1.msra.mxu0 0.0
    %9708 = vmatprep.subr.mxu0 0.0
    %9709 = vmatpush1.msra.mxu0 0.0
    %9710 = vmatprep.subr.mxu0 0.0
    %9711 = vmatpush1.msra.mxu0 0.0
    %9712 = vmatprep.subr.mxu0 0.0
    %9713 = vmatpush1.msra.mxu0 0.0
    %9714 = vmatprep.subr.mxu0 0.0
    %9715 = vmatpush1.msra.mxu0 0.0
    %9716 = vmatprep.subr.mxu0 0.0
    %9717 = vmatpush1.msra.mxu0 0.0
    %9718 = vmatprep.subr.mxu0 0.0
    %9719 = vmatpush1.msra.mxu0 0.0
    %9720 = vmatprep.subr.mxu0 %v9674
    %9721 = vmatpush1.msra.mxu0 %v9673
    %9722 = vmatprep.subr.mxu0 0.0
    %9723 = vmatpush2.msra.mxu0 0.0
    %9724 = vmatprep.subr.mxu0 0.0
    %9725 = vmatpush2.msra.mxu0 0.0
    %9726 = vmatprep.subr.mxu0 0.0
    %9727 = vmatpush2.msra.mxu0 0.0
    %9728 = vmatprep.subr.mxu0 0.0
    %9729 = vmatpush2.msra.mxu0 0.0
    %9730 = vmatprep.subr.mxu0 0.0
    %9731 = vmatpush2.msra.mxu0 0.0
    %9732 = vmatprep.subr.mxu0 0.0
    %9733 = vmatpush2.msra.mxu0 0.0
    %9734 = vmatprep.subr.mxu0 0.0
    %9735 = vmatpush2.msra.mxu0 0.0
    %9736 = vmatprep.subr.mxu0 0.0
    %9737 = vmatpush2.msra.mxu0 0.0
    %9738 = vmatprep.subr.mxu0 0.0
    %9739 = vmatpush2.msra.mxu0 0.0
    %9740 = vmatprep.subr.mxu0 0.0
    %9741 = vmatpush2.msra.mxu0 0.0
    %9742 = vmatprep.subr.mxu0 0.0
    %9743 = vmatpush2.msra.mxu0 0.0
    %9744 = vmatprep.subr.mxu0 0.0
    %9745 = vmatpush2.msra.mxu0 0.0
    %9746 = vmatprep.subr.mxu0 0.0
    %9747 = vmatpush2.msra.mxu0 0.0
    %9748 = vmatprep.subr.mxu0 0.0
    %9749 = vmatpush2.msra.mxu0 0.0
    %9750 = vmatprep.subr.mxu0 0.0
    %9751 = vmatpush2.msra.mxu0 0.0
    %9752 = vmatprep.subr.mxu0 0.0
    %9753 = vmatpush2.msra.mxu0 0.0
    %9754 = vmatprep.mubr.f32.mxu0 0.0
    %9755 = vmatmul.mubr.f32.gmra.mxu0 %v9688
    %v9756 = vpop.f32.mrf.mxu0
    %v9757 = vadd.f32 0.0, %v9756
    %v9758 = vpop.f32.mrf.mxu0
    %v9759 = vadd.f32 0.0, %v9758
    %9760 = vdwg.mxu0
    %9761 = vmatprep.subr.mxu0 0.0
    %9762 = vmatpush1.msra.mxu0 0.0
    %9763 = vmatprep.subr.mxu0 0.0
    %9764 = vmatpush1.msra.mxu0 0.0
    %9765 = vmatprep.subr.mxu0 0.0
    %9766 = vmatpush1.msra.mxu0 0.0
    %9767 = vmatprep.subr.mxu0 0.0
    %9768 = vmatpush1.msra.mxu0 0.0
    %9769 = vmatprep.subr.mxu0 0.0
    %9770 = vmatpush1.msra.mxu0 0.0
    %9771 = vmatprep.subr.mxu0 0.0
    %9772 = vmatpush1.msra.mxu0 0.0
    %9773 = vmatprep.subr.mxu0 0.0
    %9774 = vmatpush1.msra.mxu0 0.0
    %9775 = vmatprep.subr.mxu0 0.0
    %9776 = vmatpush1.msra.mxu0 0.0
    %9777 = vmatprep.subr.mxu0 0.0
    %9778 = vmatpush1.msra.mxu0 0.0
    %9779 = vmatprep.subr.mxu0 0.0
    %9780 = vmatpush1.msra.mxu0 0.0
    %9781 = vmatprep.subr.mxu0 0.0
    %9782 = vmatpush1.msra.mxu0 0.0
    %9783 = vmatprep.subr.mxu0 0.0
    %9784 = vmatpush1.msra.mxu0 0.0
    %9785 = vmatprep.subr.mxu0 0.0
    %9786 = vmatpush1.msra.mxu0 0.0
    %9787 = vmatprep.subr.mxu0 0.0
    %9788 = vmatpush1.msra.mxu0 0.0
    %9789 = vmatprep.subr.mxu0 0.0
    %9790 = vmatpush1.msra.mxu0 0.0
    %9791 = vmatprep.subr.mxu0 %v9676
    %9792 = vmatpush1.msra.mxu0 %v9675
    %9793 = vmatprep.subr.mxu0 0.0
    %9794 = vmatpush2.msra.mxu0 0.0
    %9795 = vmatprep.subr.mxu0 0.0
    %9796 = vmatpush2.msra.mxu0 0.0
    %9797 = vmatprep.subr.mxu0 0.0
    %9798 = vmatpush2.msra.mxu0 0.0
    %9799 = vmatprep.subr.mxu0 0.0
    %9800 = vmatpush2.msra.mxu0 0.0
    %9801 = vmatprep.subr.mxu0 0.0
    %9802 = vmatpush2.msra.mxu0 0.0
    %9803 = vmatprep.subr.mxu0 0.0
    %9804 = vmatpush2.msra.mxu0 0.0
    %9805 = vmatprep.subr.mxu0 0.0
    %9806 = vmatpush2.msra.mxu0 0.0
    %9807 = vmatprep.subr.mxu0 0.0
    %9808 = vmatpush2.msra.mxu0 0.0
    %9809 = vmatprep.subr.mxu0 0.0
    %9810 = vmatpush2.msra.mxu0 0.0
    %9811 = vmatprep.subr.mxu0 0.0
    %9812 = vmatpush2.msra.mxu0 0.0
    %9813 = vmatprep.subr.mxu0 0.0
    %9814 = vmatpush2.msra.mxu0 0.0
    %9815 = vmatprep.subr.mxu0 0.0
    %9816 = vmatpush2.msra.mxu0 0.0
    %9817 = vmatprep.subr.mxu0 0.0
    %9818 = vmatpush2.msra.mxu0 0.0
    %9819 = vmatprep.subr.mxu0 0.0
    %9820 = vmatpush2.msra.mxu0 0.0
    %9821 = vmatprep.subr.mxu0 0.0
    %9822 = vmatpush2.msra.mxu0 0.0
    %9823 = vmatprep.subr.mxu0 0.0
    %9824 = vmatpush2.msra.mxu0 0.0
    %9825 = vmatprep.mubr.f32.mxu0 0.0
    %9826 = vmatmul.mubr.f32.gmra.mxu0 %v9688
    %v9827 = vpop.f32.mrf.mxu0
    %v9828 = vadd.f32 0.0, %v9827
    %v9829 = vpop.f32.mrf.mxu0
    %v9830 = vadd.f32 0.0, %v9829
    %9831 = vdwg.mxu0
    %v9832 = vadd.f32 %v9669, %v9757
    %v9833 = vadd.f32 %v9670, %v9759
    %v9834 = vadd.f32 %v9671, %v9828
    %v9835 = vadd.f32 %v9672, %v9830
    %v9836 = vld [vmem:[%s5 + $0x120] sm:$0xff]
    %v9837 = vld [vmem:[%s5 + $0x128] sm:$0xff]
    %v9838 = vld [vmem:[%s5 + $0x130] sm:$0xff]
    %v9839 = vld [vmem:[%s5 + $0x138] sm:$0xff]
    %v9842 = vlaneseq
    %v9843 = vshrl.u32 %v9842, 7
    %v9844 = vsub.s32 0, %v9843
    %v9845 = vrot.slane %v8354, %v9844
    %v9846 = vlaneseq
    %v9847 = vshrl.u32 %v9846, 7
    %v9848 = vsub.s32 0, %v9847
    %v9849 = vrot.slane %v8370, %v9848
    %v9850 = vsel %vm6697, %v9849, %v9845
    %v9851 = vsel %vm2778, %v9850, 0
    %9853 = vmatprep.subr.mxu0 0.0
    %9854 = vmatpush1.msra.mxu0 0.0
    %9855 = vmatprep.subr.mxu0 0.0
    %9856 = vmatpush1.msra.mxu0 0.0
    %9857 = vmatprep.subr.mxu0 0.0
    %9858 = vmatpush1.msra.mxu0 0.0
    %9859 = vmatprep.subr.mxu0 0.0
    %9860 = vmatpush1.msra.mxu0 0.0
    %9861 = vmatprep.subr.mxu0 0.0
    %9862 = vmatpush1.msra.mxu0 0.0
    %9863 = vmatprep.subr.mxu0 0.0
    %9864 = vmatpush1.msra.mxu0 0.0
    %9865 = vmatprep.subr.mxu0 0.0
    %9866 = vmatpush1.msra.mxu0 0.0
    %9867 = vmatprep.subr.mxu0 0.0
    %9868 = vmatpush1.msra.mxu0 0.0
    %9869 = vmatprep.subr.mxu0 0.0
    %9870 = vmatpush1.msra.mxu0 0.0
    %9871 = vmatprep.subr.mxu0 0.0
    %9872 = vmatpush1.msra.mxu0 0.0
    %9873 = vmatprep.subr.mxu0 0.0
    %9874 = vmatpush1.msra.mxu0 0.0
    %9875 = vmatprep.subr.mxu0 0.0
    %9876 = vmatpush1.msra.mxu0 0.0
    %9877 = vmatprep.subr.mxu0 0.0
    %9878 = vmatpush1.msra.mxu0 0.0
    %9879 = vmatprep.subr.mxu0 0.0
    %9880 = vmatpush1.msra.mxu0 0.0
    %9881 = vmatprep.subr.mxu0 0.0
    %9882 = vmatpush1.msra.mxu0 0.0
    %9883 = vmatprep.subr.mxu0 %v9837
    %9884 = vmatpush1.msra.mxu0 %v9836
    %9885 = vmatprep.subr.mxu0 0.0
    %9886 = vmatpush2.msra.mxu0 0.0
    %9887 = vmatprep.subr.mxu0 0.0
    %9888 = vmatpush2.msra.mxu0 0.0
    %9889 = vmatprep.subr.mxu0 0.0
    %9890 = vmatpush2.msra.mxu0 0.0
    %9891 = vmatprep.subr.mxu0 0.0
    %9892 = vmatpush2.msra.mxu0 0.0
    %9893 = vmatprep.subr.mxu0 0.0
    %9894 = vmatpush2.msra.mxu0 0.0
    %9895 = vmatprep.subr.mxu0 0.0
    %9896 = vmatpush2.msra.mxu0 0.0
    %9897 = vmatprep.subr.mxu0 0.0
    %9898 = vmatpush2.msra.mxu0 0.0
    %9899 = vmatprep.subr.mxu0 0.0
    %9900 = vmatpush2.msra.mxu0 0.0
    %9901 = vmatprep.subr.mxu0 0.0
    %9902 = vmatpush2.msra.mxu0 0.0
    %9903 = vmatprep.subr.mxu0 0.0
    %9904 = vmatpush2.msra.mxu0 0.0
    %9905 = vmatprep.subr.mxu0 0.0
    %9906 = vmatpush2.msra.mxu0 0.0
    %9907 = vmatprep.subr.mxu0 0.0
    %9908 = vmatpush2.msra.mxu0 0.0
    %9909 = vmatprep.subr.mxu0 0.0
    %9910 = vmatpush2.msra.mxu0 0.0
    %9911 = vmatprep.subr.mxu0 0.0
    %9912 = vmatpush2.msra.mxu0 0.0
    %9913 = vmatprep.subr.mxu0 0.0
    %9914 = vmatpush2.msra.mxu0 0.0
    %9915 = vmatprep.subr.mxu0 0.0
    %9916 = vmatpush2.msra.mxu0 0.0
    %9917 = vmatprep.mubr.f32.mxu0 0.0
    %9918 = vmatmul.mubr.f32.gmra.mxu0 %v9851
    %v9919 = vpop.f32.mrf.mxu0
    %v9920 = vadd.f32 0.0, %v9919
    %v9921 = vpop.f32.mrf.mxu0
    %v9922 = vadd.f32 0.0, %v9921
    %9923 = vdwg.mxu0
    %9924 = vmatprep.subr.mxu0 0.0
    %9925 = vmatpush1.msra.mxu0 0.0
    %9926 = vmatprep.subr.mxu0 0.0
    %9927 = vmatpush1.msra.mxu0 0.0
    %9928 = vmatprep.subr.mxu0 0.0
    %9929 = vmatpush1.msra.mxu0 0.0
    %9930 = vmatprep.subr.mxu0 0.0
    %9931 = vmatpush1.msra.mxu0 0.0
    %9932 = vmatprep.subr.mxu0 0.0
    %9933 = vmatpush1.msra.mxu0 0.0
    %9934 = vmatprep.subr.mxu0 0.0
    %9935 = vmatpush1.msra.mxu0 0.0
    %9936 = vmatprep.subr.mxu0 0.0
    %9937 = vmatpush1.msra.mxu0 0.0
    %9938 = vmatprep.subr.mxu0 0.0
    %9939 = vmatpush1.msra.mxu0 0.0
    %9940 = vmatprep.subr.mxu0 0.0
    %9941 = vmatpush1.msra.mxu0 0.0
    %9942 = vmatprep.subr.mxu0 0.0
    %9943 = vmatpush1.msra.mxu0 0.0
    %9944 = vmatprep.subr.mxu0 0.0
    %9945 = vmatpush1.msra.mxu0 0.0
    %9946 = vmatprep.subr.mxu0 0.0
    %9947 = vmatpush1.msra.mxu0 0.0
    %9948 = vmatprep.subr.mxu0 0.0
    %9949 = vmatpush1.msra.mxu0 0.0
    %9950 = vmatprep.subr.mxu0 0.0
    %9951 = vmatpush1.msra.mxu0 0.0
    %9952 = vmatprep.subr.mxu0 0.0
    %9953 = vmatpush1.msra.mxu0 0.0
    %9954 = vmatprep.subr.mxu0 %v9839
    %9955 = vmatpush1.msra.mxu0 %v9838
    %9956 = vmatprep.subr.mxu0 0.0
    %9957 = vmatpush2.msra.mxu0 0.0
    %9958 = vmatprep.subr.mxu0 0.0
    %9959 = vmatpush2.msra.mxu0 0.0
    %9960 = vmatprep.subr.mxu0 0.0
    %9961 = vmatpush2.msra.mxu0 0.0
    %9962 = vmatprep.subr.mxu0 0.0
    %9963 = vmatpush2.msra.mxu0 0.0
    %9964 = vmatprep.subr.mxu0 0.0
    %9965 = vmatpush2.msra.mxu0 0.0
    %9966 = vmatprep.subr.mxu0 0.0
    %9967 = vmatpush2.msra.mxu0 0.0
    %9968 = vmatprep.subr.mxu0 0.0
    %9969 = vmatpush2.msra.mxu0 0.0
    %9970 = vmatprep.subr.mxu0 0.0
    %9971 = vmatpush2.msra.mxu0 0.0
    %9972 = vmatprep.subr.mxu0 0.0
    %9973 = vmatpush2.msra.mxu0 0.0
    %9974 = vmatprep.subr.mxu0 0.0
    %9975 = vmatpush2.msra.mxu0 0.0
    %9976 = vmatprep.subr.mxu0 0.0
    %9977 = vmatpush2.msra.mxu0 0.0
    %9978 = vmatprep.subr.mxu0 0.0
    %9979 = vmatpush2.msra.mxu0 0.0
    %9980 = vmatprep.subr.mxu0 0.0
    %9981 = vmatpush2.msra.mxu0 0.0
    %9982 = vmatprep.subr.mxu0 0.0
    %9983 = vmatpush2.msra.mxu0 0.0
    %9984 = vmatprep.subr.mxu0 0.0
    %9985 = vmatpush2.msra.mxu0 0.0
    %9986 = vmatprep.subr.mxu0 0.0
    %9987 = vmatpush2.msra.mxu0 0.0
    %9988 = vmatprep.mubr.f32.mxu0 0.0
    %9989 = vmatmul.mubr.f32.gmra.mxu0 %v9851
    %v9990 = vpop.f32.mrf.mxu0
    %v9991 = vadd.f32 0.0, %v9990
    %v9992 = vpop.f32.mrf.mxu0
    %v9993 = vadd.f32 0.0, %v9992
    %9994 = vdwg.mxu0
    %v9995 = vadd.f32 %v9832, %v9920
    %v9996 = vadd.f32 %v9833, %v9922
    %v9997 = vadd.f32 %v9834, %v9991
    %v9998 = vadd.f32 %v9835, %v9993
    %v9999 = vld [vmem:[%s5 + $0x140] sm:$0xff]
    %v10000 = vld [vmem:[%s5 + $0x148] sm:$0xff]
    %v10001 = vld [vmem:[%s5 + $0x150] sm:$0xff]
    %v10002 = vld [vmem:[%s5 + $0x158] sm:$0xff]
    %v10005 = vlaneseq
    %v10006 = vshrl.u32 %v10005, 7
    %v10007 = vsub.s32 0, %v10006
    %v10008 = vrot.slane %v8355, %v10007
    %v10009 = vlaneseq
    %v10010 = vshrl.u32 %v10009, 7
    %v10011 = vsub.s32 0, %v10010
    %v10012 = vrot.slane %v8371, %v10011
    %v10013 = vsel %vm6697, %v10012, %v10008
    %v10014 = vsel %vm2778, %v10013, 0
    %10016 = vmatprep.subr.mxu0 0.0
    %10017 = vmatpush1.msra.mxu0 0.0
    %10018 = vmatprep.subr.mxu0 0.0
    %10019 = vmatpush1.msra.mxu0 0.0
    %10020 = vmatprep.subr.mxu0 0.0
    %10021 = vmatpush1.msra.mxu0 0.0
    %10022 = vmatprep.subr.mxu0 0.0
    %10023 = vmatpush1.msra.mxu0 0.0
    %10024 = vmatprep.subr.mxu0 0.0
    %10025 = vmatpush1.msra.mxu0 0.0
    %10026 = vmatprep.subr.mxu0 0.0
    %10027 = vmatpush1.msra.mxu0 0.0
    %10028 = vmatprep.subr.mxu0 0.0
    %10029 = vmatpush1.msra.mxu0 0.0
    %10030 = vmatprep.subr.mxu0 0.0
    %10031 = vmatpush1.msra.mxu0 0.0
    %10032 = vmatprep.subr.mxu0 0.0
    %10033 = vmatpush1.msra.mxu0 0.0
    %10034 = vmatprep.subr.mxu0 0.0
    %10035 = vmatpush1.msra.mxu0 0.0
    %10036 = vmatprep.subr.mxu0 0.0
    %10037 = vmatpush1.msra.mxu0 0.0
    %10038 = vmatprep.subr.mxu0 0.0
    %10039 = vmatpush1.msra.mxu0 0.0
    %10040 = vmatprep.subr.mxu0 0.0
    %10041 = vmatpush1.msra.mxu0 0.0
    %10042 = vmatprep.subr.mxu0 0.0
    %10043 = vmatpush1.msra.mxu0 0.0
    %10044 = vmatprep.subr.mxu0 0.0
    %10045 = vmatpush1.msra.mxu0 0.0
    %10046 = vmatprep.subr.mxu0 %v10000
    %10047 = vmatpush1.msra.mxu0 %v9999
    %10048 = vmatprep.subr.mxu0 0.0
    %10049 = vmatpush2.msra.mxu0 0.0
    %10050 = vmatprep.subr.mxu0 0.0
    %10051 = vmatpush2.msra.mxu0 0.0
    %10052 = vmatprep.subr.mxu0 0.0
    %10053 = vmatpush2.msra.mxu0 0.0
    %10054 = vmatprep.subr.mxu0 0.0
    %10055 = vmatpush2.msra.mxu0 0.0
    %10056 = vmatprep.subr.mxu0 0.0
    %10057 = vmatpush2.msra.mxu0 0.0
    %10058 = vmatprep.subr.mxu0 0.0
    %10059 = vmatpush2.msra.mxu0 0.0
    %10060 = vmatprep.subr.mxu0 0.0
    %10061 = vmatpush2.msra.mxu0 0.0
    %10062 = vmatprep.subr.mxu0 0.0
    %10063 = vmatpush2.msra.mxu0 0.0
    %10064 = vmatprep.subr.mxu0 0.0
    %10065 = vmatpush2.msra.mxu0 0.0
    %10066 = vmatprep.subr.mxu0 0.0
    %10067 = vmatpush2.msra.mxu0 0.0
    %10068 = vmatprep.subr.mxu0 0.0
    %10069 = vmatpush2.msra.mxu0 0.0
    %10070 = vmatprep.subr.mxu0 0.0
    %10071 = vmatpush2.msra.mxu0 0.0
    %10072 = vmatprep.subr.mxu0 0.0
    %10073 = vmatpush2.msra.mxu0 0.0
    %10074 = vmatprep.subr.mxu0 0.0
    %10075 = vmatpush2.msra.mxu0 0.0
    %10076 = vmatprep.subr.mxu0 0.0
    %10077 = vmatpush2.msra.mxu0 0.0
    %10078 = vmatprep.subr.mxu0 0.0
    %10079 = vmatpush2.msra.mxu0 0.0
    %10080 = vmatprep.mubr.f32.mxu0 0.0
    %10081 = vmatmul.mubr.f32.gmra.mxu0 %v10014
    %v10082 = vpop.f32.mrf.mxu0
    %v10083 = vadd.f32 0.0, %v10082
    %v10084 = vpop.f32.mrf.mxu0
    %v10085 = vadd.f32 0.0, %v10084
    %10086 = vdwg.mxu0
    %10087 = vmatprep.subr.mxu0 0.0
    %10088 = vmatpush1.msra.mxu0 0.0
    %10089 = vmatprep.subr.mxu0 0.0
    %10090 = vmatpush1.msra.mxu0 0.0
    %10091 = vmatprep.subr.mxu0 0.0
    %10092 = vmatpush1.msra.mxu0 0.0
    %10093 = vmatprep.subr.mxu0 0.0
    %10094 = vmatpush1.msra.mxu0 0.0
    %10095 = vmatprep.subr.mxu0 0.0
    %10096 = vmatpush1.msra.mxu0 0.0
    %10097 = vmatprep.subr.mxu0 0.0
    %10098 = vmatpush1.msra.mxu0 0.0
    %10099 = vmatprep.subr.mxu0 0.0
    %10100 = vmatpush1.msra.mxu0 0.0
    %10101 = vmatprep.subr.mxu0 0.0
    %10102 = vmatpush1.msra.mxu0 0.0
    %10103 = vmatprep.subr.mxu0 0.0
    %10104 = vmatpush1.msra.mxu0 0.0
    %10105 = vmatprep.subr.mxu0 0.0
    %10106 = vmatpush1.msra.mxu0 0.0
    %10107 = vmatprep.subr.mxu0 0.0
    %10108 = vmatpush1.msra.mxu0 0.0
    %10109 = vmatprep.subr.mxu0 0.0
    %10110 = vmatpush1.msra.mxu0 0.0
    %10111 = vmatprep.subr.mxu0 0.0
    %10112 = vmatpush1.msra.mxu0 0.0
    %10113 = vmatprep.subr.mxu0 0.0
    %10114 = vmatpush1.msra.mxu0 0.0
    %10115 = vmatprep.subr.mxu0 0.0
    %10116 = vmatpush1.msra.mxu0 0.0
    %10117 = vmatprep.subr.mxu0 %v10002
    %10118 = vmatpush1.msra.mxu0 %v10001
    %10119 = vmatprep.subr.mxu0 0.0
    %10120 = vmatpush2.msra.mxu0 0.0
    %10121 = vmatprep.subr.mxu0 0.0
    %10122 = vmatpush2.msra.mxu0 0.0
    %10123 = vmatprep.subr.mxu0 0.0
    %10124 = vmatpush2.msra.mxu0 0.0
    %10125 = vmatprep.subr.mxu0 0.0
    %10126 = vmatpush2.msra.mxu0 0.0
    %10127 = vmatprep.subr.mxu0 0.0
    %10128 = vmatpush2.msra.mxu0 0.0
    %10129 = vmatprep.subr.mxu0 0.0
    %10130 = vmatpush2.msra.mxu0 0.0
    %10131 = vmatprep.subr.mxu0 0.0
    %10132 = vmatpush2.msra.mxu0 0.0
    %10133 = vmatprep.subr.mxu0 0.0
    %10134 = vmatpush2.msra.mxu0 0.0
    %10135 = vmatprep.subr.mxu0 0.0
    %10136 = vmatpush2.msra.mxu0 0.0
    %10137 = vmatprep.subr.mxu0 0.0
    %10138 = vmatpush2.msra.mxu0 0.0
    %10139 = vmatprep.subr.mxu0 0.0
    %10140 = vmatpush2.msra.mxu0 0.0
    %10141 = vmatprep.subr.mxu0 0.0
    %10142 = vmatpush2.msra.mxu0 0.0
    %10143 = vmatprep.subr.mxu0 0.0
    %10144 = vmatpush2.msra.mxu0 0.0
    %10145 = vmatprep.subr.mxu0 0.0
    %10146 = vmatpush2.msra.mxu0 0.0
    %10147 = vmatprep.subr.mxu0 0.0
    %10148 = vmatpush2.msra.mxu0 0.0
    %10149 = vmatprep.subr.mxu0 0.0
    %10150 = vmatpush2.msra.mxu0 0.0
    %10151 = vmatprep.mubr.f32.mxu0 0.0
    %10152 = vmatmul.mubr.f32.gmra.mxu0 %v10014
    %v10153 = vpop.f32.mrf.mxu0
    %v10154 = vadd.f32 0.0, %v10153
    %v10155 = vpop.f32.mrf.mxu0
    %v10156 = vadd.f32 0.0, %v10155
    %10157 = vdwg.mxu0
    %v10158 = vadd.f32 %v9995, %v10083
    %v10159 = vadd.f32 %v9996, %v10085
    %v10160 = vadd.f32 %v9997, %v10154
    %v10161 = vadd.f32 %v9998, %v10156
    %v10162 = vld [vmem:[%s5 + $0x160] sm:$0xff]
    %v10163 = vld [vmem:[%s5 + $0x168] sm:$0xff]
    %v10164 = vld [vmem:[%s5 + $0x170] sm:$0xff]
    %v10165 = vld [vmem:[%s5 + $0x178] sm:$0xff]
    %v10168 = vlaneseq
    %v10169 = vshrl.u32 %v10168, 7
    %v10170 = vsub.s32 0, %v10169
    %v10171 = vrot.slane %v8356, %v10170
    %v10172 = vlaneseq
    %v10173 = vshrl.u32 %v10172, 7
    %v10174 = vsub.s32 0, %v10173
    %v10175 = vrot.slane %v8372, %v10174
    %v10176 = vsel %vm6697, %v10175, %v10171
    %v10177 = vsel %vm2778, %v10176, 0
    %10179 = vmatprep.subr.mxu0 0.0
    %10180 = vmatpush1.msra.mxu0 0.0
    %10181 = vmatprep.subr.mxu0 0.0
    %10182 = vmatpush1.msra.mxu0 0.0
    %10183 = vmatprep.subr.mxu0 0.0
    %10184 = vmatpush1.msra.mxu0 0.0
    %10185 = vmatprep.subr.mxu0 0.0
    %10186 = vmatpush1.msra.mxu0 0.0
    %10187 = vmatprep.subr.mxu0 0.0
    %10188 = vmatpush1.msra.mxu0 0.0
    %10189 = vmatprep.subr.mxu0 0.0
    %10190 = vmatpush1.msra.mxu0 0.0
    %10191 = vmatprep.subr.mxu0 0.0
    %10192 = vmatpush1.msra.mxu0 0.0
    %10193 = vmatprep.subr.mxu0 0.0
    %10194 = vmatpush1.msra.mxu0 0.0
    %10195 = vmatprep.subr.mxu0 0.0
    %10196 = vmatpush1.msra.mxu0 0.0
    %10197 = vmatprep.subr.mxu0 0.0
    %10198 = vmatpush1.msra.mxu0 0.0
    %10199 = vmatprep.subr.mxu0 0.0
    %10200 = vmatpush1.msra.mxu0 0.0
    %10201 = vmatprep.subr.mxu0 0.0
    %10202 = vmatpush1.msra.mxu0 0.0
    %10203 = vmatprep.subr.mxu0 0.0
    %10204 = vmatpush1.msra.mxu0 0.0
    %10205 = vmatprep.subr.mxu0 0.0
    %10206 = vmatpush1.msra.mxu0 0.0
    %10207 = vmatprep.subr.mxu0 0.0
    %10208 = vmatpush1.msra.mxu0 0.0
    %10209 = vmatprep.subr.mxu0 %v10163
    %10210 = vmatpush1.msra.mxu0 %v10162
    %10211 = vmatprep.subr.mxu0 0.0
    %10212 = vmatpush2.msra.mxu0 0.0
    %10213 = vmatprep.subr.mxu0 0.0
    %10214 = vmatpush2.msra.mxu0 0.0
    %10215 = vmatprep.subr.mxu0 0.0
    %10216 = vmatpush2.msra.mxu0 0.0
    %10217 = vmatprep.subr.mxu0 0.0
    %10218 = vmatpush2.msra.mxu0 0.0
    %10219 = vmatprep.subr.mxu0 0.0
    %10220 = vmatpush2.msra.mxu0 0.0
    %10221 = vmatprep.subr.mxu0 0.0
    %10222 = vmatpush2.msra.mxu0 0.0
    %10223 = vmatprep.subr.mxu0 0.0
    %10224 = vmatpush2.msra.mxu0 0.0
    %10225 = vmatprep.subr.mxu0 0.0
    %10226 = vmatpush2.msra.mxu0 0.0
    %10227 = vmatprep.subr.mxu0 0.0
    %10228 = vmatpush2.msra.mxu0 0.0
    %10229 = vmatprep.subr.mxu0 0.0
    %10230 = vmatpush2.msra.mxu0 0.0
    %10231 = vmatprep.subr.mxu0 0.0
    %10232 = vmatpush2.msra.mxu0 0.0
    %10233 = vmatprep.subr.mxu0 0.0
    %10234 = vmatpush2.msra.mxu0 0.0
    %10235 = vmatprep.subr.mxu0 0.0
    %10236 = vmatpush2.msra.mxu0 0.0
    %10237 = vmatprep.subr.mxu0 0.0
    %10238 = vmatpush2.msra.mxu0 0.0
    %10239 = vmatprep.subr.mxu0 0.0
    %10240 = vmatpush2.msra.mxu0 0.0
    %10241 = vmatprep.subr.mxu0 0.0
    %10242 = vmatpush2.msra.mxu0 0.0
    %10243 = vmatprep.mubr.f32.mxu0 0.0
    %10244 = vmatmul.mubr.f32.gmra.mxu0 %v10177
    %v10245 = vpop.f32.mrf.mxu0
    %v10246 = vadd.f32 0.0, %v10245
    %v10247 = vpop.f32.mrf.mxu0
    %v10248 = vadd.f32 0.0, %v10247
    %10249 = vdwg.mxu0
    %10250 = vmatprep.subr.mxu0 0.0
    %10251 = vmatpush1.msra.mxu0 0.0
    %10252 = vmatprep.subr.mxu0 0.0
    %10253 = vmatpush1.msra.mxu0 0.0
    %10254 = vmatprep.subr.mxu0 0.0
    %10255 = vmatpush1.msra.mxu0 0.0
    %10256 = vmatprep.subr.mxu0 0.0
    %10257 = vmatpush1.msra.mxu0 0.0
    %10258 = vmatprep.subr.mxu0 0.0
    %10259 = vmatpush1.msra.mxu0 0.0
    %10260 = vmatprep.subr.mxu0 0.0
    %10261 = vmatpush1.msra.mxu0 0.0
    %10262 = vmatprep.subr.mxu0 0.0
    %10263 = vmatpush1.msra.mxu0 0.0
    %10264 = vmatprep.subr.mxu0 0.0
    %10265 = vmatpush1.msra.mxu0 0.0
    %10266 = vmatprep.subr.mxu0 0.0
    %10267 = vmatpush1.msra.mxu0 0.0
    %10268 = vmatprep.subr.mxu0 0.0
    %10269 = vmatpush1.msra.mxu0 0.0
    %10270 = vmatprep.subr.mxu0 0.0
    %10271 = vmatpush1.msra.mxu0 0.0
    %10272 = vmatprep.subr.mxu0 0.0
    %10273 = vmatpush1.msra.mxu0 0.0
    %10274 = vmatprep.subr.mxu0 0.0
    %10275 = vmatpush1.msra.mxu0 0.0
    %10276 = vmatprep.subr.mxu0 0.0
    %10277 = vmatpush1.msra.mxu0 0.0
    %10278 = vmatprep.subr.mxu0 0.0
    %10279 = vmatpush1.msra.mxu0 0.0
    %10280 = vmatprep.subr.mxu0 %v10165
    %10281 = vmatpush1.msra.mxu0 %v10164
    %10282 = vmatprep.subr.mxu0 0.0
    %10283 = vmatpush2.msra.mxu0 0.0
    %10284 = vmatprep.subr.mxu0 0.0
    %10285 = vmatpush2.msra.mxu0 0.0
    %10286 = vmatprep.subr.mxu0 0.0
    %10287 = vmatpush2.msra.mxu0 0.0
    %10288 = vmatprep.subr.mxu0 0.0
    %10289 = vmatpush2.msra.mxu0 0.0
    %10290 = vmatprep.subr.mxu0 0.0
    %10291 = vmatpush2.msra.mxu0 0.0
    %10292 = vmatprep.subr.mxu0 0.0
    %10293 = vmatpush2.msra.mxu0 0.0
    %10294 = vmatprep.subr.mxu0 0.0
    %10295 = vmatpush2.msra.mxu0 0.0
    %10296 = vmatprep.subr.mxu0 0.0
    %10297 = vmatpush2.msra.mxu0 0.0
    %10298 = vmatprep.subr.mxu0 0.0
    %10299 = vmatpush2.msra.mxu0 0.0
    %10300 = vmatprep.subr.mxu0 0.0
    %10301 = vmatpush2.msra.mxu0 0.0
    %10302 = vmatprep.subr.mxu0 0.0
    %10303 = vmatpush2.msra.mxu0 0.0
    %10304 = vmatprep.subr.mxu0 0.0
    %10305 = vmatpush2.msra.mxu0 0.0
    %10306 = vmatprep.subr.mxu0 0.0
    %10307 = vmatpush2.msra.mxu0 0.0
    %10308 = vmatprep.subr.mxu0 0.0
    %10309 = vmatpush2.msra.mxu0 0.0
    %10310 = vmatprep.subr.mxu0 0.0
    %10311 = vmatpush2.msra.mxu0 0.0
    %10312 = vmatprep.subr.mxu0 0.0
    %10313 = vmatpush2.msra.mxu0 0.0
    %10314 = vmatprep.mubr.f32.mxu0 0.0
    %10315 = vmatmul.mubr.f32.gmra.mxu0 %v10177
    %v10316 = vpop.f32.mrf.mxu0
    %v10317 = vadd.f32 0.0, %v10316
    %v10318 = vpop.f32.mrf.mxu0
    %v10319 = vadd.f32 0.0, %v10318
    %10320 = vdwg.mxu0
    %v10321 = vadd.f32 %v10158, %v10246
    %v10322 = vadd.f32 %v10159, %v10248
    %v10323 = vadd.f32 %v10160, %v10317
    %v10324 = vadd.f32 %v10161, %v10319
    %v10325 = vld [vmem:[%s5 + $0x180] sm:$0xff]
    %v10326 = vld [vmem:[%s5 + $0x188] sm:$0xff]
    %v10327 = vld [vmem:[%s5 + $0x190] sm:$0xff]
    %v10328 = vld [vmem:[%s5 + $0x198] sm:$0xff]
    %v10331 = vlaneseq
    %v10332 = vshrl.u32 %v10331, 7
    %v10333 = vsub.s32 0, %v10332
    %v10334 = vrot.slane %v8357, %v10333
    %v10335 = vlaneseq
    %v10336 = vshrl.u32 %v10335, 7
    %v10337 = vsub.s32 0, %v10336
    %v10338 = vrot.slane %v8373, %v10337
    %v10339 = vsel %vm6697, %v10338, %v10334
    %v10340 = vsel %vm2778, %v10339, 0
    %10342 = vmatprep.subr.mxu0 0.0
    %10343 = vmatpush1.msra.mxu0 0.0
    %10344 = vmatprep.subr.mxu0 0.0
    %10345 = vmatpush1.msra.mxu0 0.0
    %10346 = vmatprep.subr.mxu0 0.0
    %10347 = vmatpush1.msra.mxu0 0.0
    %10348 = vmatprep.subr.mxu0 0.0
    %10349 = vmatpush1.msra.mxu0 0.0
    %10350 = vmatprep.subr.mxu0 0.0
    %10351 = vmatpush1.msra.mxu0 0.0
    %10352 = vmatprep.subr.mxu0 0.0
    %10353 = vmatpush1.msra.mxu0 0.0
    %10354 = vmatprep.subr.mxu0 0.0
    %10355 = vmatpush1.msra.mxu0 0.0
    %10356 = vmatprep.subr.mxu0 0.0
    %10357 = vmatpush1.msra.mxu0 0.0
    %10358 = vmatprep.subr.mxu0 0.0
    %10359 = vmatpush1.msra.mxu0 0.0
    %10360 = vmatprep.subr.mxu0 0.0
    %10361 = vmatpush1.msra.mxu0 0.0
    %10362 = vmatprep.subr.mxu0 0.0
    %10363 = vmatpush1.msra.mxu0 0.0
    %10364 = vmatprep.subr.mxu0 0.0
    %10365 = vmatpush1.msra.mxu0 0.0
    %10366 = vmatprep.subr.mxu0 0.0
    %10367 = vmatpush1.msra.mxu0 0.0
    %10368 = vmatprep.subr.mxu0 0.0
    %10369 = vmatpush1.msra.mxu0 0.0
    %10370 = vmatprep.subr.mxu0 0.0
    %10371 = vmatpush1.msra.mxu0 0.0
    %10372 = vmatprep.subr.mxu0 %v10326
    %10373 = vmatpush1.msra.mxu0 %v10325
    %10374 = vmatprep.subr.mxu0 0.0
    %10375 = vmatpush2.msra.mxu0 0.0
    %10376 = vmatprep.subr.mxu0 0.0
    %10377 = vmatpush2.msra.mxu0 0.0
    %10378 = vmatprep.subr.mxu0 0.0
    %10379 = vmatpush2.msra.mxu0 0.0
    %10380 = vmatprep.subr.mxu0 0.0
    %10381 = vmatpush2.msra.mxu0 0.0
    %10382 = vmatprep.subr.mxu0 0.0
    %10383 = vmatpush2.msra.mxu0 0.0
    %10384 = vmatprep.subr.mxu0 0.0
    %10385 = vmatpush2.msra.mxu0 0.0
    %10386 = vmatprep.subr.mxu0 0.0
    %10387 = vmatpush2.msra.mxu0 0.0
    %10388 = vmatprep.subr.mxu0 0.0
    %10389 = vmatpush2.msra.mxu0 0.0
    %10390 = vmatprep.subr.mxu0 0.0
    %10391 = vmatpush2.msra.mxu0 0.0
    %10392 = vmatprep.subr.mxu0 0.0
    %10393 = vmatpush2.msra.mxu0 0.0
    %10394 = vmatprep.subr.mxu0 0.0
    %10395 = vmatpush2.msra.mxu0 0.0
    %10396 = vmatprep.subr.mxu0 0.0
    %10397 = vmatpush2.msra.mxu0 0.0
    %10398 = vmatprep.subr.mxu0 0.0
    %10399 = vmatpush2.msra.mxu0 0.0
    %10400 = vmatprep.subr.mxu0 0.0
    %10401 = vmatpush2.msra.mxu0 0.0
    %10402 = vmatprep.subr.mxu0 0.0
    %10403 = vmatpush2.msra.mxu0 0.0
    %10404 = vmatprep.subr.mxu0 0.0
    %10405 = vmatpush2.msra.mxu0 0.0
    %10406 = vmatprep.mubr.f32.mxu0 0.0
    %10407 = vmatmul.mubr.f32.gmra.mxu0 %v10340
    %v10408 = vpop.f32.mrf.mxu0
    %v10409 = vadd.f32 0.0, %v10408
    %v10410 = vpop.f32.mrf.mxu0
    %v10411 = vadd.f32 0.0, %v10410
    %10412 = vdwg.mxu0
    %10413 = vmatprep.subr.mxu0 0.0
    %10414 = vmatpush1.msra.mxu0 0.0
    %10415 = vmatprep.subr.mxu0 0.0
    %10416 = vmatpush1.msra.mxu0 0.0
    %10417 = vmatprep.subr.mxu0 0.0
    %10418 = vmatpush1.msra.mxu0 0.0
    %10419 = vmatprep.subr.mxu0 0.0
    %10420 = vmatpush1.msra.mxu0 0.0
    %10421 = vmatprep.subr.mxu0 0.0
    %10422 = vmatpush1.msra.mxu0 0.0
    %10423 = vmatprep.subr.mxu0 0.0
    %10424 = vmatpush1.msra.mxu0 0.0
    %10425 = vmatprep.subr.mxu0 0.0
    %10426 = vmatpush1.msra.mxu0 0.0
    %10427 = vmatprep.subr.mxu0 0.0
    %10428 = vmatpush1.msra.mxu0 0.0
    %10429 = vmatprep.subr.mxu0 0.0
    %10430 = vmatpush1.msra.mxu0 0.0
    %10431 = vmatprep.subr.mxu0 0.0
    %10432 = vmatpush1.msra.mxu0 0.0
    %10433 = vmatprep.subr.mxu0 0.0
    %10434 = vmatpush1.msra.mxu0 0.0
    %10435 = vmatprep.subr.mxu0 0.0
    %10436 = vmatpush1.msra.mxu0 0.0
    %10437 = vmatprep.subr.mxu0 0.0
    %10438 = vmatpush1.msra.mxu0 0.0
    %10439 = vmatprep.subr.mxu0 0.0
    %10440 = vmatpush1.msra.mxu0 0.0
    %10441 = vmatprep.subr.mxu0 0.0
    %10442 = vmatpush1.msra.mxu0 0.0
    %10443 = vmatprep.subr.mxu0 %v10328
    %10444 = vmatpush1.msra.mxu0 %v10327
    %10445 = vmatprep.subr.mxu0 0.0
    %10446 = vmatpush2.msra.mxu0 0.0
    %10447 = vmatprep.subr.mxu0 0.0
    %10448 = vmatpush2.msra.mxu0 0.0
    %10449 = vmatprep.subr.mxu0 0.0
    %10450 = vmatpush2.msra.mxu0 0.0
    %10451 = vmatprep.subr.mxu0 0.0
    %10452 = vmatpush2.msra.mxu0 0.0
    %10453 = vmatprep.subr.mxu0 0.0
    %10454 = vmatpush2.msra.mxu0 0.0
    %10455 = vmatprep.subr.mxu0 0.0
    %10456 = vmatpush2.msra.mxu0 0.0
    %10457 = vmatprep.subr.mxu0 0.0
    %10458 = vmatpush2.msra.mxu0 0.0
    %10459 = vmatprep.subr.mxu0 0.0
    %10460 = vmatpush2.msra.mxu0 0.0
    %10461 = vmatprep.subr.mxu0 0.0
    %10462 = vmatpush2.msra.mxu0 0.0
    %10463 = vmatprep.subr.mxu0 0.0
    %10464 = vmatpush2.msra.mxu0 0.0
    %10465 = vmatprep.subr.mxu0 0.0
    %10466 = vmatpush2.msra.mxu0 0.0
    %10467 = vmatprep.subr.mxu0 0.0
    %10468 = vmatpush2.msra.mxu0 0.0
    %10469 = vmatprep.subr.mxu0 0.0
    %10470 = vmatpush2.msra.mxu0 0.0
    %10471 = vmatprep.subr.mxu0 0.0
    %10472 = vmatpush2.msra.mxu0 0.0
    %10473 = vmatprep.subr.mxu0 0.0
    %10474 = vmatpush2.msra.mxu0 0.0
    %10475 = vmatprep.subr.mxu0 0.0
    %10476 = vmatpush2.msra.mxu0 0.0
    %10477 = vmatprep.mubr.f32.mxu0 0.0
    %10478 = vmatmul.mubr.f32.gmra.mxu0 %v10340
    %v10479 = vpop.f32.mrf.mxu0
    %v10480 = vadd.f32 0.0, %v10479
    %v10481 = vpop.f32.mrf.mxu0
    %v10482 = vadd.f32 0.0, %v10481
    %10483 = vdwg.mxu0
    %v10484 = vadd.f32 %v10321, %v10409
    %v10485 = vadd.f32 %v10322, %v10411
    %v10486 = vadd.f32 %v10323, %v10480
    %v10487 = vadd.f32 %v10324, %v10482
    %v10488 = vld [vmem:[%s5 + $0x1a0] sm:$0xff]
    %v10489 = vld [vmem:[%s5 + $0x1a8] sm:$0xff]
    %v10490 = vld [vmem:[%s5 + $0x1b0] sm:$0xff]
    %v10491 = vld [vmem:[%s5 + $0x1b8] sm:$0xff]
    %v10494 = vlaneseq
    %v10495 = vshrl.u32 %v10494, 7
    %v10496 = vsub.s32 0, %v10495
    %v10497 = vrot.slane %v8358, %v10496
    %v10498 = vlaneseq
    %v10499 = vshrl.u32 %v10498, 7
    %v10500 = vsub.s32 0, %v10499
    %v10501 = vrot.slane %v8374, %v10500
    %v10502 = vsel %vm6697, %v10501, %v10497
    %v10503 = vsel %vm2778, %v10502, 0
    %10505 = vmatprep.subr.mxu0 0.0
    %10506 = vmatpush1.msra.mxu0 0.0
    %10507 = vmatprep.subr.mxu0 0.0
    %10508 = vmatpush1.msra.mxu0 0.0
    %10509 = vmatprep.subr.mxu0 0.0
    %10510 = vmatpush1.msra.mxu0 0.0
    %10511 = vmatprep.subr.mxu0 0.0
    %10512 = vmatpush1.msra.mxu0 0.0
    %10513 = vmatprep.subr.mxu0 0.0
    %10514 = vmatpush1.msra.mxu0 0.0
    %10515 = vmatprep.subr.mxu0 0.0
    %10516 = vmatpush1.msra.mxu0 0.0
    %10517 = vmatprep.subr.mxu0 0.0
    %10518 = vmatpush1.msra.mxu0 0.0
    %10519 = vmatprep.subr.mxu0 0.0
    %10520 = vmatpush1.msra.mxu0 0.0
    %10521 = vmatprep.subr.mxu0 0.0
    %10522 = vmatpush1.msra.mxu0 0.0
    %10523 = vmatprep.subr.mxu0 0.0
    %10524 = vmatpush1.msra.mxu0 0.0
    %10525 = vmatprep.subr.mxu0 0.0
    %10526 = vmatpush1.msra.mxu0 0.0
    %10527 = vmatprep.subr.mxu0 0.0
    %10528 = vmatpush1.msra.mxu0 0.0
    %10529 = vmatprep.subr.mxu0 0.0
    %10530 = vmatpush1.msra.mxu0 0.0
    %10531 = vmatprep.subr.mxu0 0.0
    %10532 = vmatpush1.msra.mxu0 0.0
    %10533 = vmatprep.subr.mxu0 0.0
    %10534 = vmatpush1.msra.mxu0 0.0
    %10535 = vmatprep.subr.mxu0 %v10489
    %10536 = vmatpush1.msra.mxu0 %v10488
    %10537 = vmatprep.subr.mxu0 0.0
    %10538 = vmatpush2.msra.mxu0 0.0
    %10539 = vmatprep.subr.mxu0 0.0
    %10540 = vmatpush2.msra.mxu0 0.0
    %10541 = vmatprep.subr.mxu0 0.0
    %10542 = vmatpush2.msra.mxu0 0.0
    %10543 = vmatprep.subr.mxu0 0.0
    %10544 = vmatpush2.msra.mxu0 0.0
    %10545 = vmatprep.subr.mxu0 0.0
    %10546 = vmatpush2.msra.mxu0 0.0
    %10547 = vmatprep.subr.mxu0 0.0
    %10548 = vmatpush2.msra.mxu0 0.0
    %10549 = vmatprep.subr.mxu0 0.0
    %10550 = vmatpush2.msra.mxu0 0.0
    %10551 = vmatprep.subr.mxu0 0.0
    %10552 = vmatpush2.msra.mxu0 0.0
    %10553 = vmatprep.subr.mxu0 0.0
    %10554 = vmatpush2.msra.mxu0 0.0
    %10555 = vmatprep.subr.mxu0 0.0
    %10556 = vmatpush2.msra.mxu0 0.0
    %10557 = vmatprep.subr.mxu0 0.0
    %10558 = vmatpush2.msra.mxu0 0.0
    %10559 = vmatprep.subr.mxu0 0.0
    %10560 = vmatpush2.msra.mxu0 0.0
    %10561 = vmatprep.subr.mxu0 0.0
    %10562 = vmatpush2.msra.mxu0 0.0
    %10563 = vmatprep.subr.mxu0 0.0
    %10564 = vmatpush2.msra.mxu0 0.0
    %10565 = vmatprep.subr.mxu0 0.0
    %10566 = vmatpush2.msra.mxu0 0.0
    %10567 = vmatprep.subr.mxu0 0.0
    %10568 = vmatpush2.msra.mxu0 0.0
    %10569 = vmatprep.mubr.f32.mxu0 0.0
    %10570 = vmatmul.mubr.f32.gmra.mxu0 %v10503
    %v10571 = vpop.f32.mrf.mxu0
    %v10572 = vadd.f32 0.0, %v10571
    %v10573 = vpop.f32.mrf.mxu0
    %v10574 = vadd.f32 0.0, %v10573
    %10575 = vdwg.mxu0
    %10576 = vmatprep.subr.mxu0 0.0
    %10577 = vmatpush1.msra.mxu0 0.0
    %10578 = vmatprep.subr.mxu0 0.0
    %10579 = vmatpush1.msra.mxu0 0.0
    %10580 = vmatprep.subr.mxu0 0.0
    %10581 = vmatpush1.msra.mxu0 0.0
    %10582 = vmatprep.subr.mxu0 0.0
    %10583 = vmatpush1.msra.mxu0 0.0
    %10584 = vmatprep.subr.mxu0 0.0
    %10585 = vmatpush1.msra.mxu0 0.0
    %10586 = vmatprep.subr.mxu0 0.0
    %10587 = vmatpush1.msra.mxu0 0.0
    %10588 = vmatprep.subr.mxu0 0.0
    %10589 = vmatpush1.msra.mxu0 0.0
    %10590 = vmatprep.subr.mxu0 0.0
    %10591 = vmatpush1.msra.mxu0 0.0
    %10592 = vmatprep.subr.mxu0 0.0
    %10593 = vmatpush1.msra.mxu0 0.0
    %10594 = vmatprep.subr.mxu0 0.0
    %10595 = vmatpush1.msra.mxu0 0.0
    %10596 = vmatprep.subr.mxu0 0.0
    %10597 = vmatpush1.msra.mxu0 0.0
    %10598 = vmatprep.subr.mxu0 0.0
    %10599 = vmatpush1.msra.mxu0 0.0
    %10600 = vmatprep.subr.mxu0 0.0
    %10601 = vmatpush1.msra.mxu0 0.0
    %10602 = vmatprep.subr.mxu0 0.0
    %10603 = vmatpush1.msra.mxu0 0.0
    %10604 = vmatprep.subr.mxu0 0.0
    %10605 = vmatpush1.msra.mxu0 0.0
    %10606 = vmatprep.subr.mxu0 %v10491
    %10607 = vmatpush1.msra.mxu0 %v10490
    %10608 = vmatprep.subr.mxu0 0.0
    %10609 = vmatpush2.msra.mxu0 0.0
    %10610 = vmatprep.subr.mxu0 0.0
    %10611 = vmatpush2.msra.mxu0 0.0
    %10612 = vmatprep.subr.mxu0 0.0
    %10613 = vmatpush2.msra.mxu0 0.0
    %10614 = vmatprep.subr.mxu0 0.0
    %10615 = vmatpush2.msra.mxu0 0.0
    %10616 = vmatprep.subr.mxu0 0.0
    %10617 = vmatpush2.msra.mxu0 0.0
    %10618 = vmatprep.subr.mxu0 0.0
    %10619 = vmatpush2.msra.mxu0 0.0
    %10620 = vmatprep.subr.mxu0 0.0
    %10621 = vmatpush2.msra.mxu0 0.0
    %10622 = vmatprep.subr.mxu0 0.0
    %10623 = vmatpush2.msra.mxu0 0.0
    %10624 = vmatprep.subr.mxu0 0.0
    %10625 = vmatpush2.msra.mxu0 0.0
    %10626 = vmatprep.subr.mxu0 0.0
    %10627 = vmatpush2.msra.mxu0 0.0
    %10628 = vmatprep.subr.mxu0 0.0
    %10629 = vmatpush2.msra.mxu0 0.0
    %10630 = vmatprep.subr.mxu0 0.0
    %10631 = vmatpush2.msra.mxu0 0.0
    %10632 = vmatprep.subr.mxu0 0.0
    %10633 = vmatpush2.msra.mxu0 0.0
    %10634 = vmatprep.subr.mxu0 0.0
    %10635 = vmatpush2.msra.mxu0 0.0
    %10636 = vmatprep.subr.mxu0 0.0
    %10637 = vmatpush2.msra.mxu0 0.0
    %10638 = vmatprep.subr.mxu0 0.0
    %10639 = vmatpush2.msra.mxu0 0.0
    %10640 = vmatprep.mubr.f32.mxu0 0.0
    %10641 = vmatmul.mubr.f32.gmra.mxu0 %v10503
    %v10642 = vpop.f32.mrf.mxu0
    %v10643 = vadd.f32 0.0, %v10642
    %v10644 = vpop.f32.mrf.mxu0
    %v10645 = vadd.f32 0.0, %v10644
    %10646 = vdwg.mxu0
    %v10647 = vadd.f32 %v10484, %v10572
    %v10648 = vadd.f32 %v10485, %v10574
    %v10649 = vadd.f32 %v10486, %v10643
    %v10650 = vadd.f32 %v10487, %v10645
    %v10651 = vld [vmem:[%s5 + $0x1c0] sm:$0xff]
    %v10652 = vld [vmem:[%s5 + $0x1c8] sm:$0xff]
    %v10653 = vld [vmem:[%s5 + $0x1d0] sm:$0xff]
    %v10654 = vld [vmem:[%s5 + $0x1d8] sm:$0xff]
    %v10657 = vlaneseq
    %v10658 = vshrl.u32 %v10657, 7
    %v10659 = vsub.s32 0, %v10658
    %v10660 = vrot.slane %v8359, %v10659
    %v10661 = vlaneseq
    %v10662 = vshrl.u32 %v10661, 7
    %v10663 = vsub.s32 0, %v10662
    %v10664 = vrot.slane %v8375, %v10663
    %v10665 = vsel %vm6697, %v10664, %v10660
    %v10666 = vsel %vm2778, %v10665, 0
    %10668 = vmatprep.subr.mxu0 0.0
    %10669 = vmatpush1.msra.mxu0 0.0
    %10670 = vmatprep.subr.mxu0 0.0
    %10671 = vmatpush1.msra.mxu0 0.0
    %10672 = vmatprep.subr.mxu0 0.0
    %10673 = vmatpush1.msra.mxu0 0.0
    %10674 = vmatprep.subr.mxu0 0.0
    %10675 = vmatpush1.msra.mxu0 0.0
    %10676 = vmatprep.subr.mxu0 0.0
    %10677 = vmatpush1.msra.mxu0 0.0
    %10678 = vmatprep.subr.mxu0 0.0
    %10679 = vmatpush1.msra.mxu0 0.0
    %10680 = vmatprep.subr.mxu0 0.0
    %10681 = vmatpush1.msra.mxu0 0.0
    %10682 = vmatprep.subr.mxu0 0.0
    %10683 = vmatpush1.msra.mxu0 0.0
    %10684 = vmatprep.subr.mxu0 0.0
    %10685 = vmatpush1.msra.mxu0 0.0
    %10686 = vmatprep.subr.mxu0 0.0
    %10687 = vmatpush1.msra.mxu0 0.0
    %10688 = vmatprep.subr.mxu0 0.0
    %10689 = vmatpush1.msra.mxu0 0.0
    %10690 = vmatprep.subr.mxu0 0.0
    %10691 = vmatpush1.msra.mxu0 0.0
    %10692 = vmatprep.subr.mxu0 0.0
    %10693 = vmatpush1.msra.mxu0 0.0
    %10694 = vmatprep.subr.mxu0 0.0
    %10695 = vmatpush1.msra.mxu0 0.0
    %10696 = vmatprep.subr.mxu0 0.0
    %10697 = vmatpush1.msra.mxu0 0.0
    %10698 = vmatprep.subr.mxu0 %v10652
    %10699 = vmatpush1.msra.mxu0 %v10651
    %10700 = vmatprep.subr.mxu0 0.0
    %10701 = vmatpush2.msra.mxu0 0.0
    %10702 = vmatprep.subr.mxu0 0.0
    %10703 = vmatpush2.msra.mxu0 0.0
    %10704 = vmatprep.subr.mxu0 0.0
    %10705 = vmatpush2.msra.mxu0 0.0
    %10706 = vmatprep.subr.mxu0 0.0
    %10707 = vmatpush2.msra.mxu0 0.0
    %10708 = vmatprep.subr.mxu0 0.0
    %10709 = vmatpush2.msra.mxu0 0.0
    %10710 = vmatprep.subr.mxu0 0.0
    %10711 = vmatpush2.msra.mxu0 0.0
    %10712 = vmatprep.subr.mxu0 0.0
    %10713 = vmatpush2.msra.mxu0 0.0
    %10714 = vmatprep.subr.mxu0 0.0
    %10715 = vmatpush2.msra.mxu0 0.0
    %10716 = vmatprep.subr.mxu0 0.0
    %10717 = vmatpush2.msra.mxu0 0.0
    %10718 = vmatprep.subr.mxu0 0.0
    %10719 = vmatpush2.msra.mxu0 0.0
    %10720 = vmatprep.subr.mxu0 0.0
    %10721 = vmatpush2.msra.mxu0 0.0
    %10722 = vmatprep.subr.mxu0 0.0
    %10723 = vmatpush2.msra.mxu0 0.0
    %10724 = vmatprep.subr.mxu0 0.0
    %10725 = vmatpush2.msra.mxu0 0.0
    %10726 = vmatprep.subr.mxu0 0.0
    %10727 = vmatpush2.msra.mxu0 0.0
    %10728 = vmatprep.subr.mxu0 0.0
    %10729 = vmatpush2.msra.mxu0 0.0
    %10730 = vmatprep.subr.mxu0 0.0
    %10731 = vmatpush2.msra.mxu0 0.0
    %10732 = vmatprep.mubr.f32.mxu0 0.0
    %10733 = vmatmul.mubr.f32.gmra.mxu0 %v10666
    %v10734 = vpop.f32.mrf.mxu0
    %v10735 = vadd.f32 0.0, %v10734
    %v10736 = vpop.f32.mrf.mxu0
    %v10737 = vadd.f32 0.0, %v10736
    %10738 = vdwg.mxu0
    %10739 = vmatprep.subr.mxu0 0.0
    %10740 = vmatpush1.msra.mxu0 0.0
    %10741 = vmatprep.subr.mxu0 0.0
    %10742 = vmatpush1.msra.mxu0 0.0
    %10743 = vmatprep.subr.mxu0 0.0
    %10744 = vmatpush1.msra.mxu0 0.0
    %10745 = vmatprep.subr.mxu0 0.0
    %10746 = vmatpush1.msra.mxu0 0.0
    %10747 = vmatprep.subr.mxu0 0.0
    %10748 = vmatpush1.msra.mxu0 0.0
    %10749 = vmatprep.subr.mxu0 0.0
    %10750 = vmatpush1.msra.mxu0 0.0
    %10751 = vmatprep.subr.mxu0 0.0
    %10752 = vmatpush1.msra.mxu0 0.0
    %10753 = vmatprep.subr.mxu0 0.0
    %10754 = vmatpush1.msra.mxu0 0.0
    %10755 = vmatprep.subr.mxu0 0.0
    %10756 = vmatpush1.msra.mxu0 0.0
    %10757 = vmatprep.subr.mxu0 0.0
    %10758 = vmatpush1.msra.mxu0 0.0
    %10759 = vmatprep.subr.mxu0 0.0
    %10760 = vmatpush1.msra.mxu0 0.0
    %10761 = vmatprep.subr.mxu0 0.0
    %10762 = vmatpush1.msra.mxu0 0.0
    %10763 = vmatprep.subr.mxu0 0.0
    %10764 = vmatpush1.msra.mxu0 0.0
    %10765 = vmatprep.subr.mxu0 0.0
    %10766 = vmatpush1.msra.mxu0 0.0
    %10767 = vmatprep.subr.mxu0 0.0
    %10768 = vmatpush1.msra.mxu0 0.0
    %10769 = vmatprep.subr.mxu0 %v10654
    %10770 = vmatpush1.msra.mxu0 %v10653
    %10771 = vmatprep.subr.mxu0 0.0
    %10772 = vmatpush2.msra.mxu0 0.0
    %10773 = vmatprep.subr.mxu0 0.0
    %10774 = vmatpush2.msra.mxu0 0.0
    %10775 = vmatprep.subr.mxu0 0.0
    %10776 = vmatpush2.msra.mxu0 0.0
    %10777 = vmatprep.subr.mxu0 0.0
    %10778 = vmatpush2.msra.mxu0 0.0
    %10779 = vmatprep.subr.mxu0 0.0
    %10780 = vmatpush2.msra.mxu0 0.0
    %10781 = vmatprep.subr.mxu0 0.0
    %10782 = vmatpush2.msra.mxu0 0.0
    %10783 = vmatprep.subr.mxu0 0.0
    %10784 = vmatpush2.msra.mxu0 0.0
    %10785 = vmatprep.subr.mxu0 0.0
    %10786 = vmatpush2.msra.mxu0 0.0
    %10787 = vmatprep.subr.mxu0 0.0
    %10788 = vmatpush2.msra.mxu0 0.0
    %10789 = vmatprep.subr.mxu0 0.0
    %10790 = vmatpush2.msra.mxu0 0.0
    %10791 = vmatprep.subr.mxu0 0.0
    %10792 = vmatpush2.msra.mxu0 0.0
    %10793 = vmatprep.subr.mxu0 0.0
    %10794 = vmatpush2.msra.mxu0 0.0
    %10795 = vmatprep.subr.mxu0 0.0
    %10796 = vmatpush2.msra.mxu0 0.0
    %10797 = vmatprep.subr.mxu0 0.0
    %10798 = vmatpush2.msra.mxu0 0.0
    %10799 = vmatprep.subr.mxu0 0.0
    %10800 = vmatpush2.msra.mxu0 0.0
    %10801 = vmatprep.subr.mxu0 0.0
    %10802 = vmatpush2.msra.mxu0 0.0
    %10803 = vmatprep.mubr.f32.mxu0 0.0
    %10804 = vmatmul.mubr.f32.gmra.mxu0 %v10666
    %v10805 = vpop.f32.mrf.mxu0
    %v10806 = vadd.f32 0.0, %v10805
    %v10807 = vpop.f32.mrf.mxu0
    %v10808 = vadd.f32 0.0, %v10807
    %10809 = vdwg.mxu0
    %v10810 = vadd.f32 %v10647, %v10735
    %v10811 = vadd.f32 %v10648, %v10737
    %v10812 = vadd.f32 %v10649, %v10806
    %v10813 = vadd.f32 %v10650, %v10808
    %v10814 = vld [vmem:[%s5 + $0x1e0] sm:$0xff]
    %v10815 = vld [vmem:[%s5 + $0x1e8] sm:$0xff]
    %v10816 = vld [vmem:[%s5 + $0x1f0] sm:$0xff]
    %v10817 = vld [vmem:[%s5 + $0x1f8] sm:$0xff]
    %v10820 = vlaneseq
    %v10821 = vshrl.u32 %v10820, 7
    %v10822 = vsub.s32 0, %v10821
    %v10823 = vrot.slane %v8360, %v10822
    %v10824 = vlaneseq
    %v10825 = vshrl.u32 %v10824, 7
    %v10826 = vsub.s32 0, %v10825
    %v10827 = vrot.slane %v8376, %v10826
    %v10828 = vsel %vm6697, %v10827, %v10823
    %v10829 = vsel %vm2778, %v10828, 0
    %10831 = vmatprep.subr.mxu0 0.0
    %10832 = vmatpush1.msra.mxu0 0.0
    %10833 = vmatprep.subr.mxu0 0.0
    %10834 = vmatpush1.msra.mxu0 0.0
    %10835 = vmatprep.subr.mxu0 0.0
    %10836 = vmatpush1.msra.mxu0 0.0
    %10837 = vmatprep.subr.mxu0 0.0
    %10838 = vmatpush1.msra.mxu0 0.0
    %10839 = vmatprep.subr.mxu0 0.0
    %10840 = vmatpush1.msra.mxu0 0.0
    %10841 = vmatprep.subr.mxu0 0.0
    %10842 = vmatpush1.msra.mxu0 0.0
    %10843 = vmatprep.subr.mxu0 0.0
    %10844 = vmatpush1.msra.mxu0 0.0
    %10845 = vmatprep.subr.mxu0 0.0
    %10846 = vmatpush1.msra.mxu0 0.0
    %10847 = vmatprep.subr.mxu0 0.0
    %10848 = vmatpush1.msra.mxu0 0.0
    %10849 = vmatprep.subr.mxu0 0.0
    %10850 = vmatpush1.msra.mxu0 0.0
    %10851 = vmatprep.subr.mxu0 0.0
    %10852 = vmatpush1.msra.mxu0 0.0
    %10853 = vmatprep.subr.mxu0 0.0
    %10854 = vmatpush1.msra.mxu0 0.0
    %10855 = vmatprep.subr.mxu0 0.0
    %10856 = vmatpush1.msra.mxu0 0.0
    %10857 = vmatprep.subr.mxu0 0.0
    %10858 = vmatpush1.msra.mxu0 0.0
    %10859 = vmatprep.subr.mxu0 0.0
    %10860 = vmatpush1.msra.mxu0 0.0
    %10861 = vmatprep.subr.mxu0 %v10815
    %10862 = vmatpush1.msra.mxu0 %v10814
    %10863 = vmatprep.subr.mxu0 0.0
    %10864 = vmatpush2.msra.mxu0 0.0
    %10865 = vmatprep.subr.mxu0 0.0
    %10866 = vmatpush2.msra.mxu0 0.0
    %10867 = vmatprep.subr.mxu0 0.0
    %10868 = vmatpush2.msra.mxu0 0.0
    %10869 = vmatprep.subr.mxu0 0.0
    %10870 = vmatpush2.msra.mxu0 0.0
    %10871 = vmatprep.subr.mxu0 0.0
    %10872 = vmatpush2.msra.mxu0 0.0
    %10873 = vmatprep.subr.mxu0 0.0
    %10874 = vmatpush2.msra.mxu0 0.0
    %10875 = vmatprep.subr.mxu0 0.0
    %10876 = vmatpush2.msra.mxu0 0.0
    %10877 = vmatprep.subr.mxu0 0.0
    %10878 = vmatpush2.msra.mxu0 0.0
    %10879 = vmatprep.subr.mxu0 0.0
    %10880 = vmatpush2.msra.mxu0 0.0
    %10881 = vmatprep.subr.mxu0 0.0
    %10882 = vmatpush2.msra.mxu0 0.0
    %10883 = vmatprep.subr.mxu0 0.0
    %10884 = vmatpush2.msra.mxu0 0.0
    %10885 = vmatprep.subr.mxu0 0.0
    %10886 = vmatpush2.msra.mxu0 0.0
    %10887 = vmatprep.subr.mxu0 0.0
    %10888 = vmatpush2.msra.mxu0 0.0
    %10889 = vmatprep.subr.mxu0 0.0
    %10890 = vmatpush2.msra.mxu0 0.0
    %10891 = vmatprep.subr.mxu0 0.0
    %10892 = vmatpush2.msra.mxu0 0.0
    %10893 = vmatprep.subr.mxu0 0.0
    %10894 = vmatpush2.msra.mxu0 0.0
    %10895 = vmatprep.mubr.f32.mxu0 0.0
    %10896 = vmatmul.mubr.f32.gmra.mxu0 %v10829
    %v10897 = vpop.f32.mrf.mxu0
    %v10898 = vadd.f32 0.0, %v10897
    %v10899 = vpop.f32.mrf.mxu0
    %v10900 = vadd.f32 0.0, %v10899
    %10901 = vdwg.mxu0
    %10902 = vmatprep.subr.mxu0 0.0
    %10903 = vmatpush1.msra.mxu0 0.0
    %10904 = vmatprep.subr.mxu0 0.0
    %10905 = vmatpush1.msra.mxu0 0.0
    %10906 = vmatprep.subr.mxu0 0.0
    %10907 = vmatpush1.msra.mxu0 0.0
    %10908 = vmatprep.subr.mxu0 0.0
    %10909 = vmatpush1.msra.mxu0 0.0
    %10910 = vmatprep.subr.mxu0 0.0
    %10911 = vmatpush1.msra.mxu0 0.0
    %10912 = vmatprep.subr.mxu0 0.0
    %10913 = vmatpush1.msra.mxu0 0.0
    %10914 = vmatprep.subr.mxu0 0.0
    %10915 = vmatpush1.msra.mxu0 0.0
    %10916 = vmatprep.subr.mxu0 0.0
    %10917 = vmatpush1.msra.mxu0 0.0
    %10918 = vmatprep.subr.mxu0 0.0
    %10919 = vmatpush1.msra.mxu0 0.0
    %10920 = vmatprep.subr.mxu0 0.0
    %10921 = vmatpush1.msra.mxu0 0.0
    %10922 = vmatprep.subr.mxu0 0.0
    %10923 = vmatpush1.msra.mxu0 0.0
    %10924 = vmatprep.subr.mxu0 0.0
    %10925 = vmatpush1.msra.mxu0 0.0
    %10926 = vmatprep.subr.mxu0 0.0
    %10927 = vmatpush1.msra.mxu0 0.0
    %10928 = vmatprep.subr.mxu0 0.0
    %10929 = vmatpush1.msra.mxu0 0.0
    %10930 = vmatprep.subr.mxu0 0.0
    %10931 = vmatpush1.msra.mxu0 0.0
    %10932 = vmatprep.subr.mxu0 %v10817
    %10933 = vmatpush1.msra.mxu0 %v10816
    %10934 = vmatprep.subr.mxu0 0.0
    %10935 = vmatpush2.msra.mxu0 0.0
    %10936 = vmatprep.subr.mxu0 0.0
    %10937 = vmatpush2.msra.mxu0 0.0
    %10938 = vmatprep.subr.mxu0 0.0
    %10939 = vmatpush2.msra.mxu0 0.0
    %10940 = vmatprep.subr.mxu0 0.0
    %10941 = vmatpush2.msra.mxu0 0.0
    %10942 = vmatprep.subr.mxu0 0.0
    %10943 = vmatpush2.msra.mxu0 0.0
    %10944 = vmatprep.subr.mxu0 0.0
    %10945 = vmatpush2.msra.mxu0 0.0
    %10946 = vmatprep.subr.mxu0 0.0
    %10947 = vmatpush2.msra.mxu0 0.0
    %10948 = vmatprep.subr.mxu0 0.0
    %10949 = vmatpush2.msra.mxu0 0.0
    %10950 = vmatprep.subr.mxu0 0.0
    %10951 = vmatpush2.msra.mxu0 0.0
    %10952 = vmatprep.subr.mxu0 0.0
    %10953 = vmatpush2.msra.mxu0 0.0
    %10954 = vmatprep.subr.mxu0 0.0
    %10955 = vmatpush2.msra.mxu0 0.0
    %10956 = vmatprep.subr.mxu0 0.0
    %10957 = vmatpush2.msra.mxu0 0.0
    %10958 = vmatprep.subr.mxu0 0.0
    %10959 = vmatpush2.msra.mxu0 0.0
    %10960 = vmatprep.subr.mxu0 0.0
    %10961 = vmatpush2.msra.mxu0 0.0
    %10962 = vmatprep.subr.mxu0 0.0
    %10963 = vmatpush2.msra.mxu0 0.0
    %10964 = vmatprep.subr.mxu0 0.0
    %10965 = vmatpush2.msra.mxu0 0.0
    %10966 = vmatprep.mubr.f32.mxu0 0.0
    %10967 = vmatmul.mubr.f32.gmra.mxu0 %v10829
    %v10968 = vpop.f32.mrf.mxu0
    %v10969 = vadd.f32 0.0, %v10968
    %v10970 = vpop.f32.mrf.mxu0
    %v10971 = vadd.f32 0.0, %v10970
    %10972 = vdwg.mxu0
    %v10973 = vadd.f32 %v10810, %v10898
    %v10974 = vadd.f32 %v10811, %v10900
    %v10975 = vadd.f32 %v10812, %v10969
    %v10976 = vadd.f32 %v10813, %v10971
    %v10977 = vld [vmem:[%s6] sm:$0xf]
    %v10979 = vlaneseq
    %v10980 = vshrl.u32 %v10979, 7
    %v10981 = vsub.s32 0, %v10980
    %v10982 = vrot.slane %v10977, %v10981
    %v10983 = vlaneseq
    %v10984 = vshrl.u32 %v10983, 7
    %v10985 = vsub.s32 1, %v10984
    %v10986 = vrot.slane %v10977, %v10985
    %v10987 = vlaneseq
    %v10988 = vshrl.u32 %v10987, 7
    %v10989 = vsub.s32 2, %v10988
    %v10990 = vrot.slane %v10977, %v10989
    %v10991 = vlaneseq
    %v10992 = vshrl.u32 %v10991, 7
    %v10993 = vsub.s32 3, %v10992
    %v10994 = vrot.slane %v10977, %v10993
    %v10999 = vadd.f32 %v10973, %v10982
    %v11000 = vadd.f32 %v10974, %v10986
    %v11001 = vadd.f32 %v10975, %v10990
    %v11002 = vadd.f32 %v10976, %v10994
    %v11003 = vmax.f32 %v10999, 0.0
    %v11004 = vmax.f32 %v11000, 0.0
    %v11005 = vmax.f32 %v11001, 0.0
    %v11006 = vmax.f32 %v11002, 0.0
    %v11007 = vld [vmem:[%s7] sm:$0xff]
    %v11008 = vld [vmem:[%s7 + $0x8] sm:$0xff]
    %v11009 = vld [vmem:[%s7 + $0x10] sm:$0xff]
    %v11010 = vld [vmem:[%s7 + $0x18] sm:$0xff]
    %v11011 = vld [vmem:[%s7 + $0x20] sm:$0xff]
    %v11012 = vld [vmem:[%s7 + $0x28] sm:$0xff]
    %v11013 = vld [vmem:[%s7 + $0x30] sm:$0xff]
    %v11014 = vld [vmem:[%s7 + $0x38] sm:$0xff]
    %v11015 = vld [vmem:[%s7 + $0x40] sm:$0xff]
    %v11016 = vld [vmem:[%s7 + $0x48] sm:$0xff]
    %v11017 = vld [vmem:[%s7 + $0x50] sm:$0xff]
    %v11018 = vld [vmem:[%s7 + $0x58] sm:$0xff]
    %v11019 = vld [vmem:[%s7 + $0x60] sm:$0xff]
    %v11020 = vld [vmem:[%s7 + $0x68] sm:$0xff]
    %v11021 = vld [vmem:[%s7 + $0x70] sm:$0xff]
    %v11022 = vld [vmem:[%s7 + $0x78] sm:$0xff]
    %v11023 = vld [vmem:[%s7 + $0x80] sm:$0xff]
    %v11024 = vld [vmem:[%s7 + $0x88] sm:$0xff]
    %v11025 = vld [vmem:[%s7 + $0x90] sm:$0xff]
    %v11026 = vld [vmem:[%s7 + $0x98] sm:$0xff]
    %v11027 = vld [vmem:[%s7 + $0xa0] sm:$0xff]
    %v11028 = vld [vmem:[%s7 + $0xa8] sm:$0xff]
    %v11029 = vld [vmem:[%s7 + $0xb0] sm:$0xff]
    %v11030 = vld [vmem:[%s7 + $0xb8] sm:$0xff]
    %v11031 = vld [vmem:[%s7 + $0xc0] sm:$0xff]
    %v11032 = vld [vmem:[%s7 + $0xc8] sm:$0xff]
    %v11033 = vld [vmem:[%s7 + $0xd0] sm:$0xff]
    %v11034 = vld [vmem:[%s7 + $0xd8] sm:$0xff]
    %v11035 = vld [vmem:[%s7 + $0xe0] sm:$0xff]
    %v11036 = vld [vmem:[%s7 + $0xe8] sm:$0xff]
    %v11037 = vld [vmem:[%s7 + $0xf0] sm:$0xff]
    %v11038 = vld [vmem:[%s7 + $0xf8] sm:$0xff]
    %v11039 = vld [vmem:[%s7 + $0x100] sm:$0xff]
    %v11040 = vld [vmem:[%s7 + $0x108] sm:$0xff]
    %v11041 = vld [vmem:[%s7 + $0x110] sm:$0xff]
    %v11042 = vld [vmem:[%s7 + $0x118] sm:$0xff]
    %v11043 = vld [vmem:[%s7 + $0x120] sm:$0xff]
    %v11044 = vld [vmem:[%s7 + $0x128] sm:$0xff]
    %v11045 = vld [vmem:[%s7 + $0x130] sm:$0xff]
    %v11046 = vld [vmem:[%s7 + $0x138] sm:$0xff]
    %v11047 = vld [vmem:[%s7 + $0x140] sm:$0xff]
    %v11048 = vld [vmem:[%s7 + $0x148] sm:$0xff]
    %v11049 = vld [vmem:[%s7 + $0x150] sm:$0xff]
    %v11050 = vld [vmem:[%s7 + $0x158] sm:$0xff]
    %v11051 = vld [vmem:[%s7 + $0x160] sm:$0xff]
    %v11052 = vld [vmem:[%s7 + $0x168] sm:$0xff]
    %v11053 = vld [vmem:[%s7 + $0x170] sm:$0xff]
    %v11054 = vld [vmem:[%s7 + $0x178] sm:$0xff]
    %v11055 = vld [vmem:[%s7 + $0x180] sm:$0xff]
    %v11056 = vld [vmem:[%s7 + $0x188] sm:$0xff]
    %v11057 = vld [vmem:[%s7 + $0x190] sm:$0xff]
    %v11058 = vld [vmem:[%s7 + $0x198] sm:$0xff]
    %v11059 = vld [vmem:[%s7 + $0x1a0] sm:$0xff]
    %v11060 = vld [vmem:[%s7 + $0x1a8] sm:$0xff]
    %v11061 = vld [vmem:[%s7 + $0x1b0] sm:$0xff]
    %v11062 = vld [vmem:[%s7 + $0x1b8] sm:$0xff]
    %v11063 = vld [vmem:[%s7 + $0x1c0] sm:$0xff]
    %v11064 = vld [vmem:[%s7 + $0x1c8] sm:$0xff]
    %v11065 = vld [vmem:[%s7 + $0x1d0] sm:$0xff]
    %v11066 = vld [vmem:[%s7 + $0x1d8] sm:$0xff]
    %v11067 = vld [vmem:[%s7 + $0x1e0] sm:$0xff]
    %v11068 = vld [vmem:[%s7 + $0x1e8] sm:$0xff]
    %v11069 = vld [vmem:[%s7 + $0x1f0] sm:$0xff]
    %v11070 = vld [vmem:[%s7 + $0x1f8] sm:$0xff]
    %v11071 = vld [vmem:[%s8] sm:$0x1]
    %v11073 = vlaneseq
    %v11074 = vshrl.u32 %v11073, 7
    %v11075 = vsub.s32 0, %v11074
    %v11076 = vrot.slane %v11071, %v11075
    %11078 = vmatprep.subr.mxu0 0.0
    %11079 = vmatpush1.msra.mxu0 %v11022
    %11080 = vmatprep.subr.mxu0 0.0
    %11081 = vmatpush1.msra.mxu0 %v11021
    %11082 = vmatprep.subr.mxu0 0.0
    %11083 = vmatpush1.msra.mxu0 %v11020
    %11084 = vmatprep.subr.mxu0 0.0
    %11085 = vmatpush1.msra.mxu0 %v11019
    %11086 = vmatprep.subr.mxu0 0.0
    %11087 = vmatpush1.msra.mxu0 %v11018
    %11088 = vmatprep.subr.mxu0 0.0
    %11089 = vmatpush1.msra.mxu0 %v11017
    %11090 = vmatprep.subr.mxu0 0.0
    %11091 = vmatpush1.msra.mxu0 %v11016
    %11092 = vmatprep.subr.mxu0 0.0
    %11093 = vmatpush1.msra.mxu0 %v11015
    %11094 = vmatprep.subr.mxu0 0.0
    %11095 = vmatpush1.msra.mxu0 %v11014
    %11096 = vmatprep.subr.mxu0 0.0
    %11097 = vmatpush1.msra.mxu0 %v11013
    %11098 = vmatprep.subr.mxu0 0.0
    %11099 = vmatpush1.msra.mxu0 %v11012
    %11100 = vmatprep.subr.mxu0 0.0
    %11101 = vmatpush1.msra.mxu0 %v11011
    %11102 = vmatprep.subr.mxu0 0.0
    %11103 = vmatpush1.msra.mxu0 %v11010
    %11104 = vmatprep.subr.mxu0 0.0
    %11105 = vmatpush1.msra.mxu0 %v11009
    %11106 = vmatprep.subr.mxu0 0.0
    %11107 = vmatpush1.msra.mxu0 %v11008
    %11108 = vmatprep.subr.mxu0 0.0
    %11109 = vmatpush1.msra.mxu0 %v11007
    %11110 = vmatprep.subr.mxu0 0.0
    %11111 = vmatpush2.msra.mxu0 %v11038
    %11112 = vmatprep.subr.mxu0 0.0
    %11113 = vmatpush2.msra.mxu0 %v11037
    %11114 = vmatprep.subr.mxu0 0.0
    %11115 = vmatpush2.msra.mxu0 %v11036
    %11116 = vmatprep.subr.mxu0 0.0
    %11117 = vmatpush2.msra.mxu0 %v11035
    %11118 = vmatprep.subr.mxu0 0.0
    %11119 = vmatpush2.msra.mxu0 %v11034
    %11120 = vmatprep.subr.mxu0 0.0
    %11121 = vmatpush2.msra.mxu0 %v11033
    %11122 = vmatprep.subr.mxu0 0.0
    %11123 = vmatpush2.msra.mxu0 %v11032
    %11124 = vmatprep.subr.mxu0 0.0
    %11125 = vmatpush2.msra.mxu0 %v11031
    %11126 = vmatprep.subr.mxu0 0.0
    %11127 = vmatpush2.msra.mxu0 %v11030
    %11128 = vmatprep.subr.mxu0 0.0
    %11129 = vmatpush2.msra.mxu0 %v11029
    %11130 = vmatprep.subr.mxu0 0.0
    %11131 = vmatpush2.msra.mxu0 %v11028
    %11132 = vmatprep.subr.mxu0 0.0
    %11133 = vmatpush2.msra.mxu0 %v11027
    %11134 = vmatprep.subr.mxu0 0.0
    %11135 = vmatpush2.msra.mxu0 %v11026
    %11136 = vmatprep.subr.mxu0 0.0
    %11137 = vmatpush2.msra.mxu0 %v11025
    %11138 = vmatprep.subr.mxu0 0.0
    %11139 = vmatpush2.msra.mxu0 %v11024
    %11140 = vmatprep.subr.mxu0 0.0
    %11141 = vmatpush2.msra.mxu0 %v11023
    %11142 = vmatprep.mubr.f32.mxu0 %v11004
    %11143 = vmatmul.mubr.f32.gmra.mxu0 %v11003
    %v11144 = vpop.f32.mrf.mxu0
    %v11145 = vadd.f32 %v11076, %v11144
    %v11146 = vpop.f32.mrf.mxu0
    %11147 = vdwg.mxu0
    %11148 = vmatprep.subr.mxu0 0.0
    %11149 = vmatpush1.msra.mxu0 %v11054
    %11150 = vmatprep.subr.mxu0 0.0
    %11151 = vmatpush1.msra.mxu0 %v11053
    %11152 = vmatprep.subr.mxu0 0.0
    %11153 = vmatpush1.msra.mxu0 %v11052
    %11154 = vmatprep.subr.mxu0 0.0
    %11155 = vmatpush1.msra.mxu0 %v11051
    %11156 = vmatprep.subr.mxu0 0.0
    %11157 = vmatpush1.msra.mxu0 %v11050
    %11158 = vmatprep.subr.mxu0 0.0
    %11159 = vmatpush1.msra.mxu0 %v11049
    %11160 = vmatprep.subr.mxu0 0.0
    %11161 = vmatpush1.msra.mxu0 %v11048
    %11162 = vmatprep.subr.mxu0 0.0
    %11163 = vmatpush1.msra.mxu0 %v11047
    %11164 = vmatprep.subr.mxu0 0.0
    %11165 = vmatpush1.msra.mxu0 %v11046
    %11166 = vmatprep.subr.mxu0 0.0
    %11167 = vmatpush1.msra.mxu0 %v11045
    %11168 = vmatprep.subr.mxu0 0.0
    %11169 = vmatpush1.msra.mxu0 %v11044
    %11170 = vmatprep.subr.mxu0 0.0
    %11171 = vmatpush1.msra.mxu0 %v11043
    %11172 = vmatprep.subr.mxu0 0.0
    %11173 = vmatpush1.msra.mxu0 %v11042
    %11174 = vmatprep.subr.mxu0 0.0
    %11175 = vmatpush1.msra.mxu0 %v11041
    %11176 = vmatprep.subr.mxu0 0.0
    %11177 = vmatpush1.msra.mxu0 %v11040
    %11178 = vmatprep.subr.mxu0 0.0
    %11179 = vmatpush1.msra.mxu0 %v11039
    %11180 = vmatprep.subr.mxu0 0.0
    %11181 = vmatpush2.msra.mxu0 %v11070
    %11182 = vmatprep.subr.mxu0 0.0
    %11183 = vmatpush2.msra.mxu0 %v11069
    %11184 = vmatprep.subr.mxu0 0.0
    %11185 = vmatpush2.msra.mxu0 %v11068
    %11186 = vmatprep.subr.mxu0 0.0
    %11187 = vmatpush2.msra.mxu0 %v11067
    %11188 = vmatprep.subr.mxu0 0.0
    %11189 = vmatpush2.msra.mxu0 %v11066
    %11190 = vmatprep.subr.mxu0 0.0
    %11191 = vmatpush2.msra.mxu0 %v11065
    %11192 = vmatprep.subr.mxu0 0.0
    %11193 = vmatpush2.msra.mxu0 %v11064
    %11194 = vmatprep.subr.mxu0 0.0
    %11195 = vmatpush2.msra.mxu0 %v11063
    %11196 = vmatprep.subr.mxu0 0.0
    %11197 = vmatpush2.msra.mxu0 %v11062
    %11198 = vmatprep.subr.mxu0 0.0
    %11199 = vmatpush2.msra.mxu0 %v11061
    %11200 = vmatprep.subr.mxu0 0.0
    %11201 = vmatpush2.msra.mxu0 %v11060
    %11202 = vmatprep.subr.mxu0 0.0
    %11203 = vmatpush2.msra.mxu0 %v11059
    %11204 = vmatprep.subr.mxu0 0.0
    %11205 = vmatpush2.msra.mxu0 %v11058
    %11206 = vmatprep.subr.mxu0 0.0
    %11207 = vmatpush2.msra.mxu0 %v11057
    %11208 = vmatprep.subr.mxu0 0.0
    %11209 = vmatpush2.msra.mxu0 %v11056
    %11210 = vmatprep.subr.mxu0 0.0
    %11211 = vmatpush2.msra.mxu0 %v11055
    %11212 = vmatprep.mubr.f32.mxu0 %v11006
    %11213 = vmatmul.mubr.f32.gmra.mxu0 %v11005
    %v11214 = vpop.f32.mrf.mxu0
    %v11215 = vadd.f32 %v11145, %v11214
    %v11216 = vpop.f32.mrf.mxu0
    %11217 = vdwg.mxu0
    %vm11218 = vcmask 74752
    %11219 = vst.msk [vmem:[#allocation2] sm:$0x3] %vm11218, %v11215
    // Predicated region
    $region38: #{cnn_forward.1} parent=1 // pred_check
      _
    $region39: #{cnn_forward.1} parent=1 // pred_check_branch
      %11221 = sbr.rel (0) target = $region41
    $region40: #{cnn_forward.1} parent=1 // pred_region
      %s11223 = ssub.s32 32, 32
      %11224 = vsyncadd [#allocation3], %s11223
      %s11226 = sshll.u32 [#allocation2], 4
      %s11227 = int_to_ptr.vmem [resolvable:$true] %s11226
      %11229 = dma.vmem_to_hbm [thread:$0]  %s11227, 32, %s9, [#allocation3]
    $region41: #{cnn_forward.1} parent=1 // pred_fallthru
      _
    // Predicated region
    $region42: #{cnn_forward.1} parent=1 // pred_check
      _
    $region43: #{cnn_forward.1} parent=1 // pred_check_branch
      %11231 = sbr.rel (0) target = $region45
    $region44: #{cnn_forward.1} parent=1 // pred_region
      %11232 = dma.done [#allocation3], 32
    $region45: #{cnn_forward.1} parent=1 // pred_fallthru
      _
    %11233 = vsyncpa [#allocation3], 1

</llo_original>
